<compile_context>
chip_gen: v6e
topology: v6e:2x2x1
jax: 0.10.0
libtpu: 0.0.40
codegen_flags: <defaults>
</compile_context>

<pallas_src>
import jax
import jax.numpy as jnp
import numpy as np
from jax import lax
from jax.experimental import pallas as pl
from jax.experimental.pallas import tpu as pltpu

_VMEM = pl.BlockSpec(memory_space=pltpu.MemorySpace.VMEM)
_ANY = pl.BlockSpec(memory_space=pl.ANY)

# ---------------- static geometry (the 64*6*6 classifier implies 3x32x32 input) ----------------
B = 2                      # batch
H = W = 32                 # input spatial size
C_IN = 3
C1, C2 = 32, 64            # conv output channels
KH = KW = 3
OUT1 = H - (KH - 1)        # 30   conv1 output H/W
P1HW = OUT1 // 2           # 15   pool1 output H/W
OUT2 = P1HW - (KH - 1)     # 13   conv2 output H/W
P2HW = OUT2 // 2           # 6    pool2 output H/W
FEAT = C2 * P2HW * P2HW    # 2304 classifier input features
NHID = 128

K1 = KH * KW * C_IN        # 27   conv1 im2col depth
K1_PAD = 32                # padded to a clean lane count
K2 = KH * KW * C1          # 288  conv2 im2col depth

# pool1-grid row id (also indexes conv2 outputs): q = (pi*15 + pj)*B + b (batch innermost)
N_P1 = P1HW * P1HW * B     # 450 valid rows
PAR_BLK = 512              # per-parity row padding (multiple of 128)
N_X = 4 * PAR_BLK          # 2048 conv1 im2col rows (4 pool-window parities)

# conv2 tap (di,dj) -> row shift on the pool1 grid
_C2_OFF = [(di * P1HW + dj) * B for di in range(KH) for dj in range(KW)]   # 0..64 (all even)
M2 = 368                   # conv2 rows computed (covers every consumed row; multiple of 16)

# pool2 window element (e,f) -> row shift on the conv2 grid
_P2_OFF = [(e * P1HW + f) * B for e in range(2) for f in range(2)]         # {0, 2, 30, 32}
M2P = M2 - max(_P2_OFF)    # 336 pooled rows computed


def _p2_row(qi, qj):
    # pooled pixel (qi, qj) occupies rows [_p2_row, _p2_row + B) of the pool2 slab
    return (2 * qi * P1HW + 2 * qj) * B


# ---------------- static "garbage rows are never consumed" audit (review concern #1) ----------
_CONSUMED_P2_MAX = _p2_row(P2HW - 1, P2HW - 1) + (B - 1)   # 321: last pool2 row read by fc1
_CONSUMED_C2_MAX = _CONSUMED_P2_MAX + max(_P2_OFF)         # 353: last conv2 row read by pool2
_CONSUMED_P1_MAX = _CONSUMED_C2_MAX + max(_C2_OFF)         # 417: last pool1 row read by conv2
assert _CONSUMED_P2_MAX + B <= M2P                 # fc1 gather stays inside the pooled slab
assert _CONSUMED_C2_MAX < M2                       # every consumed conv2 row is computed
assert max(_P2_OFF) + M2P <= M2                    # pool2 slices stay inside the conv2 slab
assert max(_C2_OFF) + M2 <= PAR_BLK                # conv2 slices stay inside padded pool1 slab
assert _CONSUMED_P1_MAX < N_P1                     # consumed rows never touch pool1 padding
assert 2 * (P2HW - 1) + 1 + (KH - 1) <= P1HW - 1   # consumed conv2 taps stay on the 15x15 grid
assert PAR_BLK % 128 == 0 and M2 % 16 == 0 and M2P % 16 == 0 and FEAT == P2HW * P2HW * C2


# ---------------- the single fused Pallas kernel ----------------

def _simple_cnn_kernel(x_ref, w1_ref, b1_ref, w2_ref, b2_ref,
                       fc1w_hbm, fc1b_ref, fc2w_ref, fc2b_ref,
                       o_ref,
                       cols2_scr, hvec_scr, fc1w_vmem, fc1_sem):
    f32 = jnp.float32

    # Kick off the ~576 KB fc1-weight HBM->VMEM copy so it hides behind conv1/conv2 compute.
    fc1_cp = pltpu.make_async_copy(fc1w_hbm, fc1w_vmem, fc1_sem)
    fc1_cp.start()

    # ---- conv1: a single [2048,32]@[32,32] MXU pass over the parity-ordered im2col ----
    a1 = jnp.dot(x_ref[...], w1_ref[...], preferred_element_type=f32)        # [2048, 32] f32

    # ---- maxpool1: elementwise max of the 4 aligned parity blocks; bias+ReLU after the max
    p1 = jnp.maximum(jnp.maximum(a1[0:PAR_BLK], a1[PAR_BLK:2 * PAR_BLK]),
                     jnp.maximum(a1[2 * PAR_BLK:3 * PAR_BLK], a1[3 * PAR_BLK:4 * PAR_BLK]))
    p1 = jnp.maximum(p1 + b1_ref[...], 0.0).astype(jnp.bfloat16)             # [512, 32]

    # ---- conv2: in-kernel im2col (9 row-shifted slabs -> K=288), then ONE MXU pass ----
    for t in range(KH * KW):
        off = _C2_OFF[t]
        cols2_scr[:, t * C1:(t + 1) * C1] = p1[off:off + M2, :]
    a2 = jnp.dot(cols2_scr[...], w2_ref[...], preferred_element_type=f32)    # [368, 64] f32

    # ---- maxpool2: max of 4 row-shifted slices; bias+ReLU after the max ----
    p2 = jnp.maximum(
        jnp.maximum(a2[_P2_OFF[0]:_P2_OFF[0] + M2P], a2[_P2_OFF[1]:_P2_OFF[1] + M2P]),
        jnp.maximum(a2[_P2_OFF[2]:_P2_OFF[2] + M2P], a2[_P2_OFF[3]:_P2_OFF[3] + M2P]))
    p2 = jnp.maximum(p2 + b2_ref[...], 0.0).astype(jnp.bfloat16)             # [336, 64]

    # ---- gather the 36 pooled pixel (batch-pair) rows into ONE [B, 2304] slab ----
    # column order (qi, qj, c) matches the host-permuted fc1 weight.
    for qi in range(P2HW):
        for qj in range(P2HW):
            p = qi * P2HW + qj
            r = _p2_row(qi, qj)
            hvec_scr[:, p * C2:(p + 1) * C2] = p2[r:r + B, :]

    # ---- classifier: wait for fc1 weights, then two streaming dots ----
    fc1_cp.wait()
    h = jnp.dot(hvec_scr[...], fc1w_vmem[...], preferred_element_type=f32) + fc1b_ref[...]
    h = jnp.maximum(h, 0.0).astype(jnp.bfloat16)                             # [B, 128]
    out = jnp.dot(h, fc2w_ref[...], preferred_element_type=f32) + fc2b_ref[...]
    o_ref[...] = out.astype(o_ref.dtype)


# ---------------- wrapper-side input im2col (tiny XLA layout plumbing, inside jit) ------------

def _conv1_im2col(x_nchw):
    """[B,3,32,32] -> [2048, 32] bf16.

    Row r = parity*512 + ((pi*15 + pj)*B + b) with parity = (i%2)*2 + (j%2), i = 2*pi + i%2,
    j = 2*pj + j%2.  Column = (di*3 + dj)*3 + c (zero-padded to 32).  Rows 450..511 of each
    parity block are zero padding (never consumed downstream, see static audit above)."""
    taps = [x_nchw[:, :, di:di + OUT1, dj:dj + OUT1]
            for di in range(KH) for dj in range(KW)]            # 9 x [B, C, 30, 30]
    p = jnp.stack(taps, axis=-1)                                # [B, C, 30, 30, 9]
    p = jnp.transpose(p, (2, 3, 0, 4, 1))                       # [30, 30, B, 9, C] = (i, j, b, t, c)
    p = p.reshape(P1HW, 2, P1HW, 2, B, K1)                      # [pi, e, pj, f, b, 27]
    p = jnp.transpose(p, (1, 3, 0, 2, 4, 5))                    # [e, f, pi, pj, b, 27]
    p = p.reshape(4, N_P1, K1)
    p = jnp.pad(p, ((0, 0), (0, PAR_BLK - N_P1), (0, K1_PAD - K1)))
    return p.reshape(N_X, K1_PAD).astype(jnp.bfloat16)


# ---------------- one-time host-side parameter repacking ----------------

def prepare_params(params):
    def conv_to_mat(w_oihw, k_pad):
        cout, cin, kh, kw = w_oihw.shape
        m = jnp.transpose(w_oihw, (2, 3, 1, 0)).reshape(kh * kw * cin, cout)  # rows (di, dj, cin)
        m = jnp.pad(m, ((0, k_pad - kh * kw * cin), (0, 0)))
        return m.astype(jnp.bfloat16)

    nclass = params["fc2_w"].shape[0]
    # fc1 columns: torch flatten order (c, qi, qj) -> kernel slab order (qi, qj, c)
    fc1_hwc = (params["fc1_w"]
               .reshape(NHID, C2, P2HW, P2HW)
               .transpose(0, 2, 3, 1)
               .reshape(NHID, FEAT))
    return {
        "w1": conv_to_mat(params["conv1_w"], K1_PAD),                 # [32, 32]    bf16
        "b1": params["conv1_b"].reshape(1, C1).astype(jnp.float32),
        "w2": conv_to_mat(params["conv2_w"], K2),                     # [288, 64]   bf16
        "b2": params["conv2_b"].reshape(1, C2).astype(jnp.float32),
        "fc1_w": fc1_hwc.T.astype(jnp.bfloat16),                      # [2304, 128] bf16 (HBM -> in-kernel DMA)
        "fc1_b": params["fc1_b"].reshape(1, NHID).astype(jnp.float32),
        "fc2_w": params["fc2_w"].T.astype(jnp.bfloat16),              # [128, nclass] bf16
        "fc2_b": params["fc2_b"].reshape(1, nclass).astype(jnp.float32),
    }


# ---------------- forward ----------------

def simple_cnn_forward(x_nchw, prep):
    b, c, h, w = x_nchw.shape
    assert (b, c, h, w) == (B, C_IN, H, W), "geometry is compiled in (batch=2, 3x32x32 input)"
    x_cols = _conv1_im2col(x_nchw)
    nclass = prep["fc2_w"].shape[1]
    return pl.pallas_call(
        _simple_cnn_kernel,
        out_shape=jax.ShapeDtypeStruct((B, nclass), jnp.float32),
        in_specs=[_VMEM, _VMEM, _VMEM, _VMEM, _VMEM,   # x, w1, b1, w2, b2
                  _ANY,                                # fc1_w stays in HBM (manual DMA)
                  _VMEM, _VMEM, _VMEM],                # fc1_b, fc2_w, fc2_b
        out_specs=_VMEM,
        scratch_shapes=[
            pltpu.VMEM((M2, K2), jnp.bfloat16),        # conv2 im2col  [368, 288]
            pltpu.VMEM((B, FEAT), jnp.bfloat16),       # fc1 input slab [2, 2304]
            pltpu.VMEM((FEAT, NHID), jnp.bfloat16),    # fc1 weights (DMA destination)
            pltpu.SemaphoreType.DMA,                   # fc1 weight copy semaphore
        ],
    )(x_cols, prep["w1"], prep["b1"], prep["w2"], prep["b2"],
      prep["fc1_w"], prep["fc1_b"], prep["fc2_w"], prep["fc2_b"])


# ---------------- deterministic parameter init (PyTorch-default-style uniform) ----------------

def init_params(key, input_channel=3, num_classes=10):
    ks = jax.random.split(key, 8)

    def u(k, shape, fan_in):
        bound = 1.0 / np.sqrt(fan_in)
        return jax.random.uniform(k, shape, jnp.float32, -bound, bound)

    return {
        "conv1_w": u(ks[0], (32, input_channel, 3, 3), input_channel * 9),
        "conv1_b": u(ks[1], (32,), input_channel * 9),
        "conv2_w": u(ks[2], (64, 32, 3, 3), 32 * 9),
        "conv2_b": u(ks[3], (64,), 32 * 9),
        "fc1_w": u(ks[4], (128, 64 * 6 * 6), 64 * 6 * 6),
        "fc1_b": u(ks[5], (128,), 64 * 6 * 6),
        "fc2_w": u(ks[6], (num_classes, 128), 128),
        "fc2_b": u(ks[7], (num_classes,), 128),
    }


# ---------------- pure-JAX reference (f32) for a sanity check ----------------

def reference_forward(x, params):
    def conv(xx, w, b):
        y = lax.conv_general_dilated(xx, w, (1, 1), "VALID",
                                     dimension_numbers=("NCHW", "OIHW", "NCHW"))
        return jax.nn.relu(y + b[None, :, None, None])

    def pool(xx):
        return lax.reduce_window(xx, -jnp.inf, lax.max, (1, 1, 2, 2), (1, 1, 2, 2), "VALID")

    y = pool(conv(x, params["conv1_w"], params["conv1_b"]))
    y = pool(conv(y, params["conv2_w"], params["conv2_b"]))
    feat = y.reshape(y.shape[0], -1)
    h = jax.nn.relu(feat @ params["fc1_w"].T + params["fc1_b"])
    return h @ params["fc2_w"].T + params["fc2_b"]


if __name__ == "__main__":
    key = jax.random.PRNGKey(0)
    k_x, k_p = jax.random.split(key)

    x = jax.random.normal(k_x, (B, C_IN, H, W), jnp.float32)
    params = init_params(k_p, input_channel=C_IN, num_classes=10)

    prep = prepare_params(params)          # one-time weight repacking (outside the hot path)
    prep = jax.tree_util.tree_map(jax.block_until_ready, prep)

    y = jax.jit(simple_cnn_forward)(x, prep)
    y = jax.block_until_ready(y)
    assert y.shape == (B, 10) and y.dtype == jnp.float32

    y_ref = reference_forward(x, params)
    np.testing.assert_allclose(np.asarray(y), np.asarray(y_ref), rtol=5e-2, atol=5e-2)

    print("KERNEL_OK")
</pallas_src>

<mosaic_0001>
module attributes {stable_mosaic.version = 11 : i64} {
  func.func @_simple_cnn_kernel(%arg0: memref<2048x32xbf16, #tpu.memory_space<vmem>>, %arg1: memref<32x32xbf16, #tpu.memory_space<vmem>>, %arg2: memref<1x32xf32, #tpu.memory_space<vmem>>, %arg3: memref<288x64xbf16, #tpu.memory_space<vmem>>, %arg4: memref<1x64xf32, #tpu.memory_space<vmem>>, %arg5: memref<2304x128xbf16, #tpu.memory_space<any>>, %arg6: memref<1x128xf32, #tpu.memory_space<vmem>>, %arg7: memref<128x10xbf16, #tpu.memory_space<vmem>>, %arg8: memref<1x10xf32, #tpu.memory_space<vmem>>, %arg9: memref<2x10xf32, #tpu.memory_space<vmem>>, %arg10: memref<368x288xbf16, #tpu.memory_space<vmem>>, %arg11: memref<2x2304xbf16, #tpu.memory_space<vmem>>, %arg12: memref<2304x128xbf16, #tpu.memory_space<vmem>>, %arg13: memref<!tpu.dma_semaphore, #tpu.memory_space<semaphore_mem>>) attributes {dimension_semantics = [], scalar_prefetch = 0 : i64, scratch_operands = 4 : i64, tpu.core_type = #tpu.core_type<tc>} {
    tpu.enqueue_dma source(%arg5 : memref<2304x128xbf16, #tpu.memory_space<any>>) target(%arg12 : memref<2304x128xbf16, #tpu.memory_space<vmem>>) target_semaphore(%arg13 : memref<!tpu.dma_semaphore, #tpu.memory_space<semaphore_mem>>)
    %c0 = arith.constant 0 : index
    %c0_0 = arith.constant 0 : index
    %0 = vector.load %arg0[%c0, %c0_0] : memref<2048x32xbf16, #tpu.memory_space<vmem>>, vector<2048x32xbf16>
    %c0_1 = arith.constant 0 : index
    %c0_2 = arith.constant 0 : index
    %1 = vector.load %arg1[%c0_1, %c0_2] : memref<32x32xbf16, #tpu.memory_space<vmem>>, vector<32x32xbf16>
    %cst = arith.constant dense<0.000000e+00> : vector<2048x32xf32>
    %2 = tpu.matmul %0, %1, %cst {dimension_numbers = #tpu.dot_dimension_numbers<[1], [0], [0], [1], [0, 0, 1, 1], [], []>} : vector<2048x32xbf16>, vector<32x32xbf16>, vector<2048x32xf32> -> vector<2048x32xf32>
    %3 = vector.extract_strided_slice %2 {offsets = [0, 0], sizes = [512, 32], strides = [1, 1]} : vector<2048x32xf32> to vector<512x32xf32>
    %4 = vector.extract_strided_slice %2 {offsets = [512, 0], sizes = [512, 32], strides = [1, 1]} : vector<2048x32xf32> to vector<512x32xf32>
    %5 = arith.maximumf %3, %4 : vector<512x32xf32>
    %6 = vector.extract_strided_slice %2 {offsets = [1024, 0], sizes = [512, 32], strides = [1, 1]} : vector<2048x32xf32> to vector<512x32xf32>
    %7 = vector.extract_strided_slice %2 {offsets = [1536, 0], sizes = [512, 32], strides = [1, 1]} : vector<2048x32xf32> to vector<512x32xf32>
    %8 = arith.maximumf %6, %7 : vector<512x32xf32>
    %9 = arith.maximumf %5, %8 : vector<512x32xf32>
    %c0_3 = arith.constant 0 : index
    %c0_4 = arith.constant 0 : index
    %10 = vector.load %arg2[%c0_3, %c0_4] : memref<1x32xf32, #tpu.memory_space<vmem>>, vector<1x32xf32>
    %11 = vector.broadcast %10 : vector<1x32xf32> to vector<512x32xf32>
    %12 = arith.addf %9, %11 : vector<512x32xf32>
    %cst_5 = arith.constant 0.000000e+00 : f32
    %13 = vector.broadcast %cst_5 : f32 to vector<512x32xf32>
    %14 = arith.maximumf %12, %13 : vector<512x32xf32>
    %15 = arith.truncf %14 : vector<512x32xf32> to vector<512x32xbf16>
    %16 = vector.extract_strided_slice %15 {offsets = [0, 0], sizes = [368, 32], strides = [1, 1]} : vector<512x32xbf16> to vector<368x32xbf16>
    %c0_6 = arith.constant 0 : index
    %c0_7 = arith.constant 0 : index
    %17 = vector.load %arg10[%c0_6, %c0_7] : memref<368x288xbf16, #tpu.memory_space<vmem>>, vector<368x32xbf16>
    tpu.vector_store %arg10[%c0_6, %c0_7], %16 {strides = array<i32>} : memref<368x288xbf16, #tpu.memory_space<vmem>>, vector<368x32xbf16>,
    %18 = vector.extract_strided_slice %15 {offsets = [2, 0], sizes = [368, 32], strides = [1, 1]} : vector<512x32xbf16> to vector<368x32xbf16>
    %c0_8 = arith.constant 0 : index
    %c32 = arith.constant 32 : index
    %19 = vector.load %arg10[%c0_8, %c32] : memref<368x288xbf16, #tpu.memory_space<vmem>>, vector<368x32xbf16>
    tpu.vector_store %arg10[%c0_8, %c32], %18 {strides = array<i32>} : memref<368x288xbf16, #tpu.memory_space<vmem>>, vector<368x32xbf16>,
    %20 = vector.extract_strided_slice %15 {offsets = [4, 0], sizes = [368, 32], strides = [1, 1]} : vector<512x32xbf16> to vector<368x32xbf16>
    %c0_9 = arith.constant 0 : index
    %c64 = arith.constant 64 : index
    %21 = vector.load %arg10[%c0_9, %c64] : memref<368x288xbf16, #tpu.memory_space<vmem>>, vector<368x32xbf16>
    tpu.vector_store %arg10[%c0_9, %c64], %20 {strides = array<i32>} : memref<368x288xbf16, #tpu.memory_space<vmem>>, vector<368x32xbf16>,
    %22 = vector.extract_strided_slice %15 {offsets = [30, 0], sizes = [368, 32], strides = [1, 1]} : vector<512x32xbf16> to vector<368x32xbf16>
    %c0_10 = arith.constant 0 : index
    %c96 = arith.constant 96 : index
    %23 = vector.load %arg10[%c0_10, %c96] : memref<368x288xbf16, #tpu.memory_space<vmem>>, vector<368x32xbf16>
    tpu.vector_store %arg10[%c0_10, %c96], %22 {strides = array<i32>} : memref<368x288xbf16, #tpu.memory_space<vmem>>, vector<368x32xbf16>,
    %24 = vector.extract_strided_slice %15 {offsets = [32, 0], sizes = [368, 32], strides = [1, 1]} : vector<512x32xbf16> to vector<368x32xbf16>
    %c0_11 = arith.constant 0 : index
    %c128 = arith.constant 128 : index
    %25 = vector.load %arg10[%c0_11, %c128] : memref<368x288xbf16, #tpu.memory_space<vmem>>, vector<368x32xbf16>
    tpu.vector_store %arg10[%c0_11, %c128], %24 {strides = array<i32>} : memref<368x288xbf16, #tpu.memory_space<vmem>>, vector<368x32xbf16>,
    %26 = vector.extract_strided_slice %15 {offsets = [34, 0], sizes = [368, 32], strides = [1, 1]} : vector<512x32xbf16> to vector<368x32xbf16>
    %c0_12 = arith.constant 0 : index
    %c160 = arith.constant 160 : index
    %27 = vector.load %arg10[%c0_12, %c160] : memref<368x288xbf16, #tpu.memory_space<vmem>>, vector<368x32xbf16>
    tpu.vector_store %arg10[%c0_12, %c160], %26 {strides = array<i32>} : memref<368x288xbf16, #tpu.memory_space<vmem>>, vector<368x32xbf16>,
    %28 = vector.extract_strided_slice %15 {offsets = [60, 0], sizes = [368, 32], strides = [1, 1]} : vector<512x32xbf16> to vector<368x32xbf16>
    %c0_13 = arith.constant 0 : index
    %c192 = arith.constant 192 : index
    %29 = vector.load %arg10[%c0_13, %c192] : memref<368x288xbf16, #tpu.memory_space<vmem>>, vector<368x32xbf16>
    tpu.vector_store %arg10[%c0_13, %c192], %28 {strides = array<i32>} : memref<368x288xbf16, #tpu.memory_space<vmem>>, vector<368x32xbf16>,
    %30 = vector.extract_strided_slice %15 {offsets = [62, 0], sizes = [368, 32], strides = [1, 1]} : vector<512x32xbf16> to vector<368x32xbf16>
    %c0_14 = arith.constant 0 : index
    %c224 = arith.constant 224 : index
    %31 = vector.load %arg10[%c0_14, %c224] : memref<368x288xbf16, #tpu.memory_space<vmem>>, vector<368x32xbf16>
    tpu.vector_store %arg10[%c0_14, %c224], %30 {strides = array<i32>} : memref<368x288xbf16, #tpu.memory_space<vmem>>, vector<368x32xbf16>,
    %32 = vector.extract_strided_slice %15 {offsets = [64, 0], sizes = [368, 32], strides = [1, 1]} : vector<512x32xbf16> to vector<368x32xbf16>
    %c0_15 = arith.constant 0 : index
    %c256 = arith.constant 256 : index
    %33 = vector.load %arg10[%c0_15, %c256] : memref<368x288xbf16, #tpu.memory_space<vmem>>, vector<368x32xbf16>
    tpu.vector_store %arg10[%c0_15, %c256], %32 {strides = array<i32>} : memref<368x288xbf16, #tpu.memory_space<vmem>>, vector<368x32xbf16>,
    %c0_16 = arith.constant 0 : index
    %c0_17 = arith.constant 0 : index
    %34 = vector.load %arg10[%c0_16, %c0_17] : memref<368x288xbf16, #tpu.memory_space<vmem>>, vector<368x288xbf16>
    %c0_18 = arith.constant 0 : index
    %c0_19 = arith.constant 0 : index
    %35 = vector.load %arg3[%c0_18, %c0_19] : memref<288x64xbf16, #tpu.memory_space<vmem>>, vector<288x64xbf16>
    %cst_20 = arith.constant dense<0.000000e+00> : vector<368x64xf32>
    %36 = tpu.matmul %34, %35, %cst_20 {dimension_numbers = #tpu.dot_dimension_numbers<[1], [0], [0], [1], [0, 0, 1, 1], [], []>} : vector<368x288xbf16>, vector<288x64xbf16>, vector<368x64xf32> -> vector<368x64xf32>
    %37 = vector.extract_strided_slice %36 {offsets = [0, 0], sizes = [336, 64], strides = [1, 1]} : vector<368x64xf32> to vector<336x64xf32>
    %38 = vector.extract_strided_slice %36 {offsets = [2, 0], sizes = [336, 64], strides = [1, 1]} : vector<368x64xf32> to vector<336x64xf32>
    %39 = arith.maximumf %37, %38 : vector<336x64xf32>
    %40 = vector.extract_strided_slice %36 {offsets = [30, 0], sizes = [336, 64], strides = [1, 1]} : vector<368x64xf32> to vector<336x64xf32>
    %41 = vector.extract_strided_slice %36 {offsets = [32, 0], sizes = [336, 64], strides = [1, 1]} : vector<368x64xf32> to vector<336x64xf32>
    %42 = arith.maximumf %40, %41 : vector<336x64xf32>
    %43 = arith.maximumf %39, %42 : vector<336x64xf32>
    %c0_21 = arith.constant 0 : index
    %c0_22 = arith.constant 0 : index
    %44 = vector.load %arg4[%c0_21, %c0_22] : memref<1x64xf32, #tpu.memory_space<vmem>>, vector<1x64xf32>
    %45 = vector.broadcast %44 : vector<1x64xf32> to vector<336x64xf32>
    %46 = arith.addf %43, %45 : vector<336x64xf32>
    %cst_23 = arith.constant 0.000000e+00 : f32
    %47 = vector.broadcast %cst_23 : f32 to vector<336x64xf32>
    %48 = arith.maximumf %46, %47 : vector<336x64xf32>
    %49 = arith.truncf %48 : vector<336x64xf32> to vector<336x64xbf16>
    %50 = vector.extract_strided_slice %49 {offsets = [0, 0], sizes = [2, 64], strides = [1, 1]} : vector<336x64xbf16> to vector<2x64xbf16>
    %c0_24 = arith.constant 0 : index
    %c0_25 = arith.constant 0 : index
    %51 = vector.load %arg11[%c0_24, %c0_25] : memref<2x2304xbf16, #tpu.memory_space<vmem>>, vector<2x64xbf16>
    tpu.vector_store %arg11[%c0_24, %c0_25], %50 {strides = array<i32>} : memref<2x2304xbf16, #tpu.memory_space<vmem>>, vector<2x64xbf16>,
    %52 = vector.extract_strided_slice %49 {offsets = [4, 0], sizes = [2, 64], strides = [1, 1]} : vector<336x64xbf16> to vector<2x64xbf16>
    %c0_26 = arith.constant 0 : index
    %c64_27 = arith.constant 64 : index
    %53 = vector.load %arg11[%c0_26, %c64_27] : memref<2x2304xbf16, #tpu.memory_space<vmem>>, vector<2x64xbf16>
    tpu.vector_store %arg11[%c0_26, %c64_27], %52 {strides = array<i32>} : memref<2x2304xbf16, #tpu.memory_space<vmem>>, vector<2x64xbf16>,
    %54 = vector.extract_strided_slice %49 {offsets = [8, 0], sizes = [2, 64], strides = [1, 1]} : vector<336x64xbf16> to vector<2x64xbf16>
    %c0_28 = arith.constant 0 : index
    %c128_29 = arith.constant 128 : index
    %55 = vector.load %arg11[%c0_28, %c128_29] : memref<2x2304xbf16, #tpu.memory_space<vmem>>, vector<2x64xbf16>
    tpu.vector_store %arg11[%c0_28, %c128_29], %54 {strides = array<i32>} : memref<2x2304xbf16, #tpu.memory_space<vmem>>, vector<2x64xbf16>,
    %56 = vector.extract_strided_slice %49 {offsets = [12, 0], sizes = [2, 64], strides = [1, 1]} : vector<336x64xbf16> to vector<2x64xbf16>
    %c0_30 = arith.constant 0 : index
    %c192_31 = arith.constant 192 : index
    %57 = vector.load %arg11[%c0_30, %c192_31] : memref<2x2304xbf16, #tpu.memory_space<vmem>>, vector<2x64xbf16>
    tpu.vector_store %arg11[%c0_30, %c192_31], %56 {strides = array<i32>} : memref<2x2304xbf16, #tpu.memory_space<vmem>>, vector<2x64xbf16>,
    %58 = vector.extract_strided_slice %49 {offsets = [16, 0], sizes = [2, 64], strides = [1, 1]} : vector<336x64xbf16> to vector<2x64xbf16>
    %c0_32 = arith.constant 0 : index
    %c256_33 = arith.constant 256 : index
    %59 = vector.load %arg11[%c0_32, %c256_33] : memref<2x2304xbf16, #tpu.memory_space<vmem>>, vector<2x64xbf16>
    tpu.vector_store %arg11[%c0_32, %c256_33], %58 {strides = array<i32>} : memref<2x2304xbf16, #tpu.memory_space<vmem>>, vector<2x64xbf16>,
    %60 = vector.extract_strided_slice %49 {offsets = [20, 0], sizes = [2, 64], strides = [1, 1]} : vector<336x64xbf16> to vector<2x64xbf16>
    %c0_34 = arith.constant 0 : index
    %c320 = arith.constant 320 : index
    %61 = vector.load %arg11[%c0_34, %c320] : memref<2x2304xbf16, #tpu.memory_space<vmem>>, vector<2x64xbf16>
    tpu.vector_store %arg11[%c0_34, %c320], %60 {strides = array<i32>} : memref<2x2304xbf16, #tpu.memory_space<vmem>>, vector<2x64xbf16>,
    %62 = vector.extract_strided_slice %49 {offsets = [60, 0], sizes = [2, 64], strides = [1, 1]} : vector<336x64xbf16> to vector<2x64xbf16>
    %c0_35 = arith.constant 0 : index
    %c384 = arith.constant 384 : index
    %63 = vector.load %arg11[%c0_35, %c384] : memref<2x2304xbf16, #tpu.memory_space<vmem>>, vector<2x64xbf16>
    tpu.vector_store %arg11[%c0_35, %c384], %62 {strides = array<i32>} : memref<2x2304xbf16, #tpu.memory_space<vmem>>, vector<2x64xbf16>,
    %64 = vector.extract_strided_slice %49 {offsets = [64, 0], sizes = [2, 64], strides = [1, 1]} : vector<336x64xbf16> to vector<2x64xbf16>
    %c0_36 = arith.constant 0 : index
    %c448 = arith.constant 448 : index
    %65 = vector.load %arg11[%c0_36, %c448] : memref<2x2304xbf16, #tpu.memory_space<vmem>>, vector<2x64xbf16>
    tpu.vector_store %arg11[%c0_36, %c448], %64 {strides = array<i32>} : memref<2x2304xbf16, #tpu.memory_space<vmem>>, vector<2x64xbf16>,
    %66 = vector.extract_strided_slice %49 {offsets = [68, 0], sizes = [2, 64], strides = [1, 1]} : vector<336x64xbf16> to vector<2x64xbf16>
    %c0_37 = arith.constant 0 : index
    %c512 = arith.constant 512 : index
    %67 = vector.load %arg11[%c0_37, %c512] : memref<2x2304xbf16, #tpu.memory_space<vmem>>, vector<2x64xbf16>
    tpu.vector_store %arg11[%c0_37, %c512], %66 {strides = array<i32>} : memref<2x2304xbf16, #tpu.memory_space<vmem>>, vector<2x64xbf16>,
    %68 = vector.extract_strided_slice %49 {offsets = [72, 0], sizes = [2, 64], strides = [1, 1]} : vector<336x64xbf16> to vector<2x64xbf16>
    %c0_38 = arith.constant 0 : index
    %c576 = arith.constant 576 : index
    %69 = vector.load %arg11[%c0_38, %c576] : memref<2x2304xbf16, #tpu.memory_space<vmem>>, vector<2x64xbf16>
    tpu.vector_store %arg11[%c0_38, %c576], %68 {strides = array<i32>} : memref<2x2304xbf16, #tpu.memory_space<vmem>>, vector<2x64xbf16>,
    %70 = vector.extract_strided_slice %49 {offsets = [76, 0], sizes = [2, 64], strides = [1, 1]} : vector<336x64xbf16> to vector<2x64xbf16>
    %c0_39 = arith.constant 0 : index
    %c640 = arith.constant 640 : index
    %71 = vector.load %arg11[%c0_39, %c640] : memref<2x2304xbf16, #tpu.memory_space<vmem>>, vector<2x64xbf16>
    tpu.vector_store %arg11[%c0_39, %c640], %70 {strides = array<i32>} : memref<2x2304xbf16, #tpu.memory_space<vmem>>, vector<2x64xbf16>,
    %72 = vector.extract_strided_slice %49 {offsets = [80, 0], sizes = [2, 64], strides = [1, 1]} : vector<336x64xbf16> to vector<2x64xbf16>
    %c0_40 = arith.constant 0 : index
    %c704 = arith.constant 704 : index
    %73 = vector.load %arg11[%c0_40, %c704] : memref<2x2304xbf16, #tpu.memory_space<vmem>>, vector<2x64xbf16>
    tpu.vector_store %arg11[%c0_40, %c704], %72 {strides = array<i32>} : memref<2x2304xbf16, #tpu.memory_space<vmem>>, vector<2x64xbf16>,
    %74 = vector.extract_strided_slice %49 {offsets = [120, 0], sizes = [2, 64], strides = [1, 1]} : vector<336x64xbf16> to vector<2x64xbf16>
    %c0_41 = arith.constant 0 : index
    %c768 = arith.constant 768 : index
    %75 = vector.load %arg11[%c0_41, %c768] : memref<2x2304xbf16, #tpu.memory_space<vmem>>, vector<2x64xbf16>
    tpu.vector_store %arg11[%c0_41, %c768], %74 {strides = array<i32>} : memref<2x2304xbf16, #tpu.memory_space<vmem>>, vector<2x64xbf16>,
    %76 = vector.extract_strided_slice %49 {offsets = [124, 0], sizes = [2, 64], strides = [1, 1]} : vector<336x64xbf16> to vector<2x64xbf16>
    %c0_42 = arith.constant 0 : index
    %c832 = arith.constant 832 : index
    %77 = vector.load %arg11[%c0_42, %c832] : memref<2x2304xbf16, #tpu.memory_space<vmem>>, vector<2x64xbf16>
    tpu.vector_store %arg11[%c0_42, %c832], %76 {strides = array<i32>} : memref<2x2304xbf16, #tpu.memory_space<vmem>>, vector<2x64xbf16>,
    %78 = vector.extract_strided_slice %49 {offsets = [128, 0], sizes = [2, 64], strides = [1, 1]} : vector<336x64xbf16> to vector<2x64xbf16>
    %c0_43 = arith.constant 0 : index
    %c896 = arith.constant 896 : index
    %79 = vector.load %arg11[%c0_43, %c896] : memref<2x2304xbf16, #tpu.memory_space<vmem>>, vector<2x64xbf16>
    tpu.vector_store %arg11[%c0_43, %c896], %78 {strides = array<i32>} : memref<2x2304xbf16, #tpu.memory_space<vmem>>, vector<2x64xbf16>,
    %80 = vector.extract_strided_slice %49 {offsets = [132, 0], sizes = [2, 64], strides = [1, 1]} : vector<336x64xbf16> to vector<2x64xbf16>
    %c0_44 = arith.constant 0 : index
    %c960 = arith.constant 960 : index
    %81 = vector.load %arg11[%c0_44, %c960] : memref<2x2304xbf16, #tpu.memory_space<vmem>>, vector<2x64xbf16>
    tpu.vector_store %arg11[%c0_44, %c960], %80 {strides = array<i32>} : memref<2x2304xbf16, #tpu.memory_space<vmem>>, vector<2x64xbf16>,
    %82 = vector.extract_strided_slice %49 {offsets = [136, 0], sizes = [2, 64], strides = [1, 1]} : vector<336x64xbf16> to vector<2x64xbf16>
    %c0_45 = arith.constant 0 : index
    %c1024 = arith.constant 1024 : index
    %83 = vector.load %arg11[%c0_45, %c1024] : memref<2x2304xbf16, #tpu.memory_space<vmem>>, vector<2x64xbf16>
    tpu.vector_store %arg11[%c0_45, %c1024], %82 {strides = array<i32>} : memref<2x2304xbf16, #tpu.memory_space<vmem>>, vector<2x64xbf16>,
    %84 = vector.extract_strided_slice %49 {offsets = [140, 0], sizes = [2, 64], strides = [1, 1]} : vector<336x64xbf16> to vector<2x64xbf16>
    %c0_46 = arith.constant 0 : index
    %c1088 = arith.constant 1088 : index
    %85 = vector.load %arg11[%c0_46, %c1088] : memref<2x2304xbf16, #tpu.memory_space<vmem>>, vector<2x64xbf16>
    tpu.vector_store %arg11[%c0_46, %c1088], %84 {strides = array<i32>} : memref<2x2304xbf16, #tpu.memory_space<vmem>>, vector<2x64xbf16>,
    %86 = vector.extract_strided_slice %49 {offsets = [180, 0], sizes = [2, 64], strides = [1, 1]} : vector<336x64xbf16> to vector<2x64xbf16>
    %c0_47 = arith.constant 0 : index
    %c1152 = arith.constant 1152 : index
    %87 = vector.load %arg11[%c0_47, %c1152] : memref<2x2304xbf16, #tpu.memory_space<vmem>>, vector<2x64xbf16>
    tpu.vector_store %arg11[%c0_47, %c1152], %86 {strides = array<i32>} : memref<2x2304xbf16, #tpu.memory_space<vmem>>, vector<2x64xbf16>,
    %88 = vector.extract_strided_slice %49 {offsets = [184, 0], sizes = [2, 64], strides = [1, 1]} : vector<336x64xbf16> to vector<2x64xbf16>
    %c0_48 = arith.constant 0 : index
    %c1216 = arith.constant 1216 : index
    %89 = vector.load %arg11[%c0_48, %c1216] : memref<2x2304xbf16, #tpu.memory_space<vmem>>, vector<2x64xbf16>
    tpu.vector_store %arg11[%c0_48, %c1216], %88 {strides = array<i32>} : memref<2x2304xbf16, #tpu.memory_space<vmem>>, vector<2x64xbf16>,
    %90 = vector.extract_strided_slice %49 {offsets = [188, 0], sizes = [2, 64], strides = [1, 1]} : vector<336x64xbf16> to vector<2x64xbf16>
    %c0_49 = arith.constant 0 : index
    %c1280 = arith.constant 1280 : index
    %91 = vector.load %arg11[%c0_49, %c1280] : memref<2x2304xbf16, #tpu.memory_space<vmem>>, vector<2x64xbf16>
    tpu.vector_store %arg11[%c0_49, %c1280], %90 {strides = array<i32>} : memref<2x2304xbf16, #tpu.memory_space<vmem>>, vector<2x64xbf16>,
    %92 = vector.extract_strided_slice %49 {offsets = [192, 0], sizes = [2, 64], strides = [1, 1]} : vector<336x64xbf16> to vector<2x64xbf16>
    %c0_50 = arith.constant 0 : index
    %c1344 = arith.constant 1344 : index
    %93 = vector.load %arg11[%c0_50, %c1344] : memref<2x2304xbf16, #tpu.memory_space<vmem>>, vector<2x64xbf16>
    tpu.vector_store %arg11[%c0_50, %c1344], %92 {strides = array<i32>} : memref<2x2304xbf16, #tpu.memory_space<vmem>>, vector<2x64xbf16>,
    %94 = vector.extract_strided_slice %49 {offsets = [196, 0], sizes = [2, 64], strides = [1, 1]} : vector<336x64xbf16> to vector<2x64xbf16>
    %c0_51 = arith.constant 0 : index
    %c1408 = arith.constant 1408 : index
    %95 = vector.load %arg11[%c0_51, %c1408] : memref<2x2304xbf16, #tpu.memory_space<vmem>>, vector<2x64xbf16>
    tpu.vector_store %arg11[%c0_51, %c1408], %94 {strides = array<i32>} : memref<2x2304xbf16, #tpu.memory_space<vmem>>, vector<2x64xbf16>,
    %96 = vector.extract_strided_slice %49 {offsets = [200, 0], sizes = [2, 64], strides = [1, 1]} : vector<336x64xbf16> to vector<2x64xbf16>
    %c0_52 = arith.constant 0 : index
    %c1472 = arith.constant 1472 : index
    %97 = vector.load %arg11[%c0_52, %c1472] : memref<2x2304xbf16, #tpu.memory_space<vmem>>, vector<2x64xbf16>
    tpu.vector_store %arg11[%c0_52, %c1472], %96 {strides = array<i32>} : memref<2x2304xbf16, #tpu.memory_space<vmem>>, vector<2x64xbf16>,
    %98 = vector.extract_strided_slice %49 {offsets = [240, 0], sizes = [2, 64], strides = [1, 1]} : vector<336x64xbf16> to vector<2x64xbf16>
    %c0_53 = arith.constant 0 : index
    %c1536 = arith.constant 1536 : index
    %99 = vector.load %arg11[%c0_53, %c1536] : memref<2x2304xbf16, #tpu.memory_space<vmem>>, vector<2x64xbf16>
    tpu.vector_store %arg11[%c0_53, %c1536], %98 {strides = array<i32>} : memref<2x2304xbf16, #tpu.memory_space<vmem>>, vector<2x64xbf16>,
    %100 = vector.extract_strided_slice %49 {offsets = [244, 0], sizes = [2, 64], strides = [1, 1]} : vector<336x64xbf16> to vector<2x64xbf16>
    %c0_54 = arith.constant 0 : index
    %c1600 = arith.constant 1600 : index
    %101 = vector.load %arg11[%c0_54, %c1600] : memref<2x2304xbf16, #tpu.memory_space<vmem>>, vector<2x64xbf16>
    tpu.vector_store %arg11[%c0_54, %c1600], %100 {strides = array<i32>} : memref<2x2304xbf16, #tpu.memory_space<vmem>>, vector<2x64xbf16>,
    %102 = vector.extract_strided_slice %49 {offsets = [248, 0], sizes = [2, 64], strides = [1, 1]} : vector<336x64xbf16> to vector<2x64xbf16>
    %c0_55 = arith.constant 0 : index
    %c1664 = arith.constant 1664 : index
    %103 = vector.load %arg11[%c0_55, %c1664] : memref<2x2304xbf16, #tpu.memory_space<vmem>>, vector<2x64xbf16>
    tpu.vector_store %arg11[%c0_55, %c1664], %102 {strides = array<i32>} : memref<2x2304xbf16, #tpu.memory_space<vmem>>, vector<2x64xbf16>,
    %104 = vector.extract_strided_slice %49 {offsets = [252, 0], sizes = [2, 64], strides = [1, 1]} : vector<336x64xbf16> to vector<2x64xbf16>
    %c0_56 = arith.constant 0 : index
    %c1728 = arith.constant 1728 : index
    %105 = vector.load %arg11[%c0_56, %c1728] : memref<2x2304xbf16, #tpu.memory_space<vmem>>, vector<2x64xbf16>
    tpu.vector_store %arg11[%c0_56, %c1728], %104 {strides = array<i32>} : memref<2x2304xbf16, #tpu.memory_space<vmem>>, vector<2x64xbf16>,
    %106 = vector.extract_strided_slice %49 {offsets = [256, 0], sizes = [2, 64], strides = [1, 1]} : vector<336x64xbf16> to vector<2x64xbf16>
    %c0_57 = arith.constant 0 : index
    %c1792 = arith.constant 1792 : index
    %107 = vector.load %arg11[%c0_57, %c1792] : memref<2x2304xbf16, #tpu.memory_space<vmem>>, vector<2x64xbf16>
    tpu.vector_store %arg11[%c0_57, %c1792], %106 {strides = array<i32>} : memref<2x2304xbf16, #tpu.memory_space<vmem>>, vector<2x64xbf16>,
    %108 = vector.extract_strided_slice %49 {offsets = [260, 0], sizes = [2, 64], strides = [1, 1]} : vector<336x64xbf16> to vector<2x64xbf16>
    %c0_58 = arith.constant 0 : index
    %c1856 = arith.constant 1856 : index
    %109 = vector.load %arg11[%c0_58, %c1856] : memref<2x2304xbf16, #tpu.memory_space<vmem>>, vector<2x64xbf16>
    tpu.vector_store %arg11[%c0_58, %c1856], %108 {strides = array<i32>} : memref<2x2304xbf16, #tpu.memory_space<vmem>>, vector<2x64xbf16>,
    %110 = vector.extract_strided_slice %49 {offsets = [300, 0], sizes = [2, 64], strides = [1, 1]} : vector<336x64xbf16> to vector<2x64xbf16>
    %c0_59 = arith.constant 0 : index
    %c1920 = arith.constant 1920 : index
    %111 = vector.load %arg11[%c0_59, %c1920] : memref<2x2304xbf16, #tpu.memory_space<vmem>>, vector<2x64xbf16>
    tpu.vector_store %arg11[%c0_59, %c1920], %110 {strides = array<i32>} : memref<2x2304xbf16, #tpu.memory_space<vmem>>, vector<2x64xbf16>,
    %112 = vector.extract_strided_slice %49 {offsets = [304, 0], sizes = [2, 64], strides = [1, 1]} : vector<336x64xbf16> to vector<2x64xbf16>
    %c0_60 = arith.constant 0 : index
    %c1984 = arith.constant 1984 : index
    %113 = vector.load %arg11[%c0_60, %c1984] : memref<2x2304xbf16, #tpu.memory_space<vmem>>, vector<2x64xbf16>
    tpu.vector_store %arg11[%c0_60, %c1984], %112 {strides = array<i32>} : memref<2x2304xbf16, #tpu.memory_space<vmem>>, vector<2x64xbf16>,
    %114 = vector.extract_strided_slice %49 {offsets = [308, 0], sizes = [2, 64], strides = [1, 1]} : vector<336x64xbf16> to vector<2x64xbf16>
    %c0_61 = arith.constant 0 : index
    %c2048 = arith.constant 2048 : index
    %115 = vector.load %arg11[%c0_61, %c2048] : memref<2x2304xbf16, #tpu.memory_space<vmem>>, vector<2x64xbf16>
    tpu.vector_store %arg11[%c0_61, %c2048], %114 {strides = array<i32>} : memref<2x2304xbf16, #tpu.memory_space<vmem>>, vector<2x64xbf16>,
    %116 = vector.extract_strided_slice %49 {offsets = [312, 0], sizes = [2, 64], strides = [1, 1]} : vector<336x64xbf16> to vector<2x64xbf16>
    %c0_62 = arith.constant 0 : index
    %c2112 = arith.constant 2112 : index
    %117 = vector.load %arg11[%c0_62, %c2112] : memref<2x2304xbf16, #tpu.memory_space<vmem>>, vector<2x64xbf16>
    tpu.vector_store %arg11[%c0_62, %c2112], %116 {strides = array<i32>} : memref<2x2304xbf16, #tpu.memory_space<vmem>>, vector<2x64xbf16>,
    %118 = vector.extract_strided_slice %49 {offsets = [316, 0], sizes = [2, 64], strides = [1, 1]} : vector<336x64xbf16> to vector<2x64xbf16>
    %c0_63 = arith.constant 0 : index
    %c2176 = arith.constant 2176 : index
    %119 = vector.load %arg11[%c0_63, %c2176] : memref<2x2304xbf16, #tpu.memory_space<vmem>>, vector<2x64xbf16>
    tpu.vector_store %arg11[%c0_63, %c2176], %118 {strides = array<i32>} : memref<2x2304xbf16, #tpu.memory_space<vmem>>, vector<2x64xbf16>,
    %120 = vector.extract_strided_slice %49 {offsets = [320, 0], sizes = [2, 64], strides = [1, 1]} : vector<336x64xbf16> to vector<2x64xbf16>
    %c0_64 = arith.constant 0 : index
    %c2240 = arith.constant 2240 : index
    %121 = vector.load %arg11[%c0_64, %c2240] : memref<2x2304xbf16, #tpu.memory_space<vmem>>, vector<2x64xbf16>
    tpu.vector_store %arg11[%c0_64, %c2240], %120 {strides = array<i32>} : memref<2x2304xbf16, #tpu.memory_space<vmem>>, vector<2x64xbf16>,
    tpu.wait_dma2 semaphore(%arg13 : memref<!tpu.dma_semaphore, #tpu.memory_space<semaphore_mem>>) src(%arg5 : memref<2304x128xbf16, #tpu.memory_space<any>>) dst(%arg12 : memref<2304x128xbf16, #tpu.memory_space<vmem>>)
    %c0_65 = arith.constant 0 : index
    %c0_66 = arith.constant 0 : index
    %122 = vector.load %arg11[%c0_65, %c0_66] : memref<2x2304xbf16, #tpu.memory_space<vmem>>, vector<2x2304xbf16>
    %c0_67 = arith.constant 0 : index
    %c0_68 = arith.constant 0 : index
    %123 = vector.load %arg12[%c0_67, %c0_68] : memref<2304x128xbf16, #tpu.memory_space<vmem>>, vector<2304x128xbf16>
    %cst_69 = arith.constant dense<0.000000e+00> : vector<2x128xf32>
    %124 = tpu.matmul %122, %123, %cst_69 {dimension_numbers = #tpu.dot_dimension_numbers<[1], [0], [0], [1], [0, 0, 1, 1], [], []>} : vector<2x2304xbf16>, vector<2304x128xbf16>, vector<2x128xf32> -> vector<2x128xf32>
    %c0_70 = arith.constant 0 : index
    %c0_71 = arith.constant 0 : index
    %125 = vector.load %arg6[%c0_70, %c0_71] : memref<1x128xf32, #tpu.memory_space<vmem>>, vector<1x128xf32>
    %126 = vector.broadcast %125 : vector<1x128xf32> to vector<2x128xf32>
    %127 = arith.addf %124, %126 : vector<2x128xf32>
    %cst_72 = arith.constant 0.000000e+00 : f32
    %128 = vector.broadcast %cst_72 : f32 to vector<2x128xf32>
    %129 = arith.maximumf %127, %128 : vector<2x128xf32>
    %130 = arith.truncf %129 : vector<2x128xf32> to vector<2x128xbf16>
    %c0_73 = arith.constant 0 : index
    %c0_74 = arith.constant 0 : index
    %131 = vector.load %arg7[%c0_73, %c0_74] : memref<128x10xbf16, #tpu.memory_space<vmem>>, vector<128x10xbf16>
    %cst_75 = arith.constant dense<0.000000e+00> : vector<2x10xf32>
    %132 = tpu.matmul %130, %131, %cst_75 {dimension_numbers = #tpu.dot_dimension_numbers<[1], [0], [0], [1], [0, 0, 1, 1], [], []>} : vector<2x128xbf16>, vector<128x10xbf16>, vector<2x10xf32> -> vector<2x10xf32>
    %c0_76 = arith.constant 0 : index
    %c0_77 = arith.constant 0 : index
    %133 = vector.load %arg8[%c0_76, %c0_77] : memref<1x10xf32, #tpu.memory_space<vmem>>, vector<1x10xf32>
    %134 = vector.broadcast %133 : vector<1x10xf32> to vector<2x10xf32>
    %135 = arith.addf %132, %134 : vector<2x10xf32>
    %c0_78 = arith.constant 0 : index
    %c0_79 = arith.constant 0 : index
    %136 = vector.load %arg9[%c0_78, %c0_79] : memref<2x10xf32, #tpu.memory_space<vmem>>, vector<2x10xf32>
    tpu.vector_store %arg9[%c0_78, %c0_79], %135 {strides = array<i32>} : memref<2x10xf32, #tpu.memory_space<vmem>>, vector<2x10xf32>,
    return
  }
}

</mosaic_0001>

<llo_original>
// kernel: simple_cnn_forward.1
$region0: #{simple_cnn_forward.1}
  #allocation0 [shape = 'u32[]', space=smem, size = 0x4, offset = 0x4, fixed_abs, tag = 'smem constant byte address 0x4 - core index']
  #allocation1 [shape = 'u32[144,128]{1,0:T(1,128)}', space=vmem, size = 0x12000, scoped, tag = 'internal scratch']
  #allocation2 [shape = 'bf16[368,288]{1,0:T(8,128)(2,1)}', space=vmem, size = 0x45000, scoped, tag = 'scratch operand']
  #allocation3 [shape = 'bf16[2,2304]{1,0:T(2,128)(2,1)}', space=vmem, size = 0x2400, scoped, tag = 'scratch operand']
  #allocation4 [shape = 'bf16[2304,128]{1,0:T(8,128)(2,1)}', space=vmem, size = 0x90000, scoped, tag = 'scratch operand']
  #allocation5 [shape = 's32[1]{0}', space=sflag, size = 0x4, scoped, tag = 'scratch operand']
  #allocation8 [shape = 's32[]', space=sflag, size = 0x4, offset = 0, fixed_abs, tag = 'sflag constant byte address 0x0 - dummy sync flag']
  %s0 = inlined_call_operand.vmem [shape: bf16[2048,32], index: 0, kind: input, shape index: {}]
  %s1 = inlined_call_operand.vmem [shape: bf16[32,32], index: 1, kind: input, shape index: {}]
  %s2 = inlined_call_operand.vmem [shape: f32[1,32], index: 2, kind: input, shape index: {}]
  %s3 = inlined_call_operand.vmem [shape: bf16[288,64], index: 3, kind: input, shape index: {}]
  %s4 = inlined_call_operand.vmem [shape: f32[1,64], index: 4, kind: input, shape index: {}]
  %s5 = inlined_call_operand.vmem [shape: bf16[2304,128], index: 5, kind: input, shape index: {}]
  %s6 = inlined_call_operand.vmem [shape: f32[1,128], index: 6, kind: input, shape index: {}]
  %s7 = inlined_call_operand.vmem [shape: bf16[128,10], index: 7, kind: input, shape index: {}]
  %s8 = inlined_call_operand.vmem [shape: f32[1,10], index: 8, kind: input, shape index: {}]
  %s9 = inlined_call_operand.hbm [shape: f32[2,10], index: 9, kind: output, shape index: {}]
  %s10 = sld [smem:[#allocation0]]
  $region76: #{simple_cnn_forward.1} parent=0
    _
  %s12 = ssub.s32 1, %s10
  %s13 = scalar_select 0, %s12, %s10
  $region1: #{simple_cnn_forward.1} parent=0
    #allocation6 [shape = 'u8[1024]{0}', space=vmem, size = 0x400, scoped, tag = 'output window, operand 0, single buffered']
    #allocation7 [shape = 's32[1]{0}', space=sflag, size = 0x4, scoped, tag = 'scoped memory for simple_cnn_forward.1']
    %14 = vsyncpa [#allocation7], 0
    // Predicated region
    $region2: #{simple_cnn_forward.1} parent=1 // pred_check
      _
    $region3: #{simple_cnn_forward.1} parent=1 // pred_check_branch
      %16 = sbr.rel (0) target = $region5
    $region4: #{simple_cnn_forward.1} parent=1 // pred_region
      _
    $region5: #{simple_cnn_forward.1} parent=1 // pred_fallthru
      _
    // Predicated region
    $region6: #{simple_cnn_forward.1} parent=1 // pred_check
      _
    $region7: #{simple_cnn_forward.1} parent=1 // pred_check_branch
      %18 = sbr.rel (0) target = $region9
    $region8: #{simple_cnn_forward.1} parent=1 // pred_region
      _
    $region9: #{simple_cnn_forward.1} parent=1 // pred_fallthru
      _
    // Predicated region
    $region10: #{simple_cnn_forward.1} parent=1 // pred_check
      _
    $region11: #{simple_cnn_forward.1} parent=1 // pred_check_branch
      %20 = sbr.rel (0) target = $region13
    $region12: #{simple_cnn_forward.1} parent=1 // pred_region
      _
    $region13: #{simple_cnn_forward.1} parent=1 // pred_fallthru
      _
    // Predicated region
    $region14: #{simple_cnn_forward.1} parent=1 // pred_check
      _
    $region15: #{simple_cnn_forward.1} parent=1 // pred_check_branch
      %22 = sbr.rel (0) target = $region17
    $region16: #{simple_cnn_forward.1} parent=1 // pred_region
      _
    $region17: #{simple_cnn_forward.1} parent=1 // pred_fallthru
      _
    // Predicated region
    $region18: #{simple_cnn_forward.1} parent=1 // pred_check
      _
    $region19: #{simple_cnn_forward.1} parent=1 // pred_check_branch
      %24 = sbr.rel (0) target = $region21
    $region20: #{simple_cnn_forward.1} parent=1 // pred_region
      _
    $region21: #{simple_cnn_forward.1} parent=1 // pred_fallthru
      _
    // Predicated region
    $region22: #{simple_cnn_forward.1} parent=1 // pred_check
      _
    $region23: #{simple_cnn_forward.1} parent=1 // pred_check_branch
      %26 = sbr.rel (0) target = $region25
    $region24: #{simple_cnn_forward.1} parent=1 // pred_region
      _
    $region25: #{simple_cnn_forward.1} parent=1 // pred_fallthru
      _
    // Predicated region
    $region26: #{simple_cnn_forward.1} parent=1 // pred_check
      _
    $region27: #{simple_cnn_forward.1} parent=1 // pred_check_branch
      %28 = sbr.rel (0) target = $region29
    $region28: #{simple_cnn_forward.1} parent=1 // pred_region
      _
    $region29: #{simple_cnn_forward.1} parent=1 // pred_fallthru
      _
    // Predicated region
    $region30: #{simple_cnn_forward.1} parent=1 // pred_check
      _
    $region31: #{simple_cnn_forward.1} parent=1 // pred_check_branch
      %30 = sbr.rel (0) target = $region33
    $region32: #{simple_cnn_forward.1} parent=1 // pred_region
      _
    $region33: #{simple_cnn_forward.1} parent=1 // pred_fallthru
      _
    %p33 = scmp.lt.u32.totalorder 1152, 8
    %p34 = pneg %p33
    // Predicated region
    $region34: #{simple_cnn_forward.1} parent=1 // pred_check
      _
    $region35: #{simple_cnn_forward.1} parent=1 // pred_check_branch
      %36 = sbr.rel (%p33) target = $region37
    $region36: #{simple_cnn_forward.1} parent=1 // pred_region
      %s52 = sand.u32 1152, 7
      %p53 = scmp.eq.s32.totalorder %s52, 0
      // Predicated region
      $region49: #{simple_cnn_forward.1} parent=36 // pred_check
        %p54 = pneg %p53
      $region50: #{simple_cnn_forward.1} parent=36 // pred_check_branch
        %56 = sbr.rel (%p54) target = $region52
      $region51: #{simple_cnn_forward.1} parent=36 // pred_region
        loop: start=0, step=1, limit=1
        $region53: #{simple_cnn_forward.1} parent=51 // loop_pre_header
          _
        $region54: #{simple_cnn_forward.1} parent=51 // loop_header
          %s58 = sphi 0, %s62
          %p59 = scmp.ge.s32.totalorder %s58, 1
          %s63 = sphi %s5, %s5
          %s64 = sphi [#allocation4], [#allocation4]
        $region55: #{simple_cnn_forward.1} parent=51 // loop_header_branch
          %61 = sbr.rel (%p59) target = $region59
        $region56: #{simple_cnn_forward.1} parent=51 // loop_body
          %v65 = vld [vmem:[%s63] sm:$0xff]
          %66 = vst [vmem:[%s64] sm:$0xff] %v65
          %v67 = vld [vmem:[%s63 + $0x8] sm:$0xff]
          %68 = vst [vmem:[%s64 + $0x8] sm:$0xff] %v67
          %v69 = vld [vmem:[%s63 + $0x10] sm:$0xff]
          %70 = vst [vmem:[%s64 + $0x10] sm:$0xff] %v69
          %v71 = vld [vmem:[%s63 + $0x18] sm:$0xff]
          %72 = vst [vmem:[%s64 + $0x18] sm:$0xff] %v71
          %v73 = vld [vmem:[%s63 + $0x20] sm:$0xff]
          %74 = vst [vmem:[%s64 + $0x20] sm:$0xff] %v73
          %v75 = vld [vmem:[%s63 + $0x28] sm:$0xff]
          %76 = vst [vmem:[%s64 + $0x28] sm:$0xff] %v75
          %v77 = vld [vmem:[%s63 + $0x30] sm:$0xff]
          %78 = vst [vmem:[%s64 + $0x30] sm:$0xff] %v77
          %v79 = vld [vmem:[%s63 + $0x38] sm:$0xff]
          %80 = vst [vmem:[%s64 + $0x38] sm:$0xff] %v79
          %v81 = vld [vmem:[%s63 + $0x40] sm:$0xff]
          %82 = vst [vmem:[%s64 + $0x40] sm:$0xff] %v81
          %v83 = vld [vmem:[%s63 + $0x48] sm:$0xff]
          %84 = vst [vmem:[%s64 + $0x48] sm:$0xff] %v83
          %v85 = vld [vmem:[%s63 + $0x50] sm:$0xff]
          %86 = vst [vmem:[%s64 + $0x50] sm:$0xff] %v85
          %v87 = vld [vmem:[%s63 + $0x58] sm:$0xff]
          %88 = vst [vmem:[%s64 + $0x58] sm:$0xff] %v87
          %v89 = vld [vmem:[%s63 + $0x60] sm:$0xff]
          %90 = vst [vmem:[%s64 + $0x60] sm:$0xff] %v89
          %v91 = vld [vmem:[%s63 + $0x68] sm:$0xff]
          %92 = vst [vmem:[%s64 + $0x68] sm:$0xff] %v91
          %v93 = vld [vmem:[%s63 + $0x70] sm:$0xff]
          %94 = vst [vmem:[%s64 + $0x70] sm:$0xff] %v93
          %v95 = vld [vmem:[%s63 + $0x78] sm:$0xff]
          %96 = vst [vmem:[%s64 + $0x78] sm:$0xff] %v95
          %v97 = vld [vmem:[%s63 + $0x80] sm:$0xff]
          %98 = vst [vmem:[%s64 + $0x80] sm:$0xff] %v97
          %v99 = vld [vmem:[%s63 + $0x88] sm:$0xff]
          %100 = vst [vmem:[%s64 + $0x88] sm:$0xff] %v99
          %v101 = vld [vmem:[%s63 + $0x90] sm:$0xff]
          %102 = vst [vmem:[%s64 + $0x90] sm:$0xff] %v101
          %v103 = vld [vmem:[%s63 + $0x98] sm:$0xff]
          %104 = vst [vmem:[%s64 + $0x98] sm:$0xff] %v103
          %v105 = vld [vmem:[%s63 + $0xa0] sm:$0xff]
          %106 = vst [vmem:[%s64 + $0xa0] sm:$0xff] %v105
          %v107 = vld [vmem:[%s63 + $0xa8] sm:$0xff]
          %108 = vst [vmem:[%s64 + $0xa8] sm:$0xff] %v107
          %v109 = vld [vmem:[%s63 + $0xb0] sm:$0xff]
          %110 = vst [vmem:[%s64 + $0xb0] sm:$0xff] %v109
          %v111 = vld [vmem:[%s63 + $0xb8] sm:$0xff]
          %112 = vst [vmem:[%s64 + $0xb8] sm:$0xff] %v111
          %v113 = vld [vmem:[%s63 + $0xc0] sm:$0xff]
          %114 = vst [vmem:[%s64 + $0xc0] sm:$0xff] %v113
          %v115 = vld [vmem:[%s63 + $0xc8] sm:$0xff]
          %116 = vst [vmem:[%s64 + $0xc8] sm:$0xff] %v115
          %v117 = vld [vmem:[%s63 + $0xd0] sm:$0xff]
          %118 = vst [vmem:[%s64 + $0xd0] sm:$0xff] %v117
          %v119 = vld [vmem:[%s63 + $0xd8] sm:$0xff]
          %120 = vst [vmem:[%s64 + $0xd8] sm:$0xff] %v119
          %v121 = vld [vmem:[%s63 + $0xe0] sm:$0xff]
          %122 = vst [vmem:[%s64 + $0xe0] sm:$0xff] %v121
          %v123 = vld [vmem:[%s63 + $0xe8] sm:$0xff]
          %124 = vst [vmem:[%s64 + $0xe8] sm:$0xff] %v123
          %v125 = vld [vmem:[%s63 + $0xf0] sm:$0xff]
          %126 = vst [vmem:[%s64 + $0xf0] sm:$0xff] %v125
          %v127 = vld [vmem:[%s63 + $0xf8] sm:$0xff]
          %128 = vst [vmem:[%s64 + $0xf8] sm:$0xff] %v127
          %v129 = vld [vmem:[%s63 + $0x100] sm:$0xff]
          %130 = vst [vmem:[%s64 + $0x100] sm:$0xff] %v129
          %v131 = vld [vmem:[%s63 + $0x108] sm:$0xff]
          %132 = vst [vmem:[%s64 + $0x108] sm:$0xff] %v131
          %v133 = vld [vmem:[%s63 + $0x110] sm:$0xff]
          %134 = vst [vmem:[%s64 + $0x110] sm:$0xff] %v133
          %v135 = vld [vmem:[%s63 + $0x118] sm:$0xff]
          %136 = vst [vmem:[%s64 + $0x118] sm:$0xff] %v135
          %v137 = vld [vmem:[%s63 + $0x120] sm:$0xff]
          %138 = vst [vmem:[%s64 + $0x120] sm:$0xff] %v137
          %v139 = vld [vmem:[%s63 + $0x128] sm:$0xff]
          %140 = vst [vmem:[%s64 + $0x128] sm:$0xff] %v139
          %v141 = vld [vmem:[%s63 + $0x130] sm:$0xff]
          %142 = vst [vmem:[%s64 + $0x130] sm:$0xff] %v141
          %v143 = vld [vmem:[%s63 + $0x138] sm:$0xff]
          %144 = vst [vmem:[%s64 + $0x138] sm:$0xff] %v143
          %v145 = vld [vmem:[%s63 + $0x140] sm:$0xff]
          %146 = vst [vmem:[%s64 + $0x140] sm:$0xff] %v145
          %v147 = vld [vmem:[%s63 + $0x148] sm:$0xff]
          %148 = vst [vmem:[%s64 + $0x148] sm:$0xff] %v147
          %v149 = vld [vmem:[%s63 + $0x150] sm:$0xff]
          %150 = vst [vmem:[%s64 + $0x150] sm:$0xff] %v149
          %v151 = vld [vmem:[%s63 + $0x158] sm:$0xff]
          %152 = vst [vmem:[%s64 + $0x158] sm:$0xff] %v151
          %v153 = vld [vmem:[%s63 + $0x160] sm:$0xff]
          %154 = vst [vmem:[%s64 + $0x160] sm:$0xff] %v153
          %v155 = vld [vmem:[%s63 + $0x168] sm:$0xff]
          %156 = vst [vmem:[%s64 + $0x168] sm:$0xff] %v155
          %v157 = vld [vmem:[%s63 + $0x170] sm:$0xff]
          %158 = vst [vmem:[%s64 + $0x170] sm:$0xff] %v157
          %v159 = vld [vmem:[%s63 + $0x178] sm:$0xff]
          %160 = vst [vmem:[%s64 + $0x178] sm:$0xff] %v159
          %v161 = vld [vmem:[%s63 + $0x180] sm:$0xff]
          %162 = vst [vmem:[%s64 + $0x180] sm:$0xff] %v161
          %v163 = vld [vmem:[%s63 + $0x188] sm:$0xff]
          %164 = vst [vmem:[%s64 + $0x188] sm:$0xff] %v163
          %v165 = vld [vmem:[%s63 + $0x190] sm:$0xff]
          %166 = vst [vmem:[%s64 + $0x190] sm:$0xff] %v165
          %v167 = vld [vmem:[%s63 + $0x198] sm:$0xff]
          %168 = vst [vmem:[%s64 + $0x198] sm:$0xff] %v167
          %v169 = vld [vmem:[%s63 + $0x1a0] sm:$0xff]
          %170 = vst [vmem:[%s64 + $0x1a0] sm:$0xff] %v169
          %v171 = vld [vmem:[%s63 + $0x1a8] sm:$0xff]
          %172 = vst [vmem:[%s64 + $0x1a8] sm:$0xff] %v171
          %v173 = vld [vmem:[%s63 + $0x1b0] sm:$0xff]
          %174 = vst [vmem:[%s64 + $0x1b0] sm:$0xff] %v173
          %v175 = vld [vmem:[%s63 + $0x1b8] sm:$0xff]
          %176 = vst [vmem:[%s64 + $0x1b8] sm:$0xff] %v175
          %v177 = vld [vmem:[%s63 + $0x1c0] sm:$0xff]
          %178 = vst [vmem:[%s64 + $0x1c0] sm:$0xff] %v177
          %v179 = vld [vmem:[%s63 + $0x1c8] sm:$0xff]
          %180 = vst [vmem:[%s64 + $0x1c8] sm:$0xff] %v179
          %v181 = vld [vmem:[%s63 + $0x1d0] sm:$0xff]
          %182 = vst [vmem:[%s64 + $0x1d0] sm:$0xff] %v181
          %v183 = vld [vmem:[%s63 + $0x1d8] sm:$0xff]
          %184 = vst [vmem:[%s64 + $0x1d8] sm:$0xff] %v183
          %v185 = vld [vmem:[%s63 + $0x1e0] sm:$0xff]
          %186 = vst [vmem:[%s64 + $0x1e0] sm:$0xff] %v185
          %v187 = vld [vmem:[%s63 + $0x1e8] sm:$0xff]
          %188 = vst [vmem:[%s64 + $0x1e8] sm:$0xff] %v187
          %v189 = vld [vmem:[%s63 + $0x1f0] sm:$0xff]
          %190 = vst [vmem:[%s64 + $0x1f0] sm:$0xff] %v189
          %v191 = vld [vmem:[%s63 + $0x1f8] sm:$0xff]
          %192 = vst [vmem:[%s64 + $0x1f8] sm:$0xff] %v191
          %v193 = vld [vmem:[%s63 + $0x200] sm:$0xff]
          %194 = vst [vmem:[%s64 + $0x200] sm:$0xff] %v193
          %v195 = vld [vmem:[%s63 + $0x208] sm:$0xff]
          %196 = vst [vmem:[%s64 + $0x208] sm:$0xff] %v195
          %v197 = vld [vmem:[%s63 + $0x210] sm:$0xff]
          %198 = vst [vmem:[%s64 + $0x210] sm:$0xff] %v197
          %v199 = vld [vmem:[%s63 + $0x218] sm:$0xff]
          %200 = vst [vmem:[%s64 + $0x218] sm:$0xff] %v199
          %v201 = vld [vmem:[%s63 + $0x220] sm:$0xff]
          %202 = vst [vmem:[%s64 + $0x220] sm:$0xff] %v201
          %v203 = vld [vmem:[%s63 + $0x228] sm:$0xff]
          %204 = vst [vmem:[%s64 + $0x228] sm:$0xff] %v203
          %v205 = vld [vmem:[%s63 + $0x230] sm:$0xff]
          %206 = vst [vmem:[%s64 + $0x230] sm:$0xff] %v205
          %v207 = vld [vmem:[%s63 + $0x238] sm:$0xff]
          %208 = vst [vmem:[%s64 + $0x238] sm:$0xff] %v207
          %v209 = vld [vmem:[%s63 + $0x240] sm:$0xff]
          %210 = vst [vmem:[%s64 + $0x240] sm:$0xff] %v209
          %v211 = vld [vmem:[%s63 + $0x248] sm:$0xff]
          %212 = vst [vmem:[%s64 + $0x248] sm:$0xff] %v211
          %v213 = vld [vmem:[%s63 + $0x250] sm:$0xff]
          %214 = vst [vmem:[%s64 + $0x250] sm:$0xff] %v213
          %v215 = vld [vmem:[%s63 + $0x258] sm:$0xff]
          %216 = vst [vmem:[%s64 + $0x258] sm:$0xff] %v215
          %v217 = vld [vmem:[%s63 + $0x260] sm:$0xff]
          %218 = vst [vmem:[%s64 + $0x260] sm:$0xff] %v217
          %v219 = vld [vmem:[%s63 + $0x268] sm:$0xff]
          %220 = vst [vmem:[%s64 + $0x268] sm:$0xff] %v219
          %v221 = vld [vmem:[%s63 + $0x270] sm:$0xff]
          %222 = vst [vmem:[%s64 + $0x270] sm:$0xff] %v221
          %v223 = vld [vmem:[%s63 + $0x278] sm:$0xff]
          %224 = vst [vmem:[%s64 + $0x278] sm:$0xff] %v223
          %v225 = vld [vmem:[%s63 + $0x280] sm:$0xff]
          %226 = vst [vmem:[%s64 + $0x280] sm:$0xff] %v225
          %v227 = vld [vmem:[%s63 + $0x288] sm:$0xff]
          %228 = vst [vmem:[%s64 + $0x288] sm:$0xff] %v227
          %v229 = vld [vmem:[%s63 + $0x290] sm:$0xff]
          %230 = vst [vmem:[%s64 + $0x290] sm:$0xff] %v229
          %v231 = vld [vmem:[%s63 + $0x298] sm:$0xff]
          %232 = vst [vmem:[%s64 + $0x298] sm:$0xff] %v231
          %v233 = vld [vmem:[%s63 + $0x2a0] sm:$0xff]
          %234 = vst [vmem:[%s64 + $0x2a0] sm:$0xff] %v233
          %v235 = vld [vmem:[%s63 + $0x2a8] sm:$0xff]
          %236 = vst [vmem:[%s64 + $0x2a8] sm:$0xff] %v235
          %v237 = vld [vmem:[%s63 + $0x2b0] sm:$0xff]
          %238 = vst [vmem:[%s64 + $0x2b0] sm:$0xff] %v237
          %v239 = vld [vmem:[%s63 + $0x2b8] sm:$0xff]
          %240 = vst [vmem:[%s64 + $0x2b8] sm:$0xff] %v239
          %v241 = vld [vmem:[%s63 + $0x2c0] sm:$0xff]
          %242 = vst [vmem:[%s64 + $0x2c0] sm:$0xff] %v241
          %v243 = vld [vmem:[%s63 + $0x2c8] sm:$0xff]
          %244 = vst [vmem:[%s64 + $0x2c8] sm:$0xff] %v243
          %v245 = vld [vmem:[%s63 + $0x2d0] sm:$0xff]
          %246 = vst [vmem:[%s64 + $0x2d0] sm:$0xff] %v245
          %v247 = vld [vmem:[%s63 + $0x2d8] sm:$0xff]
          %248 = vst [vmem:[%s64 + $0x2d8] sm:$0xff] %v247
          %v249 = vld [vmem:[%s63 + $0x2e0] sm:$0xff]
          %250 = vst [vmem:[%s64 + $0x2e0] sm:$0xff] %v249
          %v251 = vld [vmem:[%s63 + $0x2e8] sm:$0xff]
          %252 = vst [vmem:[%s64 + $0x2e8] sm:$0xff] %v251
          %v253 = vld [vmem:[%s63 + $0x2f0] sm:$0xff]
          %254 = vst [vmem:[%s64 + $0x2f0] sm:$0xff] %v253
          %v255 = vld [vmem:[%s63 + $0x2f8] sm:$0xff]
          %256 = vst [vmem:[%s64 + $0x2f8] sm:$0xff] %v255
          %v257 = vld [vmem:[%s63 + $0x300] sm:$0xff]
          %258 = vst [vmem:[%s64 + $0x300] sm:$0xff] %v257
          %v259 = vld [vmem:[%s63 + $0x308] sm:$0xff]
          %260 = vst [vmem:[%s64 + $0x308] sm:$0xff] %v259
          %v261 = vld [vmem:[%s63 + $0x310] sm:$0xff]
          %262 = vst [vmem:[%s64 + $0x310] sm:$0xff] %v261
          %v263 = vld [vmem:[%s63 + $0x318] sm:$0xff]
          %264 = vst [vmem:[%s64 + $0x318] sm:$0xff] %v263
          %v265 = vld [vmem:[%s63 + $0x320] sm:$0xff]
          %266 = vst [vmem:[%s64 + $0x320] sm:$0xff] %v265
          %v267 = vld [vmem:[%s63 + $0x328] sm:$0xff]
          %268 = vst [vmem:[%s64 + $0x328] sm:$0xff] %v267
          %v269 = vld [vmem:[%s63 + $0x330] sm:$0xff]
          %270 = vst [vmem:[%s64 + $0x330] sm:$0xff] %v269
          %v271 = vld [vmem:[%s63 + $0x338] sm:$0xff]
          %272 = vst [vmem:[%s64 + $0x338] sm:$0xff] %v271
          %v273 = vld [vmem:[%s63 + $0x340] sm:$0xff]
          %274 = vst [vmem:[%s64 + $0x340] sm:$0xff] %v273
          %v275 = vld [vmem:[%s63 + $0x348] sm:$0xff]
          %276 = vst [vmem:[%s64 + $0x348] sm:$0xff] %v275
          %v277 = vld [vmem:[%s63 + $0x350] sm:$0xff]
          %278 = vst [vmem:[%s64 + $0x350] sm:$0xff] %v277
          %v279 = vld [vmem:[%s63 + $0x358] sm:$0xff]
          %280 = vst [vmem:[%s64 + $0x358] sm:$0xff] %v279
          %v281 = vld [vmem:[%s63 + $0x360] sm:$0xff]
          %282 = vst [vmem:[%s64 + $0x360] sm:$0xff] %v281
          %v283 = vld [vmem:[%s63 + $0x368] sm:$0xff]
          %284 = vst [vmem:[%s64 + $0x368] sm:$0xff] %v283
          %v285 = vld [vmem:[%s63 + $0x370] sm:$0xff]
          %286 = vst [vmem:[%s64 + $0x370] sm:$0xff] %v285
          %v287 = vld [vmem:[%s63 + $0x378] sm:$0xff]
          %288 = vst [vmem:[%s64 + $0x378] sm:$0xff] %v287
          %v289 = vld [vmem:[%s63 + $0x380] sm:$0xff]
          %290 = vst [vmem:[%s64 + $0x380] sm:$0xff] %v289
          %v291 = vld [vmem:[%s63 + $0x388] sm:$0xff]
          %292 = vst [vmem:[%s64 + $0x388] sm:$0xff] %v291
          %v293 = vld [vmem:[%s63 + $0x390] sm:$0xff]
          %294 = vst [vmem:[%s64 + $0x390] sm:$0xff] %v293
          %v295 = vld [vmem:[%s63 + $0x398] sm:$0xff]
          %296 = vst [vmem:[%s64 + $0x398] sm:$0xff] %v295
          %v297 = vld [vmem:[%s63 + $0x3a0] sm:$0xff]
          %298 = vst [vmem:[%s64 + $0x3a0] sm:$0xff] %v297
          %v299 = vld [vmem:[%s63 + $0x3a8] sm:$0xff]
          %300 = vst [vmem:[%s64 + $0x3a8] sm:$0xff] %v299
          %v301 = vld [vmem:[%s63 + $0x3b0] sm:$0xff]
          %302 = vst [vmem:[%s64 + $0x3b0] sm:$0xff] %v301
          %v303 = vld [vmem:[%s63 + $0x3b8] sm:$0xff]
          %304 = vst [vmem:[%s64 + $0x3b8] sm:$0xff] %v303
          %v305 = vld [vmem:[%s63 + $0x3c0] sm:$0xff]
          %306 = vst [vmem:[%s64 + $0x3c0] sm:$0xff] %v305
          %v307 = vld [vmem:[%s63 + $0x3c8] sm:$0xff]
          %308 = vst [vmem:[%s64 + $0x3c8] sm:$0xff] %v307
          %v309 = vld [vmem:[%s63 + $0x3d0] sm:$0xff]
          %310 = vst [vmem:[%s64 + $0x3d0] sm:$0xff] %v309
          %v311 = vld [vmem:[%s63 + $0x3d8] sm:$0xff]
          %312 = vst [vmem:[%s64 + $0x3d8] sm:$0xff] %v311
          %v313 = vld [vmem:[%s63 + $0x3e0] sm:$0xff]
          %314 = vst [vmem:[%s64 + $0x3e0] sm:$0xff] %v313
          %v315 = vld [vmem:[%s63 + $0x3e8] sm:$0xff]
          %316 = vst [vmem:[%s64 + $0x3e8] sm:$0xff] %v315
          %v317 = vld [vmem:[%s63 + $0x3f0] sm:$0xff]
          %318 = vst [vmem:[%s64 + $0x3f0] sm:$0xff] %v317
          %v319 = vld [vmem:[%s63 + $0x3f8] sm:$0xff]
          %320 = vst [vmem:[%s64 + $0x3f8] sm:$0xff] %v319
          %v321 = vld [vmem:[%s63 + $0x400] sm:$0xff]
          %322 = vst [vmem:[%s64 + $0x400] sm:$0xff] %v321
          %v323 = vld [vmem:[%s63 + $0x408] sm:$0xff]
          %324 = vst [vmem:[%s64 + $0x408] sm:$0xff] %v323
          %v325 = vld [vmem:[%s63 + $0x410] sm:$0xff]
          %326 = vst [vmem:[%s64 + $0x410] sm:$0xff] %v325
          %v327 = vld [vmem:[%s63 + $0x418] sm:$0xff]
          %328 = vst [vmem:[%s64 + $0x418] sm:$0xff] %v327
          %v329 = vld [vmem:[%s63 + $0x420] sm:$0xff]
          %330 = vst [vmem:[%s64 + $0x420] sm:$0xff] %v329
          %v331 = vld [vmem:[%s63 + $0x428] sm:$0xff]
          %332 = vst [vmem:[%s64 + $0x428] sm:$0xff] %v331
          %v333 = vld [vmem:[%s63 + $0x430] sm:$0xff]
          %334 = vst [vmem:[%s64 + $0x430] sm:$0xff] %v333
          %v335 = vld [vmem:[%s63 + $0x438] sm:$0xff]
          %336 = vst [vmem:[%s64 + $0x438] sm:$0xff] %v335
          %v337 = vld [vmem:[%s63 + $0x440] sm:$0xff]
          %338 = vst [vmem:[%s64 + $0x440] sm:$0xff] %v337
          %v339 = vld [vmem:[%s63 + $0x448] sm:$0xff]
          %340 = vst [vmem:[%s64 + $0x448] sm:$0xff] %v339
          %v341 = vld [vmem:[%s63 + $0x450] sm:$0xff]
          %342 = vst [vmem:[%s64 + $0x450] sm:$0xff] %v341
          %v343 = vld [vmem:[%s63 + $0x458] sm:$0xff]
          %344 = vst [vmem:[%s64 + $0x458] sm:$0xff] %v343
          %v345 = vld [vmem:[%s63 + $0x460] sm:$0xff]
          %346 = vst [vmem:[%s64 + $0x460] sm:$0xff] %v345
          %v347 = vld [vmem:[%s63 + $0x468] sm:$0xff]
          %348 = vst [vmem:[%s64 + $0x468] sm:$0xff] %v347
          %v349 = vld [vmem:[%s63 + $0x470] sm:$0xff]
          %350 = vst [vmem:[%s64 + $0x470] sm:$0xff] %v349
          %v351 = vld [vmem:[%s63 + $0x478] sm:$0xff]
          %352 = vst [vmem:[%s64 + $0x478] sm:$0xff] %v351
        $region57: #{simple_cnn_forward.1} parent=51 // loop_footer
          %s62 = sadd.s32 1, %s58
        $region58: #{simple_cnn_forward.1} parent=51 // loop_footer_branch
          %57 = sbr.rel target = $region54
        $region59: #{simple_cnn_forward.1} parent=51 // loop_exit
          _
      $region52: #{simple_cnn_forward.1} parent=36 // pred_fallthru
        _
      %p353 = pneg %p53
      // Predicated region
      $region60: #{simple_cnn_forward.1} parent=36 // pred_check
        _
      $region61: #{simple_cnn_forward.1} parent=36 // pred_check_branch
        %355 = sbr.rel (%p53) target = $region63
      $region62: #{simple_cnn_forward.1} parent=36 // pred_region
        %s356 = sand.u32 1152, 7
      $region63: #{simple_cnn_forward.1} parent=36 // pred_fallthru
        _
    $region37: #{simple_cnn_forward.1} parent=1 // pred_fallthru
      _
    // Predicated region
    $region38: #{simple_cnn_forward.1} parent=1 // pred_check
      %p37 = pneg %p33
    $region39: #{simple_cnn_forward.1} parent=1 // pred_check_branch
      %39 = sbr.rel (%p37) target = $region41
    $region40: #{simple_cnn_forward.1} parent=1 // pred_region
      %s40 = sshll.u32 1, 1152
      %s41 = ssub.s32 %s40, 1
      loop: start=0, step=1, limit=1
      $region42: #{simple_cnn_forward.1} parent=40 // loop_pre_header
        _
      $region43: #{simple_cnn_forward.1} parent=40 // loop_header
        %s43 = sphi 0, %s47
        %p44 = scmp.ge.s32.totalorder %s43, 1
        %s48 = sphi %s5, %s5
        %s49 = sphi [#allocation4], [#allocation4]
      $region44: #{simple_cnn_forward.1} parent=40 // loop_header_branch
        %46 = sbr.rel (%p44) target = $region48
      $region45: #{simple_cnn_forward.1} parent=40 // loop_body
        %v50 = vld [vmem:[%s48] sm:%s41]
        %51 = vst [vmem:[%s49] sm:%s41] %v50
      $region46: #{simple_cnn_forward.1} parent=40 // loop_footer
        %s47 = sadd.s32 1, %s43
      $region47: #{simple_cnn_forward.1} parent=40 // loop_footer_branch
        %42 = sbr.rel target = $region43
      $region48: #{simple_cnn_forward.1} parent=40 // loop_exit
        _
    $region41: #{simple_cnn_forward.1} parent=1 // pred_fallthru
      _
    // Predicated region
    $region64: #{simple_cnn_forward.1} parent=1 // pred_check
      _
    $region65: #{simple_cnn_forward.1} parent=1 // pred_check_branch
      %359 = sbr.rel (0) target = $region67
    $region66: #{simple_cnn_forward.1} parent=1 // pred_region
      %360 = vsyncadd [#allocation5], 18432
    $region67: #{simple_cnn_forward.1} parent=1 // pred_fallthru
      _
    %v361 = vld [vmem:[%s0] sm:$0xf]
    %v362 = vld [vmem:[%s0 + $0x4] sm:$0xf]
    %v363 = vld [vmem:[%s0 + $0x8] sm:$0xf]
    %v364 = vld [vmem:[%s0 + $0xc] sm:$0xf]
    %v365 = vld [vmem:[%s0 + $0x10] sm:$0xf]
    %v366 = vld [vmem:[%s0 + $0x14] sm:$0xf]
    %v367 = vld [vmem:[%s0 + $0x18] sm:$0xf]
    %v368 = vld [vmem:[%s0 + $0x1c] sm:$0xf]
    %v369 = vld [vmem:[%s0 + $0x20] sm:$0xf]
    %v370 = vld [vmem:[%s0 + $0x24] sm:$0xf]
    %v371 = vld [vmem:[%s0 + $0x28] sm:$0xf]
    %v372 = vld [vmem:[%s0 + $0x2c] sm:$0xf]
    %v373 = vld [vmem:[%s0 + $0x30] sm:$0xf]
    %v374 = vld [vmem:[%s0 + $0x34] sm:$0xf]
    %v375 = vld [vmem:[%s0 + $0x38] sm:$0xf]
    %v376 = vld [vmem:[%s0 + $0x3c] sm:$0xf]
    %v377 = vld [vmem:[%s0 + $0x40] sm:$0xf]
    %v378 = vld [vmem:[%s0 + $0x44] sm:$0xf]
    %v379 = vld [vmem:[%s0 + $0x48] sm:$0xf]
    %v380 = vld [vmem:[%s0 + $0x4c] sm:$0xf]
    %v381 = vld [vmem:[%s0 + $0x50] sm:$0xf]
    %v382 = vld [vmem:[%s0 + $0x54] sm:$0xf]
    %v383 = vld [vmem:[%s0 + $0x58] sm:$0xf]
    %v384 = vld [vmem:[%s0 + $0x5c] sm:$0xf]
    %v385 = vld [vmem:[%s0 + $0x60] sm:$0xf]
    %v386 = vld [vmem:[%s0 + $0x64] sm:$0xf]
    %v387 = vld [vmem:[%s0 + $0x68] sm:$0xf]
    %v388 = vld [vmem:[%s0 + $0x6c] sm:$0xf]
    %v389 = vld [vmem:[%s0 + $0x70] sm:$0xf]
    %v390 = vld [vmem:[%s0 + $0x74] sm:$0xf]
    %v391 = vld [vmem:[%s0 + $0x78] sm:$0xf]
    %v392 = vld [vmem:[%s0 + $0x7c] sm:$0xf]
    %v393 = vld [vmem:[%s0 + $0x80] sm:$0xf]
    %v394 = vld [vmem:[%s0 + $0x84] sm:$0xf]
    %v395 = vld [vmem:[%s0 + $0x88] sm:$0xf]
    %v396 = vld [vmem:[%s0 + $0x8c] sm:$0xf]
    %v397 = vld [vmem:[%s0 + $0x90] sm:$0xf]
    %v398 = vld [vmem:[%s0 + $0x94] sm:$0xf]
    %v399 = vld [vmem:[%s0 + $0x98] sm:$0xf]
    %v400 = vld [vmem:[%s0 + $0x9c] sm:$0xf]
    %v401 = vld [vmem:[%s0 + $0xa0] sm:$0xf]
    %v402 = vld [vmem:[%s0 + $0xa4] sm:$0xf]
    %v403 = vld [vmem:[%s0 + $0xa8] sm:$0xf]
    %v404 = vld [vmem:[%s0 + $0xac] sm:$0xf]
    %v405 = vld [vmem:[%s0 + $0xb0] sm:$0xf]
    %v406 = vld [vmem:[%s0 + $0xb4] sm:$0xf]
    %v407 = vld [vmem:[%s0 + $0xb8] sm:$0xf]
    %v408 = vld [vmem:[%s0 + $0xbc] sm:$0xf]
    %v409 = vld [vmem:[%s0 + $0xc0] sm:$0xf]
    %v410 = vld [vmem:[%s0 + $0xc4] sm:$0xf]
    %v411 = vld [vmem:[%s0 + $0xc8] sm:$0xf]
    %v412 = vld [vmem:[%s0 + $0xcc] sm:$0xf]
    %v413 = vld [vmem:[%s0 + $0xd0] sm:$0xf]
    %v414 = vld [vmem:[%s0 + $0xd4] sm:$0xf]
    %v415 = vld [vmem:[%s0 + $0xd8] sm:$0xf]
    %v416 = vld [vmem:[%s0 + $0xdc] sm:$0xf]
    %v417 = vld [vmem:[%s0 + $0xe0] sm:$0xf]
    %v418 = vld [vmem:[%s0 + $0xe4] sm:$0xf]
    %v419 = vld [vmem:[%s0 + $0xe8] sm:$0xf]
    %v420 = vld [vmem:[%s0 + $0xec] sm:$0xf]
    %v421 = vld [vmem:[%s0 + $0xf0] sm:$0xf]
    %v422 = vld [vmem:[%s0 + $0xf4] sm:$0xf]
    %v423 = vld [vmem:[%s0 + $0xf8] sm:$0xf]
    %v424 = vld [vmem:[%s0 + $0xfc] sm:$0xf]
    %v425 = vld [vmem:[%s0 + $0x100] sm:$0xf]
    %v426 = vld [vmem:[%s0 + $0x104] sm:$0xf]
    %v427 = vld [vmem:[%s0 + $0x108] sm:$0xf]
    %v428 = vld [vmem:[%s0 + $0x10c] sm:$0xf]
    %v429 = vld [vmem:[%s0 + $0x110] sm:$0xf]
    %v430 = vld [vmem:[%s0 + $0x114] sm:$0xf]
    %v431 = vld [vmem:[%s0 + $0x118] sm:$0xf]
    %v432 = vld [vmem:[%s0 + $0x11c] sm:$0xf]
    %v433 = vld [vmem:[%s0 + $0x120] sm:$0xf]
    %v434 = vld [vmem:[%s0 + $0x124] sm:$0xf]
    %v435 = vld [vmem:[%s0 + $0x128] sm:$0xf]
    %v436 = vld [vmem:[%s0 + $0x12c] sm:$0xf]
    %v437 = vld [vmem:[%s0 + $0x130] sm:$0xf]
    %v438 = vld [vmem:[%s0 + $0x134] sm:$0xf]
    %v439 = vld [vmem:[%s0 + $0x138] sm:$0xf]
    %v440 = vld [vmem:[%s0 + $0x13c] sm:$0xf]
    %v441 = vld [vmem:[%s0 + $0x140] sm:$0xf]
    %v442 = vld [vmem:[%s0 + $0x144] sm:$0xf]
    %v443 = vld [vmem:[%s0 + $0x148] sm:$0xf]
    %v444 = vld [vmem:[%s0 + $0x14c] sm:$0xf]
    %v445 = vld [vmem:[%s0 + $0x150] sm:$0xf]
    %v446 = vld [vmem:[%s0 + $0x154] sm:$0xf]
    %v447 = vld [vmem:[%s0 + $0x158] sm:$0xf]
    %v448 = vld [vmem:[%s0 + $0x15c] sm:$0xf]
    %v449 = vld [vmem:[%s0 + $0x160] sm:$0xf]
    %v450 = vld [vmem:[%s0 + $0x164] sm:$0xf]
    %v451 = vld [vmem:[%s0 + $0x168] sm:$0xf]
    %v452 = vld [vmem:[%s0 + $0x16c] sm:$0xf]
    %v453 = vld [vmem:[%s0 + $0x170] sm:$0xf]
    %v454 = vld [vmem:[%s0 + $0x174] sm:$0xf]
    %v455 = vld [vmem:[%s0 + $0x178] sm:$0xf]
    %v456 = vld [vmem:[%s0 + $0x17c] sm:$0xf]
    %v457 = vld [vmem:[%s0 + $0x180] sm:$0xf]
    %v458 = vld [vmem:[%s0 + $0x184] sm:$0xf]
    %v459 = vld [vmem:[%s0 + $0x188] sm:$0xf]
    %v460 = vld [vmem:[%s0 + $0x18c] sm:$0xf]
    %v461 = vld [vmem:[%s0 + $0x190] sm:$0xf]
    %v462 = vld [vmem:[%s0 + $0x194] sm:$0xf]
    %v463 = vld [vmem:[%s0 + $0x198] sm:$0xf]
    %v464 = vld [vmem:[%s0 + $0x19c] sm:$0xf]
    %v465 = vld [vmem:[%s0 + $0x1a0] sm:$0xf]
    %v466 = vld [vmem:[%s0 + $0x1a4] sm:$0xf]
    %v467 = vld [vmem:[%s0 + $0x1a8] sm:$0xf]
    %v468 = vld [vmem:[%s0 + $0x1ac] sm:$0xf]
    %v469 = vld [vmem:[%s0 + $0x1b0] sm:$0xf]
    %v470 = vld [vmem:[%s0 + $0x1b4] sm:$0xf]
    %v471 = vld [vmem:[%s0 + $0x1b8] sm:$0xf]
    %v472 = vld [vmem:[%s0 + $0x1bc] sm:$0xf]
    %v473 = vld [vmem:[%s0 + $0x1c0] sm:$0xf]
    %v474 = vld [vmem:[%s0 + $0x1c4] sm:$0xf]
    %v475 = vld [vmem:[%s0 + $0x1c8] sm:$0xf]
    %v476 = vld [vmem:[%s0 + $0x1cc] sm:$0xf]
    %v477 = vld [vmem:[%s0 + $0x1d0] sm:$0xf]
    %v478 = vld [vmem:[%s0 + $0x1d4] sm:$0xf]
    %v479 = vld [vmem:[%s0 + $0x1d8] sm:$0xf]
    %v480 = vld [vmem:[%s0 + $0x1dc] sm:$0xf]
    %v481 = vld [vmem:[%s0 + $0x1e0] sm:$0xf]
    %v482 = vld [vmem:[%s0 + $0x1e4] sm:$0xf]
    %v483 = vld [vmem:[%s0 + $0x1e8] sm:$0xf]
    %v484 = vld [vmem:[%s0 + $0x1ec] sm:$0xf]
    %v485 = vld [vmem:[%s0 + $0x1f0] sm:$0xf]
    %v486 = vld [vmem:[%s0 + $0x1f4] sm:$0xf]
    %v487 = vld [vmem:[%s0 + $0x1f8] sm:$0xf]
    %v488 = vld [vmem:[%s0 + $0x1fc] sm:$0xf]
    %v489 = vld [vmem:[%s0 + $0x200] sm:$0xf]
    %v490 = vld [vmem:[%s0 + $0x204] sm:$0xf]
    %v491 = vld [vmem:[%s0 + $0x208] sm:$0xf]
    %v492 = vld [vmem:[%s0 + $0x20c] sm:$0xf]
    %v493 = vld [vmem:[%s0 + $0x210] sm:$0xf]
    %v494 = vld [vmem:[%s0 + $0x214] sm:$0xf]
    %v495 = vld [vmem:[%s0 + $0x218] sm:$0xf]
    %v496 = vld [vmem:[%s0 + $0x21c] sm:$0xf]
    %v497 = vld [vmem:[%s0 + $0x220] sm:$0xf]
    %v498 = vld [vmem:[%s0 + $0x224] sm:$0xf]
    %v499 = vld [vmem:[%s0 + $0x228] sm:$0xf]
    %v500 = vld [vmem:[%s0 + $0x22c] sm:$0xf]
    %v501 = vld [vmem:[%s0 + $0x230] sm:$0xf]
    %v502 = vld [vmem:[%s0 + $0x234] sm:$0xf]
    %v503 = vld [vmem:[%s0 + $0x238] sm:$0xf]
    %v504 = vld [vmem:[%s0 + $0x23c] sm:$0xf]
    %v505 = vld [vmem:[%s0 + $0x240] sm:$0xf]
    %v506 = vld [vmem:[%s0 + $0x244] sm:$0xf]
    %v507 = vld [vmem:[%s0 + $0x248] sm:$0xf]
    %v508 = vld [vmem:[%s0 + $0x24c] sm:$0xf]
    %v509 = vld [vmem:[%s0 + $0x250] sm:$0xf]
    %v510 = vld [vmem:[%s0 + $0x254] sm:$0xf]
    %v511 = vld [vmem:[%s0 + $0x258] sm:$0xf]
    %v512 = vld [vmem:[%s0 + $0x25c] sm:$0xf]
    %v513 = vld [vmem:[%s0 + $0x260] sm:$0xf]
    %v514 = vld [vmem:[%s0 + $0x264] sm:$0xf]
    %v515 = vld [vmem:[%s0 + $0x268] sm:$0xf]
    %v516 = vld [vmem:[%s0 + $0x26c] sm:$0xf]
    %v517 = vld [vmem:[%s0 + $0x270] sm:$0xf]
    %v518 = vld [vmem:[%s0 + $0x274] sm:$0xf]
    %v519 = vld [vmem:[%s0 + $0x278] sm:$0xf]
    %v520 = vld [vmem:[%s0 + $0x27c] sm:$0xf]
    %v521 = vld [vmem:[%s0 + $0x280] sm:$0xf]
    %v522 = vld [vmem:[%s0 + $0x284] sm:$0xf]
    %v523 = vld [vmem:[%s0 + $0x288] sm:$0xf]
    %v524 = vld [vmem:[%s0 + $0x28c] sm:$0xf]
    %v525 = vld [vmem:[%s0 + $0x290] sm:$0xf]
    %v526 = vld [vmem:[%s0 + $0x294] sm:$0xf]
    %v527 = vld [vmem:[%s0 + $0x298] sm:$0xf]
    %v528 = vld [vmem:[%s0 + $0x29c] sm:$0xf]
    %v529 = vld [vmem:[%s0 + $0x2a0] sm:$0xf]
    %v530 = vld [vmem:[%s0 + $0x2a4] sm:$0xf]
    %v531 = vld [vmem:[%s0 + $0x2a8] sm:$0xf]
    %v532 = vld [vmem:[%s0 + $0x2ac] sm:$0xf]
    %v533 = vld [vmem:[%s0 + $0x2b0] sm:$0xf]
    %v534 = vld [vmem:[%s0 + $0x2b4] sm:$0xf]
    %v535 = vld [vmem:[%s0 + $0x2b8] sm:$0xf]
    %v536 = vld [vmem:[%s0 + $0x2bc] sm:$0xf]
    %v537 = vld [vmem:[%s0 + $0x2c0] sm:$0xf]
    %v538 = vld [vmem:[%s0 + $0x2c4] sm:$0xf]
    %v539 = vld [vmem:[%s0 + $0x2c8] sm:$0xf]
    %v540 = vld [vmem:[%s0 + $0x2cc] sm:$0xf]
    %v541 = vld [vmem:[%s0 + $0x2d0] sm:$0xf]
    %v542 = vld [vmem:[%s0 + $0x2d4] sm:$0xf]
    %v543 = vld [vmem:[%s0 + $0x2d8] sm:$0xf]
    %v544 = vld [vmem:[%s0 + $0x2dc] sm:$0xf]
    %v545 = vld [vmem:[%s0 + $0x2e0] sm:$0xf]
    %v546 = vld [vmem:[%s0 + $0x2e4] sm:$0xf]
    %v547 = vld [vmem:[%s0 + $0x2e8] sm:$0xf]
    %v548 = vld [vmem:[%s0 + $0x2ec] sm:$0xf]
    %v549 = vld [vmem:[%s0 + $0x2f0] sm:$0xf]
    %v550 = vld [vmem:[%s0 + $0x2f4] sm:$0xf]
    %v551 = vld [vmem:[%s0 + $0x2f8] sm:$0xf]
    %v552 = vld [vmem:[%s0 + $0x2fc] sm:$0xf]
    %v553 = vld [vmem:[%s0 + $0x300] sm:$0xf]
    %v554 = vld [vmem:[%s0 + $0x304] sm:$0xf]
    %v555 = vld [vmem:[%s0 + $0x308] sm:$0xf]
    %v556 = vld [vmem:[%s0 + $0x30c] sm:$0xf]
    %v557 = vld [vmem:[%s0 + $0x310] sm:$0xf]
    %v558 = vld [vmem:[%s0 + $0x314] sm:$0xf]
    %v559 = vld [vmem:[%s0 + $0x318] sm:$0xf]
    %v560 = vld [vmem:[%s0 + $0x31c] sm:$0xf]
    %v561 = vld [vmem:[%s0 + $0x320] sm:$0xf]
    %v562 = vld [vmem:[%s0 + $0x324] sm:$0xf]
    %v563 = vld [vmem:[%s0 + $0x328] sm:$0xf]
    %v564 = vld [vmem:[%s0 + $0x32c] sm:$0xf]
    %v565 = vld [vmem:[%s0 + $0x330] sm:$0xf]
    %v566 = vld [vmem:[%s0 + $0x334] sm:$0xf]
    %v567 = vld [vmem:[%s0 + $0x338] sm:$0xf]
    %v568 = vld [vmem:[%s0 + $0x33c] sm:$0xf]
    %v569 = vld [vmem:[%s0 + $0x340] sm:$0xf]
    %v570 = vld [vmem:[%s0 + $0x344] sm:$0xf]
    %v571 = vld [vmem:[%s0 + $0x348] sm:$0xf]
    %v572 = vld [vmem:[%s0 + $0x34c] sm:$0xf]
    %v573 = vld [vmem:[%s0 + $0x350] sm:$0xf]
    %v574 = vld [vmem:[%s0 + $0x354] sm:$0xf]
    %v575 = vld [vmem:[%s0 + $0x358] sm:$0xf]
    %v576 = vld [vmem:[%s0 + $0x35c] sm:$0xf]
    %v577 = vld [vmem:[%s0 + $0x360] sm:$0xf]
    %v578 = vld [vmem:[%s0 + $0x364] sm:$0xf]
    %v579 = vld [vmem:[%s0 + $0x368] sm:$0xf]
    %v580 = vld [vmem:[%s0 + $0x36c] sm:$0xf]
    %v581 = vld [vmem:[%s0 + $0x370] sm:$0xf]
    %v582 = vld [vmem:[%s0 + $0x374] sm:$0xf]
    %v583 = vld [vmem:[%s0 + $0x378] sm:$0xf]
    %v584 = vld [vmem:[%s0 + $0x37c] sm:$0xf]
    %v585 = vld [vmem:[%s0 + $0x380] sm:$0xf]
    %v586 = vld [vmem:[%s0 + $0x384] sm:$0xf]
    %v587 = vld [vmem:[%s0 + $0x388] sm:$0xf]
    %v588 = vld [vmem:[%s0 + $0x38c] sm:$0xf]
    %v589 = vld [vmem:[%s0 + $0x390] sm:$0xf]
    %v590 = vld [vmem:[%s0 + $0x394] sm:$0xf]
    %v591 = vld [vmem:[%s0 + $0x398] sm:$0xf]
    %v592 = vld [vmem:[%s0 + $0x39c] sm:$0xf]
    %v593 = vld [vmem:[%s0 + $0x3a0] sm:$0xf]
    %v594 = vld [vmem:[%s0 + $0x3a4] sm:$0xf]
    %v595 = vld [vmem:[%s0 + $0x3a8] sm:$0xf]
    %v596 = vld [vmem:[%s0 + $0x3ac] sm:$0xf]
    %v597 = vld [vmem:[%s0 + $0x3b0] sm:$0xf]
    %v598 = vld [vmem:[%s0 + $0x3b4] sm:$0xf]
    %v599 = vld [vmem:[%s0 + $0x3b8] sm:$0xf]
    %v600 = vld [vmem:[%s0 + $0x3bc] sm:$0xf]
    %v601 = vld [vmem:[%s0 + $0x3c0] sm:$0xf]
    %v602 = vld [vmem:[%s0 + $0x3c4] sm:$0xf]
    %v603 = vld [vmem:[%s0 + $0x3c8] sm:$0xf]
    %v604 = vld [vmem:[%s0 + $0x3cc] sm:$0xf]
    %v605 = vld [vmem:[%s0 + $0x3d0] sm:$0xf]
    %v606 = vld [vmem:[%s0 + $0x3d4] sm:$0xf]
    %v607 = vld [vmem:[%s0 + $0x3d8] sm:$0xf]
    %v608 = vld [vmem:[%s0 + $0x3dc] sm:$0xf]
    %v609 = vld [vmem:[%s0 + $0x3e0] sm:$0xf]
    %v610 = vld [vmem:[%s0 + $0x3e4] sm:$0xf]
    %v611 = vld [vmem:[%s0 + $0x3e8] sm:$0xf]
    %v612 = vld [vmem:[%s0 + $0x3ec] sm:$0xf]
    %v613 = vld [vmem:[%s0 + $0x3f0] sm:$0xf]
    %v614 = vld [vmem:[%s0 + $0x3f4] sm:$0xf]
    %v615 = vld [vmem:[%s0 + $0x3f8] sm:$0xf]
    %v616 = vld [vmem:[%s0 + $0x3fc] sm:$0xf]
    %v617 = vld [vmem:[%s1] sm:$0xf]
    %v618 = vld [vmem:[%s1 + $0x4] sm:$0xf]
    %v619 = vld [vmem:[%s1 + $0x8] sm:$0xf]
    %v620 = vld [vmem:[%s1 + $0xc] sm:$0xf]
    %v877 = vunpack.c.l.b16 %v361
    %v878 = vunpack.c.l.b16 %v362
    %v879 = vunpack.c.l.b16 %v363
    %v880 = vunpack.c.l.b16 %v364
    %v881 = vunpack.c.l.b16 %v365
    %v882 = vunpack.c.l.b16 %v366
    %v883 = vunpack.c.l.b16 %v367
    %v884 = vunpack.c.l.b16 %v368
    %v885 = vunpack.c.l.b16 %v369
    %v886 = vunpack.c.l.b16 %v370
    %v887 = vunpack.c.l.b16 %v371
    %v888 = vunpack.c.l.b16 %v372
    %v889 = vunpack.c.l.b16 %v373
    %v890 = vunpack.c.l.b16 %v374
    %v891 = vunpack.c.l.b16 %v375
    %v892 = vunpack.c.l.b16 %v376
    %v893 = vunpack.c.l.b16 %v377
    %v894 = vunpack.c.l.b16 %v378
    %v895 = vunpack.c.l.b16 %v379
    %v896 = vunpack.c.l.b16 %v380
    %v897 = vunpack.c.l.b16 %v381
    %v898 = vunpack.c.l.b16 %v382
    %v899 = vunpack.c.l.b16 %v383
    %v900 = vunpack.c.l.b16 %v384
    %v901 = vunpack.c.l.b16 %v385
    %v902 = vunpack.c.l.b16 %v386
    %v903 = vunpack.c.l.b16 %v387
    %v904 = vunpack.c.l.b16 %v388
    %v905 = vunpack.c.l.b16 %v389
    %v906 = vunpack.c.l.b16 %v390
    %v907 = vunpack.c.l.b16 %v391
    %v908 = vunpack.c.l.b16 %v392
    %v909 = vunpack.c.l.b16 %v393
    %v910 = vunpack.c.l.b16 %v394
    %v911 = vunpack.c.l.b16 %v395
    %v912 = vunpack.c.l.b16 %v396
    %v913 = vunpack.c.l.b16 %v397
    %v914 = vunpack.c.l.b16 %v398
    %v915 = vunpack.c.l.b16 %v399
    %v916 = vunpack.c.l.b16 %v400
    %v917 = vunpack.c.l.b16 %v401
    %v918 = vunpack.c.l.b16 %v402
    %v919 = vunpack.c.l.b16 %v403
    %v920 = vunpack.c.l.b16 %v404
    %v921 = vunpack.c.l.b16 %v405
    %v922 = vunpack.c.l.b16 %v406
    %v923 = vunpack.c.l.b16 %v407
    %v924 = vunpack.c.l.b16 %v408
    %v925 = vunpack.c.l.b16 %v409
    %v926 = vunpack.c.l.b16 %v410
    %v927 = vunpack.c.l.b16 %v411
    %v928 = vunpack.c.l.b16 %v412
    %v929 = vunpack.c.l.b16 %v413
    %v930 = vunpack.c.l.b16 %v414
    %v931 = vunpack.c.l.b16 %v415
    %v932 = vunpack.c.l.b16 %v416
    %v933 = vunpack.c.l.b16 %v417
    %v934 = vunpack.c.l.b16 %v418
    %v935 = vunpack.c.l.b16 %v419
    %v936 = vunpack.c.l.b16 %v420
    %v937 = vunpack.c.l.b16 %v421
    %v938 = vunpack.c.l.b16 %v422
    %v939 = vunpack.c.l.b16 %v423
    %v940 = vunpack.c.l.b16 %v424
    %v941 = vunpack.c.l.b16 %v425
    %v942 = vunpack.c.l.b16 %v426
    %v943 = vunpack.c.l.b16 %v427
    %v944 = vunpack.c.l.b16 %v428
    %v945 = vunpack.c.l.b16 %v429
    %v946 = vunpack.c.l.b16 %v430
    %v947 = vunpack.c.l.b16 %v431
    %v948 = vunpack.c.l.b16 %v432
    %v949 = vunpack.c.l.b16 %v433
    %v950 = vunpack.c.l.b16 %v434
    %v951 = vunpack.c.l.b16 %v435
    %v952 = vunpack.c.l.b16 %v436
    %v953 = vunpack.c.l.b16 %v437
    %v954 = vunpack.c.l.b16 %v438
    %v955 = vunpack.c.l.b16 %v439
    %v956 = vunpack.c.l.b16 %v440
    %v957 = vunpack.c.l.b16 %v441
    %v958 = vunpack.c.l.b16 %v442
    %v959 = vunpack.c.l.b16 %v443
    %v960 = vunpack.c.l.b16 %v444
    %v961 = vunpack.c.l.b16 %v445
    %v962 = vunpack.c.l.b16 %v446
    %v963 = vunpack.c.l.b16 %v447
    %v964 = vunpack.c.l.b16 %v448
    %v965 = vunpack.c.l.b16 %v449
    %v966 = vunpack.c.l.b16 %v450
    %v967 = vunpack.c.l.b16 %v451
    %v968 = vunpack.c.l.b16 %v452
    %v969 = vunpack.c.l.b16 %v453
    %v970 = vunpack.c.l.b16 %v454
    %v971 = vunpack.c.l.b16 %v455
    %v972 = vunpack.c.l.b16 %v456
    %v973 = vunpack.c.l.b16 %v457
    %v974 = vunpack.c.l.b16 %v458
    %v975 = vunpack.c.l.b16 %v459
    %v976 = vunpack.c.l.b16 %v460
    %v977 = vunpack.c.l.b16 %v461
    %v978 = vunpack.c.l.b16 %v462
    %v979 = vunpack.c.l.b16 %v463
    %v980 = vunpack.c.l.b16 %v464
    %v981 = vunpack.c.l.b16 %v465
    %v982 = vunpack.c.l.b16 %v466
    %v983 = vunpack.c.l.b16 %v467
    %v984 = vunpack.c.l.b16 %v468
    %v985 = vunpack.c.l.b16 %v469
    %v986 = vunpack.c.l.b16 %v470
    %v987 = vunpack.c.l.b16 %v471
    %v988 = vunpack.c.l.b16 %v472
    %v989 = vunpack.c.l.b16 %v473
    %v990 = vunpack.c.l.b16 %v474
    %v991 = vunpack.c.l.b16 %v475
    %v992 = vunpack.c.l.b16 %v476
    %v993 = vunpack.c.l.b16 %v477
    %v994 = vunpack.c.l.b16 %v478
    %v995 = vunpack.c.l.b16 %v479
    %v996 = vunpack.c.l.b16 %v480
    %v997 = vunpack.c.l.b16 %v481
    %v998 = vunpack.c.l.b16 %v482
    %v999 = vunpack.c.l.b16 %v483
    %v1000 = vunpack.c.l.b16 %v484
    %v1001 = vunpack.c.l.b16 %v485
    %v1002 = vunpack.c.l.b16 %v486
    %v1003 = vunpack.c.l.b16 %v487
    %v1004 = vunpack.c.l.b16 %v488
    %v1005 = vunpack.c.l.b16 %v489
    %v1006 = vunpack.c.l.b16 %v490
    %v1007 = vunpack.c.l.b16 %v491
    %v1008 = vunpack.c.l.b16 %v492
    %v1009 = vunpack.c.l.b16 %v493
    %v1010 = vunpack.c.l.b16 %v494
    %v1011 = vunpack.c.l.b16 %v495
    %v1012 = vunpack.c.l.b16 %v496
    %v1013 = vunpack.c.l.b16 %v497
    %v1014 = vunpack.c.l.b16 %v498
    %v1015 = vunpack.c.l.b16 %v499
    %v1016 = vunpack.c.l.b16 %v500
    %v1017 = vunpack.c.l.b16 %v501
    %v1018 = vunpack.c.l.b16 %v502
    %v1019 = vunpack.c.l.b16 %v503
    %v1020 = vunpack.c.l.b16 %v504
    %v1021 = vunpack.c.l.b16 %v505
    %v1022 = vunpack.c.l.b16 %v506
    %v1023 = vunpack.c.l.b16 %v507
    %v1024 = vunpack.c.l.b16 %v508
    %v1025 = vunpack.c.l.b16 %v509
    %v1026 = vunpack.c.l.b16 %v510
    %v1027 = vunpack.c.l.b16 %v511
    %v1028 = vunpack.c.l.b16 %v512
    %v1029 = vunpack.c.l.b16 %v513
    %v1030 = vunpack.c.l.b16 %v514
    %v1031 = vunpack.c.l.b16 %v515
    %v1032 = vunpack.c.l.b16 %v516
    %v1033 = vunpack.c.l.b16 %v517
    %v1034 = vunpack.c.l.b16 %v518
    %v1035 = vunpack.c.l.b16 %v519
    %v1036 = vunpack.c.l.b16 %v520
    %v1037 = vunpack.c.l.b16 %v521
    %v1038 = vunpack.c.l.b16 %v522
    %v1039 = vunpack.c.l.b16 %v523
    %v1040 = vunpack.c.l.b16 %v524
    %v1041 = vunpack.c.l.b16 %v525
    %v1042 = vunpack.c.l.b16 %v526
    %v1043 = vunpack.c.l.b16 %v527
    %v1044 = vunpack.c.l.b16 %v528
    %v1045 = vunpack.c.l.b16 %v529
    %v1046 = vunpack.c.l.b16 %v530
    %v1047 = vunpack.c.l.b16 %v531
    %v1048 = vunpack.c.l.b16 %v532
    %v1049 = vunpack.c.l.b16 %v533
    %v1050 = vunpack.c.l.b16 %v534
    %v1051 = vunpack.c.l.b16 %v535
    %v1052 = vunpack.c.l.b16 %v536
    %v1053 = vunpack.c.l.b16 %v537
    %v1054 = vunpack.c.l.b16 %v538
    %v1055 = vunpack.c.l.b16 %v539
    %v1056 = vunpack.c.l.b16 %v540
    %v1057 = vunpack.c.l.b16 %v541
    %v1058 = vunpack.c.l.b16 %v542
    %v1059 = vunpack.c.l.b16 %v543
    %v1060 = vunpack.c.l.b16 %v544
    %v1061 = vunpack.c.l.b16 %v545
    %v1062 = vunpack.c.l.b16 %v546
    %v1063 = vunpack.c.l.b16 %v547
    %v1064 = vunpack.c.l.b16 %v548
    %v1065 = vunpack.c.l.b16 %v549
    %v1066 = vunpack.c.l.b16 %v550
    %v1067 = vunpack.c.l.b16 %v551
    %v1068 = vunpack.c.l.b16 %v552
    %v1069 = vunpack.c.l.b16 %v553
    %v1070 = vunpack.c.l.b16 %v554
    %v1071 = vunpack.c.l.b16 %v555
    %v1072 = vunpack.c.l.b16 %v556
    %v1073 = vunpack.c.l.b16 %v557
    %v1074 = vunpack.c.l.b16 %v558
    %v1075 = vunpack.c.l.b16 %v559
    %v1076 = vunpack.c.l.b16 %v560
    %v1077 = vunpack.c.l.b16 %v561
    %v1078 = vunpack.c.l.b16 %v562
    %v1079 = vunpack.c.l.b16 %v563
    %v1080 = vunpack.c.l.b16 %v564
    %v1081 = vunpack.c.l.b16 %v565
    %v1082 = vunpack.c.l.b16 %v566
    %v1083 = vunpack.c.l.b16 %v567
    %v1084 = vunpack.c.l.b16 %v568
    %v1085 = vunpack.c.l.b16 %v569
    %v1086 = vunpack.c.l.b16 %v570
    %v1087 = vunpack.c.l.b16 %v571
    %v1088 = vunpack.c.l.b16 %v572
    %v1089 = vunpack.c.l.b16 %v573
    %v1090 = vunpack.c.l.b16 %v574
    %v1091 = vunpack.c.l.b16 %v575
    %v1092 = vunpack.c.l.b16 %v576
    %v1093 = vunpack.c.l.b16 %v577
    %v1094 = vunpack.c.l.b16 %v578
    %v1095 = vunpack.c.l.b16 %v579
    %v1096 = vunpack.c.l.b16 %v580
    %v1097 = vunpack.c.l.b16 %v581
    %v1098 = vunpack.c.l.b16 %v582
    %v1099 = vunpack.c.l.b16 %v583
    %v1100 = vunpack.c.l.b16 %v584
    %v1101 = vunpack.c.l.b16 %v585
    %v1102 = vunpack.c.l.b16 %v586
    %v1103 = vunpack.c.l.b16 %v587
    %v1104 = vunpack.c.l.b16 %v588
    %v1105 = vunpack.c.l.b16 %v589
    %v1106 = vunpack.c.l.b16 %v590
    %v1107 = vunpack.c.l.b16 %v591
    %v1108 = vunpack.c.l.b16 %v592
    %v1109 = vunpack.c.l.b16 %v593
    %v1110 = vunpack.c.l.b16 %v594
    %v1111 = vunpack.c.l.b16 %v595
    %v1112 = vunpack.c.l.b16 %v596
    %v1113 = vunpack.c.l.b16 %v597
    %v1114 = vunpack.c.l.b16 %v598
    %v1115 = vunpack.c.l.b16 %v599
    %v1116 = vunpack.c.l.b16 %v600
    %v1117 = vunpack.c.l.b16 %v601
    %v1118 = vunpack.c.l.b16 %v602
    %v1119 = vunpack.c.l.b16 %v603
    %v1120 = vunpack.c.l.b16 %v604
    %v1121 = vunpack.c.l.b16 %v605
    %v1122 = vunpack.c.l.b16 %v606
    %v1123 = vunpack.c.l.b16 %v607
    %v1124 = vunpack.c.l.b16 %v608
    %v1125 = vunpack.c.l.b16 %v609
    %v1126 = vunpack.c.l.b16 %v610
    %v1127 = vunpack.c.l.b16 %v611
    %v1128 = vunpack.c.l.b16 %v612
    %v1129 = vunpack.c.l.b16 %v613
    %v1130 = vunpack.c.l.b16 %v614
    %v1131 = vunpack.c.l.b16 %v615
    %v1132 = vunpack.c.l.b16 %v616
    %v1133 = vpack.c.b16 %v878, %v877
    %v1134 = vpack.c.b16 %v880, %v879
    %v1135 = vpack.c.b16 %v882, %v881
    %v1136 = vpack.c.b16 %v884, %v883
    %v1137 = vpack.c.b16 %v886, %v885
    %v1138 = vpack.c.b16 %v888, %v887
    %v1139 = vpack.c.b16 %v890, %v889
    %v1140 = vpack.c.b16 %v892, %v891
    %v1141 = vpack.c.b16 %v894, %v893
    %v1142 = vpack.c.b16 %v896, %v895
    %v1143 = vpack.c.b16 %v898, %v897
    %v1144 = vpack.c.b16 %v900, %v899
    %v1145 = vpack.c.b16 %v902, %v901
    %v1146 = vpack.c.b16 %v904, %v903
    %v1147 = vpack.c.b16 %v906, %v905
    %v1148 = vpack.c.b16 %v908, %v907
    %v1149 = vpack.c.b16 %v910, %v909
    %v1150 = vpack.c.b16 %v912, %v911
    %v1151 = vpack.c.b16 %v914, %v913
    %v1152 = vpack.c.b16 %v916, %v915
    %v1153 = vpack.c.b16 %v918, %v917
    %v1154 = vpack.c.b16 %v920, %v919
    %v1155 = vpack.c.b16 %v922, %v921
    %v1156 = vpack.c.b16 %v924, %v923
    %v1157 = vpack.c.b16 %v926, %v925
    %v1158 = vpack.c.b16 %v928, %v927
    %v1159 = vpack.c.b16 %v930, %v929
    %v1160 = vpack.c.b16 %v932, %v931
    %v1161 = vpack.c.b16 %v934, %v933
    %v1162 = vpack.c.b16 %v936, %v935
    %v1163 = vpack.c.b16 %v938, %v937
    %v1164 = vpack.c.b16 %v940, %v939
    %v1165 = vpack.c.b16 %v942, %v941
    %v1166 = vpack.c.b16 %v944, %v943
    %v1167 = vpack.c.b16 %v946, %v945
    %v1168 = vpack.c.b16 %v948, %v947
    %v1169 = vpack.c.b16 %v950, %v949
    %v1170 = vpack.c.b16 %v952, %v951
    %v1171 = vpack.c.b16 %v954, %v953
    %v1172 = vpack.c.b16 %v956, %v955
    %v1173 = vpack.c.b16 %v958, %v957
    %v1174 = vpack.c.b16 %v960, %v959
    %v1175 = vpack.c.b16 %v962, %v961
    %v1176 = vpack.c.b16 %v964, %v963
    %v1177 = vpack.c.b16 %v966, %v965
    %v1178 = vpack.c.b16 %v968, %v967
    %v1179 = vpack.c.b16 %v970, %v969
    %v1180 = vpack.c.b16 %v972, %v971
    %v1181 = vpack.c.b16 %v974, %v973
    %v1182 = vpack.c.b16 %v976, %v975
    %v1183 = vpack.c.b16 %v978, %v977
    %v1184 = vpack.c.b16 %v980, %v979
    %v1185 = vpack.c.b16 %v982, %v981
    %v1186 = vpack.c.b16 %v984, %v983
    %v1187 = vpack.c.b16 %v986, %v985
    %v1188 = vpack.c.b16 %v988, %v987
    %v1189 = vpack.c.b16 %v990, %v989
    %v1190 = vpack.c.b16 %v992, %v991
    %v1191 = vpack.c.b16 %v994, %v993
    %v1192 = vpack.c.b16 %v996, %v995
    %v1193 = vpack.c.b16 %v998, %v997
    %v1194 = vpack.c.b16 %v1000, %v999
    %v1195 = vpack.c.b16 %v1002, %v1001
    %v1196 = vpack.c.b16 %v1004, %v1003
    %v1197 = vpack.c.b16 %v1006, %v1005
    %v1198 = vpack.c.b16 %v1008, %v1007
    %v1199 = vpack.c.b16 %v1010, %v1009
    %v1200 = vpack.c.b16 %v1012, %v1011
    %v1201 = vpack.c.b16 %v1014, %v1013
    %v1202 = vpack.c.b16 %v1016, %v1015
    %v1203 = vpack.c.b16 %v1018, %v1017
    %v1204 = vpack.c.b16 %v1020, %v1019
    %v1205 = vpack.c.b16 %v1022, %v1021
    %v1206 = vpack.c.b16 %v1024, %v1023
    %v1207 = vpack.c.b16 %v1026, %v1025
    %v1208 = vpack.c.b16 %v1028, %v1027
    %v1209 = vpack.c.b16 %v1030, %v1029
    %v1210 = vpack.c.b16 %v1032, %v1031
    %v1211 = vpack.c.b16 %v1034, %v1033
    %v1212 = vpack.c.b16 %v1036, %v1035
    %v1213 = vpack.c.b16 %v1038, %v1037
    %v1214 = vpack.c.b16 %v1040, %v1039
    %v1215 = vpack.c.b16 %v1042, %v1041
    %v1216 = vpack.c.b16 %v1044, %v1043
    %v1217 = vpack.c.b16 %v1046, %v1045
    %v1218 = vpack.c.b16 %v1048, %v1047
    %v1219 = vpack.c.b16 %v1050, %v1049
    %v1220 = vpack.c.b16 %v1052, %v1051
    %v1221 = vpack.c.b16 %v1054, %v1053
    %v1222 = vpack.c.b16 %v1056, %v1055
    %v1223 = vpack.c.b16 %v1058, %v1057
    %v1224 = vpack.c.b16 %v1060, %v1059
    %v1225 = vpack.c.b16 %v1062, %v1061
    %v1226 = vpack.c.b16 %v1064, %v1063
    %v1227 = vpack.c.b16 %v1066, %v1065
    %v1228 = vpack.c.b16 %v1068, %v1067
    %v1229 = vpack.c.b16 %v1070, %v1069
    %v1230 = vpack.c.b16 %v1072, %v1071
    %v1231 = vpack.c.b16 %v1074, %v1073
    %v1232 = vpack.c.b16 %v1076, %v1075
    %v1233 = vpack.c.b16 %v1078, %v1077
    %v1234 = vpack.c.b16 %v1080, %v1079
    %v1235 = vpack.c.b16 %v1082, %v1081
    %v1236 = vpack.c.b16 %v1084, %v1083
    %v1237 = vpack.c.b16 %v1086, %v1085
    %v1238 = vpack.c.b16 %v1088, %v1087
    %v1239 = vpack.c.b16 %v1090, %v1089
    %v1240 = vpack.c.b16 %v1092, %v1091
    %v1241 = vpack.c.b16 %v1094, %v1093
    %v1242 = vpack.c.b16 %v1096, %v1095
    %v1243 = vpack.c.b16 %v1098, %v1097
    %v1244 = vpack.c.b16 %v1100, %v1099
    %v1245 = vpack.c.b16 %v1102, %v1101
    %v1246 = vpack.c.b16 %v1104, %v1103
    %v1247 = vpack.c.b16 %v1106, %v1105
    %v1248 = vpack.c.b16 %v1108, %v1107
    %v1249 = vpack.c.b16 %v1110, %v1109
    %v1250 = vpack.c.b16 %v1112, %v1111
    %v1251 = vpack.c.b16 %v1114, %v1113
    %v1252 = vpack.c.b16 %v1116, %v1115
    %v1253 = vpack.c.b16 %v1118, %v1117
    %v1254 = vpack.c.b16 %v1120, %v1119
    %v1255 = vpack.c.b16 %v1122, %v1121
    %v1256 = vpack.c.b16 %v1124, %v1123
    %v1257 = vpack.c.b16 %v1126, %v1125
    %v1258 = vpack.c.b16 %v1128, %v1127
    %v1259 = vpack.c.b16 %v1130, %v1129
    %v1260 = vpack.c.b16 %v1132, %v1131
    %v1265 = vunpack.c.l.b16 %v617
    %v1266 = vunpack.c.l.b16 %v618
    %v1267 = vunpack.c.l.b16 %v619
    %v1268 = vunpack.c.l.b16 %v620
    %v1269 = vpack.c.b16 %v1266, %v1265
    %v1270 = vpack.c.b16 %v1268, %v1267
    %vm1273 = vcmask 261120
    %v1275 = vsel %vm1273, %v1133, 0
    %v1278 = vsel %vm1273, %v1134, 0
    %v1281 = vsel %vm1273, %v1135, 0
    %v1284 = vsel %vm1273, %v1136, 0
    %v1287 = vsel %vm1273, %v1137, 0
    %v1290 = vsel %vm1273, %v1138, 0
    %v1293 = vsel %vm1273, %v1139, 0
    %v1296 = vsel %vm1273, %v1140, 0
    %v1299 = vsel %vm1273, %v1141, 0
    %v1302 = vsel %vm1273, %v1142, 0
    %v1305 = vsel %vm1273, %v1143, 0
    %v1308 = vsel %vm1273, %v1144, 0
    %v1311 = vsel %vm1273, %v1145, 0
    %v1314 = vsel %vm1273, %v1146, 0
    %v1317 = vsel %vm1273, %v1147, 0
    %v1320 = vsel %vm1273, %v1148, 0
    %v1323 = vsel %vm1273, %v1149, 0
    %v1326 = vsel %vm1273, %v1150, 0
    %v1329 = vsel %vm1273, %v1151, 0
    %v1332 = vsel %vm1273, %v1152, 0
    %v1335 = vsel %vm1273, %v1153, 0
    %v1338 = vsel %vm1273, %v1154, 0
    %v1341 = vsel %vm1273, %v1155, 0
    %v1344 = vsel %vm1273, %v1156, 0
    %v1347 = vsel %vm1273, %v1157, 0
    %v1350 = vsel %vm1273, %v1158, 0
    %v1353 = vsel %vm1273, %v1159, 0
    %v1356 = vsel %vm1273, %v1160, 0
    %v1359 = vsel %vm1273, %v1161, 0
    %v1362 = vsel %vm1273, %v1162, 0
    %v1365 = vsel %vm1273, %v1163, 0
    %v1368 = vsel %vm1273, %v1164, 0
    %v1371 = vsel %vm1273, %v1165, 0
    %v1374 = vsel %vm1273, %v1166, 0
    %v1377 = vsel %vm1273, %v1167, 0
    %v1380 = vsel %vm1273, %v1168, 0
    %v1383 = vsel %vm1273, %v1169, 0
    %v1386 = vsel %vm1273, %v1170, 0
    %v1389 = vsel %vm1273, %v1171, 0
    %v1392 = vsel %vm1273, %v1172, 0
    %v1395 = vsel %vm1273, %v1173, 0
    %v1398 = vsel %vm1273, %v1174, 0
    %v1401 = vsel %vm1273, %v1175, 0
    %v1404 = vsel %vm1273, %v1176, 0
    %v1407 = vsel %vm1273, %v1177, 0
    %v1410 = vsel %vm1273, %v1178, 0
    %v1413 = vsel %vm1273, %v1179, 0
    %v1416 = vsel %vm1273, %v1180, 0
    %v1419 = vsel %vm1273, %v1181, 0
    %v1422 = vsel %vm1273, %v1182, 0
    %v1425 = vsel %vm1273, %v1183, 0
    %v1428 = vsel %vm1273, %v1184, 0
    %v1431 = vsel %vm1273, %v1185, 0
    %v1434 = vsel %vm1273, %v1186, 0
    %v1437 = vsel %vm1273, %v1187, 0
    %v1440 = vsel %vm1273, %v1188, 0
    %v1443 = vsel %vm1273, %v1189, 0
    %v1446 = vsel %vm1273, %v1190, 0
    %v1449 = vsel %vm1273, %v1191, 0
    %v1452 = vsel %vm1273, %v1192, 0
    %v1455 = vsel %vm1273, %v1193, 0
    %v1458 = vsel %vm1273, %v1194, 0
    %v1461 = vsel %vm1273, %v1195, 0
    %v1464 = vsel %vm1273, %v1196, 0
    %v1467 = vsel %vm1273, %v1197, 0
    %v1470 = vsel %vm1273, %v1198, 0
    %v1473 = vsel %vm1273, %v1199, 0
    %v1476 = vsel %vm1273, %v1200, 0
    %v1479 = vsel %vm1273, %v1201, 0
    %v1482 = vsel %vm1273, %v1202, 0
    %v1485 = vsel %vm1273, %v1203, 0
    %v1488 = vsel %vm1273, %v1204, 0
    %v1491 = vsel %vm1273, %v1205, 0
    %v1494 = vsel %vm1273, %v1206, 0
    %v1497 = vsel %vm1273, %v1207, 0
    %v1500 = vsel %vm1273, %v1208, 0
    %v1503 = vsel %vm1273, %v1209, 0
    %v1506 = vsel %vm1273, %v1210, 0
    %v1509 = vsel %vm1273, %v1211, 0
    %v1512 = vsel %vm1273, %v1212, 0
    %v1515 = vsel %vm1273, %v1213, 0
    %v1518 = vsel %vm1273, %v1214, 0
    %v1521 = vsel %vm1273, %v1215, 0
    %v1524 = vsel %vm1273, %v1216, 0
    %v1527 = vsel %vm1273, %v1217, 0
    %v1530 = vsel %vm1273, %v1218, 0
    %v1533 = vsel %vm1273, %v1219, 0
    %v1536 = vsel %vm1273, %v1220, 0
    %v1539 = vsel %vm1273, %v1221, 0
    %v1542 = vsel %vm1273, %v1222, 0
    %v1545 = vsel %vm1273, %v1223, 0
    %v1548 = vsel %vm1273, %v1224, 0
    %v1551 = vsel %vm1273, %v1225, 0
    %v1554 = vsel %vm1273, %v1226, 0
    %v1557 = vsel %vm1273, %v1227, 0
    %v1560 = vsel %vm1273, %v1228, 0
    %v1563 = vsel %vm1273, %v1229, 0
    %v1566 = vsel %vm1273, %v1230, 0
    %v1569 = vsel %vm1273, %v1231, 0
    %v1572 = vsel %vm1273, %v1232, 0
    %v1575 = vsel %vm1273, %v1233, 0
    %v1578 = vsel %vm1273, %v1234, 0
    %v1581 = vsel %vm1273, %v1235, 0
    %v1584 = vsel %vm1273, %v1236, 0
    %v1587 = vsel %vm1273, %v1237, 0
    %v1590 = vsel %vm1273, %v1238, 0
    %v1593 = vsel %vm1273, %v1239, 0
    %v1596 = vsel %vm1273, %v1240, 0
    %v1599 = vsel %vm1273, %v1241, 0
    %v1602 = vsel %vm1273, %v1242, 0
    %v1605 = vsel %vm1273, %v1243, 0
    %v1608 = vsel %vm1273, %v1244, 0
    %v1611 = vsel %vm1273, %v1245, 0
    %v1614 = vsel %vm1273, %v1246, 0
    %v1617 = vsel %vm1273, %v1247, 0
    %v1620 = vsel %vm1273, %v1248, 0
    %v1623 = vsel %vm1273, %v1249, 0
    %v1626 = vsel %vm1273, %v1250, 0
    %v1629 = vsel %vm1273, %v1251, 0
    %v1632 = vsel %vm1273, %v1252, 0
    %v1635 = vsel %vm1273, %v1253, 0
    %v1638 = vsel %vm1273, %v1254, 0
    %v1641 = vsel %vm1273, %v1255, 0
    %v1644 = vsel %vm1273, %v1256, 0
    %v1647 = vsel %vm1273, %v1257, 0
    %v1650 = vsel %vm1273, %v1258, 0
    %v1653 = vsel %vm1273, %v1259, 0
    %v1656 = vsel %vm1273, %v1260, 0
    %1658 = vmatprep.subr.bf16.mxu0 0
    %1659 = vmatpush1.bf16.msra.mxu0 0
    %1660 = vmatprep.subr.bf16.mxu0 0
    %1661 = vmatpush1.bf16.msra.mxu0 0
    %1662 = vmatprep.subr.bf16.mxu0 0
    %1663 = vmatpush1.bf16.msra.mxu0 0
    %1664 = vmatprep.subr.bf16.mxu0 0
    %1665 = vmatpush1.bf16.msra.mxu0 0
    %1666 = vmatprep.subr.bf16.mxu0 0
    %1667 = vmatpush1.bf16.msra.mxu0 0
    %1668 = vmatprep.subr.bf16.mxu0 0
    %1669 = vmatpush1.bf16.msra.mxu0 0
    %1670 = vmatprep.subr.bf16.mxu0 0
    %1671 = vmatpush1.bf16.msra.mxu0 %v1270
    %1672 = vmatprep.subr.bf16.mxu0 0
    %1673 = vmatpush1.bf16.msra.mxu0 %v1269
    %1674 = vmatprep.subr.bf16.mxu0 0
    %1675 = vmatpush2.bf16.msra.mxu0 0
    %1676 = vmatprep.subr.bf16.mxu0 0
    %1677 = vmatpush2.bf16.msra.mxu0 0
    %1678 = vmatprep.subr.bf16.mxu0 0
    %1679 = vmatpush2.bf16.msra.mxu0 0
    %1680 = vmatprep.subr.bf16.mxu0 0
    %1681 = vmatpush2.bf16.msra.mxu0 0
    %1682 = vmatprep.subr.bf16.mxu0 0
    %1683 = vmatpush2.bf16.msra.mxu0 0
    %1684 = vmatprep.subr.bf16.mxu0 0
    %1685 = vmatpush2.bf16.msra.mxu0 0
    %1686 = vmatprep.subr.bf16.mxu0 0
    %1687 = vmatpush2.bf16.msra.mxu0 0
    %1688 = vmatprep.subr.bf16.mxu0 0
    %1689 = vmatpush2.bf16.msra.mxu0 0
    %1690 = vmatprep.mubr.bf16.mxu0 0
    %1691 = vmatmul.mubr.bf16.gmra.mxu0 %v1275
    %v1692 = vpop.f32.mrf.mxu0
    %v1693 = vadd.f32 0.0, %v1692
    %v1694 = vpop.f32.mrf.mxu0
    %v1695 = vpop.f32.mrf.mxu0
    %v1696 = vadd.f32 0.0, %v1695
    %v1697 = vpop.f32.mrf.mxu0
    %1698 = vmatprep.mubr.bf16.mxu0 0
    %1699 = vmatmul.mubr.bf16.gmra.mxu0 %v1278
    %v1700 = vpop.f32.mrf.mxu0
    %v1701 = vadd.f32 0.0, %v1700
    %v1702 = vpop.f32.mrf.mxu0
    %v1703 = vpop.f32.mrf.mxu0
    %v1704 = vadd.f32 0.0, %v1703
    %v1705 = vpop.f32.mrf.mxu0
    %1706 = vmatprep.mubr.bf16.mxu0 0
    %1707 = vmatmul.mubr.bf16.gmra.mxu0 %v1281
    %v1708 = vpop.f32.mrf.mxu0
    %v1709 = vadd.f32 0.0, %v1708
    %v1710 = vpop.f32.mrf.mxu0
    %v1711 = vpop.f32.mrf.mxu0
    %v1712 = vadd.f32 0.0, %v1711
    %v1713 = vpop.f32.mrf.mxu0
    %1714 = vmatprep.mubr.bf16.mxu0 0
    %1715 = vmatmul.mubr.bf16.gmra.mxu0 %v1284
    %v1716 = vpop.f32.mrf.mxu0
    %v1717 = vadd.f32 0.0, %v1716
    %v1718 = vpop.f32.mrf.mxu0
    %v1719 = vpop.f32.mrf.mxu0
    %v1720 = vadd.f32 0.0, %v1719
    %v1721 = vpop.f32.mrf.mxu0
    %1722 = vmatprep.mubr.bf16.mxu0 0
    %1723 = vmatmul.mubr.bf16.gmra.mxu0 %v1287
    %v1724 = vpop.f32.mrf.mxu0
    %v1725 = vadd.f32 0.0, %v1724
    %v1726 = vpop.f32.mrf.mxu0
    %v1727 = vpop.f32.mrf.mxu0
    %v1728 = vadd.f32 0.0, %v1727
    %v1729 = vpop.f32.mrf.mxu0
    %1730 = vmatprep.mubr.bf16.mxu0 0
    %1731 = vmatmul.mubr.bf16.gmra.mxu0 %v1290
    %v1732 = vpop.f32.mrf.mxu0
    %v1733 = vadd.f32 0.0, %v1732
    %v1734 = vpop.f32.mrf.mxu0
    %v1735 = vpop.f32.mrf.mxu0
    %v1736 = vadd.f32 0.0, %v1735
    %v1737 = vpop.f32.mrf.mxu0
    %1738 = vmatprep.mubr.bf16.mxu0 0
    %1739 = vmatmul.mubr.bf16.gmra.mxu0 %v1293
    %v1740 = vpop.f32.mrf.mxu0
    %v1741 = vadd.f32 0.0, %v1740
    %v1742 = vpop.f32.mrf.mxu0
    %v1743 = vpop.f32.mrf.mxu0
    %v1744 = vadd.f32 0.0, %v1743
    %v1745 = vpop.f32.mrf.mxu0
    %1746 = vmatprep.mubr.bf16.mxu0 0
    %1747 = vmatmul.mubr.bf16.gmra.mxu0 %v1296
    %v1748 = vpop.f32.mrf.mxu0
    %v1749 = vadd.f32 0.0, %v1748
    %v1750 = vpop.f32.mrf.mxu0
    %v1751 = vpop.f32.mrf.mxu0
    %v1752 = vadd.f32 0.0, %v1751
    %v1753 = vpop.f32.mrf.mxu0
    %1754 = vmatprep.mubr.bf16.mxu0 0
    %1755 = vmatmul.mubr.bf16.gmra.mxu0 %v1299
    %v1756 = vpop.f32.mrf.mxu0
    %v1757 = vadd.f32 0.0, %v1756
    %v1758 = vpop.f32.mrf.mxu0
    %v1759 = vpop.f32.mrf.mxu0
    %v1760 = vadd.f32 0.0, %v1759
    %v1761 = vpop.f32.mrf.mxu0
    %1762 = vmatprep.mubr.bf16.mxu0 0
    %1763 = vmatmul.mubr.bf16.gmra.mxu0 %v1302
    %v1764 = vpop.f32.mrf.mxu0
    %v1765 = vadd.f32 0.0, %v1764
    %v1766 = vpop.f32.mrf.mxu0
    %v1767 = vpop.f32.mrf.mxu0
    %v1768 = vadd.f32 0.0, %v1767
    %v1769 = vpop.f32.mrf.mxu0
    %1770 = vmatprep.mubr.bf16.mxu0 0
    %1771 = vmatmul.mubr.bf16.gmra.mxu0 %v1305
    %v1772 = vpop.f32.mrf.mxu0
    %v1773 = vadd.f32 0.0, %v1772
    %v1774 = vpop.f32.mrf.mxu0
    %v1775 = vpop.f32.mrf.mxu0
    %v1776 = vadd.f32 0.0, %v1775
    %v1777 = vpop.f32.mrf.mxu0
    %1778 = vmatprep.mubr.bf16.mxu0 0
    %1779 = vmatmul.mubr.bf16.gmra.mxu0 %v1308
    %v1780 = vpop.f32.mrf.mxu0
    %v1781 = vadd.f32 0.0, %v1780
    %v1782 = vpop.f32.mrf.mxu0
    %v1783 = vpop.f32.mrf.mxu0
    %v1784 = vadd.f32 0.0, %v1783
    %v1785 = vpop.f32.mrf.mxu0
    %1786 = vmatprep.mubr.bf16.mxu0 0
    %1787 = vmatmul.mubr.bf16.gmra.mxu0 %v1311
    %v1788 = vpop.f32.mrf.mxu0
    %v1789 = vadd.f32 0.0, %v1788
    %v1790 = vpop.f32.mrf.mxu0
    %v1791 = vpop.f32.mrf.mxu0
    %v1792 = vadd.f32 0.0, %v1791
    %v1793 = vpop.f32.mrf.mxu0
    %1794 = vmatprep.mubr.bf16.mxu0 0
    %1795 = vmatmul.mubr.bf16.gmra.mxu0 %v1314
    %v1796 = vpop.f32.mrf.mxu0
    %v1797 = vadd.f32 0.0, %v1796
    %v1798 = vpop.f32.mrf.mxu0
    %v1799 = vpop.f32.mrf.mxu0
    %v1800 = vadd.f32 0.0, %v1799
    %v1801 = vpop.f32.mrf.mxu0
    %1802 = vmatprep.mubr.bf16.mxu0 0
    %1803 = vmatmul.mubr.bf16.gmra.mxu0 %v1317
    %v1804 = vpop.f32.mrf.mxu0
    %v1805 = vadd.f32 0.0, %v1804
    %v1806 = vpop.f32.mrf.mxu0
    %v1807 = vpop.f32.mrf.mxu0
    %v1808 = vadd.f32 0.0, %v1807
    %v1809 = vpop.f32.mrf.mxu0
    %1810 = vmatprep.mubr.bf16.mxu0 0
    %1811 = vmatmul.mubr.bf16.gmra.mxu0 %v1320
    %v1812 = vpop.f32.mrf.mxu0
    %v1813 = vadd.f32 0.0, %v1812
    %v1814 = vpop.f32.mrf.mxu0
    %v1815 = vpop.f32.mrf.mxu0
    %v1816 = vadd.f32 0.0, %v1815
    %v1817 = vpop.f32.mrf.mxu0
    %1818 = vmatprep.mubr.bf16.mxu0 0
    %1819 = vmatmul.mubr.bf16.gmra.mxu0 %v1323
    %v1820 = vpop.f32.mrf.mxu0
    %v1821 = vadd.f32 0.0, %v1820
    %v1822 = vpop.f32.mrf.mxu0
    %v1823 = vpop.f32.mrf.mxu0
    %v1824 = vadd.f32 0.0, %v1823
    %v1825 = vpop.f32.mrf.mxu0
    %1826 = vmatprep.mubr.bf16.mxu0 0
    %1827 = vmatmul.mubr.bf16.gmra.mxu0 %v1326
    %v1828 = vpop.f32.mrf.mxu0
    %v1829 = vadd.f32 0.0, %v1828
    %v1830 = vpop.f32.mrf.mxu0
    %v1831 = vpop.f32.mrf.mxu0
    %v1832 = vadd.f32 0.0, %v1831
    %v1833 = vpop.f32.mrf.mxu0
    %1834 = vmatprep.mubr.bf16.mxu0 0
    %1835 = vmatmul.mubr.bf16.gmra.mxu0 %v1329
    %v1836 = vpop.f32.mrf.mxu0
    %v1837 = vadd.f32 0.0, %v1836
    %v1838 = vpop.f32.mrf.mxu0
    %v1839 = vpop.f32.mrf.mxu0
    %v1840 = vadd.f32 0.0, %v1839
    %v1841 = vpop.f32.mrf.mxu0
    %1842 = vmatprep.mubr.bf16.mxu0 0
    %1843 = vmatmul.mubr.bf16.gmra.mxu0 %v1332
    %v1844 = vpop.f32.mrf.mxu0
    %v1845 = vadd.f32 0.0, %v1844
    %v1846 = vpop.f32.mrf.mxu0
    %v1847 = vpop.f32.mrf.mxu0
    %v1848 = vadd.f32 0.0, %v1847
    %v1849 = vpop.f32.mrf.mxu0
    %1850 = vmatprep.mubr.bf16.mxu0 0
    %1851 = vmatmul.mubr.bf16.gmra.mxu0 %v1335
    %v1852 = vpop.f32.mrf.mxu0
    %v1853 = vadd.f32 0.0, %v1852
    %v1854 = vpop.f32.mrf.mxu0
    %v1855 = vpop.f32.mrf.mxu0
    %v1856 = vadd.f32 0.0, %v1855
    %v1857 = vpop.f32.mrf.mxu0
    %1858 = vmatprep.mubr.bf16.mxu0 0
    %1859 = vmatmul.mubr.bf16.gmra.mxu0 %v1338
    %v1860 = vpop.f32.mrf.mxu0
    %v1861 = vadd.f32 0.0, %v1860
    %v1862 = vpop.f32.mrf.mxu0
    %v1863 = vpop.f32.mrf.mxu0
    %v1864 = vadd.f32 0.0, %v1863
    %v1865 = vpop.f32.mrf.mxu0
    %1866 = vmatprep.mubr.bf16.mxu0 0
    %1867 = vmatmul.mubr.bf16.gmra.mxu0 %v1341
    %v1868 = vpop.f32.mrf.mxu0
    %v1869 = vadd.f32 0.0, %v1868
    %v1870 = vpop.f32.mrf.mxu0
    %v1871 = vpop.f32.mrf.mxu0
    %v1872 = vadd.f32 0.0, %v1871
    %v1873 = vpop.f32.mrf.mxu0
    %1874 = vmatprep.mubr.bf16.mxu0 0
    %1875 = vmatmul.mubr.bf16.gmra.mxu0 %v1344
    %v1876 = vpop.f32.mrf.mxu0
    %v1877 = vadd.f32 0.0, %v1876
    %v1878 = vpop.f32.mrf.mxu0
    %v1879 = vpop.f32.mrf.mxu0
    %v1880 = vadd.f32 0.0, %v1879
    %v1881 = vpop.f32.mrf.mxu0
    %1882 = vmatprep.mubr.bf16.mxu0 0
    %1883 = vmatmul.mubr.bf16.gmra.mxu0 %v1347
    %v1884 = vpop.f32.mrf.mxu0
    %v1885 = vadd.f32 0.0, %v1884
    %v1886 = vpop.f32.mrf.mxu0
    %v1887 = vpop.f32.mrf.mxu0
    %v1888 = vadd.f32 0.0, %v1887
    %v1889 = vpop.f32.mrf.mxu0
    %1890 = vmatprep.mubr.bf16.mxu0 0
    %1891 = vmatmul.mubr.bf16.gmra.mxu0 %v1350
    %v1892 = vpop.f32.mrf.mxu0
    %v1893 = vadd.f32 0.0, %v1892
    %v1894 = vpop.f32.mrf.mxu0
    %v1895 = vpop.f32.mrf.mxu0
    %v1896 = vadd.f32 0.0, %v1895
    %v1897 = vpop.f32.mrf.mxu0
    %1898 = vmatprep.mubr.bf16.mxu0 0
    %1899 = vmatmul.mubr.bf16.gmra.mxu0 %v1353
    %v1900 = vpop.f32.mrf.mxu0
    %v1901 = vadd.f32 0.0, %v1900
    %v1902 = vpop.f32.mrf.mxu0
    %v1903 = vpop.f32.mrf.mxu0
    %v1904 = vadd.f32 0.0, %v1903
    %v1905 = vpop.f32.mrf.mxu0
    %1906 = vmatprep.mubr.bf16.mxu0 0
    %1907 = vmatmul.mubr.bf16.gmra.mxu0 %v1356
    %v1908 = vpop.f32.mrf.mxu0
    %v1909 = vpop.f32.mrf.mxu0
    %v1910 = vpop.f32.mrf.mxu0
    %v1911 = vpop.f32.mrf.mxu0
    %1912 = vmatprep.mubr.bf16.mxu0 0
    %1913 = vmatmul.mubr.bf16.gmra.mxu0 %v1359
    %v1914 = vpop.f32.mrf.mxu0
    %v1915 = vpop.f32.mrf.mxu0
    %v1916 = vpop.f32.mrf.mxu0
    %v1917 = vpop.f32.mrf.mxu0
    %1918 = vmatprep.mubr.bf16.mxu0 0
    %1919 = vmatmul.mubr.bf16.gmra.mxu0 %v1362
    %v1920 = vpop.f32.mrf.mxu0
    %v1921 = vpop.f32.mrf.mxu0
    %v1922 = vpop.f32.mrf.mxu0
    %v1923 = vpop.f32.mrf.mxu0
    %1924 = vmatprep.mubr.bf16.mxu0 0
    %1925 = vmatmul.mubr.bf16.gmra.mxu0 %v1365
    %v1926 = vpop.f32.mrf.mxu0
    %v1927 = vpop.f32.mrf.mxu0
    %v1928 = vpop.f32.mrf.mxu0
    %v1929 = vpop.f32.mrf.mxu0
    %1930 = vmatprep.mubr.bf16.mxu0 0
    %1931 = vmatmul.mubr.bf16.gmra.mxu0 %v1368
    %v1932 = vpop.f32.mrf.mxu0
    %v1933 = vpop.f32.mrf.mxu0
    %v1934 = vpop.f32.mrf.mxu0
    %v1935 = vpop.f32.mrf.mxu0
    %1936 = vmatprep.mubr.bf16.mxu0 0
    %1937 = vmatmul.mubr.bf16.gmra.mxu0 %v1371
    %v1938 = vpop.f32.mrf.mxu0
    %v1939 = vadd.f32 0.0, %v1938
    %v1940 = vpop.f32.mrf.mxu0
    %v1941 = vpop.f32.mrf.mxu0
    %v1942 = vadd.f32 0.0, %v1941
    %v1943 = vpop.f32.mrf.mxu0
    %1944 = vmatprep.mubr.bf16.mxu0 0
    %1945 = vmatmul.mubr.bf16.gmra.mxu0 %v1374
    %v1946 = vpop.f32.mrf.mxu0
    %v1947 = vadd.f32 0.0, %v1946
    %v1948 = vpop.f32.mrf.mxu0
    %v1949 = vpop.f32.mrf.mxu0
    %v1950 = vadd.f32 0.0, %v1949
    %v1951 = vpop.f32.mrf.mxu0
    %1952 = vmatprep.mubr.bf16.mxu0 0
    %1953 = vmatmul.mubr.bf16.gmra.mxu0 %v1377
    %v1954 = vpop.f32.mrf.mxu0
    %v1955 = vadd.f32 0.0, %v1954
    %v1956 = vpop.f32.mrf.mxu0
    %v1957 = vpop.f32.mrf.mxu0
    %v1958 = vadd.f32 0.0, %v1957
    %v1959 = vpop.f32.mrf.mxu0
    %1960 = vmatprep.mubr.bf16.mxu0 0
    %1961 = vmatmul.mubr.bf16.gmra.mxu0 %v1380
    %v1962 = vpop.f32.mrf.mxu0
    %v1963 = vadd.f32 0.0, %v1962
    %v1964 = vpop.f32.mrf.mxu0
    %v1965 = vpop.f32.mrf.mxu0
    %v1966 = vadd.f32 0.0, %v1965
    %v1967 = vpop.f32.mrf.mxu0
    %1968 = vmatprep.mubr.bf16.mxu0 0
    %1969 = vmatmul.mubr.bf16.gmra.mxu0 %v1383
    %v1970 = vpop.f32.mrf.mxu0
    %v1971 = vadd.f32 0.0, %v1970
    %v1972 = vpop.f32.mrf.mxu0
    %v1973 = vpop.f32.mrf.mxu0
    %v1974 = vadd.f32 0.0, %v1973
    %v1975 = vpop.f32.mrf.mxu0
    %1976 = vmatprep.mubr.bf16.mxu0 0
    %1977 = vmatmul.mubr.bf16.gmra.mxu0 %v1386
    %v1978 = vpop.f32.mrf.mxu0
    %v1979 = vadd.f32 0.0, %v1978
    %v1980 = vpop.f32.mrf.mxu0
    %v1981 = vpop.f32.mrf.mxu0
    %v1982 = vadd.f32 0.0, %v1981
    %v1983 = vpop.f32.mrf.mxu0
    %1984 = vmatprep.mubr.bf16.mxu0 0
    %1985 = vmatmul.mubr.bf16.gmra.mxu0 %v1389
    %v1986 = vpop.f32.mrf.mxu0
    %v1987 = vadd.f32 0.0, %v1986
    %v1988 = vpop.f32.mrf.mxu0
    %v1989 = vpop.f32.mrf.mxu0
    %v1990 = vadd.f32 0.0, %v1989
    %v1991 = vpop.f32.mrf.mxu0
    %1992 = vmatprep.mubr.bf16.mxu0 0
    %1993 = vmatmul.mubr.bf16.gmra.mxu0 %v1392
    %v1994 = vpop.f32.mrf.mxu0
    %v1995 = vadd.f32 0.0, %v1994
    %v1996 = vpop.f32.mrf.mxu0
    %v1997 = vpop.f32.mrf.mxu0
    %v1998 = vadd.f32 0.0, %v1997
    %v1999 = vpop.f32.mrf.mxu0
    %2000 = vmatprep.mubr.bf16.mxu0 0
    %2001 = vmatmul.mubr.bf16.gmra.mxu0 %v1395
    %v2002 = vpop.f32.mrf.mxu0
    %v2003 = vadd.f32 0.0, %v2002
    %v2004 = vpop.f32.mrf.mxu0
    %v2005 = vpop.f32.mrf.mxu0
    %v2006 = vadd.f32 0.0, %v2005
    %v2007 = vpop.f32.mrf.mxu0
    %2008 = vmatprep.mubr.bf16.mxu0 0
    %2009 = vmatmul.mubr.bf16.gmra.mxu0 %v1398
    %v2010 = vpop.f32.mrf.mxu0
    %v2011 = vadd.f32 0.0, %v2010
    %v2012 = vpop.f32.mrf.mxu0
    %v2013 = vpop.f32.mrf.mxu0
    %v2014 = vadd.f32 0.0, %v2013
    %v2015 = vpop.f32.mrf.mxu0
    %2016 = vmatprep.mubr.bf16.mxu0 0
    %2017 = vmatmul.mubr.bf16.gmra.mxu0 %v1401
    %v2018 = vpop.f32.mrf.mxu0
    %v2019 = vadd.f32 0.0, %v2018
    %v2020 = vpop.f32.mrf.mxu0
    %v2021 = vpop.f32.mrf.mxu0
    %v2022 = vadd.f32 0.0, %v2021
    %v2023 = vpop.f32.mrf.mxu0
    %2024 = vmatprep.mubr.bf16.mxu0 0
    %2025 = vmatmul.mubr.bf16.gmra.mxu0 %v1404
    %v2026 = vpop.f32.mrf.mxu0
    %v2027 = vadd.f32 0.0, %v2026
    %v2028 = vpop.f32.mrf.mxu0
    %v2029 = vpop.f32.mrf.mxu0
    %v2030 = vadd.f32 0.0, %v2029
    %v2031 = vpop.f32.mrf.mxu0
    %2032 = vmatprep.mubr.bf16.mxu0 0
    %2033 = vmatmul.mubr.bf16.gmra.mxu0 %v1407
    %v2034 = vpop.f32.mrf.mxu0
    %v2035 = vadd.f32 0.0, %v2034
    %v2036 = vpop.f32.mrf.mxu0
    %v2037 = vpop.f32.mrf.mxu0
    %v2038 = vadd.f32 0.0, %v2037
    %v2039 = vpop.f32.mrf.mxu0
    %2040 = vmatprep.mubr.bf16.mxu0 0
    %2041 = vmatmul.mubr.bf16.gmra.mxu0 %v1410
    %v2042 = vpop.f32.mrf.mxu0
    %v2043 = vadd.f32 0.0, %v2042
    %v2044 = vpop.f32.mrf.mxu0
    %v2045 = vpop.f32.mrf.mxu0
    %v2046 = vadd.f32 0.0, %v2045
    %v2047 = vpop.f32.mrf.mxu0
    %2048 = vmatprep.mubr.bf16.mxu0 0
    %2049 = vmatmul.mubr.bf16.gmra.mxu0 %v1413
    %v2050 = vpop.f32.mrf.mxu0
    %v2051 = vadd.f32 0.0, %v2050
    %v2052 = vpop.f32.mrf.mxu0
    %v2053 = vpop.f32.mrf.mxu0
    %v2054 = vadd.f32 0.0, %v2053
    %v2055 = vpop.f32.mrf.mxu0
    %2056 = vmatprep.mubr.bf16.mxu0 0
    %2057 = vmatmul.mubr.bf16.gmra.mxu0 %v1416
    %v2058 = vpop.f32.mrf.mxu0
    %v2059 = vadd.f32 0.0, %v2058
    %v2060 = vpop.f32.mrf.mxu0
    %v2061 = vpop.f32.mrf.mxu0
    %v2062 = vadd.f32 0.0, %v2061
    %v2063 = vpop.f32.mrf.mxu0
    %2064 = vmatprep.mubr.bf16.mxu0 0
    %2065 = vmatmul.mubr.bf16.gmra.mxu0 %v1419
    %v2066 = vpop.f32.mrf.mxu0
    %v2067 = vadd.f32 0.0, %v2066
    %v2068 = vpop.f32.mrf.mxu0
    %v2069 = vpop.f32.mrf.mxu0
    %v2070 = vadd.f32 0.0, %v2069
    %v2071 = vpop.f32.mrf.mxu0
    %2072 = vmatprep.mubr.bf16.mxu0 0
    %2073 = vmatmul.mubr.bf16.gmra.mxu0 %v1422
    %v2074 = vpop.f32.mrf.mxu0
    %v2075 = vadd.f32 0.0, %v2074
    %v2076 = vpop.f32.mrf.mxu0
    %v2077 = vpop.f32.mrf.mxu0
    %v2078 = vadd.f32 0.0, %v2077
    %v2079 = vpop.f32.mrf.mxu0
    %2080 = vmatprep.mubr.bf16.mxu0 0
    %2081 = vmatmul.mubr.bf16.gmra.mxu0 %v1425
    %v2082 = vpop.f32.mrf.mxu0
    %v2083 = vadd.f32 0.0, %v2082
    %v2084 = vpop.f32.mrf.mxu0
    %v2085 = vpop.f32.mrf.mxu0
    %v2086 = vadd.f32 0.0, %v2085
    %v2087 = vpop.f32.mrf.mxu0
    %2088 = vmatprep.mubr.bf16.mxu0 0
    %2089 = vmatmul.mubr.bf16.gmra.mxu0 %v1428
    %v2090 = vpop.f32.mrf.mxu0
    %v2091 = vadd.f32 0.0, %v2090
    %v2092 = vpop.f32.mrf.mxu0
    %v2093 = vpop.f32.mrf.mxu0
    %v2094 = vadd.f32 0.0, %v2093
    %v2095 = vpop.f32.mrf.mxu0
    %2096 = vmatprep.mubr.bf16.mxu0 0
    %2097 = vmatmul.mubr.bf16.gmra.mxu0 %v1431
    %v2098 = vpop.f32.mrf.mxu0
    %v2099 = vadd.f32 0.0, %v2098
    %v2100 = vpop.f32.mrf.mxu0
    %v2101 = vpop.f32.mrf.mxu0
    %v2102 = vadd.f32 0.0, %v2101
    %v2103 = vpop.f32.mrf.mxu0
    %2104 = vmatprep.mubr.bf16.mxu0 0
    %2105 = vmatmul.mubr.bf16.gmra.mxu0 %v1434
    %v2106 = vpop.f32.mrf.mxu0
    %v2107 = vadd.f32 0.0, %v2106
    %v2108 = vpop.f32.mrf.mxu0
    %v2109 = vpop.f32.mrf.mxu0
    %v2110 = vadd.f32 0.0, %v2109
    %v2111 = vpop.f32.mrf.mxu0
    %2112 = vmatprep.mubr.bf16.mxu0 0
    %2113 = vmatmul.mubr.bf16.gmra.mxu0 %v1437
    %v2114 = vpop.f32.mrf.mxu0
    %v2115 = vadd.f32 0.0, %v2114
    %v2116 = vpop.f32.mrf.mxu0
    %v2117 = vpop.f32.mrf.mxu0
    %v2118 = vadd.f32 0.0, %v2117
    %v2119 = vpop.f32.mrf.mxu0
    %2120 = vmatprep.mubr.bf16.mxu0 0
    %2121 = vmatmul.mubr.bf16.gmra.mxu0 %v1440
    %v2122 = vpop.f32.mrf.mxu0
    %v2123 = vadd.f32 0.0, %v2122
    %v2124 = vpop.f32.mrf.mxu0
    %v2125 = vpop.f32.mrf.mxu0
    %v2126 = vadd.f32 0.0, %v2125
    %v2127 = vpop.f32.mrf.mxu0
    %2128 = vmatprep.mubr.bf16.mxu0 0
    %2129 = vmatmul.mubr.bf16.gmra.mxu0 %v1443
    %v2130 = vpop.f32.mrf.mxu0
    %v2131 = vadd.f32 0.0, %v2130
    %v2132 = vpop.f32.mrf.mxu0
    %v2133 = vpop.f32.mrf.mxu0
    %v2134 = vadd.f32 0.0, %v2133
    %v2135 = vpop.f32.mrf.mxu0
    %2136 = vmatprep.mubr.bf16.mxu0 0
    %2137 = vmatmul.mubr.bf16.gmra.mxu0 %v1446
    %v2138 = vpop.f32.mrf.mxu0
    %v2139 = vadd.f32 0.0, %v2138
    %v2140 = vpop.f32.mrf.mxu0
    %v2141 = vpop.f32.mrf.mxu0
    %v2142 = vadd.f32 0.0, %v2141
    %v2143 = vpop.f32.mrf.mxu0
    %2144 = vmatprep.mubr.bf16.mxu0 0
    %2145 = vmatmul.mubr.bf16.gmra.mxu0 %v1449
    %v2146 = vpop.f32.mrf.mxu0
    %v2147 = vadd.f32 0.0, %v2146
    %v2148 = vpop.f32.mrf.mxu0
    %v2149 = vpop.f32.mrf.mxu0
    %v2150 = vadd.f32 0.0, %v2149
    %v2151 = vpop.f32.mrf.mxu0
    %2152 = vmatprep.mubr.bf16.mxu0 0
    %2153 = vmatmul.mubr.bf16.gmra.mxu0 %v1452
    %v2154 = vpop.f32.mrf.mxu0
    %v2155 = vpop.f32.mrf.mxu0
    %v2156 = vpop.f32.mrf.mxu0
    %v2157 = vpop.f32.mrf.mxu0
    %2158 = vmatprep.mubr.bf16.mxu0 0
    %2159 = vmatmul.mubr.bf16.gmra.mxu0 %v1455
    %v2160 = vpop.f32.mrf.mxu0
    %v2161 = vpop.f32.mrf.mxu0
    %v2162 = vpop.f32.mrf.mxu0
    %v2163 = vpop.f32.mrf.mxu0
    %2164 = vmatprep.mubr.bf16.mxu0 0
    %2165 = vmatmul.mubr.bf16.gmra.mxu0 %v1458
    %v2166 = vpop.f32.mrf.mxu0
    %v2167 = vpop.f32.mrf.mxu0
    %v2168 = vpop.f32.mrf.mxu0
    %v2169 = vpop.f32.mrf.mxu0
    %2170 = vmatprep.mubr.bf16.mxu0 0
    %2171 = vmatmul.mubr.bf16.gmra.mxu0 %v1461
    %v2172 = vpop.f32.mrf.mxu0
    %v2173 = vpop.f32.mrf.mxu0
    %v2174 = vpop.f32.mrf.mxu0
    %v2175 = vpop.f32.mrf.mxu0
    %2176 = vmatprep.mubr.bf16.mxu0 0
    %2177 = vmatmul.mubr.bf16.gmra.mxu0 %v1464
    %v2178 = vpop.f32.mrf.mxu0
    %v2179 = vpop.f32.mrf.mxu0
    %v2180 = vpop.f32.mrf.mxu0
    %v2181 = vpop.f32.mrf.mxu0
    %2182 = vmatprep.mubr.bf16.mxu0 0
    %2183 = vmatmul.mubr.bf16.gmra.mxu0 %v1467
    %v2184 = vpop.f32.mrf.mxu0
    %v2185 = vadd.f32 0.0, %v2184
    %v2186 = vpop.f32.mrf.mxu0
    %v2187 = vpop.f32.mrf.mxu0
    %v2188 = vadd.f32 0.0, %v2187
    %v2189 = vpop.f32.mrf.mxu0
    %2190 = vmatprep.mubr.bf16.mxu0 0
    %2191 = vmatmul.mubr.bf16.gmra.mxu0 %v1470
    %v2192 = vpop.f32.mrf.mxu0
    %v2193 = vadd.f32 0.0, %v2192
    %v2194 = vpop.f32.mrf.mxu0
    %v2195 = vpop.f32.mrf.mxu0
    %v2196 = vadd.f32 0.0, %v2195
    %v2197 = vpop.f32.mrf.mxu0
    %2198 = vmatprep.mubr.bf16.mxu0 0
    %2199 = vmatmul.mubr.bf16.gmra.mxu0 %v1473
    %v2200 = vpop.f32.mrf.mxu0
    %v2201 = vadd.f32 0.0, %v2200
    %v2202 = vpop.f32.mrf.mxu0
    %v2203 = vpop.f32.mrf.mxu0
    %v2204 = vadd.f32 0.0, %v2203
    %v2205 = vpop.f32.mrf.mxu0
    %2206 = vmatprep.mubr.bf16.mxu0 0
    %2207 = vmatmul.mubr.bf16.gmra.mxu0 %v1476
    %v2208 = vpop.f32.mrf.mxu0
    %v2209 = vadd.f32 0.0, %v2208
    %v2210 = vpop.f32.mrf.mxu0
    %v2211 = vpop.f32.mrf.mxu0
    %v2212 = vadd.f32 0.0, %v2211
    %v2213 = vpop.f32.mrf.mxu0
    %2214 = vmatprep.mubr.bf16.mxu0 0
    %2215 = vmatmul.mubr.bf16.gmra.mxu0 %v1479
    %v2216 = vpop.f32.mrf.mxu0
    %v2217 = vadd.f32 0.0, %v2216
    %v2218 = vpop.f32.mrf.mxu0
    %v2219 = vpop.f32.mrf.mxu0
    %v2220 = vadd.f32 0.0, %v2219
    %v2221 = vpop.f32.mrf.mxu0
    %2222 = vmatprep.mubr.bf16.mxu0 0
    %2223 = vmatmul.mubr.bf16.gmra.mxu0 %v1482
    %v2224 = vpop.f32.mrf.mxu0
    %v2225 = vadd.f32 0.0, %v2224
    %v2226 = vpop.f32.mrf.mxu0
    %v2227 = vpop.f32.mrf.mxu0
    %v2228 = vadd.f32 0.0, %v2227
    %v2229 = vpop.f32.mrf.mxu0
    %2230 = vmatprep.mubr.bf16.mxu0 0
    %2231 = vmatmul.mubr.bf16.gmra.mxu0 %v1485
    %v2232 = vpop.f32.mrf.mxu0
    %v2233 = vadd.f32 0.0, %v2232
    %v2234 = vpop.f32.mrf.mxu0
    %v2235 = vpop.f32.mrf.mxu0
    %v2236 = vadd.f32 0.0, %v2235
    %v2237 = vpop.f32.mrf.mxu0
    %2238 = vmatprep.mubr.bf16.mxu0 0
    %2239 = vmatmul.mubr.bf16.gmra.mxu0 %v1488
    %v2240 = vpop.f32.mrf.mxu0
    %v2241 = vadd.f32 0.0, %v2240
    %v2242 = vpop.f32.mrf.mxu0
    %v2243 = vpop.f32.mrf.mxu0
    %v2244 = vadd.f32 0.0, %v2243
    %v2245 = vpop.f32.mrf.mxu0
    %2246 = vmatprep.mubr.bf16.mxu0 0
    %2247 = vmatmul.mubr.bf16.gmra.mxu0 %v1491
    %v2248 = vpop.f32.mrf.mxu0
    %v2249 = vadd.f32 0.0, %v2248
    %v2250 = vpop.f32.mrf.mxu0
    %v2251 = vpop.f32.mrf.mxu0
    %v2252 = vadd.f32 0.0, %v2251
    %v2253 = vpop.f32.mrf.mxu0
    %2254 = vmatprep.mubr.bf16.mxu0 0
    %2255 = vmatmul.mubr.bf16.gmra.mxu0 %v1494
    %v2256 = vpop.f32.mrf.mxu0
    %v2257 = vadd.f32 0.0, %v2256
    %v2258 = vpop.f32.mrf.mxu0
    %v2259 = vpop.f32.mrf.mxu0
    %v2260 = vadd.f32 0.0, %v2259
    %v2261 = vpop.f32.mrf.mxu0
    %2262 = vmatprep.mubr.bf16.mxu0 0
    %2263 = vmatmul.mubr.bf16.gmra.mxu0 %v1497
    %v2264 = vpop.f32.mrf.mxu0
    %v2265 = vadd.f32 0.0, %v2264
    %v2266 = vpop.f32.mrf.mxu0
    %v2267 = vpop.f32.mrf.mxu0
    %v2268 = vadd.f32 0.0, %v2267
    %v2269 = vpop.f32.mrf.mxu0
    %2270 = vmatprep.mubr.bf16.mxu0 0
    %2271 = vmatmul.mubr.bf16.gmra.mxu0 %v1500
    %v2272 = vpop.f32.mrf.mxu0
    %v2273 = vadd.f32 0.0, %v2272
    %v2274 = vpop.f32.mrf.mxu0
    %v2275 = vpop.f32.mrf.mxu0
    %v2276 = vadd.f32 0.0, %v2275
    %v2277 = vpop.f32.mrf.mxu0
    %2278 = vmatprep.mubr.bf16.mxu0 0
    %2279 = vmatmul.mubr.bf16.gmra.mxu0 %v1503
    %v2280 = vpop.f32.mrf.mxu0
    %v2281 = vadd.f32 0.0, %v2280
    %v2282 = vpop.f32.mrf.mxu0
    %v2283 = vpop.f32.mrf.mxu0
    %v2284 = vadd.f32 0.0, %v2283
    %v2285 = vpop.f32.mrf.mxu0
    %2286 = vmatprep.mubr.bf16.mxu0 0
    %2287 = vmatmul.mubr.bf16.gmra.mxu0 %v1506
    %v2288 = vpop.f32.mrf.mxu0
    %v2289 = vadd.f32 0.0, %v2288
    %v2290 = vpop.f32.mrf.mxu0
    %v2291 = vpop.f32.mrf.mxu0
    %v2292 = vadd.f32 0.0, %v2291
    %v2293 = vpop.f32.mrf.mxu0
    %2294 = vmatprep.mubr.bf16.mxu0 0
    %2295 = vmatmul.mubr.bf16.gmra.mxu0 %v1509
    %v2296 = vpop.f32.mrf.mxu0
    %v2297 = vadd.f32 0.0, %v2296
    %v2298 = vpop.f32.mrf.mxu0
    %v2299 = vpop.f32.mrf.mxu0
    %v2300 = vadd.f32 0.0, %v2299
    %v2301 = vpop.f32.mrf.mxu0
    %2302 = vmatprep.mubr.bf16.mxu0 0
    %2303 = vmatmul.mubr.bf16.gmra.mxu0 %v1512
    %v2304 = vpop.f32.mrf.mxu0
    %v2305 = vadd.f32 0.0, %v2304
    %v2306 = vpop.f32.mrf.mxu0
    %v2307 = vpop.f32.mrf.mxu0
    %v2308 = vadd.f32 0.0, %v2307
    %v2309 = vpop.f32.mrf.mxu0
    %2310 = vmatprep.mubr.bf16.mxu0 0
    %2311 = vmatmul.mubr.bf16.gmra.mxu0 %v1515
    %v2312 = vpop.f32.mrf.mxu0
    %v2313 = vadd.f32 0.0, %v2312
    %v2314 = vpop.f32.mrf.mxu0
    %v2315 = vpop.f32.mrf.mxu0
    %v2316 = vadd.f32 0.0, %v2315
    %v2317 = vpop.f32.mrf.mxu0
    %2318 = vmatprep.mubr.bf16.mxu0 0
    %2319 = vmatmul.mubr.bf16.gmra.mxu0 %v1518
    %v2320 = vpop.f32.mrf.mxu0
    %v2321 = vadd.f32 0.0, %v2320
    %v2322 = vpop.f32.mrf.mxu0
    %v2323 = vpop.f32.mrf.mxu0
    %v2324 = vadd.f32 0.0, %v2323
    %v2325 = vpop.f32.mrf.mxu0
    %2326 = vmatprep.mubr.bf16.mxu0 0
    %2327 = vmatmul.mubr.bf16.gmra.mxu0 %v1521
    %v2328 = vpop.f32.mrf.mxu0
    %v2329 = vadd.f32 0.0, %v2328
    %v2330 = vpop.f32.mrf.mxu0
    %v2331 = vpop.f32.mrf.mxu0
    %v2332 = vadd.f32 0.0, %v2331
    %v2333 = vpop.f32.mrf.mxu0
    %2334 = vmatprep.mubr.bf16.mxu0 0
    %2335 = vmatmul.mubr.bf16.gmra.mxu0 %v1524
    %v2336 = vpop.f32.mrf.mxu0
    %v2337 = vadd.f32 0.0, %v2336
    %v2338 = vpop.f32.mrf.mxu0
    %v2339 = vpop.f32.mrf.mxu0
    %v2340 = vadd.f32 0.0, %v2339
    %v2341 = vpop.f32.mrf.mxu0
    %2342 = vmatprep.mubr.bf16.mxu0 0
    %2343 = vmatmul.mubr.bf16.gmra.mxu0 %v1527
    %v2344 = vpop.f32.mrf.mxu0
    %v2345 = vadd.f32 0.0, %v2344
    %v2346 = vpop.f32.mrf.mxu0
    %v2347 = vpop.f32.mrf.mxu0
    %v2348 = vadd.f32 0.0, %v2347
    %v2349 = vpop.f32.mrf.mxu0
    %2350 = vmatprep.mubr.bf16.mxu0 0
    %2351 = vmatmul.mubr.bf16.gmra.mxu0 %v1530
    %v2352 = vpop.f32.mrf.mxu0
    %v2353 = vadd.f32 0.0, %v2352
    %v2354 = vpop.f32.mrf.mxu0
    %v2355 = vpop.f32.mrf.mxu0
    %v2356 = vadd.f32 0.0, %v2355
    %v2357 = vpop.f32.mrf.mxu0
    %2358 = vmatprep.mubr.bf16.mxu0 0
    %2359 = vmatmul.mubr.bf16.gmra.mxu0 %v1533
    %v2360 = vpop.f32.mrf.mxu0
    %v2361 = vadd.f32 0.0, %v2360
    %v2362 = vpop.f32.mrf.mxu0
    %v2363 = vpop.f32.mrf.mxu0
    %v2364 = vadd.f32 0.0, %v2363
    %v2365 = vpop.f32.mrf.mxu0
    %2366 = vmatprep.mubr.bf16.mxu0 0
    %2367 = vmatmul.mubr.bf16.gmra.mxu0 %v1536
    %v2368 = vpop.f32.mrf.mxu0
    %v2369 = vadd.f32 0.0, %v2368
    %v2370 = vpop.f32.mrf.mxu0
    %v2371 = vpop.f32.mrf.mxu0
    %v2372 = vadd.f32 0.0, %v2371
    %v2373 = vpop.f32.mrf.mxu0
    %2374 = vmatprep.mubr.bf16.mxu0 0
    %2375 = vmatmul.mubr.bf16.gmra.mxu0 %v1539
    %v2376 = vpop.f32.mrf.mxu0
    %v2377 = vadd.f32 0.0, %v2376
    %v2378 = vpop.f32.mrf.mxu0
    %v2379 = vpop.f32.mrf.mxu0
    %v2380 = vadd.f32 0.0, %v2379
    %v2381 = vpop.f32.mrf.mxu0
    %2382 = vmatprep.mubr.bf16.mxu0 0
    %2383 = vmatmul.mubr.bf16.gmra.mxu0 %v1542
    %v2384 = vpop.f32.mrf.mxu0
    %v2385 = vadd.f32 0.0, %v2384
    %v2386 = vpop.f32.mrf.mxu0
    %v2387 = vpop.f32.mrf.mxu0
    %v2388 = vadd.f32 0.0, %v2387
    %v2389 = vpop.f32.mrf.mxu0
    %2390 = vmatprep.mubr.bf16.mxu0 0
    %2391 = vmatmul.mubr.bf16.gmra.mxu0 %v1545
    %v2392 = vpop.f32.mrf.mxu0
    %v2393 = vadd.f32 0.0, %v2392
    %v2394 = vpop.f32.mrf.mxu0
    %v2395 = vpop.f32.mrf.mxu0
    %v2396 = vadd.f32 0.0, %v2395
    %v2397 = vpop.f32.mrf.mxu0
    %2398 = vmatprep.mubr.bf16.mxu0 0
    %2399 = vmatmul.mubr.bf16.gmra.mxu0 %v1548
    %v2400 = vpop.f32.mrf.mxu0
    %v2401 = vpop.f32.mrf.mxu0
    %v2402 = vpop.f32.mrf.mxu0
    %v2403 = vpop.f32.mrf.mxu0
    %2404 = vmatprep.mubr.bf16.mxu0 0
    %2405 = vmatmul.mubr.bf16.gmra.mxu0 %v1551
    %v2406 = vpop.f32.mrf.mxu0
    %v2407 = vpop.f32.mrf.mxu0
    %v2408 = vpop.f32.mrf.mxu0
    %v2409 = vpop.f32.mrf.mxu0
    %2410 = vmatprep.mubr.bf16.mxu0 0
    %2411 = vmatmul.mubr.bf16.gmra.mxu0 %v1554
    %v2412 = vpop.f32.mrf.mxu0
    %v2413 = vpop.f32.mrf.mxu0
    %v2414 = vpop.f32.mrf.mxu0
    %v2415 = vpop.f32.mrf.mxu0
    %2416 = vmatprep.mubr.bf16.mxu0 0
    %2417 = vmatmul.mubr.bf16.gmra.mxu0 %v1557
    %v2418 = vpop.f32.mrf.mxu0
    %v2419 = vpop.f32.mrf.mxu0
    %v2420 = vpop.f32.mrf.mxu0
    %v2421 = vpop.f32.mrf.mxu0
    %2422 = vmatprep.mubr.bf16.mxu0 0
    %2423 = vmatmul.mubr.bf16.gmra.mxu0 %v1560
    %v2424 = vpop.f32.mrf.mxu0
    %v2425 = vpop.f32.mrf.mxu0
    %v2426 = vpop.f32.mrf.mxu0
    %v2427 = vpop.f32.mrf.mxu0
    %2428 = vmatprep.mubr.bf16.mxu0 0
    %2429 = vmatmul.mubr.bf16.gmra.mxu0 %v1563
    %v2430 = vpop.f32.mrf.mxu0
    %v2431 = vadd.f32 0.0, %v2430
    %v2432 = vpop.f32.mrf.mxu0
    %v2433 = vpop.f32.mrf.mxu0
    %v2434 = vadd.f32 0.0, %v2433
    %v2435 = vpop.f32.mrf.mxu0
    %2436 = vmatprep.mubr.bf16.mxu0 0
    %2437 = vmatmul.mubr.bf16.gmra.mxu0 %v1566
    %v2438 = vpop.f32.mrf.mxu0
    %v2439 = vadd.f32 0.0, %v2438
    %v2440 = vpop.f32.mrf.mxu0
    %v2441 = vpop.f32.mrf.mxu0
    %v2442 = vadd.f32 0.0, %v2441
    %v2443 = vpop.f32.mrf.mxu0
    %2444 = vmatprep.mubr.bf16.mxu0 0
    %2445 = vmatmul.mubr.bf16.gmra.mxu0 %v1569
    %v2446 = vpop.f32.mrf.mxu0
    %v2447 = vadd.f32 0.0, %v2446
    %v2448 = vpop.f32.mrf.mxu0
    %v2449 = vpop.f32.mrf.mxu0
    %v2450 = vadd.f32 0.0, %v2449
    %v2451 = vpop.f32.mrf.mxu0
    %2452 = vmatprep.mubr.bf16.mxu0 0
    %2453 = vmatmul.mubr.bf16.gmra.mxu0 %v1572
    %v2454 = vpop.f32.mrf.mxu0
    %v2455 = vadd.f32 0.0, %v2454
    %v2456 = vpop.f32.mrf.mxu0
    %v2457 = vpop.f32.mrf.mxu0
    %v2458 = vadd.f32 0.0, %v2457
    %v2459 = vpop.f32.mrf.mxu0
    %2460 = vmatprep.mubr.bf16.mxu0 0
    %2461 = vmatmul.mubr.bf16.gmra.mxu0 %v1575
    %v2462 = vpop.f32.mrf.mxu0
    %v2463 = vadd.f32 0.0, %v2462
    %v2464 = vpop.f32.mrf.mxu0
    %v2465 = vpop.f32.mrf.mxu0
    %v2466 = vadd.f32 0.0, %v2465
    %v2467 = vpop.f32.mrf.mxu0
    %2468 = vmatprep.mubr.bf16.mxu0 0
    %2469 = vmatmul.mubr.bf16.gmra.mxu0 %v1578
    %v2470 = vpop.f32.mrf.mxu0
    %v2471 = vadd.f32 0.0, %v2470
    %v2472 = vpop.f32.mrf.mxu0
    %v2473 = vpop.f32.mrf.mxu0
    %v2474 = vadd.f32 0.0, %v2473
    %v2475 = vpop.f32.mrf.mxu0
    %2476 = vmatprep.mubr.bf16.mxu0 0
    %2477 = vmatmul.mubr.bf16.gmra.mxu0 %v1581
    %v2478 = vpop.f32.mrf.mxu0
    %v2479 = vadd.f32 0.0, %v2478
    %v2480 = vpop.f32.mrf.mxu0
    %v2481 = vpop.f32.mrf.mxu0
    %v2482 = vadd.f32 0.0, %v2481
    %v2483 = vpop.f32.mrf.mxu0
    %2484 = vmatprep.mubr.bf16.mxu0 0
    %2485 = vmatmul.mubr.bf16.gmra.mxu0 %v1584
    %v2486 = vpop.f32.mrf.mxu0
    %v2487 = vadd.f32 0.0, %v2486
    %v2488 = vpop.f32.mrf.mxu0
    %v2489 = vpop.f32.mrf.mxu0
    %v2490 = vadd.f32 0.0, %v2489
    %v2491 = vpop.f32.mrf.mxu0
    %2492 = vmatprep.mubr.bf16.mxu0 0
    %2493 = vmatmul.mubr.bf16.gmra.mxu0 %v1587
    %v2494 = vpop.f32.mrf.mxu0
    %v2495 = vadd.f32 0.0, %v2494
    %v2496 = vpop.f32.mrf.mxu0
    %v2497 = vpop.f32.mrf.mxu0
    %v2498 = vadd.f32 0.0, %v2497
    %v2499 = vpop.f32.mrf.mxu0
    %2500 = vmatprep.mubr.bf16.mxu0 0
    %2501 = vmatmul.mubr.bf16.gmra.mxu0 %v1590
    %v2502 = vpop.f32.mrf.mxu0
    %v2503 = vadd.f32 0.0, %v2502
    %v2504 = vpop.f32.mrf.mxu0
    %v2505 = vpop.f32.mrf.mxu0
    %v2506 = vadd.f32 0.0, %v2505
    %v2507 = vpop.f32.mrf.mxu0
    %2508 = vmatprep.mubr.bf16.mxu0 0
    %2509 = vmatmul.mubr.bf16.gmra.mxu0 %v1593
    %v2510 = vpop.f32.mrf.mxu0
    %v2511 = vadd.f32 0.0, %v2510
    %v2512 = vpop.f32.mrf.mxu0
    %v2513 = vpop.f32.mrf.mxu0
    %v2514 = vadd.f32 0.0, %v2513
    %v2515 = vpop.f32.mrf.mxu0
    %2516 = vmatprep.mubr.bf16.mxu0 0
    %2517 = vmatmul.mubr.bf16.gmra.mxu0 %v1596
    %v2518 = vpop.f32.mrf.mxu0
    %v2519 = vadd.f32 0.0, %v2518
    %v2520 = vpop.f32.mrf.mxu0
    %v2521 = vpop.f32.mrf.mxu0
    %v2522 = vadd.f32 0.0, %v2521
    %v2523 = vpop.f32.mrf.mxu0
    %2524 = vmatprep.mubr.bf16.mxu0 0
    %2525 = vmatmul.mubr.bf16.gmra.mxu0 %v1599
    %v2526 = vpop.f32.mrf.mxu0
    %v2527 = vadd.f32 0.0, %v2526
    %v2528 = vpop.f32.mrf.mxu0
    %v2529 = vpop.f32.mrf.mxu0
    %v2530 = vadd.f32 0.0, %v2529
    %v2531 = vpop.f32.mrf.mxu0
    %2532 = vmatprep.mubr.bf16.mxu0 0
    %2533 = vmatmul.mubr.bf16.gmra.mxu0 %v1602
    %v2534 = vpop.f32.mrf.mxu0
    %v2535 = vadd.f32 0.0, %v2534
    %v2536 = vpop.f32.mrf.mxu0
    %v2537 = vpop.f32.mrf.mxu0
    %v2538 = vadd.f32 0.0, %v2537
    %v2539 = vpop.f32.mrf.mxu0
    %2540 = vmatprep.mubr.bf16.mxu0 0
    %2541 = vmatmul.mubr.bf16.gmra.mxu0 %v1605
    %v2542 = vpop.f32.mrf.mxu0
    %v2543 = vadd.f32 0.0, %v2542
    %v2544 = vpop.f32.mrf.mxu0
    %v2545 = vpop.f32.mrf.mxu0
    %v2546 = vadd.f32 0.0, %v2545
    %v2547 = vpop.f32.mrf.mxu0
    %2548 = vmatprep.mubr.bf16.mxu0 0
    %2549 = vmatmul.mubr.bf16.gmra.mxu0 %v1608
    %v2550 = vpop.f32.mrf.mxu0
    %v2551 = vadd.f32 0.0, %v2550
    %v2552 = vpop.f32.mrf.mxu0
    %v2553 = vpop.f32.mrf.mxu0
    %v2554 = vadd.f32 0.0, %v2553
    %v2555 = vpop.f32.mrf.mxu0
    %2556 = vmatprep.mubr.bf16.mxu0 0
    %2557 = vmatmul.mubr.bf16.gmra.mxu0 %v1611
    %v2558 = vpop.f32.mrf.mxu0
    %v2559 = vadd.f32 0.0, %v2558
    %v2560 = vpop.f32.mrf.mxu0
    %v2561 = vpop.f32.mrf.mxu0
    %v2562 = vadd.f32 0.0, %v2561
    %v2563 = vpop.f32.mrf.mxu0
    %2564 = vmatprep.mubr.bf16.mxu0 0
    %2565 = vmatmul.mubr.bf16.gmra.mxu0 %v1614
    %v2566 = vpop.f32.mrf.mxu0
    %v2567 = vadd.f32 0.0, %v2566
    %v2568 = vpop.f32.mrf.mxu0
    %v2569 = vpop.f32.mrf.mxu0
    %v2570 = vadd.f32 0.0, %v2569
    %v2571 = vpop.f32.mrf.mxu0
    %2572 = vmatprep.mubr.bf16.mxu0 0
    %2573 = vmatmul.mubr.bf16.gmra.mxu0 %v1617
    %v2574 = vpop.f32.mrf.mxu0
    %v2575 = vadd.f32 0.0, %v2574
    %v2576 = vpop.f32.mrf.mxu0
    %v2577 = vpop.f32.mrf.mxu0
    %v2578 = vadd.f32 0.0, %v2577
    %v2579 = vpop.f32.mrf.mxu0
    %2580 = vmatprep.mubr.bf16.mxu0 0
    %2581 = vmatmul.mubr.bf16.gmra.mxu0 %v1620
    %v2582 = vpop.f32.mrf.mxu0
    %v2583 = vadd.f32 0.0, %v2582
    %v2584 = vpop.f32.mrf.mxu0
    %v2585 = vpop.f32.mrf.mxu0
    %v2586 = vadd.f32 0.0, %v2585
    %v2587 = vpop.f32.mrf.mxu0
    %2588 = vmatprep.mubr.bf16.mxu0 0
    %2589 = vmatmul.mubr.bf16.gmra.mxu0 %v1623
    %v2590 = vpop.f32.mrf.mxu0
    %v2591 = vadd.f32 0.0, %v2590
    %v2592 = vpop.f32.mrf.mxu0
    %v2593 = vpop.f32.mrf.mxu0
    %v2594 = vadd.f32 0.0, %v2593
    %v2595 = vpop.f32.mrf.mxu0
    %2596 = vmatprep.mubr.bf16.mxu0 0
    %2597 = vmatmul.mubr.bf16.gmra.mxu0 %v1626
    %v2598 = vpop.f32.mrf.mxu0
    %v2599 = vadd.f32 0.0, %v2598
    %v2600 = vpop.f32.mrf.mxu0
    %v2601 = vpop.f32.mrf.mxu0
    %v2602 = vadd.f32 0.0, %v2601
    %v2603 = vpop.f32.mrf.mxu0
    %2604 = vmatprep.mubr.bf16.mxu0 0
    %2605 = vmatmul.mubr.bf16.gmra.mxu0 %v1629
    %v2606 = vpop.f32.mrf.mxu0
    %v2607 = vadd.f32 0.0, %v2606
    %v2608 = vpop.f32.mrf.mxu0
    %v2609 = vpop.f32.mrf.mxu0
    %v2610 = vadd.f32 0.0, %v2609
    %v2611 = vpop.f32.mrf.mxu0
    %2612 = vmatprep.mubr.bf16.mxu0 0
    %2613 = vmatmul.mubr.bf16.gmra.mxu0 %v1632
    %v2614 = vpop.f32.mrf.mxu0
    %v2615 = vadd.f32 0.0, %v2614
    %v2616 = vpop.f32.mrf.mxu0
    %v2617 = vpop.f32.mrf.mxu0
    %v2618 = vadd.f32 0.0, %v2617
    %v2619 = vpop.f32.mrf.mxu0
    %2620 = vmatprep.mubr.bf16.mxu0 0
    %2621 = vmatmul.mubr.bf16.gmra.mxu0 %v1635
    %v2622 = vpop.f32.mrf.mxu0
    %v2623 = vadd.f32 0.0, %v2622
    %v2624 = vpop.f32.mrf.mxu0
    %v2625 = vpop.f32.mrf.mxu0
    %v2626 = vadd.f32 0.0, %v2625
    %v2627 = vpop.f32.mrf.mxu0
    %2628 = vmatprep.mubr.bf16.mxu0 0
    %2629 = vmatmul.mubr.bf16.gmra.mxu0 %v1638
    %v2630 = vpop.f32.mrf.mxu0
    %v2631 = vadd.f32 0.0, %v2630
    %v2632 = vpop.f32.mrf.mxu0
    %v2633 = vpop.f32.mrf.mxu0
    %v2634 = vadd.f32 0.0, %v2633
    %v2635 = vpop.f32.mrf.mxu0
    %2636 = vmatprep.mubr.bf16.mxu0 0
    %2637 = vmatmul.mubr.bf16.gmra.mxu0 %v1641
    %v2638 = vpop.f32.mrf.mxu0
    %v2639 = vadd.f32 0.0, %v2638
    %v2640 = vpop.f32.mrf.mxu0
    %v2641 = vpop.f32.mrf.mxu0
    %v2642 = vadd.f32 0.0, %v2641
    %v2643 = vpop.f32.mrf.mxu0
    %2644 = vmatprep.mubr.bf16.mxu0 0
    %2645 = vmatmul.mubr.bf16.gmra.mxu0 %v1644
    %v2646 = vpop.f32.mrf.mxu0
    %v2647 = vpop.f32.mrf.mxu0
    %v2648 = vpop.f32.mrf.mxu0
    %v2649 = vpop.f32.mrf.mxu0
    %2650 = vmatprep.mubr.bf16.mxu0 0
    %2651 = vmatmul.mubr.bf16.gmra.mxu0 %v1647
    %v2652 = vpop.f32.mrf.mxu0
    %v2653 = vpop.f32.mrf.mxu0
    %v2654 = vpop.f32.mrf.mxu0
    %v2655 = vpop.f32.mrf.mxu0
    %2656 = vmatprep.mubr.bf16.mxu0 0
    %2657 = vmatmul.mubr.bf16.gmra.mxu0 %v1650
    %v2658 = vpop.f32.mrf.mxu0
    %v2659 = vpop.f32.mrf.mxu0
    %v2660 = vpop.f32.mrf.mxu0
    %v2661 = vpop.f32.mrf.mxu0
    %2662 = vmatprep.mubr.bf16.mxu0 0
    %2663 = vmatmul.mubr.bf16.gmra.mxu0 %v1653
    %v2664 = vpop.f32.mrf.mxu0
    %v2665 = vpop.f32.mrf.mxu0
    %v2666 = vpop.f32.mrf.mxu0
    %v2667 = vpop.f32.mrf.mxu0
    %2668 = vmatprep.mubr.bf16.mxu0 0
    %2669 = vmatmul.mubr.bf16.gmra.mxu0 %v1656
    %v2670 = vpop.f32.mrf.mxu0
    %v2671 = vpop.f32.mrf.mxu0
    %v2672 = vpop.f32.mrf.mxu0
    %v2673 = vpop.f32.mrf.mxu0
    %2674 = vdwg.mxu0
    %v2675 = vmax.f32 %v1693, %v1939
    %v2676 = vmax.f32 %v1696, %v1942
    %v2677 = vmax.f32 %v1701, %v1947
    %v2678 = vmax.f32 %v1704, %v1950
    %v2679 = vmax.f32 %v1709, %v1955
    %v2680 = vmax.f32 %v1712, %v1958
    %v2681 = vmax.f32 %v1717, %v1963
    %v2682 = vmax.f32 %v1720, %v1966
    %v2683 = vmax.f32 %v1725, %v1971
    %v2684 = vmax.f32 %v1728, %v1974
    %v2685 = vmax.f32 %v1733, %v1979
    %v2686 = vmax.f32 %v1736, %v1982
    %v2687 = vmax.f32 %v1741, %v1987
    %v2688 = vmax.f32 %v1744, %v1990
    %v2689 = vmax.f32 %v1749, %v1995
    %v2690 = vmax.f32 %v1752, %v1998
    %v2691 = vmax.f32 %v1757, %v2003
    %v2692 = vmax.f32 %v1760, %v2006
    %v2693 = vmax.f32 %v1765, %v2011
    %v2694 = vmax.f32 %v1768, %v2014
    %v2695 = vmax.f32 %v1773, %v2019
    %v2696 = vmax.f32 %v1776, %v2022
    %v2697 = vmax.f32 %v1781, %v2027
    %v2698 = vmax.f32 %v1784, %v2030
    %v2699 = vmax.f32 %v1789, %v2035
    %v2700 = vmax.f32 %v1792, %v2038
    %v2701 = vmax.f32 %v1797, %v2043
    %v2702 = vmax.f32 %v1800, %v2046
    %v2703 = vmax.f32 %v1805, %v2051
    %v2704 = vmax.f32 %v1808, %v2054
    %v2705 = vmax.f32 %v1813, %v2059
    %v2706 = vmax.f32 %v1816, %v2062
    %v2707 = vmax.f32 %v1821, %v2067
    %v2708 = vmax.f32 %v1824, %v2070
    %v2709 = vmax.f32 %v1829, %v2075
    %v2710 = vmax.f32 %v1832, %v2078
    %v2711 = vmax.f32 %v1837, %v2083
    %v2712 = vmax.f32 %v1840, %v2086
    %v2713 = vmax.f32 %v1845, %v2091
    %v2714 = vmax.f32 %v1848, %v2094
    %v2715 = vmax.f32 %v1853, %v2099
    %v2716 = vmax.f32 %v1856, %v2102
    %v2717 = vmax.f32 %v1861, %v2107
    %v2718 = vmax.f32 %v1864, %v2110
    %v2719 = vmax.f32 %v1869, %v2115
    %v2720 = vmax.f32 %v1872, %v2118
    %v2721 = vmax.f32 %v1877, %v2123
    %v2722 = vmax.f32 %v1880, %v2126
    %v2723 = vmax.f32 %v1885, %v2131
    %v2724 = vmax.f32 %v1888, %v2134
    %v2725 = vmax.f32 %v1893, %v2139
    %v2726 = vmax.f32 %v1896, %v2142
    %v2727 = vmax.f32 %v1901, %v2147
    %v2728 = vmax.f32 %v1904, %v2150
    %v2729 = vmax.f32 %v2185, %v2431
    %v2730 = vmax.f32 %v2188, %v2434
    %v2731 = vmax.f32 %v2193, %v2439
    %v2732 = vmax.f32 %v2196, %v2442
    %v2733 = vmax.f32 %v2201, %v2447
    %v2734 = vmax.f32 %v2204, %v2450
    %v2735 = vmax.f32 %v2209, %v2455
    %v2736 = vmax.f32 %v2212, %v2458
    %v2737 = vmax.f32 %v2217, %v2463
    %v2738 = vmax.f32 %v2220, %v2466
    %v2739 = vmax.f32 %v2225, %v2471
    %v2740 = vmax.f32 %v2228, %v2474
    %v2741 = vmax.f32 %v2233, %v2479
    %v2742 = vmax.f32 %v2236, %v2482
    %v2743 = vmax.f32 %v2241, %v2487
    %v2744 = vmax.f32 %v2244, %v2490
    %v2745 = vmax.f32 %v2249, %v2495
    %v2746 = vmax.f32 %v2252, %v2498
    %v2747 = vmax.f32 %v2257, %v2503
    %v2748 = vmax.f32 %v2260, %v2506
    %v2749 = vmax.f32 %v2265, %v2511
    %v2750 = vmax.f32 %v2268, %v2514
    %v2751 = vmax.f32 %v2273, %v2519
    %v2752 = vmax.f32 %v2276, %v2522
    %v2753 = vmax.f32 %v2281, %v2527
    %v2754 = vmax.f32 %v2284, %v2530
    %v2755 = vmax.f32 %v2289, %v2535
    %v2756 = vmax.f32 %v2292, %v2538
    %v2757 = vmax.f32 %v2297, %v2543
    %v2758 = vmax.f32 %v2300, %v2546
    %v2759 = vmax.f32 %v2305, %v2551
    %v2760 = vmax.f32 %v2308, %v2554
    %v2761 = vmax.f32 %v2313, %v2559
    %v2762 = vmax.f32 %v2316, %v2562
    %v2763 = vmax.f32 %v2321, %v2567
    %v2764 = vmax.f32 %v2324, %v2570
    %v2765 = vmax.f32 %v2329, %v2575
    %v2766 = vmax.f32 %v2332, %v2578
    %v2767 = vmax.f32 %v2337, %v2583
    %v2768 = vmax.f32 %v2340, %v2586
    %v2769 = vmax.f32 %v2345, %v2591
    %v2770 = vmax.f32 %v2348, %v2594
    %v2771 = vmax.f32 %v2353, %v2599
    %v2772 = vmax.f32 %v2356, %v2602
    %v2773 = vmax.f32 %v2361, %v2607
    %v2774 = vmax.f32 %v2364, %v2610
    %v2775 = vmax.f32 %v2369, %v2615
    %v2776 = vmax.f32 %v2372, %v2618
    %v2777 = vmax.f32 %v2377, %v2623
    %v2778 = vmax.f32 %v2380, %v2626
    %v2779 = vmax.f32 %v2385, %v2631
    %v2780 = vmax.f32 %v2388, %v2634
    %v2781 = vmax.f32 %v2393, %v2639
    %v2782 = vmax.f32 %v2396, %v2642
    %v2783 = vmax.f32 %v2675, %v2729
    %v2784 = vmax.f32 %v2676, %v2730
    %v2785 = vmax.f32 %v2677, %v2731
    %v2786 = vmax.f32 %v2678, %v2732
    %v2787 = vmax.f32 %v2679, %v2733
    %v2788 = vmax.f32 %v2680, %v2734
    %v2789 = vmax.f32 %v2681, %v2735
    %v2790 = vmax.f32 %v2682, %v2736
    %v2791 = vmax.f32 %v2683, %v2737
    %v2792 = vmax.f32 %v2684, %v2738
    %v2793 = vmax.f32 %v2685, %v2739
    %v2794 = vmax.f32 %v2686, %v2740
    %v2795 = vmax.f32 %v2687, %v2741
    %v2796 = vmax.f32 %v2688, %v2742
    %v2797 = vmax.f32 %v2689, %v2743
    %v2798 = vmax.f32 %v2690, %v2744
    %v2799 = vmax.f32 %v2691, %v2745
    %v2800 = vmax.f32 %v2692, %v2746
    %v2801 = vmax.f32 %v2693, %v2747
    %v2802 = vmax.f32 %v2694, %v2748
    %v2803 = vmax.f32 %v2695, %v2749
    %v2804 = vmax.f32 %v2696, %v2750
    %v2805 = vmax.f32 %v2697, %v2751
    %v2806 = vmax.f32 %v2698, %v2752
    %v2807 = vmax.f32 %v2699, %v2753
    %v2808 = vmax.f32 %v2700, %v2754
    %v2809 = vmax.f32 %v2701, %v2755
    %v2810 = vmax.f32 %v2702, %v2756
    %v2811 = vmax.f32 %v2703, %v2757
    %v2812 = vmax.f32 %v2704, %v2758
    %v2813 = vmax.f32 %v2705, %v2759
    %v2814 = vmax.f32 %v2706, %v2760
    %v2815 = vmax.f32 %v2707, %v2761
    %v2816 = vmax.f32 %v2708, %v2762
    %v2817 = vmax.f32 %v2709, %v2763
    %v2818 = vmax.f32 %v2710, %v2764
    %v2819 = vmax.f32 %v2711, %v2765
    %v2820 = vmax.f32 %v2712, %v2766
    %v2821 = vmax.f32 %v2713, %v2767
    %v2822 = vmax.f32 %v2714, %v2768
    %v2823 = vmax.f32 %v2715, %v2769
    %v2824 = vmax.f32 %v2716, %v2770
    %v2825 = vmax.f32 %v2717, %v2771
    %v2826 = vmax.f32 %v2718, %v2772
    %v2827 = vmax.f32 %v2719, %v2773
    %v2828 = vmax.f32 %v2720, %v2774
    %v2829 = vmax.f32 %v2721, %v2775
    %v2830 = vmax.f32 %v2722, %v2776
    %v2831 = vmax.f32 %v2723, %v2777
    %v2832 = vmax.f32 %v2724, %v2778
    %v2833 = vmax.f32 %v2725, %v2779
    %v2834 = vmax.f32 %v2726, %v2780
    %v2835 = vmax.f32 %v2727, %v2781
    %v2836 = vmax.f32 %v2728, %v2782
    %v2837 = vld [vmem:[%s2] sm:$0x1]
    %v2839 = vlaneseq
    %v2840 = vshrl.u32 %v2839, 7
    %v2841 = vsub.s32 0, %v2840
    %v2842 = vrot.slane %v2837, %v2841
    %v2844 = vadd.f32 %v2783, %v2842
    %v2845 = vadd.f32 %v2784, %v2842
    %v2846 = vadd.f32 %v2785, %v2842
    %v2847 = vadd.f32 %v2786, %v2842
    %v2848 = vadd.f32 %v2787, %v2842
    %v2849 = vadd.f32 %v2788, %v2842
    %v2850 = vadd.f32 %v2789, %v2842
    %v2851 = vadd.f32 %v2790, %v2842
    %v2852 = vadd.f32 %v2791, %v2842
    %v2853 = vadd.f32 %v2792, %v2842
    %v2854 = vadd.f32 %v2793, %v2842
    %v2855 = vadd.f32 %v2794, %v2842
    %v2856 = vadd.f32 %v2795, %v2842
    %v2857 = vadd.f32 %v2796, %v2842
    %v2858 = vadd.f32 %v2797, %v2842
    %v2859 = vadd.f32 %v2798, %v2842
    %v2860 = vadd.f32 %v2799, %v2842
    %v2861 = vadd.f32 %v2800, %v2842
    %v2862 = vadd.f32 %v2801, %v2842
    %v2863 = vadd.f32 %v2802, %v2842
    %v2864 = vadd.f32 %v2803, %v2842
    %v2865 = vadd.f32 %v2804, %v2842
    %v2866 = vadd.f32 %v2805, %v2842
    %v2867 = vadd.f32 %v2806, %v2842
    %v2868 = vadd.f32 %v2807, %v2842
    %v2869 = vadd.f32 %v2808, %v2842
    %v2870 = vadd.f32 %v2809, %v2842
    %v2871 = vadd.f32 %v2810, %v2842
    %v2872 = vadd.f32 %v2811, %v2842
    %v2873 = vadd.f32 %v2812, %v2842
    %v2874 = vadd.f32 %v2813, %v2842
    %v2875 = vadd.f32 %v2814, %v2842
    %v2876 = vadd.f32 %v2815, %v2842
    %v2877 = vadd.f32 %v2816, %v2842
    %v2878 = vadd.f32 %v2817, %v2842
    %v2879 = vadd.f32 %v2818, %v2842
    %v2880 = vadd.f32 %v2819, %v2842
    %v2881 = vadd.f32 %v2820, %v2842
    %v2882 = vadd.f32 %v2821, %v2842
    %v2883 = vadd.f32 %v2822, %v2842
    %v2884 = vadd.f32 %v2823, %v2842
    %v2885 = vadd.f32 %v2824, %v2842
    %v2886 = vadd.f32 %v2825, %v2842
    %v2887 = vadd.f32 %v2826, %v2842
    %v2888 = vadd.f32 %v2827, %v2842
    %v2889 = vadd.f32 %v2828, %v2842
    %v2890 = vadd.f32 %v2829, %v2842
    %v2891 = vadd.f32 %v2830, %v2842
    %v2892 = vadd.f32 %v2831, %v2842
    %v2893 = vadd.f32 %v2832, %v2842
    %v2894 = vadd.f32 %v2833, %v2842
    %v2895 = vadd.f32 %v2834, %v2842
    %v2896 = vadd.f32 %v2835, %v2842
    %v2897 = vadd.f32 %v2836, %v2842
    %v2898 = vmax.f32 %v2844, 0.0
    %v2899 = vmax.f32 %v2845, 0.0
    %v2900 = vmax.f32 %v2846, 0.0
    %v2901 = vmax.f32 %v2847, 0.0
    %v2902 = vmax.f32 %v2848, 0.0
    %v2903 = vmax.f32 %v2849, 0.0
    %v2904 = vmax.f32 %v2850, 0.0
    %v2905 = vmax.f32 %v2851, 0.0
    %v2906 = vmax.f32 %v2852, 0.0
    %v2907 = vmax.f32 %v2853, 0.0
    %v2908 = vmax.f32 %v2854, 0.0
    %v2909 = vmax.f32 %v2855, 0.0
    %v2910 = vmax.f32 %v2856, 0.0
    %v2911 = vmax.f32 %v2857, 0.0
    %v2912 = vmax.f32 %v2858, 0.0
    %v2913 = vmax.f32 %v2859, 0.0
    %v2914 = vmax.f32 %v2860, 0.0
    %v2915 = vmax.f32 %v2861, 0.0
    %v2916 = vmax.f32 %v2862, 0.0
    %v2917 = vmax.f32 %v2863, 0.0
    %v2918 = vmax.f32 %v2864, 0.0
    %v2919 = vmax.f32 %v2865, 0.0
    %v2920 = vmax.f32 %v2866, 0.0
    %v2921 = vmax.f32 %v2867, 0.0
    %v2922 = vmax.f32 %v2868, 0.0
    %v2923 = vmax.f32 %v2869, 0.0
    %v2924 = vmax.f32 %v2870, 0.0
    %v2925 = vmax.f32 %v2871, 0.0
    %v2926 = vmax.f32 %v2872, 0.0
    %v2927 = vmax.f32 %v2873, 0.0
    %v2928 = vmax.f32 %v2874, 0.0
    %v2929 = vmax.f32 %v2875, 0.0
    %v2930 = vmax.f32 %v2876, 0.0
    %v2931 = vmax.f32 %v2877, 0.0
    %v2932 = vmax.f32 %v2878, 0.0
    %v2933 = vmax.f32 %v2879, 0.0
    %v2934 = vmax.f32 %v2880, 0.0
    %v2935 = vmax.f32 %v2881, 0.0
    %v2936 = vmax.f32 %v2882, 0.0
    %v2937 = vmax.f32 %v2883, 0.0
    %v2938 = vmax.f32 %v2884, 0.0
    %v2939 = vmax.f32 %v2885, 0.0
    %v2940 = vmax.f32 %v2886, 0.0
    %v2941 = vmax.f32 %v2887, 0.0
    %v2942 = vmax.f32 %v2888, 0.0
    %v2943 = vmax.f32 %v2889, 0.0
    %v2944 = vmax.f32 %v2890, 0.0
    %v2945 = vmax.f32 %v2891, 0.0
    %v2946 = vmax.f32 %v2892, 0.0
    %v2947 = vmax.f32 %v2893, 0.0
    %v2948 = vmax.f32 %v2894, 0.0
    %v2949 = vmax.f32 %v2895, 0.0
    %v2950 = vmax.f32 %v2896, 0.0
    %v2951 = vmax.f32 %v2897, 0.0
    %v2952 = vpack.c.bf16 %v2899, %v2898
    %v2953 = vpack.c.bf16 %v2901, %v2900
    %v2954 = vpack.c.bf16 %v2903, %v2902
    %v2955 = vpack.c.bf16 %v2905, %v2904
    %v2956 = vpack.c.bf16 %v2907, %v2906
    %v2957 = vpack.c.bf16 %v2909, %v2908
    %v2958 = vpack.c.bf16 %v2911, %v2910
    %v2959 = vpack.c.bf16 %v2913, %v2912
    %v2960 = vpack.c.bf16 %v2915, %v2914
    %v2961 = vpack.c.bf16 %v2917, %v2916
    %v2962 = vpack.c.bf16 %v2919, %v2918
    %v2963 = vpack.c.bf16 %v2921, %v2920
    %v2964 = vpack.c.bf16 %v2923, %v2922
    %v2965 = vpack.c.bf16 %v2925, %v2924
    %v2966 = vpack.c.bf16 %v2927, %v2926
    %v2967 = vpack.c.bf16 %v2929, %v2928
    %v2968 = vpack.c.bf16 %v2931, %v2930
    %v2969 = vpack.c.bf16 %v2933, %v2932
    %v2970 = vpack.c.bf16 %v2935, %v2934
    %v2971 = vpack.c.bf16 %v2937, %v2936
    %v2972 = vpack.c.bf16 %v2939, %v2938
    %v2973 = vpack.c.bf16 %v2941, %v2940
    %v2974 = vpack.c.bf16 %v2943, %v2942
    %v2975 = vpack.c.bf16 %v2945, %v2944
    %v2976 = vpack.c.bf16 %v2947, %v2946
    %v2977 = vpack.c.bf16 %v2949, %v2948
    %v2978 = vpack.c.bf16 %v2951, %v2950
    %v3002 = vunpack.c.l.b16 %v2952
    %v3003 = vunpack.c.h.b16 %v2952
    %v3004 = vunpack.c.l.b16 %v2953
    %v3005 = vunpack.c.h.b16 %v2953
    %v3006 = vunpack.c.l.b16 %v2954
    %v3007 = vunpack.c.h.b16 %v2954
    %v3008 = vunpack.c.l.b16 %v2955
    %v3009 = vunpack.c.h.b16 %v2955
    %v3010 = vunpack.c.l.b16 %v2956
    %v3011 = vunpack.c.h.b16 %v2956
    %v3012 = vunpack.c.l.b16 %v2957
    %v3013 = vunpack.c.h.b16 %v2957
    %v3014 = vunpack.c.l.b16 %v2958
    %v3015 = vunpack.c.h.b16 %v2958
    %v3016 = vunpack.c.l.b16 %v2959
    %v3017 = vunpack.c.h.b16 %v2959
    %v3018 = vunpack.c.l.b16 %v2960
    %v3019 = vunpack.c.h.b16 %v2960
    %v3020 = vunpack.c.l.b16 %v2961
    %v3021 = vunpack.c.h.b16 %v2961
    %v3022 = vunpack.c.l.b16 %v2962
    %v3023 = vunpack.c.h.b16 %v2962
    %v3024 = vunpack.c.l.b16 %v2963
    %v3025 = vunpack.c.h.b16 %v2963
    %v3026 = vunpack.c.l.b16 %v2964
    %v3027 = vunpack.c.h.b16 %v2964
    %v3028 = vunpack.c.l.b16 %v2965
    %v3029 = vunpack.c.h.b16 %v2965
    %v3030 = vunpack.c.l.b16 %v2966
    %v3031 = vunpack.c.h.b16 %v2966
    %v3032 = vunpack.c.l.b16 %v2967
    %v3033 = vunpack.c.h.b16 %v2967
    %v3034 = vunpack.c.l.b16 %v2968
    %v3035 = vunpack.c.h.b16 %v2968
    %v3036 = vunpack.c.l.b16 %v2969
    %v3037 = vunpack.c.h.b16 %v2969
    %v3038 = vunpack.c.l.b16 %v2970
    %v3039 = vunpack.c.h.b16 %v2970
    %v3040 = vunpack.c.l.b16 %v2971
    %v3041 = vunpack.c.h.b16 %v2971
    %v3042 = vunpack.c.l.b16 %v2972
    %v3043 = vunpack.c.h.b16 %v2972
    %v3044 = vunpack.c.l.b16 %v2973
    %v3045 = vunpack.c.h.b16 %v2973
    %v3046 = vunpack.c.l.b16 %v2974
    %v3047 = vunpack.c.h.b16 %v2974
    %v3048 = vpack.c.b16 %v3002, %v3002
    %v3049 = vpack.c.b16 %v3003, %v3003
    %v3050 = vpack.c.b16 %v3004, %v3004
    %v3051 = vpack.c.b16 %v3005, %v3005
    %v3052 = vpack.c.b16 %v3006, %v3006
    %v3053 = vpack.c.b16 %v3007, %v3007
    %v3054 = vpack.c.b16 %v3008, %v3008
    %v3055 = vpack.c.b16 %v3009, %v3009
    %v3056 = vpack.c.b16 %v3010, %v3010
    %v3057 = vpack.c.b16 %v3011, %v3011
    %v3058 = vpack.c.b16 %v3012, %v3012
    %v3059 = vpack.c.b16 %v3013, %v3013
    %v3060 = vpack.c.b16 %v3014, %v3014
    %v3061 = vpack.c.b16 %v3015, %v3015
    %v3062 = vpack.c.b16 %v3016, %v3016
    %v3063 = vpack.c.b16 %v3017, %v3017
    %v3064 = vpack.c.b16 %v3018, %v3018
    %v3065 = vpack.c.b16 %v3019, %v3019
    %v3066 = vpack.c.b16 %v3020, %v3020
    %v3067 = vpack.c.b16 %v3021, %v3021
    %v3068 = vpack.c.b16 %v3022, %v3022
    %v3069 = vpack.c.b16 %v3023, %v3023
    %v3070 = vpack.c.b16 %v3024, %v3024
    %v3071 = vpack.c.b16 %v3025, %v3025
    %v3072 = vpack.c.b16 %v3026, %v3026
    %v3073 = vpack.c.b16 %v3027, %v3027
    %v3074 = vpack.c.b16 %v3028, %v3028
    %v3075 = vpack.c.b16 %v3029, %v3029
    %v3076 = vpack.c.b16 %v3030, %v3030
    %v3077 = vpack.c.b16 %v3031, %v3031
    %v3078 = vpack.c.b16 %v3032, %v3032
    %v3079 = vpack.c.b16 %v3033, %v3033
    %v3080 = vpack.c.b16 %v3034, %v3034
    %v3081 = vpack.c.b16 %v3035, %v3035
    %v3082 = vpack.c.b16 %v3036, %v3036
    %v3083 = vpack.c.b16 %v3037, %v3037
    %v3084 = vpack.c.b16 %v3038, %v3038
    %v3085 = vpack.c.b16 %v3039, %v3039
    %v3086 = vpack.c.b16 %v3040, %v3040
    %v3087 = vpack.c.b16 %v3041, %v3041
    %v3088 = vpack.c.b16 %v3042, %v3042
    %v3089 = vpack.c.b16 %v3043, %v3043
    %v3090 = vpack.c.b16 %v3044, %v3044
    %v3091 = vpack.c.b16 %v3045, %v3045
    %v3092 = vpack.c.b16 %v3046, %v3046
    %v3093 = vpack.c.b16 %v3047, %v3047
    %vm3140 = vcmask 257024
    %3141 = vst.msk [vmem:[#allocation2] sm:$0xf] %vm3140, %v3048
    %3142 = vst.msk [vmem:[#allocation2 + $0xc] sm:$0xf] %vm3140, %v3049
    %3143 = vst.msk [vmem:[#allocation2 + $0x18] sm:$0xf] %vm3140, %v3050
    %3144 = vst.msk [vmem:[#allocation2 + $0x24] sm:$0xf] %vm3140, %v3051
    %3145 = vst.msk [vmem:[#allocation2 + $0x30] sm:$0xf] %vm3140, %v3052
    %3146 = vst.msk [vmem:[#allocation2 + $0x3c] sm:$0xf] %vm3140, %v3053
    %3147 = vst.msk [vmem:[#allocation2 + $0x48] sm:$0xf] %vm3140, %v3054
    %3148 = vst.msk [vmem:[#allocation2 + $0x54] sm:$0xf] %vm3140, %v3055
    %3149 = vst.msk [vmem:[#allocation2 + $0x60] sm:$0xf] %vm3140, %v3056
    %3150 = vst.msk [vmem:[#allocation2 + $0x6c] sm:$0xf] %vm3140, %v3057
    %3151 = vst.msk [vmem:[#allocation2 + $0x78] sm:$0xf] %vm3140, %v3058
    %3152 = vst.msk [vmem:[#allocation2 + $0x84] sm:$0xf] %vm3140, %v3059
    %3153 = vst.msk [vmem:[#allocation2 + $0x90] sm:$0xf] %vm3140, %v3060
    %3154 = vst.msk [vmem:[#allocation2 + $0x9c] sm:$0xf] %vm3140, %v3061
    %3155 = vst.msk [vmem:[#allocation2 + $0xa8] sm:$0xf] %vm3140, %v3062
    %3156 = vst.msk [vmem:[#allocation2 + $0xb4] sm:$0xf] %vm3140, %v3063
    %3157 = vst.msk [vmem:[#allocation2 + $0xc0] sm:$0xf] %vm3140, %v3064
    %3158 = vst.msk [vmem:[#allocation2 + $0xcc] sm:$0xf] %vm3140, %v3065
    %3159 = vst.msk [vmem:[#allocation2 + $0xd8] sm:$0xf] %vm3140, %v3066
    %3160 = vst.msk [vmem:[#allocation2 + $0xe4] sm:$0xf] %vm3140, %v3067
    %3161 = vst.msk [vmem:[#allocation2 + $0xf0] sm:$0xf] %vm3140, %v3068
    %3162 = vst.msk [vmem:[#allocation2 + $0xfc] sm:$0xf] %vm3140, %v3069
    %3163 = vst.msk [vmem:[#allocation2 + $0x108] sm:$0xf] %vm3140, %v3070
    %3164 = vst.msk [vmem:[#allocation2 + $0x114] sm:$0xf] %vm3140, %v3071
    %3165 = vst.msk [vmem:[#allocation2 + $0x120] sm:$0xf] %vm3140, %v3072
    %3166 = vst.msk [vmem:[#allocation2 + $0x12c] sm:$0xf] %vm3140, %v3073
    %3167 = vst.msk [vmem:[#allocation2 + $0x138] sm:$0xf] %vm3140, %v3074
    %3168 = vst.msk [vmem:[#allocation2 + $0x144] sm:$0xf] %vm3140, %v3075
    %3169 = vst.msk [vmem:[#allocation2 + $0x150] sm:$0xf] %vm3140, %v3076
    %3170 = vst.msk [vmem:[#allocation2 + $0x15c] sm:$0xf] %vm3140, %v3077
    %3171 = vst.msk [vmem:[#allocation2 + $0x168] sm:$0xf] %vm3140, %v3078
    %3172 = vst.msk [vmem:[#allocation2 + $0x174] sm:$0xf] %vm3140, %v3079
    %3173 = vst.msk [vmem:[#allocation2 + $0x180] sm:$0xf] %vm3140, %v3080
    %3174 = vst.msk [vmem:[#allocation2 + $0x18c] sm:$0xf] %vm3140, %v3081
    %3175 = vst.msk [vmem:[#allocation2 + $0x198] sm:$0xf] %vm3140, %v3082
    %3176 = vst.msk [vmem:[#allocation2 + $0x1a4] sm:$0xf] %vm3140, %v3083
    %3177 = vst.msk [vmem:[#allocation2 + $0x1b0] sm:$0xf] %vm3140, %v3084
    %3178 = vst.msk [vmem:[#allocation2 + $0x1bc] sm:$0xf] %vm3140, %v3085
    %3179 = vst.msk [vmem:[#allocation2 + $0x1c8] sm:$0xf] %vm3140, %v3086
    %3180 = vst.msk [vmem:[#allocation2 + $0x1d4] sm:$0xf] %vm3140, %v3087
    %3181 = vst.msk [vmem:[#allocation2 + $0x1e0] sm:$0xf] %vm3140, %v3088
    %3182 = vst.msk [vmem:[#allocation2 + $0x1ec] sm:$0xf] %vm3140, %v3089
    %3183 = vst.msk [vmem:[#allocation2 + $0x1f8] sm:$0xf] %vm3140, %v3090
    %3184 = vst.msk [vmem:[#allocation2 + $0x204] sm:$0xf] %vm3140, %v3091
    %3185 = vst.msk [vmem:[#allocation2 + $0x210] sm:$0xf] %vm3140, %v3092
    %3186 = vst.msk [vmem:[#allocation2 + $0x21c] sm:$0xf] %vm3140, %v3093
    %v3188 = vunpack.c.l.b16 %v2975
    %v3189 = vpack.c.b16 %v3188, %v3188
    %vm3190 = vcmask 1042432
    %vm3191 = vcmask 1046532
    %vm3192 = vmor %vm3190, %vm3191
    %v3193 = vrot.slane %v3048, 5
    %v3194 = vrot.slane %v3193, 4
    %v3195 = vrot.slane %v3049, 5
    %v3196 = vsel %vm3192, %v3194, %v3195
    %v3197 = vrot.slane %v3195, 4
    %v3198 = vrot.slane %v3050, 5
    %v3199 = vsel %vm3192, %v3197, %v3198
    %v3200 = vrot.slane %v3198, 4
    %v3201 = vrot.slane %v3051, 5
    %v3202 = vsel %vm3192, %v3200, %v3201
    %v3203 = vrot.slane %v3201, 4
    %v3204 = vrot.slane %v3052, 5
    %v3205 = vsel %vm3192, %v3203, %v3204
    %v3206 = vrot.slane %v3204, 4
    %v3207 = vrot.slane %v3053, 5
    %v3208 = vsel %vm3192, %v3206, %v3207
    %v3209 = vrot.slane %v3207, 4
    %v3210 = vrot.slane %v3054, 5
    %v3211 = vsel %vm3192, %v3209, %v3210
    %v3212 = vrot.slane %v3210, 4
    %v3213 = vrot.slane %v3055, 5
    %v3214 = vsel %vm3192, %v3212, %v3213
    %v3215 = vrot.slane %v3213, 4
    %v3216 = vrot.slane %v3056, 5
    %v3217 = vsel %vm3192, %v3215, %v3216
    %v3218 = vrot.slane %v3216, 4
    %v3219 = vrot.slane %v3057, 5
    %v3220 = vsel %vm3192, %v3218, %v3219
    %v3221 = vrot.slane %v3219, 4
    %v3222 = vrot.slane %v3058, 5
    %v3223 = vsel %vm3192, %v3221, %v3222
    %v3224 = vrot.slane %v3222, 4
    %v3225 = vrot.slane %v3059, 5
    %v3226 = vsel %vm3192, %v3224, %v3225
    %v3227 = vrot.slane %v3225, 4
    %v3228 = vrot.slane %v3060, 5
    %v3229 = vsel %vm3192, %v3227, %v3228
    %v3230 = vrot.slane %v3228, 4
    %v3231 = vrot.slane %v3061, 5
    %v3232 = vsel %vm3192, %v3230, %v3231
    %v3233 = vrot.slane %v3231, 4
    %v3234 = vrot.slane %v3062, 5
    %v3235 = vsel %vm3192, %v3233, %v3234
    %v3236 = vrot.slane %v3234, 4
    %v3237 = vrot.slane %v3063, 5
    %v3238 = vsel %vm3192, %v3236, %v3237
    %v3239 = vrot.slane %v3237, 4
    %v3240 = vrot.slane %v3064, 5
    %v3241 = vsel %vm3192, %v3239, %v3240
    %v3242 = vrot.slane %v3240, 4
    %v3243 = vrot.slane %v3065, 5
    %v3244 = vsel %vm3192, %v3242, %v3243
    %v3245 = vrot.slane %v3243, 4
    %v3246 = vrot.slane %v3066, 5
    %v3247 = vsel %vm3192, %v3245, %v3246
    %v3248 = vrot.slane %v3246, 4
    %v3249 = vrot.slane %v3067, 5
    %v3250 = vsel %vm3192, %v3248, %v3249
    %v3251 = vrot.slane %v3249, 4
    %v3252 = vrot.slane %v3068, 5
    %v3253 = vsel %vm3192, %v3251, %v3252
    %v3254 = vrot.slane %v3252, 4
    %v3255 = vrot.slane %v3069, 5
    %v3256 = vsel %vm3192, %v3254, %v3255
    %v3257 = vrot.slane %v3255, 4
    %v3258 = vrot.slane %v3070, 5
    %v3259 = vsel %vm3192, %v3257, %v3258
    %v3260 = vrot.slane %v3258, 4
    %v3261 = vrot.slane %v3071, 5
    %v3262 = vsel %vm3192, %v3260, %v3261
    %v3263 = vrot.slane %v3261, 4
    %v3264 = vrot.slane %v3072, 5
    %v3265 = vsel %vm3192, %v3263, %v3264
    %v3266 = vrot.slane %v3264, 4
    %v3267 = vrot.slane %v3073, 5
    %v3268 = vsel %vm3192, %v3266, %v3267
    %v3269 = vrot.slane %v3267, 4
    %v3270 = vrot.slane %v3074, 5
    %v3271 = vsel %vm3192, %v3269, %v3270
    %v3272 = vrot.slane %v3270, 4
    %v3273 = vrot.slane %v3075, 5
    %v3274 = vsel %vm3192, %v3272, %v3273
    %v3275 = vrot.slane %v3273, 4
    %v3276 = vrot.slane %v3076, 5
    %v3277 = vsel %vm3192, %v3275, %v3276
    %v3278 = vrot.slane %v3276, 4
    %v3279 = vrot.slane %v3077, 5
    %v3280 = vsel %vm3192, %v3278, %v3279
    %v3281 = vrot.slane %v3279, 4
    %v3282 = vrot.slane %v3078, 5
    %v3283 = vsel %vm3192, %v3281, %v3282
    %v3284 = vrot.slane %v3282, 4
    %v3285 = vrot.slane %v3079, 5
    %v3286 = vsel %vm3192, %v3284, %v3285
    %v3287 = vrot.slane %v3285, 4
    %v3288 = vrot.slane %v3080, 5
    %v3289 = vsel %vm3192, %v3287, %v3288
    %v3290 = vrot.slane %v3288, 4
    %v3291 = vrot.slane %v3081, 5
    %v3292 = vsel %vm3192, %v3290, %v3291
    %v3293 = vrot.slane %v3291, 4
    %v3294 = vrot.slane %v3082, 5
    %v3295 = vsel %vm3192, %v3293, %v3294
    %v3296 = vrot.slane %v3294, 4
    %v3297 = vrot.slane %v3083, 5
    %v3298 = vsel %vm3192, %v3296, %v3297
    %v3299 = vrot.slane %v3297, 4
    %v3300 = vrot.slane %v3084, 5
    %v3301 = vsel %vm3192, %v3299, %v3300
    %v3302 = vrot.slane %v3300, 4
    %v3303 = vrot.slane %v3085, 5
    %v3304 = vsel %vm3192, %v3302, %v3303
    %v3305 = vrot.slane %v3303, 4
    %v3306 = vrot.slane %v3086, 5
    %v3307 = vsel %vm3192, %v3305, %v3306
    %v3308 = vrot.slane %v3306, 4
    %v3309 = vrot.slane %v3087, 5
    %v3310 = vsel %vm3192, %v3308, %v3309
    %v3311 = vrot.slane %v3309, 4
    %v3312 = vrot.slane %v3088, 5
    %v3313 = vsel %vm3192, %v3311, %v3312
    %v3314 = vrot.slane %v3312, 4
    %v3315 = vrot.slane %v3089, 5
    %v3316 = vsel %vm3192, %v3314, %v3315
    %v3317 = vrot.slane %v3315, 4
    %v3318 = vrot.slane %v3090, 5
    %v3319 = vsel %vm3192, %v3317, %v3318
    %v3320 = vrot.slane %v3318, 4
    %v3321 = vrot.slane %v3091, 5
    %v3322 = vsel %vm3192, %v3320, %v3321
    %v3323 = vrot.slane %v3321, 4
    %v3324 = vrot.slane %v3092, 5
    %v3325 = vsel %vm3192, %v3323, %v3324
    %v3326 = vrot.slane %v3324, 4
    %v3327 = vrot.slane %v3093, 5
    %v3328 = vsel %vm3192, %v3326, %v3327
    %v3329 = vrot.slane %v3327, 4
    %v3330 = vrot.slane %v3189, 5
    %v3331 = vsel %vm3192, %v3329, %v3330
    %3332 = vrot.lane.b32.xlu0 %v3196, 32
    %v3333 = vpop.permute.xlu0 %3332
    %3334 = vrot.lane.b32.xlu0 %v3199, 32
    %v3335 = vpop.permute.xlu0 %3334
    %3336 = vrot.lane.b32.xlu0 %v3202, 32
    %v3337 = vpop.permute.xlu0 %3336
    %3338 = vrot.lane.b32.xlu0 %v3205, 32
    %v3339 = vpop.permute.xlu0 %3338
    %3340 = vrot.lane.b32.xlu0 %v3208, 32
    %v3341 = vpop.permute.xlu0 %3340
    %3342 = vrot.lane.b32.xlu0 %v3211, 32
    %v3343 = vpop.permute.xlu0 %3342
    %3344 = vrot.lane.b32.xlu0 %v3214, 32
    %v3345 = vpop.permute.xlu0 %3344
    %3346 = vrot.lane.b32.xlu0 %v3217, 32
    %v3347 = vpop.permute.xlu0 %3346
    %3348 = vrot.lane.b32.xlu0 %v3220, 32
    %v3349 = vpop.permute.xlu0 %3348
    %3350 = vrot.lane.b32.xlu0 %v3223, 32
    %v3351 = vpop.permute.xlu0 %3350
    %3352 = vrot.lane.b32.xlu0 %v3226, 32
    %v3353 = vpop.permute.xlu0 %3352
    %3354 = vrot.lane.b32.xlu0 %v3229, 32
    %v3355 = vpop.permute.xlu0 %3354
    %3356 = vrot.lane.b32.xlu0 %v3232, 32
    %v3357 = vpop.permute.xlu0 %3356
    %3358 = vrot.lane.b32.xlu0 %v3235, 32
    %v3359 = vpop.permute.xlu0 %3358
    %3360 = vrot.lane.b32.xlu0 %v3238, 32
    %v3361 = vpop.permute.xlu0 %3360
    %3362 = vrot.lane.b32.xlu0 %v3241, 32
    %v3363 = vpop.permute.xlu0 %3362
    %3364 = vrot.lane.b32.xlu0 %v3244, 32
    %v3365 = vpop.permute.xlu0 %3364
    %3366 = vrot.lane.b32.xlu0 %v3247, 32
    %v3367 = vpop.permute.xlu0 %3366
    %3368 = vrot.lane.b32.xlu0 %v3250, 32
    %v3369 = vpop.permute.xlu0 %3368
    %3370 = vrot.lane.b32.xlu0 %v3253, 32
    %v3371 = vpop.permute.xlu0 %3370
    %3372 = vrot.lane.b32.xlu0 %v3256, 32
    %v3373 = vpop.permute.xlu0 %3372
    %3374 = vrot.lane.b32.xlu0 %v3259, 32
    %v3375 = vpop.permute.xlu0 %3374
    %3376 = vrot.lane.b32.xlu0 %v3262, 32
    %v3377 = vpop.permute.xlu0 %3376
    %3378 = vrot.lane.b32.xlu0 %v3265, 32
    %v3379 = vpop.permute.xlu0 %3378
    %3380 = vrot.lane.b32.xlu0 %v3268, 32
    %v3381 = vpop.permute.xlu0 %3380
    %3382 = vrot.lane.b32.xlu0 %v3271, 32
    %v3383 = vpop.permute.xlu0 %3382
    %3384 = vrot.lane.b32.xlu0 %v3274, 32
    %v3385 = vpop.permute.xlu0 %3384
    %3386 = vrot.lane.b32.xlu0 %v3277, 32
    %v3387 = vpop.permute.xlu0 %3386
    %3388 = vrot.lane.b32.xlu0 %v3280, 32
    %v3389 = vpop.permute.xlu0 %3388
    %3390 = vrot.lane.b32.xlu0 %v3283, 32
    %v3391 = vpop.permute.xlu0 %3390
    %3392 = vrot.lane.b32.xlu0 %v3286, 32
    %v3393 = vpop.permute.xlu0 %3392
    %3394 = vrot.lane.b32.xlu0 %v3289, 32
    %v3395 = vpop.permute.xlu0 %3394
    %3396 = vrot.lane.b32.xlu0 %v3292, 32
    %v3397 = vpop.permute.xlu0 %3396
    %3398 = vrot.lane.b32.xlu0 %v3295, 32
    %v3399 = vpop.permute.xlu0 %3398
    %3400 = vrot.lane.b32.xlu0 %v3298, 32
    %v3401 = vpop.permute.xlu0 %3400
    %3402 = vrot.lane.b32.xlu0 %v3301, 32
    %v3403 = vpop.permute.xlu0 %3402
    %3404 = vrot.lane.b32.xlu0 %v3304, 32
    %v3405 = vpop.permute.xlu0 %3404
    %3406 = vrot.lane.b32.xlu0 %v3307, 32
    %v3407 = vpop.permute.xlu0 %3406
    %3408 = vrot.lane.b32.xlu0 %v3310, 32
    %v3409 = vpop.permute.xlu0 %3408
    %3410 = vrot.lane.b32.xlu0 %v3313, 32
    %v3411 = vpop.permute.xlu0 %3410
    %3412 = vrot.lane.b32.xlu0 %v3316, 32
    %v3413 = vpop.permute.xlu0 %3412
    %3414 = vrot.lane.b32.xlu0 %v3319, 32
    %v3415 = vpop.permute.xlu0 %3414
    %3416 = vrot.lane.b32.xlu0 %v3322, 32
    %v3417 = vpop.permute.xlu0 %3416
    %3418 = vrot.lane.b32.xlu0 %v3325, 32
    %v3419 = vpop.permute.xlu0 %3418
    %3420 = vrot.lane.b32.xlu0 %v3328, 32
    %v3421 = vpop.permute.xlu0 %3420
    %3422 = vrot.lane.b32.xlu0 %v3331, 32
    %v3423 = vpop.permute.xlu0 %3422
    %vm3470 = vcmask 519424
    %3471 = vst.msk [vmem:[#allocation2] sm:$0xf] %vm3470, %v3333
    %3472 = vst.msk [vmem:[#allocation2 + $0xc] sm:$0xf] %vm3470, %v3335
    %3473 = vst.msk [vmem:[#allocation2 + $0x18] sm:$0xf] %vm3470, %v3337
    %3474 = vst.msk [vmem:[#allocation2 + $0x24] sm:$0xf] %vm3470, %v3339
    %3475 = vst.msk [vmem:[#allocation2 + $0x30] sm:$0xf] %vm3470, %v3341
    %3476 = vst.msk [vmem:[#allocation2 + $0x3c] sm:$0xf] %vm3470, %v3343
    %3477 = vst.msk [vmem:[#allocation2 + $0x48] sm:$0xf] %vm3470, %v3345
    %3478 = vst.msk [vmem:[#allocation2 + $0x54] sm:$0xf] %vm3470, %v3347
    %3479 = vst.msk [vmem:[#allocation2 + $0x60] sm:$0xf] %vm3470, %v3349
    %3480 = vst.msk [vmem:[#allocation2 + $0x6c] sm:$0xf] %vm3470, %v3351
    %3481 = vst.msk [vmem:[#allocation2 + $0x78] sm:$0xf] %vm3470, %v3353
    %3482 = vst.msk [vmem:[#allocation2 + $0x84] sm:$0xf] %vm3470, %v3355
    %3483 = vst.msk [vmem:[#allocation2 + $0x90] sm:$0xf] %vm3470, %v3357
    %3484 = vst.msk [vmem:[#allocation2 + $0x9c] sm:$0xf] %vm3470, %v3359
    %3485 = vst.msk [vmem:[#allocation2 + $0xa8] sm:$0xf] %vm3470, %v3361
    %3486 = vst.msk [vmem:[#allocation2 + $0xb4] sm:$0xf] %vm3470, %v3363
    %3487 = vst.msk [vmem:[#allocation2 + $0xc0] sm:$0xf] %vm3470, %v3365
    %3488 = vst.msk [vmem:[#allocation2 + $0xcc] sm:$0xf] %vm3470, %v3367
    %3489 = vst.msk [vmem:[#allocation2 + $0xd8] sm:$0xf] %vm3470, %v3369
    %3490 = vst.msk [vmem:[#allocation2 + $0xe4] sm:$0xf] %vm3470, %v3371
    %3491 = vst.msk [vmem:[#allocation2 + $0xf0] sm:$0xf] %vm3470, %v3373
    %3492 = vst.msk [vmem:[#allocation2 + $0xfc] sm:$0xf] %vm3470, %v3375
    %3493 = vst.msk [vmem:[#allocation2 + $0x108] sm:$0xf] %vm3470, %v3377
    %3494 = vst.msk [vmem:[#allocation2 + $0x114] sm:$0xf] %vm3470, %v3379
    %3495 = vst.msk [vmem:[#allocation2 + $0x120] sm:$0xf] %vm3470, %v3381
    %3496 = vst.msk [vmem:[#allocation2 + $0x12c] sm:$0xf] %vm3470, %v3383
    %3497 = vst.msk [vmem:[#allocation2 + $0x138] sm:$0xf] %vm3470, %v3385
    %3498 = vst.msk [vmem:[#allocation2 + $0x144] sm:$0xf] %vm3470, %v3387
    %3499 = vst.msk [vmem:[#allocation2 + $0x150] sm:$0xf] %vm3470, %v3389
    %3500 = vst.msk [vmem:[#allocation2 + $0x15c] sm:$0xf] %vm3470, %v3391
    %3501 = vst.msk [vmem:[#allocation2 + $0x168] sm:$0xf] %vm3470, %v3393
    %3502 = vst.msk [vmem:[#allocation2 + $0x174] sm:$0xf] %vm3470, %v3395
    %3503 = vst.msk [vmem:[#allocation2 + $0x180] sm:$0xf] %vm3470, %v3397
    %3504 = vst.msk [vmem:[#allocation2 + $0x18c] sm:$0xf] %vm3470, %v3399
    %3505 = vst.msk [vmem:[#allocation2 + $0x198] sm:$0xf] %vm3470, %v3401
    %3506 = vst.msk [vmem:[#allocation2 + $0x1a4] sm:$0xf] %vm3470, %v3403
    %3507 = vst.msk [vmem:[#allocation2 + $0x1b0] sm:$0xf] %vm3470, %v3405
    %3508 = vst.msk [vmem:[#allocation2 + $0x1bc] sm:$0xf] %vm3470, %v3407
    %3509 = vst.msk [vmem:[#allocation2 + $0x1c8] sm:$0xf] %vm3470, %v3409
    %3510 = vst.msk [vmem:[#allocation2 + $0x1d4] sm:$0xf] %vm3470, %v3411
    %3511 = vst.msk [vmem:[#allocation2 + $0x1e0] sm:$0xf] %vm3470, %v3413
    %3512 = vst.msk [vmem:[#allocation2 + $0x1ec] sm:$0xf] %vm3470, %v3415
    %3513 = vst.msk [vmem:[#allocation2 + $0x1f8] sm:$0xf] %vm3470, %v3417
    %3514 = vst.msk [vmem:[#allocation2 + $0x204] sm:$0xf] %vm3470, %v3419
    %3515 = vst.msk [vmem:[#allocation2 + $0x210] sm:$0xf] %vm3470, %v3421
    %3516 = vst.msk [vmem:[#allocation2 + $0x21c] sm:$0xf] %vm3470, %v3423
    %vm3517 = vcmask 1041408
    %vm3518 = vcmask 1045508
    %vm3519 = vmor %vm3517, %vm3518
    %v3520 = vrot.slane %v3048, 6
    %v3521 = vrot.slane %v3520, 4
    %v3522 = vrot.slane %v3049, 6
    %v3523 = vsel %vm3519, %v3521, %v3522
    %v3524 = vrot.slane %v3522, 4
    %v3525 = vrot.slane %v3050, 6
    %v3526 = vsel %vm3519, %v3524, %v3525
    %v3527 = vrot.slane %v3525, 4
    %v3528 = vrot.slane %v3051, 6
    %v3529 = vsel %vm3519, %v3527, %v3528
    %v3530 = vrot.slane %v3528, 4
    %v3531 = vrot.slane %v3052, 6
    %v3532 = vsel %vm3519, %v3530, %v3531
    %v3533 = vrot.slane %v3531, 4
    %v3534 = vrot.slane %v3053, 6
    %v3535 = vsel %vm3519, %v3533, %v3534
    %v3536 = vrot.slane %v3534, 4
    %v3537 = vrot.slane %v3054, 6
    %v3538 = vsel %vm3519, %v3536, %v3537
    %v3539 = vrot.slane %v3537, 4
    %v3540 = vrot.slane %v3055, 6
    %v3541 = vsel %vm3519, %v3539, %v3540
    %v3542 = vrot.slane %v3540, 4
    %v3543 = vrot.slane %v3056, 6
    %v3544 = vsel %vm3519, %v3542, %v3543
    %v3545 = vrot.slane %v3543, 4
    %v3546 = vrot.slane %v3057, 6
    %v3547 = vsel %vm3519, %v3545, %v3546
    %v3548 = vrot.slane %v3546, 4
    %v3549 = vrot.slane %v3058, 6
    %v3550 = vsel %vm3519, %v3548, %v3549
    %v3551 = vrot.slane %v3549, 4
    %v3552 = vrot.slane %v3059, 6
    %v3553 = vsel %vm3519, %v3551, %v3552
    %v3554 = vrot.slane %v3552, 4
    %v3555 = vrot.slane %v3060, 6
    %v3556 = vsel %vm3519, %v3554, %v3555
    %v3557 = vrot.slane %v3555, 4
    %v3558 = vrot.slane %v3061, 6
    %v3559 = vsel %vm3519, %v3557, %v3558
    %v3560 = vrot.slane %v3558, 4
    %v3561 = vrot.slane %v3062, 6
    %v3562 = vsel %vm3519, %v3560, %v3561
    %v3563 = vrot.slane %v3561, 4
    %v3564 = vrot.slane %v3063, 6
    %v3565 = vsel %vm3519, %v3563, %v3564
    %v3566 = vrot.slane %v3564, 4
    %v3567 = vrot.slane %v3064, 6
    %v3568 = vsel %vm3519, %v3566, %v3567
    %v3569 = vrot.slane %v3567, 4
    %v3570 = vrot.slane %v3065, 6
    %v3571 = vsel %vm3519, %v3569, %v3570
    %v3572 = vrot.slane %v3570, 4
    %v3573 = vrot.slane %v3066, 6
    %v3574 = vsel %vm3519, %v3572, %v3573
    %v3575 = vrot.slane %v3573, 4
    %v3576 = vrot.slane %v3067, 6
    %v3577 = vsel %vm3519, %v3575, %v3576
    %v3578 = vrot.slane %v3576, 4
    %v3579 = vrot.slane %v3068, 6
    %v3580 = vsel %vm3519, %v3578, %v3579
    %v3581 = vrot.slane %v3579, 4
    %v3582 = vrot.slane %v3069, 6
    %v3583 = vsel %vm3519, %v3581, %v3582
    %v3584 = vrot.slane %v3582, 4
    %v3585 = vrot.slane %v3070, 6
    %v3586 = vsel %vm3519, %v3584, %v3585
    %v3587 = vrot.slane %v3585, 4
    %v3588 = vrot.slane %v3071, 6
    %v3589 = vsel %vm3519, %v3587, %v3588
    %v3590 = vrot.slane %v3588, 4
    %v3591 = vrot.slane %v3072, 6
    %v3592 = vsel %vm3519, %v3590, %v3591
    %v3593 = vrot.slane %v3591, 4
    %v3594 = vrot.slane %v3073, 6
    %v3595 = vsel %vm3519, %v3593, %v3594
    %v3596 = vrot.slane %v3594, 4
    %v3597 = vrot.slane %v3074, 6
    %v3598 = vsel %vm3519, %v3596, %v3597
    %v3599 = vrot.slane %v3597, 4
    %v3600 = vrot.slane %v3075, 6
    %v3601 = vsel %vm3519, %v3599, %v3600
    %v3602 = vrot.slane %v3600, 4
    %v3603 = vrot.slane %v3076, 6
    %v3604 = vsel %vm3519, %v3602, %v3603
    %v3605 = vrot.slane %v3603, 4
    %v3606 = vrot.slane %v3077, 6
    %v3607 = vsel %vm3519, %v3605, %v3606
    %v3608 = vrot.slane %v3606, 4
    %v3609 = vrot.slane %v3078, 6
    %v3610 = vsel %vm3519, %v3608, %v3609
    %v3611 = vrot.slane %v3609, 4
    %v3612 = vrot.slane %v3079, 6
    %v3613 = vsel %vm3519, %v3611, %v3612
    %v3614 = vrot.slane %v3612, 4
    %v3615 = vrot.slane %v3080, 6
    %v3616 = vsel %vm3519, %v3614, %v3615
    %v3617 = vrot.slane %v3615, 4
    %v3618 = vrot.slane %v3081, 6
    %v3619 = vsel %vm3519, %v3617, %v3618
    %v3620 = vrot.slane %v3618, 4
    %v3621 = vrot.slane %v3082, 6
    %v3622 = vsel %vm3519, %v3620, %v3621
    %v3623 = vrot.slane %v3621, 4
    %v3624 = vrot.slane %v3083, 6
    %v3625 = vsel %vm3519, %v3623, %v3624
    %v3626 = vrot.slane %v3624, 4
    %v3627 = vrot.slane %v3084, 6
    %v3628 = vsel %vm3519, %v3626, %v3627
    %v3629 = vrot.slane %v3627, 4
    %v3630 = vrot.slane %v3085, 6
    %v3631 = vsel %vm3519, %v3629, %v3630
    %v3632 = vrot.slane %v3630, 4
    %v3633 = vrot.slane %v3086, 6
    %v3634 = vsel %vm3519, %v3632, %v3633
    %v3635 = vrot.slane %v3633, 4
    %v3636 = vrot.slane %v3087, 6
    %v3637 = vsel %vm3519, %v3635, %v3636
    %v3638 = vrot.slane %v3636, 4
    %v3639 = vrot.slane %v3088, 6
    %v3640 = vsel %vm3519, %v3638, %v3639
    %v3641 = vrot.slane %v3639, 4
    %v3642 = vrot.slane %v3089, 6
    %v3643 = vsel %vm3519, %v3641, %v3642
    %v3644 = vrot.slane %v3642, 4
    %v3645 = vrot.slane %v3090, 6
    %v3646 = vsel %vm3519, %v3644, %v3645
    %v3647 = vrot.slane %v3645, 4
    %v3648 = vrot.slane %v3091, 6
    %v3649 = vsel %vm3519, %v3647, %v3648
    %v3650 = vrot.slane %v3648, 4
    %v3651 = vrot.slane %v3092, 6
    %v3652 = vsel %vm3519, %v3650, %v3651
    %v3653 = vrot.slane %v3651, 4
    %v3654 = vrot.slane %v3093, 6
    %v3655 = vsel %vm3519, %v3653, %v3654
    %v3656 = vrot.slane %v3654, 4
    %v3657 = vrot.slane %v3189, 6
    %v3658 = vsel %vm3519, %v3656, %v3657
    %3659 = vrot.lane.b32.xlu0 %v3523, 64
    %v3660 = vpop.permute.xlu0 %3659
    %3661 = vrot.lane.b32.xlu0 %v3526, 64
    %v3662 = vpop.permute.xlu0 %3661
    %3663 = vrot.lane.b32.xlu0 %v3529, 64
    %v3664 = vpop.permute.xlu0 %3663
    %3665 = vrot.lane.b32.xlu0 %v3532, 64
    %v3666 = vpop.permute.xlu0 %3665
    %3667 = vrot.lane.b32.xlu0 %v3535, 64
    %v3668 = vpop.permute.xlu0 %3667
    %3669 = vrot.lane.b32.xlu0 %v3538, 64
    %v3670 = vpop.permute.xlu0 %3669
    %3671 = vrot.lane.b32.xlu0 %v3541, 64
    %v3672 = vpop.permute.xlu0 %3671
    %3673 = vrot.lane.b32.xlu0 %v3544, 64
    %v3674 = vpop.permute.xlu0 %3673
    %3675 = vrot.lane.b32.xlu0 %v3547, 64
    %v3676 = vpop.permute.xlu0 %3675
    %3677 = vrot.lane.b32.xlu0 %v3550, 64
    %v3678 = vpop.permute.xlu0 %3677
    %3679 = vrot.lane.b32.xlu0 %v3553, 64
    %v3680 = vpop.permute.xlu0 %3679
    %3681 = vrot.lane.b32.xlu0 %v3556, 64
    %v3682 = vpop.permute.xlu0 %3681
    %3683 = vrot.lane.b32.xlu0 %v3559, 64
    %v3684 = vpop.permute.xlu0 %3683
    %3685 = vrot.lane.b32.xlu0 %v3562, 64
    %v3686 = vpop.permute.xlu0 %3685
    %3687 = vrot.lane.b32.xlu0 %v3565, 64
    %v3688 = vpop.permute.xlu0 %3687
    %3689 = vrot.lane.b32.xlu0 %v3568, 64
    %v3690 = vpop.permute.xlu0 %3689
    %3691 = vrot.lane.b32.xlu0 %v3571, 64
    %v3692 = vpop.permute.xlu0 %3691
    %3693 = vrot.lane.b32.xlu0 %v3574, 64
    %v3694 = vpop.permute.xlu0 %3693
    %3695 = vrot.lane.b32.xlu0 %v3577, 64
    %v3696 = vpop.permute.xlu0 %3695
    %3697 = vrot.lane.b32.xlu0 %v3580, 64
    %v3698 = vpop.permute.xlu0 %3697
    %3699 = vrot.lane.b32.xlu0 %v3583, 64
    %v3700 = vpop.permute.xlu0 %3699
    %3701 = vrot.lane.b32.xlu0 %v3586, 64
    %v3702 = vpop.permute.xlu0 %3701
    %3703 = vrot.lane.b32.xlu0 %v3589, 64
    %v3704 = vpop.permute.xlu0 %3703
    %3705 = vrot.lane.b32.xlu0 %v3592, 64
    %v3706 = vpop.permute.xlu0 %3705
    %3707 = vrot.lane.b32.xlu0 %v3595, 64
    %v3708 = vpop.permute.xlu0 %3707
    %3709 = vrot.lane.b32.xlu0 %v3598, 64
    %v3710 = vpop.permute.xlu0 %3709
    %3711 = vrot.lane.b32.xlu0 %v3601, 64
    %v3712 = vpop.permute.xlu0 %3711
    %3713 = vrot.lane.b32.xlu0 %v3604, 64
    %v3714 = vpop.permute.xlu0 %3713
    %3715 = vrot.lane.b32.xlu0 %v3607, 64
    %v3716 = vpop.permute.xlu0 %3715
    %3717 = vrot.lane.b32.xlu0 %v3610, 64
    %v3718 = vpop.permute.xlu0 %3717
    %3719 = vrot.lane.b32.xlu0 %v3613, 64
    %v3720 = vpop.permute.xlu0 %3719
    %3721 = vrot.lane.b32.xlu0 %v3616, 64
    %v3722 = vpop.permute.xlu0 %3721
    %3723 = vrot.lane.b32.xlu0 %v3619, 64
    %v3724 = vpop.permute.xlu0 %3723
    %3725 = vrot.lane.b32.xlu0 %v3622, 64
    %v3726 = vpop.permute.xlu0 %3725
    %3727 = vrot.lane.b32.xlu0 %v3625, 64
    %v3728 = vpop.permute.xlu0 %3727
    %3729 = vrot.lane.b32.xlu0 %v3628, 64
    %v3730 = vpop.permute.xlu0 %3729
    %3731 = vrot.lane.b32.xlu0 %v3631, 64
    %v3732 = vpop.permute.xlu0 %3731
    %3733 = vrot.lane.b32.xlu0 %v3634, 64
    %v3734 = vpop.permute.xlu0 %3733
    %3735 = vrot.lane.b32.xlu0 %v3637, 64
    %v3736 = vpop.permute.xlu0 %3735
    %3737 = vrot.lane.b32.xlu0 %v3640, 64
    %v3738 = vpop.permute.xlu0 %3737
    %3739 = vrot.lane.b32.xlu0 %v3643, 64
    %v3740 = vpop.permute.xlu0 %3739
    %3741 = vrot.lane.b32.xlu0 %v3646, 64
    %v3742 = vpop.permute.xlu0 %3741
    %3743 = vrot.lane.b32.xlu0 %v3649, 64
    %v3744 = vpop.permute.xlu0 %3743
    %3745 = vrot.lane.b32.xlu0 %v3652, 64
    %v3746 = vpop.permute.xlu0 %3745
    %3747 = vrot.lane.b32.xlu0 %v3655, 64
    %v3748 = vpop.permute.xlu0 %3747
    %3749 = vrot.lane.b32.xlu0 %v3658, 64
    %v3750 = vpop.permute.xlu0 %3749
    %vm3797 = vcmask 781824
    %3798 = vst.msk [vmem:[#allocation2] sm:$0xf] %vm3797, %v3660
    %3799 = vst.msk [vmem:[#allocation2 + $0xc] sm:$0xf] %vm3797, %v3662
    %3800 = vst.msk [vmem:[#allocation2 + $0x18] sm:$0xf] %vm3797, %v3664
    %3801 = vst.msk [vmem:[#allocation2 + $0x24] sm:$0xf] %vm3797, %v3666
    %3802 = vst.msk [vmem:[#allocation2 + $0x30] sm:$0xf] %vm3797, %v3668
    %3803 = vst.msk [vmem:[#allocation2 + $0x3c] sm:$0xf] %vm3797, %v3670
    %3804 = vst.msk [vmem:[#allocation2 + $0x48] sm:$0xf] %vm3797, %v3672
    %3805 = vst.msk [vmem:[#allocation2 + $0x54] sm:$0xf] %vm3797, %v3674
    %3806 = vst.msk [vmem:[#allocation2 + $0x60] sm:$0xf] %vm3797, %v3676
    %3807 = vst.msk [vmem:[#allocation2 + $0x6c] sm:$0xf] %vm3797, %v3678
    %3808 = vst.msk [vmem:[#allocation2 + $0x78] sm:$0xf] %vm3797, %v3680
    %3809 = vst.msk [vmem:[#allocation2 + $0x84] sm:$0xf] %vm3797, %v3682
    %3810 = vst.msk [vmem:[#allocation2 + $0x90] sm:$0xf] %vm3797, %v3684
    %3811 = vst.msk [vmem:[#allocation2 + $0x9c] sm:$0xf] %vm3797, %v3686
    %3812 = vst.msk [vmem:[#allocation2 + $0xa8] sm:$0xf] %vm3797, %v3688
    %3813 = vst.msk [vmem:[#allocation2 + $0xb4] sm:$0xf] %vm3797, %v3690
    %3814 = vst.msk [vmem:[#allocation2 + $0xc0] sm:$0xf] %vm3797, %v3692
    %3815 = vst.msk [vmem:[#allocation2 + $0xcc] sm:$0xf] %vm3797, %v3694
    %3816 = vst.msk [vmem:[#allocation2 + $0xd8] sm:$0xf] %vm3797, %v3696
    %3817 = vst.msk [vmem:[#allocation2 + $0xe4] sm:$0xf] %vm3797, %v3698
    %3818 = vst.msk [vmem:[#allocation2 + $0xf0] sm:$0xf] %vm3797, %v3700
    %3819 = vst.msk [vmem:[#allocation2 + $0xfc] sm:$0xf] %vm3797, %v3702
    %3820 = vst.msk [vmem:[#allocation2 + $0x108] sm:$0xf] %vm3797, %v3704
    %3821 = vst.msk [vmem:[#allocation2 + $0x114] sm:$0xf] %vm3797, %v3706
    %3822 = vst.msk [vmem:[#allocation2 + $0x120] sm:$0xf] %vm3797, %v3708
    %3823 = vst.msk [vmem:[#allocation2 + $0x12c] sm:$0xf] %vm3797, %v3710
    %3824 = vst.msk [vmem:[#allocation2 + $0x138] sm:$0xf] %vm3797, %v3712
    %3825 = vst.msk [vmem:[#allocation2 + $0x144] sm:$0xf] %vm3797, %v3714
    %3826 = vst.msk [vmem:[#allocation2 + $0x150] sm:$0xf] %vm3797, %v3716
    %3827 = vst.msk [vmem:[#allocation2 + $0x15c] sm:$0xf] %vm3797, %v3718
    %3828 = vst.msk [vmem:[#allocation2 + $0x168] sm:$0xf] %vm3797, %v3720
    %3829 = vst.msk [vmem:[#allocation2 + $0x174] sm:$0xf] %vm3797, %v3722
    %3830 = vst.msk [vmem:[#allocation2 + $0x180] sm:$0xf] %vm3797, %v3724
    %3831 = vst.msk [vmem:[#allocation2 + $0x18c] sm:$0xf] %vm3797, %v3726
    %3832 = vst.msk [vmem:[#allocation2 + $0x198] sm:$0xf] %vm3797, %v3728
    %3833 = vst.msk [vmem:[#allocation2 + $0x1a4] sm:$0xf] %vm3797, %v3730
    %3834 = vst.msk [vmem:[#allocation2 + $0x1b0] sm:$0xf] %vm3797, %v3732
    %3835 = vst.msk [vmem:[#allocation2 + $0x1bc] sm:$0xf] %vm3797, %v3734
    %3836 = vst.msk [vmem:[#allocation2 + $0x1c8] sm:$0xf] %vm3797, %v3736
    %3837 = vst.msk [vmem:[#allocation2 + $0x1d4] sm:$0xf] %vm3797, %v3738
    %3838 = vst.msk [vmem:[#allocation2 + $0x1e0] sm:$0xf] %vm3797, %v3740
    %3839 = vst.msk [vmem:[#allocation2 + $0x1ec] sm:$0xf] %vm3797, %v3742
    %3840 = vst.msk [vmem:[#allocation2 + $0x1f8] sm:$0xf] %vm3797, %v3744
    %3841 = vst.msk [vmem:[#allocation2 + $0x204] sm:$0xf] %vm3797, %v3746
    %3842 = vst.msk [vmem:[#allocation2 + $0x210] sm:$0xf] %vm3797, %v3748
    %3843 = vst.msk [vmem:[#allocation2 + $0x21c] sm:$0xf] %vm3797, %v3750
    %v3845 = vunpack.c.h.b16 %v2975
    %v3846 = vunpack.c.l.b16 %v2976
    %v3847 = vunpack.c.h.b16 %v2976
    %v3848 = vpack.c.b16 %v3845, %v3845
    %v3849 = vpack.c.b16 %v3846, %v3846
    %v3850 = vpack.c.b16 %v3847, %v3847
    %vm3851 = vcmask 1040384
    %vm3852 = vcmask 1044484
    %vm3853 = vmor %vm3851, %vm3852
    %v3854 = vrot.slane %v3051, 7
    %v3855 = vrot.slane %v3854, 4
    %v3856 = vrot.slane %v3052, 7
    %v3857 = vsel %vm3853, %v3855, %v3856
    %v3858 = vrot.slane %v3856, 4
    %v3859 = vrot.slane %v3053, 7
    %v3860 = vsel %vm3853, %v3858, %v3859
    %v3861 = vrot.slane %v3859, 4
    %v3862 = vrot.slane %v3054, 7
    %v3863 = vsel %vm3853, %v3861, %v3862
    %v3864 = vrot.slane %v3862, 4
    %v3865 = vrot.slane %v3055, 7
    %v3866 = vsel %vm3853, %v3864, %v3865
    %v3867 = vrot.slane %v3865, 4
    %v3868 = vrot.slane %v3056, 7
    %v3869 = vsel %vm3853, %v3867, %v3868
    %v3870 = vrot.slane %v3868, 4
    %v3871 = vrot.slane %v3057, 7
    %v3872 = vsel %vm3853, %v3870, %v3871
    %v3873 = vrot.slane %v3871, 4
    %v3874 = vrot.slane %v3058, 7
    %v3875 = vsel %vm3853, %v3873, %v3874
    %v3876 = vrot.slane %v3874, 4
    %v3877 = vrot.slane %v3059, 7
    %v3878 = vsel %vm3853, %v3876, %v3877
    %v3879 = vrot.slane %v3877, 4
    %v3880 = vrot.slane %v3060, 7
    %v3881 = vsel %vm3853, %v3879, %v3880
    %v3882 = vrot.slane %v3880, 4
    %v3883 = vrot.slane %v3061, 7
    %v3884 = vsel %vm3853, %v3882, %v3883
    %v3885 = vrot.slane %v3883, 4
    %v3886 = vrot.slane %v3062, 7
    %v3887 = vsel %vm3853, %v3885, %v3886
    %v3888 = vrot.slane %v3886, 4
    %v3889 = vrot.slane %v3063, 7
    %v3890 = vsel %vm3853, %v3888, %v3889
    %v3891 = vrot.slane %v3889, 4
    %v3892 = vrot.slane %v3064, 7
    %v3893 = vsel %vm3853, %v3891, %v3892
    %v3894 = vrot.slane %v3892, 4
    %v3895 = vrot.slane %v3065, 7
    %v3896 = vsel %vm3853, %v3894, %v3895
    %v3897 = vrot.slane %v3895, 4
    %v3898 = vrot.slane %v3066, 7
    %v3899 = vsel %vm3853, %v3897, %v3898
    %v3900 = vrot.slane %v3898, 4
    %v3901 = vrot.slane %v3067, 7
    %v3902 = vsel %vm3853, %v3900, %v3901
    %v3903 = vrot.slane %v3901, 4
    %v3904 = vrot.slane %v3068, 7
    %v3905 = vsel %vm3853, %v3903, %v3904
    %v3906 = vrot.slane %v3904, 4
    %v3907 = vrot.slane %v3069, 7
    %v3908 = vsel %vm3853, %v3906, %v3907
    %v3909 = vrot.slane %v3907, 4
    %v3910 = vrot.slane %v3070, 7
    %v3911 = vsel %vm3853, %v3909, %v3910
    %v3912 = vrot.slane %v3910, 4
    %v3913 = vrot.slane %v3071, 7
    %v3914 = vsel %vm3853, %v3912, %v3913
    %v3915 = vrot.slane %v3913, 4
    %v3916 = vrot.slane %v3072, 7
    %v3917 = vsel %vm3853, %v3915, %v3916
    %v3918 = vrot.slane %v3916, 4
    %v3919 = vrot.slane %v3073, 7
    %v3920 = vsel %vm3853, %v3918, %v3919
    %v3921 = vrot.slane %v3919, 4
    %v3922 = vrot.slane %v3074, 7
    %v3923 = vsel %vm3853, %v3921, %v3922
    %v3924 = vrot.slane %v3922, 4
    %v3925 = vrot.slane %v3075, 7
    %v3926 = vsel %vm3853, %v3924, %v3925
    %v3927 = vrot.slane %v3925, 4
    %v3928 = vrot.slane %v3076, 7
    %v3929 = vsel %vm3853, %v3927, %v3928
    %v3930 = vrot.slane %v3928, 4
    %v3931 = vrot.slane %v3077, 7
    %v3932 = vsel %vm3853, %v3930, %v3931
    %v3933 = vrot.slane %v3931, 4
    %v3934 = vrot.slane %v3078, 7
    %v3935 = vsel %vm3853, %v3933, %v3934
    %v3936 = vrot.slane %v3934, 4
    %v3937 = vrot.slane %v3079, 7
    %v3938 = vsel %vm3853, %v3936, %v3937
    %v3939 = vrot.slane %v3937, 4
    %v3940 = vrot.slane %v3080, 7
    %v3941 = vsel %vm3853, %v3939, %v3940
    %v3942 = vrot.slane %v3940, 4
    %v3943 = vrot.slane %v3081, 7
    %v3944 = vsel %vm3853, %v3942, %v3943
    %v3945 = vrot.slane %v3943, 4
    %v3946 = vrot.slane %v3082, 7
    %v3947 = vsel %vm3853, %v3945, %v3946
    %v3948 = vrot.slane %v3946, 4
    %v3949 = vrot.slane %v3083, 7
    %v3950 = vsel %vm3853, %v3948, %v3949
    %v3951 = vrot.slane %v3949, 4
    %v3952 = vrot.slane %v3084, 7
    %v3953 = vsel %vm3853, %v3951, %v3952
    %v3954 = vrot.slane %v3952, 4
    %v3955 = vrot.slane %v3085, 7
    %v3956 = vsel %vm3853, %v3954, %v3955
    %v3957 = vrot.slane %v3955, 4
    %v3958 = vrot.slane %v3086, 7
    %v3959 = vsel %vm3853, %v3957, %v3958
    %v3960 = vrot.slane %v3958, 4
    %v3961 = vrot.slane %v3087, 7
    %v3962 = vsel %vm3853, %v3960, %v3961
    %v3963 = vrot.slane %v3961, 4
    %v3964 = vrot.slane %v3088, 7
    %v3965 = vsel %vm3853, %v3963, %v3964
    %v3966 = vrot.slane %v3964, 4
    %v3967 = vrot.slane %v3089, 7
    %v3968 = vsel %vm3853, %v3966, %v3967
    %v3969 = vrot.slane %v3967, 4
    %v3970 = vrot.slane %v3090, 7
    %v3971 = vsel %vm3853, %v3969, %v3970
    %v3972 = vrot.slane %v3970, 4
    %v3973 = vrot.slane %v3091, 7
    %v3974 = vsel %vm3853, %v3972, %v3973
    %v3975 = vrot.slane %v3973, 4
    %v3976 = vrot.slane %v3092, 7
    %v3977 = vsel %vm3853, %v3975, %v3976
    %v3978 = vrot.slane %v3976, 4
    %v3979 = vrot.slane %v3093, 7
    %v3980 = vsel %vm3853, %v3978, %v3979
    %v3981 = vrot.slane %v3979, 4
    %v3982 = vrot.slane %v3189, 7
    %v3983 = vsel %vm3853, %v3981, %v3982
    %v3984 = vrot.slane %v3982, 4
    %v3985 = vrot.slane %v3848, 7
    %v3986 = vsel %vm3853, %v3984, %v3985
    %v3987 = vrot.slane %v3985, 4
    %v3988 = vrot.slane %v3849, 7
    %v3989 = vsel %vm3853, %v3987, %v3988
    %v3990 = vrot.slane %v3988, 4
    %v3991 = vrot.slane %v3850, 7
    %v3992 = vsel %vm3853, %v3990, %v3991
    %3993 = vrot.lane.b32.xlu0 %v3857, 96
    %v3994 = vpop.permute.xlu0 %3993
    %3995 = vrot.lane.b32.xlu0 %v3860, 96
    %v3996 = vpop.permute.xlu0 %3995
    %3997 = vrot.lane.b32.xlu0 %v3863, 96
    %v3998 = vpop.permute.xlu0 %3997
    %3999 = vrot.lane.b32.xlu0 %v3866, 96
    %v4000 = vpop.permute.xlu0 %3999
    %4001 = vrot.lane.b32.xlu0 %v3869, 96
    %v4002 = vpop.permute.xlu0 %4001
    %4003 = vrot.lane.b32.xlu0 %v3872, 96
    %v4004 = vpop.permute.xlu0 %4003
    %4005 = vrot.lane.b32.xlu0 %v3875, 96
    %v4006 = vpop.permute.xlu0 %4005
    %4007 = vrot.lane.b32.xlu0 %v3878, 96
    %v4008 = vpop.permute.xlu0 %4007
    %4009 = vrot.lane.b32.xlu0 %v3881, 96
    %v4010 = vpop.permute.xlu0 %4009
    %4011 = vrot.lane.b32.xlu0 %v3884, 96
    %v4012 = vpop.permute.xlu0 %4011
    %4013 = vrot.lane.b32.xlu0 %v3887, 96
    %v4014 = vpop.permute.xlu0 %4013
    %4015 = vrot.lane.b32.xlu0 %v3890, 96
    %v4016 = vpop.permute.xlu0 %4015
    %4017 = vrot.lane.b32.xlu0 %v3893, 96
    %v4018 = vpop.permute.xlu0 %4017
    %4019 = vrot.lane.b32.xlu0 %v3896, 96
    %v4020 = vpop.permute.xlu0 %4019
    %4021 = vrot.lane.b32.xlu0 %v3899, 96
    %v4022 = vpop.permute.xlu0 %4021
    %4023 = vrot.lane.b32.xlu0 %v3902, 96
    %v4024 = vpop.permute.xlu0 %4023
    %4025 = vrot.lane.b32.xlu0 %v3905, 96
    %v4026 = vpop.permute.xlu0 %4025
    %4027 = vrot.lane.b32.xlu0 %v3908, 96
    %v4028 = vpop.permute.xlu0 %4027
    %4029 = vrot.lane.b32.xlu0 %v3911, 96
    %v4030 = vpop.permute.xlu0 %4029
    %4031 = vrot.lane.b32.xlu0 %v3914, 96
    %v4032 = vpop.permute.xlu0 %4031
    %4033 = vrot.lane.b32.xlu0 %v3917, 96
    %v4034 = vpop.permute.xlu0 %4033
    %4035 = vrot.lane.b32.xlu0 %v3920, 96
    %v4036 = vpop.permute.xlu0 %4035
    %4037 = vrot.lane.b32.xlu0 %v3923, 96
    %v4038 = vpop.permute.xlu0 %4037
    %4039 = vrot.lane.b32.xlu0 %v3926, 96
    %v4040 = vpop.permute.xlu0 %4039
    %4041 = vrot.lane.b32.xlu0 %v3929, 96
    %v4042 = vpop.permute.xlu0 %4041
    %4043 = vrot.lane.b32.xlu0 %v3932, 96
    %v4044 = vpop.permute.xlu0 %4043
    %4045 = vrot.lane.b32.xlu0 %v3935, 96
    %v4046 = vpop.permute.xlu0 %4045
    %4047 = vrot.lane.b32.xlu0 %v3938, 96
    %v4048 = vpop.permute.xlu0 %4047
    %4049 = vrot.lane.b32.xlu0 %v3941, 96
    %v4050 = vpop.permute.xlu0 %4049
    %4051 = vrot.lane.b32.xlu0 %v3944, 96
    %v4052 = vpop.permute.xlu0 %4051
    %4053 = vrot.lane.b32.xlu0 %v3947, 96
    %v4054 = vpop.permute.xlu0 %4053
    %4055 = vrot.lane.b32.xlu0 %v3950, 96
    %v4056 = vpop.permute.xlu0 %4055
    %4057 = vrot.lane.b32.xlu0 %v3953, 96
    %v4058 = vpop.permute.xlu0 %4057
    %4059 = vrot.lane.b32.xlu0 %v3956, 96
    %v4060 = vpop.permute.xlu0 %4059
    %4061 = vrot.lane.b32.xlu0 %v3959, 96
    %v4062 = vpop.permute.xlu0 %4061
    %4063 = vrot.lane.b32.xlu0 %v3962, 96
    %v4064 = vpop.permute.xlu0 %4063
    %4065 = vrot.lane.b32.xlu0 %v3965, 96
    %v4066 = vpop.permute.xlu0 %4065
    %4067 = vrot.lane.b32.xlu0 %v3968, 96
    %v4068 = vpop.permute.xlu0 %4067
    %4069 = vrot.lane.b32.xlu0 %v3971, 96
    %v4070 = vpop.permute.xlu0 %4069
    %4071 = vrot.lane.b32.xlu0 %v3974, 96
    %v4072 = vpop.permute.xlu0 %4071
    %4073 = vrot.lane.b32.xlu0 %v3977, 96
    %v4074 = vpop.permute.xlu0 %4073
    %4075 = vrot.lane.b32.xlu0 %v3980, 96
    %v4076 = vpop.permute.xlu0 %4075
    %4077 = vrot.lane.b32.xlu0 %v3983, 96
    %v4078 = vpop.permute.xlu0 %4077
    %4079 = vrot.lane.b32.xlu0 %v3986, 96
    %v4080 = vpop.permute.xlu0 %4079
    %4081 = vrot.lane.b32.xlu0 %v3989, 96
    %v4082 = vpop.permute.xlu0 %4081
    %4083 = vrot.lane.b32.xlu0 %v3992, 96
    %v4084 = vpop.permute.xlu0 %4083
    %vm4131 = vcmask 1044224
    %4132 = vst.msk [vmem:[#allocation2] sm:$0xf] %vm4131, %v3994
    %4133 = vst.msk [vmem:[#allocation2 + $0xc] sm:$0xf] %vm4131, %v3996
    %4134 = vst.msk [vmem:[#allocation2 + $0x18] sm:$0xf] %vm4131, %v3998
    %4135 = vst.msk [vmem:[#allocation2 + $0x24] sm:$0xf] %vm4131, %v4000
    %4136 = vst.msk [vmem:[#allocation2 + $0x30] sm:$0xf] %vm4131, %v4002
    %4137 = vst.msk [vmem:[#allocation2 + $0x3c] sm:$0xf] %vm4131, %v4004
    %4138 = vst.msk [vmem:[#allocation2 + $0x48] sm:$0xf] %vm4131, %v4006
    %4139 = vst.msk [vmem:[#allocation2 + $0x54] sm:$0xf] %vm4131, %v4008
    %4140 = vst.msk [vmem:[#allocation2 + $0x60] sm:$0xf] %vm4131, %v4010
    %4141 = vst.msk [vmem:[#allocation2 + $0x6c] sm:$0xf] %vm4131, %v4012
    %4142 = vst.msk [vmem:[#allocation2 + $0x78] sm:$0xf] %vm4131, %v4014
    %4143 = vst.msk [vmem:[#allocation2 + $0x84] sm:$0xf] %vm4131, %v4016
    %4144 = vst.msk [vmem:[#allocation2 + $0x90] sm:$0xf] %vm4131, %v4018
    %4145 = vst.msk [vmem:[#allocation2 + $0x9c] sm:$0xf] %vm4131, %v4020
    %4146 = vst.msk [vmem:[#allocation2 + $0xa8] sm:$0xf] %vm4131, %v4022
    %4147 = vst.msk [vmem:[#allocation2 + $0xb4] sm:$0xf] %vm4131, %v4024
    %4148 = vst.msk [vmem:[#allocation2 + $0xc0] sm:$0xf] %vm4131, %v4026
    %4149 = vst.msk [vmem:[#allocation2 + $0xcc] sm:$0xf] %vm4131, %v4028
    %4150 = vst.msk [vmem:[#allocation2 + $0xd8] sm:$0xf] %vm4131, %v4030
    %4151 = vst.msk [vmem:[#allocation2 + $0xe4] sm:$0xf] %vm4131, %v4032
    %4152 = vst.msk [vmem:[#allocation2 + $0xf0] sm:$0xf] %vm4131, %v4034
    %4153 = vst.msk [vmem:[#allocation2 + $0xfc] sm:$0xf] %vm4131, %v4036
    %4154 = vst.msk [vmem:[#allocation2 + $0x108] sm:$0xf] %vm4131, %v4038
    %4155 = vst.msk [vmem:[#allocation2 + $0x114] sm:$0xf] %vm4131, %v4040
    %4156 = vst.msk [vmem:[#allocation2 + $0x120] sm:$0xf] %vm4131, %v4042
    %4157 = vst.msk [vmem:[#allocation2 + $0x12c] sm:$0xf] %vm4131, %v4044
    %4158 = vst.msk [vmem:[#allocation2 + $0x138] sm:$0xf] %vm4131, %v4046
    %4159 = vst.msk [vmem:[#allocation2 + $0x144] sm:$0xf] %vm4131, %v4048
    %4160 = vst.msk [vmem:[#allocation2 + $0x150] sm:$0xf] %vm4131, %v4050
    %4161 = vst.msk [vmem:[#allocation2 + $0x15c] sm:$0xf] %vm4131, %v4052
    %4162 = vst.msk [vmem:[#allocation2 + $0x168] sm:$0xf] %vm4131, %v4054
    %4163 = vst.msk [vmem:[#allocation2 + $0x174] sm:$0xf] %vm4131, %v4056
    %4164 = vst.msk [vmem:[#allocation2 + $0x180] sm:$0xf] %vm4131, %v4058
    %4165 = vst.msk [vmem:[#allocation2 + $0x18c] sm:$0xf] %vm4131, %v4060
    %4166 = vst.msk [vmem:[#allocation2 + $0x198] sm:$0xf] %vm4131, %v4062
    %4167 = vst.msk [vmem:[#allocation2 + $0x1a4] sm:$0xf] %vm4131, %v4064
    %4168 = vst.msk [vmem:[#allocation2 + $0x1b0] sm:$0xf] %vm4131, %v4066
    %4169 = vst.msk [vmem:[#allocation2 + $0x1bc] sm:$0xf] %vm4131, %v4068
    %4170 = vst.msk [vmem:[#allocation2 + $0x1c8] sm:$0xf] %vm4131, %v4070
    %4171 = vst.msk [vmem:[#allocation2 + $0x1d4] sm:$0xf] %vm4131, %v4072
    %4172 = vst.msk [vmem:[#allocation2 + $0x1e0] sm:$0xf] %vm4131, %v4074
    %4173 = vst.msk [vmem:[#allocation2 + $0x1ec] sm:$0xf] %vm4131, %v4076
    %4174 = vst.msk [vmem:[#allocation2 + $0x1f8] sm:$0xf] %vm4131, %v4078
    %4175 = vst.msk [vmem:[#allocation2 + $0x204] sm:$0xf] %vm4131, %v4080
    %4176 = vst.msk [vmem:[#allocation2 + $0x210] sm:$0xf] %vm4131, %v4082
    %4177 = vst.msk [vmem:[#allocation2 + $0x21c] sm:$0xf] %vm4131, %v4084
    %4182 = vst.msk [vmem:[#allocation2 + $0x4] sm:$0xf] %vm3140, %v3052
    %4183 = vst.msk [vmem:[#allocation2 + $0x10] sm:$0xf] %vm3140, %v3053
    %4184 = vst.msk [vmem:[#allocation2 + $0x1c] sm:$0xf] %vm3140, %v3054
    %4185 = vst.msk [vmem:[#allocation2 + $0x28] sm:$0xf] %vm3140, %v3055
    %4186 = vst.msk [vmem:[#allocation2 + $0x34] sm:$0xf] %vm3140, %v3056
    %4187 = vst.msk [vmem:[#allocation2 + $0x40] sm:$0xf] %vm3140, %v3057
    %4188 = vst.msk [vmem:[#allocation2 + $0x4c] sm:$0xf] %vm3140, %v3058
    %4189 = vst.msk [vmem:[#allocation2 + $0x58] sm:$0xf] %vm3140, %v3059
    %4190 = vst.msk [vmem:[#allocation2 + $0x64] sm:$0xf] %vm3140, %v3060
    %4191 = vst.msk [vmem:[#allocation2 + $0x70] sm:$0xf] %vm3140, %v3061
    %4192 = vst.msk [vmem:[#allocation2 + $0x7c] sm:$0xf] %vm3140, %v3062
    %4193 = vst.msk [vmem:[#allocation2 + $0x88] sm:$0xf] %vm3140, %v3063
    %4194 = vst.msk [vmem:[#allocation2 + $0x94] sm:$0xf] %vm3140, %v3064
    %4195 = vst.msk [vmem:[#allocation2 + $0xa0] sm:$0xf] %vm3140, %v3065
    %4196 = vst.msk [vmem:[#allocation2 + $0xac] sm:$0xf] %vm3140, %v3066
    %4197 = vst.msk [vmem:[#allocation2 + $0xb8] sm:$0xf] %vm3140, %v3067
    %4198 = vst.msk [vmem:[#allocation2 + $0xc4] sm:$0xf] %vm3140, %v3068
    %4199 = vst.msk [vmem:[#allocation2 + $0xd0] sm:$0xf] %vm3140, %v3069
    %4200 = vst.msk [vmem:[#allocation2 + $0xdc] sm:$0xf] %vm3140, %v3070
    %4201 = vst.msk [vmem:[#allocation2 + $0xe8] sm:$0xf] %vm3140, %v3071
    %4202 = vst.msk [vmem:[#allocation2 + $0xf4] sm:$0xf] %vm3140, %v3072
    %4203 = vst.msk [vmem:[#allocation2 + $0x100] sm:$0xf] %vm3140, %v3073
    %4204 = vst.msk [vmem:[#allocation2 + $0x10c] sm:$0xf] %vm3140, %v3074
    %4205 = vst.msk [vmem:[#allocation2 + $0x118] sm:$0xf] %vm3140, %v3075
    %4206 = vst.msk [vmem:[#allocation2 + $0x124] sm:$0xf] %vm3140, %v3076
    %4207 = vst.msk [vmem:[#allocation2 + $0x130] sm:$0xf] %vm3140, %v3077
    %4208 = vst.msk [vmem:[#allocation2 + $0x13c] sm:$0xf] %vm3140, %v3078
    %4209 = vst.msk [vmem:[#allocation2 + $0x148] sm:$0xf] %vm3140, %v3079
    %4210 = vst.msk [vmem:[#allocation2 + $0x154] sm:$0xf] %vm3140, %v3080
    %4211 = vst.msk [vmem:[#allocation2 + $0x160] sm:$0xf] %vm3140, %v3081
    %4212 = vst.msk [vmem:[#allocation2 + $0x16c] sm:$0xf] %vm3140, %v3082
    %4213 = vst.msk [vmem:[#allocation2 + $0x178] sm:$0xf] %vm3140, %v3083
    %4214 = vst.msk [vmem:[#allocation2 + $0x184] sm:$0xf] %vm3140, %v3084
    %4215 = vst.msk [vmem:[#allocation2 + $0x190] sm:$0xf] %vm3140, %v3085
    %4216 = vst.msk [vmem:[#allocation2 + $0x19c] sm:$0xf] %vm3140, %v3086
    %4217 = vst.msk [vmem:[#allocation2 + $0x1a8] sm:$0xf] %vm3140, %v3087
    %4218 = vst.msk [vmem:[#allocation2 + $0x1b4] sm:$0xf] %vm3140, %v3088
    %4219 = vst.msk [vmem:[#allocation2 + $0x1c0] sm:$0xf] %vm3140, %v3089
    %4220 = vst.msk [vmem:[#allocation2 + $0x1cc] sm:$0xf] %vm3140, %v3090
    %4221 = vst.msk [vmem:[#allocation2 + $0x1d8] sm:$0xf] %vm3140, %v3091
    %4222 = vst.msk [vmem:[#allocation2 + $0x1e4] sm:$0xf] %vm3140, %v3092
    %4223 = vst.msk [vmem:[#allocation2 + $0x1f0] sm:$0xf] %vm3140, %v3093
    %4224 = vst.msk [vmem:[#allocation2 + $0x1fc] sm:$0xf] %vm3140, %v3189
    %4225 = vst.msk [vmem:[#allocation2 + $0x208] sm:$0xf] %vm3140, %v3848
    %4226 = vst.msk [vmem:[#allocation2 + $0x214] sm:$0xf] %vm3140, %v3849
    %4227 = vst.msk [vmem:[#allocation2 + $0x220] sm:$0xf] %vm3140, %v3850
    %v4229 = vunpack.c.l.b16 %v2977
    %v4230 = vpack.c.b16 %v4229, %v4229
    %v4231 = vrot.slane %v3330, 4
    %v4232 = vrot.slane %v3848, 5
    %v4233 = vsel %vm3192, %v4231, %v4232
    %v4234 = vrot.slane %v4232, 4
    %v4235 = vrot.slane %v3849, 5
    %v4236 = vsel %vm3192, %v4234, %v4235
    %v4237 = vrot.slane %v4235, 4
    %v4238 = vrot.slane %v3850, 5
    %v4239 = vsel %vm3192, %v4237, %v4238
    %v4240 = vrot.slane %v4238, 4
    %v4241 = vrot.slane %v4230, 5
    %v4242 = vsel %vm3192, %v4240, %v4241
    %4243 = vrot.lane.b32.xlu0 %v4233, 32
    %v4244 = vpop.permute.xlu0 %4243
    %4245 = vrot.lane.b32.xlu0 %v4236, 32
    %v4246 = vpop.permute.xlu0 %4245
    %4247 = vrot.lane.b32.xlu0 %v4239, 32
    %v4248 = vpop.permute.xlu0 %4247
    %4249 = vrot.lane.b32.xlu0 %v4242, 32
    %v4250 = vpop.permute.xlu0 %4249
    %4255 = vst.msk [vmem:[#allocation2 + $0x4] sm:$0xf] %vm3470, %v3341
    %4256 = vst.msk [vmem:[#allocation2 + $0x10] sm:$0xf] %vm3470, %v3343
    %4257 = vst.msk [vmem:[#allocation2 + $0x1c] sm:$0xf] %vm3470, %v3345
    %4258 = vst.msk [vmem:[#allocation2 + $0x28] sm:$0xf] %vm3470, %v3347
    %4259 = vst.msk [vmem:[#allocation2 + $0x34] sm:$0xf] %vm3470, %v3349
    %4260 = vst.msk [vmem:[#allocation2 + $0x40] sm:$0xf] %vm3470, %v3351
    %4261 = vst.msk [vmem:[#allocation2 + $0x4c] sm:$0xf] %vm3470, %v3353
    %4262 = vst.msk [vmem:[#allocation2 + $0x58] sm:$0xf] %vm3470, %v3355
    %4263 = vst.msk [vmem:[#allocation2 + $0x64] sm:$0xf] %vm3470, %v3357
    %4264 = vst.msk [vmem:[#allocation2 + $0x70] sm:$0xf] %vm3470, %v3359
    %4265 = vst.msk [vmem:[#allocation2 + $0x7c] sm:$0xf] %vm3470, %v3361
    %4266 = vst.msk [vmem:[#allocation2 + $0x88] sm:$0xf] %vm3470, %v3363
    %4267 = vst.msk [vmem:[#allocation2 + $0x94] sm:$0xf] %vm3470, %v3365
    %4268 = vst.msk [vmem:[#allocation2 + $0xa0] sm:$0xf] %vm3470, %v3367
    %4269 = vst.msk [vmem:[#allocation2 + $0xac] sm:$0xf] %vm3470, %v3369
    %4270 = vst.msk [vmem:[#allocation2 + $0xb8] sm:$0xf] %vm3470, %v3371
    %4271 = vst.msk [vmem:[#allocation2 + $0xc4] sm:$0xf] %vm3470, %v3373
    %4272 = vst.msk [vmem:[#allocation2 + $0xd0] sm:$0xf] %vm3470, %v3375
    %4273 = vst.msk [vmem:[#allocation2 + $0xdc] sm:$0xf] %vm3470, %v3377
    %4274 = vst.msk [vmem:[#allocation2 + $0xe8] sm:$0xf] %vm3470, %v3379
    %4275 = vst.msk [vmem:[#allocation2 + $0xf4] sm:$0xf] %vm3470, %v3381
    %4276 = vst.msk [vmem:[#allocation2 + $0x100] sm:$0xf] %vm3470, %v3383
    %4277 = vst.msk [vmem:[#allocation2 + $0x10c] sm:$0xf] %vm3470, %v3385
    %4278 = vst.msk [vmem:[#allocation2 + $0x118] sm:$0xf] %vm3470, %v3387
    %4279 = vst.msk [vmem:[#allocation2 + $0x124] sm:$0xf] %vm3470, %v3389
    %4280 = vst.msk [vmem:[#allocation2 + $0x130] sm:$0xf] %vm3470, %v3391
    %4281 = vst.msk [vmem:[#allocation2 + $0x13c] sm:$0xf] %vm3470, %v3393
    %4282 = vst.msk [vmem:[#allocation2 + $0x148] sm:$0xf] %vm3470, %v3395
    %4283 = vst.msk [vmem:[#allocation2 + $0x154] sm:$0xf] %vm3470, %v3397
    %4284 = vst.msk [vmem:[#allocation2 + $0x160] sm:$0xf] %vm3470, %v3399
    %4285 = vst.msk [vmem:[#allocation2 + $0x16c] sm:$0xf] %vm3470, %v3401
    %4286 = vst.msk [vmem:[#allocation2 + $0x178] sm:$0xf] %vm3470, %v3403
    %4287 = vst.msk [vmem:[#allocation2 + $0x184] sm:$0xf] %vm3470, %v3405
    %4288 = vst.msk [vmem:[#allocation2 + $0x190] sm:$0xf] %vm3470, %v3407
    %4289 = vst.msk [vmem:[#allocation2 + $0x19c] sm:$0xf] %vm3470, %v3409
    %4290 = vst.msk [vmem:[#allocation2 + $0x1a8] sm:$0xf] %vm3470, %v3411
    %4291 = vst.msk [vmem:[#allocation2 + $0x1b4] sm:$0xf] %vm3470, %v3413
    %4292 = vst.msk [vmem:[#allocation2 + $0x1c0] sm:$0xf] %vm3470, %v3415
    %4293 = vst.msk [vmem:[#allocation2 + $0x1cc] sm:$0xf] %vm3470, %v3417
    %4294 = vst.msk [vmem:[#allocation2 + $0x1d8] sm:$0xf] %vm3470, %v3419
    %4295 = vst.msk [vmem:[#allocation2 + $0x1e4] sm:$0xf] %vm3470, %v3421
    %4296 = vst.msk [vmem:[#allocation2 + $0x1f0] sm:$0xf] %vm3470, %v3423
    %4297 = vst.msk [vmem:[#allocation2 + $0x1fc] sm:$0xf] %vm3470, %v4244
    %4298 = vst.msk [vmem:[#allocation2 + $0x208] sm:$0xf] %vm3470, %v4246
    %4299 = vst.msk [vmem:[#allocation2 + $0x214] sm:$0xf] %vm3470, %v4248
    %4300 = vst.msk [vmem:[#allocation2 + $0x220] sm:$0xf] %vm3470, %v4250
    %v4302 = vunpack.c.h.b16 %v2977
    %v4303 = vunpack.c.l.b16 %v2978
    %v4304 = vunpack.c.h.b16 %v2978
    %v4305 = vpack.c.b16 %v4302, %v4302
    %v4306 = vpack.c.b16 %v4303, %v4303
    %v4307 = vpack.c.b16 %v4304, %v4304
    %v4308 = vrot.slane %v3657, 4
    %v4309 = vrot.slane %v3848, 6
    %v4310 = vsel %vm3519, %v4308, %v4309
    %v4311 = vrot.slane %v4309, 4
    %v4312 = vrot.slane %v3849, 6
    %v4313 = vsel %vm3519, %v4311, %v4312
    %v4314 = vrot.slane %v4312, 4
    %v4315 = vrot.slane %v3850, 6
    %v4316 = vsel %vm3519, %v4314, %v4315
    %v4317 = vrot.slane %v4315, 4
    %v4318 = vrot.slane %v4230, 6
    %v4319 = vsel %vm3519, %v4317, %v4318
    %v4320 = vrot.slane %v4318, 4
    %v4321 = vrot.slane %v4305, 6
    %v4322 = vsel %vm3519, %v4320, %v4321
    %v4323 = vrot.slane %v4321, 4
    %v4324 = vrot.slane %v4306, 6
    %v4325 = vsel %vm3519, %v4323, %v4324
    %v4326 = vrot.slane %v4324, 4
    %v4327 = vrot.slane %v4307, 6
    %v4328 = vsel %vm3519, %v4326, %v4327
    %4329 = vrot.lane.b32.xlu0 %v4310, 64
    %v4330 = vpop.permute.xlu0 %4329
    %4331 = vrot.lane.b32.xlu0 %v4313, 64
    %v4332 = vpop.permute.xlu0 %4331
    %4333 = vrot.lane.b32.xlu0 %v4316, 64
    %v4334 = vpop.permute.xlu0 %4333
    %4335 = vrot.lane.b32.xlu0 %v4319, 64
    %v4336 = vpop.permute.xlu0 %4335
    %4337 = vrot.lane.b32.xlu0 %v4322, 64
    %v4338 = vpop.permute.xlu0 %4337
    %4339 = vrot.lane.b32.xlu0 %v4325, 64
    %v4340 = vpop.permute.xlu0 %4339
    %4341 = vrot.lane.b32.xlu0 %v4328, 64
    %v4342 = vpop.permute.xlu0 %4341
    %4350 = vst.msk [vmem:[#allocation2 + $0x4] sm:$0xf] %vm3797, %v3674
    %4351 = vst.msk [vmem:[#allocation2 + $0x10] sm:$0xf] %vm3797, %v3676
    %4352 = vst.msk [vmem:[#allocation2 + $0x1c] sm:$0xf] %vm3797, %v3678
    %4353 = vst.msk [vmem:[#allocation2 + $0x28] sm:$0xf] %vm3797, %v3680
    %4354 = vst.msk [vmem:[#allocation2 + $0x34] sm:$0xf] %vm3797, %v3682
    %4355 = vst.msk [vmem:[#allocation2 + $0x40] sm:$0xf] %vm3797, %v3684
    %4356 = vst.msk [vmem:[#allocation2 + $0x4c] sm:$0xf] %vm3797, %v3686
    %4357 = vst.msk [vmem:[#allocation2 + $0x58] sm:$0xf] %vm3797, %v3688
    %4358 = vst.msk [vmem:[#allocation2 + $0x64] sm:$0xf] %vm3797, %v3690
    %4359 = vst.msk [vmem:[#allocation2 + $0x70] sm:$0xf] %vm3797, %v3692
    %4360 = vst.msk [vmem:[#allocation2 + $0x7c] sm:$0xf] %vm3797, %v3694
    %4361 = vst.msk [vmem:[#allocation2 + $0x88] sm:$0xf] %vm3797, %v3696
    %4362 = vst.msk [vmem:[#allocation2 + $0x94] sm:$0xf] %vm3797, %v3698
    %4363 = vst.msk [vmem:[#allocation2 + $0xa0] sm:$0xf] %vm3797, %v3700
    %4364 = vst.msk [vmem:[#allocation2 + $0xac] sm:$0xf] %vm3797, %v3702
    %4365 = vst.msk [vmem:[#allocation2 + $0xb8] sm:$0xf] %vm3797, %v3704
    %4366 = vst.msk [vmem:[#allocation2 + $0xc4] sm:$0xf] %vm3797, %v3706
    %4367 = vst.msk [vmem:[#allocation2 + $0xd0] sm:$0xf] %vm3797, %v3708
    %4368 = vst.msk [vmem:[#allocation2 + $0xdc] sm:$0xf] %vm3797, %v3710
    %4369 = vst.msk [vmem:[#allocation2 + $0xe8] sm:$0xf] %vm3797, %v3712
    %4370 = vst.msk [vmem:[#allocation2 + $0xf4] sm:$0xf] %vm3797, %v3714
    %4371 = vst.msk [vmem:[#allocation2 + $0x100] sm:$0xf] %vm3797, %v3716
    %4372 = vst.msk [vmem:[#allocation2 + $0x10c] sm:$0xf] %vm3797, %v3718
    %4373 = vst.msk [vmem:[#allocation2 + $0x118] sm:$0xf] %vm3797, %v3720
    %4374 = vst.msk [vmem:[#allocation2 + $0x124] sm:$0xf] %vm3797, %v3722
    %4375 = vst.msk [vmem:[#allocation2 + $0x130] sm:$0xf] %vm3797, %v3724
    %4376 = vst.msk [vmem:[#allocation2 + $0x13c] sm:$0xf] %vm3797, %v3726
    %4377 = vst.msk [vmem:[#allocation2 + $0x148] sm:$0xf] %vm3797, %v3728
    %4378 = vst.msk [vmem:[#allocation2 + $0x154] sm:$0xf] %vm3797, %v3730
    %4379 = vst.msk [vmem:[#allocation2 + $0x160] sm:$0xf] %vm3797, %v3732
    %4380 = vst.msk [vmem:[#allocation2 + $0x16c] sm:$0xf] %vm3797, %v3734
    %4381 = vst.msk [vmem:[#allocation2 + $0x178] sm:$0xf] %vm3797, %v3736
    %4382 = vst.msk [vmem:[#allocation2 + $0x184] sm:$0xf] %vm3797, %v3738
    %4383 = vst.msk [vmem:[#allocation2 + $0x190] sm:$0xf] %vm3797, %v3740
    %4384 = vst.msk [vmem:[#allocation2 + $0x19c] sm:$0xf] %vm3797, %v3742
    %4385 = vst.msk [vmem:[#allocation2 + $0x1a8] sm:$0xf] %vm3797, %v3744
    %4386 = vst.msk [vmem:[#allocation2 + $0x1b4] sm:$0xf] %vm3797, %v3746
    %4387 = vst.msk [vmem:[#allocation2 + $0x1c0] sm:$0xf] %vm3797, %v3748
    %4388 = vst.msk [vmem:[#allocation2 + $0x1cc] sm:$0xf] %vm3797, %v3750
    %4389 = vst.msk [vmem:[#allocation2 + $0x1d8] sm:$0xf] %vm3797, %v4330
    %4390 = vst.msk [vmem:[#allocation2 + $0x1e4] sm:$0xf] %vm3797, %v4332
    %4391 = vst.msk [vmem:[#allocation2 + $0x1f0] sm:$0xf] %vm3797, %v4334
    %4392 = vst.msk [vmem:[#allocation2 + $0x1fc] sm:$0xf] %vm3797, %v4336
    %4393 = vst.msk [vmem:[#allocation2 + $0x208] sm:$0xf] %vm3797, %v4338
    %4394 = vst.msk [vmem:[#allocation2 + $0x214] sm:$0xf] %vm3797, %v4340
    %4395 = vst.msk [vmem:[#allocation2 + $0x220] sm:$0xf] %vm3797, %v4342
    %v4396 = vrot.slane %v3991, 4
    %v4397 = vrot.slane %v4230, 7
    %v4398 = vsel %vm3853, %v4396, %v4397
    %v4399 = vrot.slane %v4397, 4
    %v4400 = vrot.slane %v4305, 7
    %v4401 = vsel %vm3853, %v4399, %v4400
    %v4402 = vrot.slane %v4400, 4
    %v4403 = vrot.slane %v4306, 7
    %v4404 = vsel %vm3853, %v4402, %v4403
    %v4405 = vrot.slane %v4403, 4
    %v4406 = vrot.slane %v4307, 7
    %v4407 = vsel %vm3853, %v4405, %v4406
    %4408 = vrot.lane.b32.xlu0 %v4398, 96
    %v4409 = vpop.permute.xlu0 %4408
    %4410 = vrot.lane.b32.xlu0 %v4401, 96
    %v4411 = vpop.permute.xlu0 %4410
    %4412 = vrot.lane.b32.xlu0 %v4404, 96
    %v4413 = vpop.permute.xlu0 %4412
    %4414 = vrot.lane.b32.xlu0 %v4407, 96
    %v4415 = vpop.permute.xlu0 %4414
    %4420 = vst.msk [vmem:[#allocation2 + $0x4] sm:$0xf] %vm4131, %v4002
    %4421 = vst.msk [vmem:[#allocation2 + $0x10] sm:$0xf] %vm4131, %v4004
    %4422 = vst.msk [vmem:[#allocation2 + $0x1c] sm:$0xf] %vm4131, %v4006
    %4423 = vst.msk [vmem:[#allocation2 + $0x28] sm:$0xf] %vm4131, %v4008
    %4424 = vst.msk [vmem:[#allocation2 + $0x34] sm:$0xf] %vm4131, %v4010
    %4425 = vst.msk [vmem:[#allocation2 + $0x40] sm:$0xf] %vm4131, %v4012
    %4426 = vst.msk [vmem:[#allocation2 + $0x4c] sm:$0xf] %vm4131, %v4014
    %4427 = vst.msk [vmem:[#allocation2 + $0x58] sm:$0xf] %vm4131, %v4016
    %4428 = vst.msk [vmem:[#allocation2 + $0x64] sm:$0xf] %vm4131, %v4018
    %4429 = vst.msk [vmem:[#allocation2 + $0x70] sm:$0xf] %vm4131, %v4020
    %4430 = vst.msk [vmem:[#allocation2 + $0x7c] sm:$0xf] %vm4131, %v4022
    %4431 = vst.msk [vmem:[#allocation2 + $0x88] sm:$0xf] %vm4131, %v4024
    %4432 = vst.msk [vmem:[#allocation2 + $0x94] sm:$0xf] %vm4131, %v4026
    %4433 = vst.msk [vmem:[#allocation2 + $0xa0] sm:$0xf] %vm4131, %v4028
    %4434 = vst.msk [vmem:[#allocation2 + $0xac] sm:$0xf] %vm4131, %v4030
    %4435 = vst.msk [vmem:[#allocation2 + $0xb8] sm:$0xf] %vm4131, %v4032
    %4436 = vst.msk [vmem:[#allocation2 + $0xc4] sm:$0xf] %vm4131, %v4034
    %4437 = vst.msk [vmem:[#allocation2 + $0xd0] sm:$0xf] %vm4131, %v4036
    %4438 = vst.msk [vmem:[#allocation2 + $0xdc] sm:$0xf] %vm4131, %v4038
    %4439 = vst.msk [vmem:[#allocation2 + $0xe8] sm:$0xf] %vm4131, %v4040
    %4440 = vst.msk [vmem:[#allocation2 + $0xf4] sm:$0xf] %vm4131, %v4042
    %4441 = vst.msk [vmem:[#allocation2 + $0x100] sm:$0xf] %vm4131, %v4044
    %4442 = vst.msk [vmem:[#allocation2 + $0x10c] sm:$0xf] %vm4131, %v4046
    %4443 = vst.msk [vmem:[#allocation2 + $0x118] sm:$0xf] %vm4131, %v4048
    %4444 = vst.msk [vmem:[#allocation2 + $0x124] sm:$0xf] %vm4131, %v4050
    %4445 = vst.msk [vmem:[#allocation2 + $0x130] sm:$0xf] %vm4131, %v4052
    %4446 = vst.msk [vmem:[#allocation2 + $0x13c] sm:$0xf] %vm4131, %v4054
    %4447 = vst.msk [vmem:[#allocation2 + $0x148] sm:$0xf] %vm4131, %v4056
    %4448 = vst.msk [vmem:[#allocation2 + $0x154] sm:$0xf] %vm4131, %v4058
    %4449 = vst.msk [vmem:[#allocation2 + $0x160] sm:$0xf] %vm4131, %v4060
    %4450 = vst.msk [vmem:[#allocation2 + $0x16c] sm:$0xf] %vm4131, %v4062
    %4451 = vst.msk [vmem:[#allocation2 + $0x178] sm:$0xf] %vm4131, %v4064
    %4452 = vst.msk [vmem:[#allocation2 + $0x184] sm:$0xf] %vm4131, %v4066
    %4453 = vst.msk [vmem:[#allocation2 + $0x190] sm:$0xf] %vm4131, %v4068
    %4454 = vst.msk [vmem:[#allocation2 + $0x19c] sm:$0xf] %vm4131, %v4070
    %4455 = vst.msk [vmem:[#allocation2 + $0x1a8] sm:$0xf] %vm4131, %v4072
    %4456 = vst.msk [vmem:[#allocation2 + $0x1b4] sm:$0xf] %vm4131, %v4074
    %4457 = vst.msk [vmem:[#allocation2 + $0x1c0] sm:$0xf] %vm4131, %v4076
    %4458 = vst.msk [vmem:[#allocation2 + $0x1cc] sm:$0xf] %vm4131, %v4078
    %4459 = vst.msk [vmem:[#allocation2 + $0x1d8] sm:$0xf] %vm4131, %v4080
    %4460 = vst.msk [vmem:[#allocation2 + $0x1e4] sm:$0xf] %vm4131, %v4082
    %4461 = vst.msk [vmem:[#allocation2 + $0x1f0] sm:$0xf] %vm4131, %v4084
    %4462 = vst.msk [vmem:[#allocation2 + $0x1fc] sm:$0xf] %vm4131, %v4409
    %4463 = vst.msk [vmem:[#allocation2 + $0x208] sm:$0xf] %vm4131, %v4411
    %4464 = vst.msk [vmem:[#allocation2 + $0x214] sm:$0xf] %vm4131, %v4413
    %4465 = vst.msk [vmem:[#allocation2 + $0x220] sm:$0xf] %vm4131, %v4415
    %4470 = vst.msk [vmem:[#allocation2 + $0x8] sm:$0xf] %vm3140, %v3056
    %4471 = vst.msk [vmem:[#allocation2 + $0x14] sm:$0xf] %vm3140, %v3057
    %4472 = vst.msk [vmem:[#allocation2 + $0x20] sm:$0xf] %vm3140, %v3058
    %4473 = vst.msk [vmem:[#allocation2 + $0x2c] sm:$0xf] %vm3140, %v3059
    %4474 = vst.msk [vmem:[#allocation2 + $0x38] sm:$0xf] %vm3140, %v3060
    %4475 = vst.msk [vmem:[#allocation2 + $0x44] sm:$0xf] %vm3140, %v3061
    %4476 = vst.msk [vmem:[#allocation2 + $0x50] sm:$0xf] %vm3140, %v3062
    %4477 = vst.msk [vmem:[#allocation2 + $0x5c] sm:$0xf] %vm3140, %v3063
    %4478 = vst.msk [vmem:[#allocation2 + $0x68] sm:$0xf] %vm3140, %v3064
    %4479 = vst.msk [vmem:[#allocation2 + $0x74] sm:$0xf] %vm3140, %v3065
    %4480 = vst.msk [vmem:[#allocation2 + $0x80] sm:$0xf] %vm3140, %v3066
    %4481 = vst.msk [vmem:[#allocation2 + $0x8c] sm:$0xf] %vm3140, %v3067
    %4482 = vst.msk [vmem:[#allocation2 + $0x98] sm:$0xf] %vm3140, %v3068
    %4483 = vst.msk [vmem:[#allocation2 + $0xa4] sm:$0xf] %vm3140, %v3069
    %4484 = vst.msk [vmem:[#allocation2 + $0xb0] sm:$0xf] %vm3140, %v3070
    %4485 = vst.msk [vmem:[#allocation2 + $0xbc] sm:$0xf] %vm3140, %v3071
    %4486 = vst.msk [vmem:[#allocation2 + $0xc8] sm:$0xf] %vm3140, %v3072
    %4487 = vst.msk [vmem:[#allocation2 + $0xd4] sm:$0xf] %vm3140, %v3073
    %4488 = vst.msk [vmem:[#allocation2 + $0xe0] sm:$0xf] %vm3140, %v3074
    %4489 = vst.msk [vmem:[#allocation2 + $0xec] sm:$0xf] %vm3140, %v3075
    %4490 = vst.msk [vmem:[#allocation2 + $0xf8] sm:$0xf] %vm3140, %v3076
    %4491 = vst.msk [vmem:[#allocation2 + $0x104] sm:$0xf] %vm3140, %v3077
    %4492 = vst.msk [vmem:[#allocation2 + $0x110] sm:$0xf] %vm3140, %v3078
    %4493 = vst.msk [vmem:[#allocation2 + $0x11c] sm:$0xf] %vm3140, %v3079
    %4494 = vst.msk [vmem:[#allocation2 + $0x128] sm:$0xf] %vm3140, %v3080
    %4495 = vst.msk [vmem:[#allocation2 + $0x134] sm:$0xf] %vm3140, %v3081
    %4496 = vst.msk [vmem:[#allocation2 + $0x140] sm:$0xf] %vm3140, %v3082
    %4497 = vst.msk [vmem:[#allocation2 + $0x14c] sm:$0xf] %vm3140, %v3083
    %4498 = vst.msk [vmem:[#allocation2 + $0x158] sm:$0xf] %vm3140, %v3084
    %4499 = vst.msk [vmem:[#allocation2 + $0x164] sm:$0xf] %vm3140, %v3085
    %4500 = vst.msk [vmem:[#allocation2 + $0x170] sm:$0xf] %vm3140, %v3086
    %4501 = vst.msk [vmem:[#allocation2 + $0x17c] sm:$0xf] %vm3140, %v3087
    %4502 = vst.msk [vmem:[#allocation2 + $0x188] sm:$0xf] %vm3140, %v3088
    %4503 = vst.msk [vmem:[#allocation2 + $0x194] sm:$0xf] %vm3140, %v3089
    %4504 = vst.msk [vmem:[#allocation2 + $0x1a0] sm:$0xf] %vm3140, %v3090
    %4505 = vst.msk [vmem:[#allocation2 + $0x1ac] sm:$0xf] %vm3140, %v3091
    %4506 = vst.msk [vmem:[#allocation2 + $0x1b8] sm:$0xf] %vm3140, %v3092
    %4507 = vst.msk [vmem:[#allocation2 + $0x1c4] sm:$0xf] %vm3140, %v3093
    %4508 = vst.msk [vmem:[#allocation2 + $0x1d0] sm:$0xf] %vm3140, %v3189
    %4509 = vst.msk [vmem:[#allocation2 + $0x1dc] sm:$0xf] %vm3140, %v3848
    %4510 = vst.msk [vmem:[#allocation2 + $0x1e8] sm:$0xf] %vm3140, %v3849
    %4511 = vst.msk [vmem:[#allocation2 + $0x1f4] sm:$0xf] %vm3140, %v3850
    %4512 = vst.msk [vmem:[#allocation2 + $0x200] sm:$0xf] %vm3140, %v4230
    %4513 = vst.msk [vmem:[#allocation2 + $0x20c] sm:$0xf] %vm3140, %v4305
    %4514 = vst.msk [vmem:[#allocation2 + $0x218] sm:$0xf] %vm3140, %v4306
    %4515 = vst.msk [vmem:[#allocation2 + $0x224] sm:$0xf] %vm3140, %v4307
    %v4516 = vld [vmem:[#allocation2] sm:$0xff]
    %v4517 = vld [vmem:[#allocation2 + $0x8] sm:$0xf]
    %v4518 = vld [vmem:[#allocation2 + $0xc] sm:$0xff]
    %v4519 = vld [vmem:[#allocation2 + $0x14] sm:$0xf]
    %v4520 = vld [vmem:[#allocation2 + $0x18] sm:$0xff]
    %v4521 = vld [vmem:[#allocation2 + $0x20] sm:$0xf]
    %v4522 = vld [vmem:[#allocation2 + $0x24] sm:$0xff]
    %v4523 = vld [vmem:[#allocation2 + $0x2c] sm:$0xf]
    %v4524 = vld [vmem:[#allocation2 + $0x30] sm:$0xff]
    %v4525 = vld [vmem:[#allocation2 + $0x38] sm:$0xf]
    %v4526 = vld [vmem:[#allocation2 + $0x3c] sm:$0xff]
    %v4527 = vld [vmem:[#allocation2 + $0x44] sm:$0xf]
    %v4528 = vld [vmem:[#allocation2 + $0x48] sm:$0xff]
    %v4529 = vld [vmem:[#allocation2 + $0x50] sm:$0xf]
    %v4530 = vld [vmem:[#allocation2 + $0x54] sm:$0xff]
    %v4531 = vld [vmem:[#allocation2 + $0x5c] sm:$0xf]
    %v4532 = vld [vmem:[#allocation2 + $0x60] sm:$0xff]
    %v4533 = vld [vmem:[#allocation2 + $0x68] sm:$0xf]
    %v4534 = vld [vmem:[#allocation2 + $0x6c] sm:$0xff]
    %v4535 = vld [vmem:[#allocation2 + $0x74] sm:$0xf]
    %v4536 = vld [vmem:[#allocation2 + $0x78] sm:$0xff]
    %v4537 = vld [vmem:[#allocation2 + $0x80] sm:$0xf]
    %v4538 = vld [vmem:[#allocation2 + $0x84] sm:$0xff]
    %v4539 = vld [vmem:[#allocation2 + $0x8c] sm:$0xf]
    %v4540 = vld [vmem:[#allocation2 + $0x90] sm:$0xff]
    %v4541 = vld [vmem:[#allocation2 + $0x98] sm:$0xf]
    %v4542 = vld [vmem:[#allocation2 + $0x9c] sm:$0xff]
    %v4543 = vld [vmem:[#allocation2 + $0xa4] sm:$0xf]
    %v4544 = vld [vmem:[#allocation2 + $0xa8] sm:$0xff]
    %v4545 = vld [vmem:[#allocation2 + $0xb0] sm:$0xf]
    %v4546 = vld [vmem:[#allocation2 + $0xb4] sm:$0xff]
    %v4547 = vld [vmem:[#allocation2 + $0xbc] sm:$0xf]
    %v4548 = vld [vmem:[#allocation2 + $0xc0] sm:$0xff]
    %v4549 = vld [vmem:[#allocation2 + $0xc8] sm:$0xf]
    %v4550 = vld [vmem:[#allocation2 + $0xcc] sm:$0xff]
    %v4551 = vld [vmem:[#allocation2 + $0xd4] sm:$0xf]
    %v4552 = vld [vmem:[#allocation2 + $0xd8] sm:$0xff]
    %v4553 = vld [vmem:[#allocation2 + $0xe0] sm:$0xf]
    %v4554 = vld [vmem:[#allocation2 + $0xe4] sm:$0xff]
    %v4555 = vld [vmem:[#allocation2 + $0xec] sm:$0xf]
    %v4556 = vld [vmem:[#allocation2 + $0xf0] sm:$0xff]
    %v4557 = vld [vmem:[#allocation2 + $0xf8] sm:$0xf]
    %v4558 = vld [vmem:[#allocation2 + $0xfc] sm:$0xff]
    %v4559 = vld [vmem:[#allocation2 + $0x104] sm:$0xf]
    %v4560 = vld [vmem:[#allocation2 + $0x108] sm:$0xff]
    %v4561 = vld [vmem:[#allocation2 + $0x110] sm:$0xf]
    %v4562 = vld [vmem:[#allocation2 + $0x114] sm:$0xff]
    %v4563 = vld [vmem:[#allocation2 + $0x11c] sm:$0xf]
    %v4564 = vld [vmem:[#allocation2 + $0x120] sm:$0xff]
    %v4565 = vld [vmem:[#allocation2 + $0x128] sm:$0xf]
    %v4566 = vld [vmem:[#allocation2 + $0x12c] sm:$0xff]
    %v4567 = vld [vmem:[#allocation2 + $0x134] sm:$0xf]
    %v4568 = vld [vmem:[#allocation2 + $0x138] sm:$0xff]
    %v4569 = vld [vmem:[#allocation2 + $0x140] sm:$0xf]
    %v4570 = vld [vmem:[#allocation2 + $0x144] sm:$0xff]
    %v4571 = vld [vmem:[#allocation2 + $0x14c] sm:$0xf]
    %v4572 = vld [vmem:[#allocation2 + $0x150] sm:$0xff]
    %v4573 = vld [vmem:[#allocation2 + $0x158] sm:$0xf]
    %v4574 = vld [vmem:[#allocation2 + $0x15c] sm:$0xff]
    %v4575 = vld [vmem:[#allocation2 + $0x164] sm:$0xf]
    %v4576 = vld [vmem:[#allocation2 + $0x168] sm:$0xff]
    %v4577 = vld [vmem:[#allocation2 + $0x170] sm:$0xf]
    %v4578 = vld [vmem:[#allocation2 + $0x174] sm:$0xff]
    %v4579 = vld [vmem:[#allocation2 + $0x17c] sm:$0xf]
    %v4580 = vld [vmem:[#allocation2 + $0x180] sm:$0xff]
    %v4581 = vld [vmem:[#allocation2 + $0x188] sm:$0xf]
    %v4582 = vld [vmem:[#allocation2 + $0x18c] sm:$0xff]
    %v4583 = vld [vmem:[#allocation2 + $0x194] sm:$0xf]
    %v4584 = vld [vmem:[#allocation2 + $0x198] sm:$0xff]
    %v4585 = vld [vmem:[#allocation2 + $0x1a0] sm:$0xf]
    %v4586 = vld [vmem:[#allocation2 + $0x1a4] sm:$0xff]
    %v4587 = vld [vmem:[#allocation2 + $0x1ac] sm:$0xf]
    %v4588 = vld [vmem:[#allocation2 + $0x1b0] sm:$0xff]
    %v4589 = vld [vmem:[#allocation2 + $0x1b8] sm:$0xf]
    %v4590 = vld [vmem:[#allocation2 + $0x1bc] sm:$0xff]
    %v4591 = vld [vmem:[#allocation2 + $0x1c4] sm:$0xf]
    %v4592 = vld [vmem:[#allocation2 + $0x1c8] sm:$0xff]
    %v4593 = vld [vmem:[#allocation2 + $0x1d0] sm:$0xf]
    %v4594 = vld [vmem:[#allocation2 + $0x1d4] sm:$0xff]
    %v4595 = vld [vmem:[#allocation2 + $0x1dc] sm:$0xf]
    %v4596 = vld [vmem:[#allocation2 + $0x1e0] sm:$0xff]
    %v4597 = vld [vmem:[#allocation2 + $0x1e8] sm:$0xf]
    %v4598 = vld [vmem:[#allocation2 + $0x1ec] sm:$0xff]
    %v4599 = vld [vmem:[#allocation2 + $0x1f4] sm:$0xf]
    %v4600 = vld [vmem:[#allocation2 + $0x1f8] sm:$0xff]
    %v4601 = vld [vmem:[#allocation2 + $0x200] sm:$0xf]
    %v4602 = vld [vmem:[#allocation2 + $0x204] sm:$0xff]
    %v4603 = vld [vmem:[#allocation2 + $0x20c] sm:$0xf]
    %v4604 = vld [vmem:[#allocation2 + $0x210] sm:$0xff]
    %v4605 = vld [vmem:[#allocation2 + $0x218] sm:$0xf]
    %v4606 = vld [vmem:[#allocation2 + $0x21c] sm:$0xff]
    %v4607 = vld [vmem:[#allocation2 + $0x224] sm:$0xf]
    %v4608 = vld [vmem:[%s3] sm:$0xf]
    %v4609 = vld [vmem:[%s3 + $0x4] sm:$0xf]
    %v4610 = vld [vmem:[%s3 + $0x8] sm:$0xf]
    %v4611 = vld [vmem:[%s3 + $0xc] sm:$0xf]
    %v4612 = vld [vmem:[%s3 + $0x10] sm:$0xf]
    %v4613 = vld [vmem:[%s3 + $0x14] sm:$0xf]
    %v4614 = vld [vmem:[%s3 + $0x18] sm:$0xf]
    %v4615 = vld [vmem:[%s3 + $0x1c] sm:$0xf]
    %v4616 = vld [vmem:[%s3 + $0x20] sm:$0xf]
    %v4617 = vld [vmem:[%s3 + $0x24] sm:$0xf]
    %v4618 = vld [vmem:[%s3 + $0x28] sm:$0xf]
    %v4619 = vld [vmem:[%s3 + $0x2c] sm:$0xf]
    %v4620 = vld [vmem:[%s3 + $0x30] sm:$0xf]
    %v4621 = vld [vmem:[%s3 + $0x34] sm:$0xf]
    %v4622 = vld [vmem:[%s3 + $0x38] sm:$0xf]
    %v4623 = vld [vmem:[%s3 + $0x3c] sm:$0xf]
    %v4624 = vld [vmem:[%s3 + $0x40] sm:$0xf]
    %v4625 = vld [vmem:[%s3 + $0x44] sm:$0xf]
    %v4626 = vld [vmem:[%s3 + $0x48] sm:$0xf]
    %v4627 = vld [vmem:[%s3 + $0x4c] sm:$0xf]
    %v4628 = vld [vmem:[%s3 + $0x50] sm:$0xf]
    %v4629 = vld [vmem:[%s3 + $0x54] sm:$0xf]
    %v4630 = vld [vmem:[%s3 + $0x58] sm:$0xf]
    %v4631 = vld [vmem:[%s3 + $0x5c] sm:$0xf]
    %v4632 = vld [vmem:[%s3 + $0x60] sm:$0xf]
    %v4633 = vld [vmem:[%s3 + $0x64] sm:$0xf]
    %v4634 = vld [vmem:[%s3 + $0x68] sm:$0xf]
    %v4635 = vld [vmem:[%s3 + $0x6c] sm:$0xf]
    %v4636 = vld [vmem:[%s3 + $0x70] sm:$0xf]
    %v4637 = vld [vmem:[%s3 + $0x74] sm:$0xf]
    %v4638 = vld [vmem:[%s3 + $0x78] sm:$0xf]
    %v4639 = vld [vmem:[%s3 + $0x7c] sm:$0xf]
    %v4640 = vld [vmem:[%s3 + $0x80] sm:$0xf]
    %v4641 = vld [vmem:[%s3 + $0x84] sm:$0xf]
    %v4642 = vld [vmem:[%s3 + $0x88] sm:$0xf]
    %v4643 = vld [vmem:[%s3 + $0x8c] sm:$0xf]
    %v4736 = vunpack.c.l.b16 %v4516
    %v4737 = vunpack.c.h.b16 %v4516
    %v4738 = vunpack.c.l.b16 %v4517
    %v4739 = vunpack.c.l.b16 %v4518
    %v4740 = vunpack.c.h.b16 %v4518
    %v4741 = vunpack.c.l.b16 %v4519
    %v4742 = vunpack.c.l.b16 %v4520
    %v4743 = vunpack.c.h.b16 %v4520
    %v4744 = vunpack.c.l.b16 %v4521
    %v4745 = vunpack.c.l.b16 %v4522
    %v4746 = vunpack.c.h.b16 %v4522
    %v4747 = vunpack.c.l.b16 %v4523
    %v4748 = vunpack.c.l.b16 %v4524
    %v4749 = vunpack.c.h.b16 %v4524
    %v4750 = vunpack.c.l.b16 %v4525
    %v4751 = vunpack.c.l.b16 %v4526
    %v4752 = vunpack.c.h.b16 %v4526
    %v4753 = vunpack.c.l.b16 %v4527
    %v4754 = vunpack.c.l.b16 %v4528
    %v4755 = vunpack.c.h.b16 %v4528
    %v4756 = vunpack.c.l.b16 %v4529
    %v4757 = vunpack.c.l.b16 %v4530
    %v4758 = vunpack.c.h.b16 %v4530
    %v4759 = vunpack.c.l.b16 %v4531
    %v4760 = vunpack.c.l.b16 %v4532
    %v4761 = vunpack.c.h.b16 %v4532
    %v4762 = vunpack.c.l.b16 %v4533
    %v4763 = vunpack.c.l.b16 %v4534
    %v4764 = vunpack.c.h.b16 %v4534
    %v4765 = vunpack.c.l.b16 %v4535
    %v4766 = vunpack.c.l.b16 %v4536
    %v4767 = vunpack.c.h.b16 %v4536
    %v4768 = vunpack.c.l.b16 %v4537
    %v4769 = vunpack.c.l.b16 %v4538
    %v4770 = vunpack.c.h.b16 %v4538
    %v4771 = vunpack.c.l.b16 %v4539
    %v4772 = vunpack.c.l.b16 %v4540
    %v4773 = vunpack.c.h.b16 %v4540
    %v4774 = vunpack.c.l.b16 %v4541
    %v4775 = vunpack.c.l.b16 %v4542
    %v4776 = vunpack.c.h.b16 %v4542
    %v4777 = vunpack.c.l.b16 %v4543
    %v4778 = vunpack.c.l.b16 %v4544
    %v4779 = vunpack.c.h.b16 %v4544
    %v4780 = vunpack.c.l.b16 %v4545
    %v4781 = vunpack.c.l.b16 %v4546
    %v4782 = vunpack.c.h.b16 %v4546
    %v4783 = vunpack.c.l.b16 %v4547
    %v4784 = vunpack.c.l.b16 %v4548
    %v4785 = vunpack.c.h.b16 %v4548
    %v4786 = vunpack.c.l.b16 %v4549
    %v4787 = vunpack.c.l.b16 %v4550
    %v4788 = vunpack.c.h.b16 %v4550
    %v4789 = vunpack.c.l.b16 %v4551
    %v4790 = vunpack.c.l.b16 %v4552
    %v4791 = vunpack.c.h.b16 %v4552
    %v4792 = vunpack.c.l.b16 %v4553
    %v4793 = vunpack.c.l.b16 %v4554
    %v4794 = vunpack.c.h.b16 %v4554
    %v4795 = vunpack.c.l.b16 %v4555
    %v4796 = vunpack.c.l.b16 %v4556
    %v4797 = vunpack.c.h.b16 %v4556
    %v4798 = vunpack.c.l.b16 %v4557
    %v4799 = vunpack.c.l.b16 %v4558
    %v4800 = vunpack.c.h.b16 %v4558
    %v4801 = vunpack.c.l.b16 %v4559
    %v4802 = vunpack.c.l.b16 %v4560
    %v4803 = vunpack.c.h.b16 %v4560
    %v4804 = vunpack.c.l.b16 %v4561
    %v4805 = vunpack.c.l.b16 %v4562
    %v4806 = vunpack.c.h.b16 %v4562
    %v4807 = vunpack.c.l.b16 %v4563
    %v4808 = vunpack.c.l.b16 %v4564
    %v4809 = vunpack.c.h.b16 %v4564
    %v4810 = vunpack.c.l.b16 %v4565
    %v4811 = vunpack.c.l.b16 %v4566
    %v4812 = vunpack.c.h.b16 %v4566
    %v4813 = vunpack.c.l.b16 %v4567
    %v4814 = vunpack.c.l.b16 %v4568
    %v4815 = vunpack.c.h.b16 %v4568
    %v4816 = vunpack.c.l.b16 %v4569
    %v4817 = vunpack.c.l.b16 %v4570
    %v4818 = vunpack.c.h.b16 %v4570
    %v4819 = vunpack.c.l.b16 %v4571
    %v4820 = vunpack.c.l.b16 %v4572
    %v4821 = vunpack.c.h.b16 %v4572
    %v4822 = vunpack.c.l.b16 %v4573
    %v4823 = vunpack.c.l.b16 %v4574
    %v4824 = vunpack.c.h.b16 %v4574
    %v4825 = vunpack.c.l.b16 %v4575
    %v4826 = vunpack.c.l.b16 %v4576
    %v4827 = vunpack.c.h.b16 %v4576
    %v4828 = vunpack.c.l.b16 %v4577
    %v4829 = vunpack.c.l.b16 %v4578
    %v4830 = vunpack.c.h.b16 %v4578
    %v4831 = vunpack.c.l.b16 %v4579
    %v4832 = vunpack.c.l.b16 %v4580
    %v4833 = vunpack.c.h.b16 %v4580
    %v4834 = vunpack.c.l.b16 %v4581
    %v4835 = vunpack.c.l.b16 %v4582
    %v4836 = vunpack.c.h.b16 %v4582
    %v4837 = vunpack.c.l.b16 %v4583
    %v4838 = vunpack.c.l.b16 %v4584
    %v4839 = vunpack.c.h.b16 %v4584
    %v4840 = vunpack.c.l.b16 %v4585
    %v4841 = vunpack.c.l.b16 %v4586
    %v4842 = vunpack.c.h.b16 %v4586
    %v4843 = vunpack.c.l.b16 %v4587
    %v4844 = vunpack.c.l.b16 %v4588
    %v4845 = vunpack.c.h.b16 %v4588
    %v4846 = vunpack.c.l.b16 %v4589
    %v4847 = vunpack.c.l.b16 %v4590
    %v4848 = vunpack.c.h.b16 %v4590
    %v4849 = vunpack.c.l.b16 %v4591
    %v4850 = vunpack.c.l.b16 %v4592
    %v4851 = vunpack.c.h.b16 %v4592
    %v4852 = vunpack.c.l.b16 %v4593
    %v4853 = vunpack.c.l.b16 %v4594
    %v4854 = vunpack.c.h.b16 %v4594
    %v4855 = vunpack.c.l.b16 %v4595
    %v4856 = vunpack.c.l.b16 %v4596
    %v4857 = vunpack.c.h.b16 %v4596
    %v4858 = vunpack.c.l.b16 %v4597
    %v4859 = vunpack.c.l.b16 %v4598
    %v4860 = vunpack.c.h.b16 %v4598
    %v4861 = vunpack.c.l.b16 %v4599
    %v4862 = vunpack.c.l.b16 %v4600
    %v4863 = vunpack.c.h.b16 %v4600
    %v4864 = vunpack.c.l.b16 %v4601
    %v4865 = vunpack.c.l.b16 %v4602
    %v4866 = vunpack.c.h.b16 %v4602
    %v4867 = vunpack.c.l.b16 %v4603
    %v4868 = vunpack.c.l.b16 %v4604
    %v4869 = vunpack.c.h.b16 %v4604
    %v4870 = vunpack.c.l.b16 %v4605
    %v4871 = vunpack.c.l.b16 %v4606
    %v4872 = vunpack.c.h.b16 %v4606
    %v4873 = vunpack.c.l.b16 %v4607
    %v4874 = vpack.c.b16 %v4739, %v4736
    %v4875 = vpack.c.b16 %v4740, %v4737
    %v4876 = vpack.c.b16 %v4741, %v4738
    %v4877 = vpack.c.b16 %v4745, %v4742
    %v4878 = vpack.c.b16 %v4746, %v4743
    %v4879 = vpack.c.b16 %v4747, %v4744
    %v4880 = vpack.c.b16 %v4751, %v4748
    %v4881 = vpack.c.b16 %v4752, %v4749
    %v4882 = vpack.c.b16 %v4753, %v4750
    %v4883 = vpack.c.b16 %v4757, %v4754
    %v4884 = vpack.c.b16 %v4758, %v4755
    %v4885 = vpack.c.b16 %v4759, %v4756
    %v4886 = vpack.c.b16 %v4763, %v4760
    %v4887 = vpack.c.b16 %v4764, %v4761
    %v4888 = vpack.c.b16 %v4765, %v4762
    %v4889 = vpack.c.b16 %v4769, %v4766
    %v4890 = vpack.c.b16 %v4770, %v4767
    %v4891 = vpack.c.b16 %v4771, %v4768
    %v4892 = vpack.c.b16 %v4775, %v4772
    %v4893 = vpack.c.b16 %v4776, %v4773
    %v4894 = vpack.c.b16 %v4777, %v4774
    %v4895 = vpack.c.b16 %v4781, %v4778
    %v4896 = vpack.c.b16 %v4782, %v4779
    %v4897 = vpack.c.b16 %v4783, %v4780
    %v4898 = vpack.c.b16 %v4787, %v4784
    %v4899 = vpack.c.b16 %v4788, %v4785
    %v4900 = vpack.c.b16 %v4789, %v4786
    %v4901 = vpack.c.b16 %v4793, %v4790
    %v4902 = vpack.c.b16 %v4794, %v4791
    %v4903 = vpack.c.b16 %v4795, %v4792
    %v4904 = vpack.c.b16 %v4799, %v4796
    %v4905 = vpack.c.b16 %v4800, %v4797
    %v4906 = vpack.c.b16 %v4801, %v4798
    %v4907 = vpack.c.b16 %v4805, %v4802
    %v4908 = vpack.c.b16 %v4806, %v4803
    %v4909 = vpack.c.b16 %v4807, %v4804
    %v4910 = vpack.c.b16 %v4811, %v4808
    %v4911 = vpack.c.b16 %v4812, %v4809
    %v4912 = vpack.c.b16 %v4813, %v4810
    %v4913 = vpack.c.b16 %v4817, %v4814
    %v4914 = vpack.c.b16 %v4818, %v4815
    %v4915 = vpack.c.b16 %v4819, %v4816
    %v4916 = vpack.c.b16 %v4823, %v4820
    %v4917 = vpack.c.b16 %v4824, %v4821
    %v4918 = vpack.c.b16 %v4825, %v4822
    %v4919 = vpack.c.b16 %v4829, %v4826
    %v4920 = vpack.c.b16 %v4830, %v4827
    %v4921 = vpack.c.b16 %v4831, %v4828
    %v4922 = vpack.c.b16 %v4835, %v4832
    %v4923 = vpack.c.b16 %v4836, %v4833
    %v4924 = vpack.c.b16 %v4837, %v4834
    %v4925 = vpack.c.b16 %v4841, %v4838
    %v4926 = vpack.c.b16 %v4842, %v4839
    %v4927 = vpack.c.b16 %v4843, %v4840
    %v4928 = vpack.c.b16 %v4847, %v4844
    %v4929 = vpack.c.b16 %v4848, %v4845
    %v4930 = vpack.c.b16 %v4849, %v4846
    %v4931 = vpack.c.b16 %v4853, %v4850
    %v4932 = vpack.c.b16 %v4854, %v4851
    %v4933 = vpack.c.b16 %v4855, %v4852
    %v4934 = vpack.c.b16 %v4859, %v4856
    %v4935 = vpack.c.b16 %v4860, %v4857
    %v4936 = vpack.c.b16 %v4861, %v4858
    %v4937 = vpack.c.b16 %v4865, %v4862
    %v4938 = vpack.c.b16 %v4866, %v4863
    %v4939 = vpack.c.b16 %v4867, %v4864
    %v4940 = vpack.c.b16 %v4871, %v4868
    %v4941 = vpack.c.b16 %v4872, %v4869
    %v4942 = vpack.c.b16 %v4873, %v4870
    %v5025 = vunpack.c.l.b16 %v4608
    %v5026 = vunpack.c.l.b16 %v4609
    %v5027 = vunpack.c.l.b16 %v4610
    %v5028 = vunpack.c.l.b16 %v4611
    %v5029 = vunpack.c.l.b16 %v4612
    %v5030 = vunpack.c.l.b16 %v4613
    %v5031 = vunpack.c.l.b16 %v4614
    %v5032 = vunpack.c.l.b16 %v4615
    %v5033 = vunpack.c.l.b16 %v4616
    %v5034 = vunpack.c.l.b16 %v4617
    %v5035 = vunpack.c.l.b16 %v4618
    %v5036 = vunpack.c.l.b16 %v4619
    %v5037 = vunpack.c.l.b16 %v4620
    %v5038 = vunpack.c.l.b16 %v4621
    %v5039 = vunpack.c.l.b16 %v4622
    %v5040 = vunpack.c.l.b16 %v4623
    %v5041 = vunpack.c.l.b16 %v4624
    %v5042 = vunpack.c.l.b16 %v4625
    %v5043 = vunpack.c.l.b16 %v4626
    %v5044 = vunpack.c.l.b16 %v4627
    %v5045 = vunpack.c.l.b16 %v4628
    %v5046 = vunpack.c.l.b16 %v4629
    %v5047 = vunpack.c.l.b16 %v4630
    %v5048 = vunpack.c.l.b16 %v4631
    %v5049 = vunpack.c.l.b16 %v4632
    %v5050 = vunpack.c.l.b16 %v4633
    %v5051 = vunpack.c.l.b16 %v4634
    %v5052 = vunpack.c.l.b16 %v4635
    %v5053 = vunpack.c.l.b16 %v4636
    %v5054 = vunpack.c.l.b16 %v4637
    %v5055 = vunpack.c.l.b16 %v4638
    %v5056 = vunpack.c.l.b16 %v4639
    %v5057 = vunpack.c.l.b16 %v4640
    %v5058 = vunpack.c.l.b16 %v4641
    %v5059 = vunpack.c.l.b16 %v4642
    %v5060 = vunpack.c.l.b16 %v4643
    %v5061 = vpack.c.b16 %v5026, %v5025
    %v5062 = vpack.c.b16 %v5028, %v5027
    %v5063 = vpack.c.b16 %v5030, %v5029
    %v5064 = vpack.c.b16 %v5032, %v5031
    %v5065 = vpack.c.b16 %v5034, %v5033
    %v5066 = vpack.c.b16 %v5036, %v5035
    %v5067 = vpack.c.b16 %v5038, %v5037
    %v5068 = vpack.c.b16 %v5040, %v5039
    %v5069 = vpack.c.b16 %v5042, %v5041
    %v5070 = vpack.c.b16 %v5044, %v5043
    %v5071 = vpack.c.b16 %v5046, %v5045
    %v5072 = vpack.c.b16 %v5048, %v5047
    %v5073 = vpack.c.b16 %v5050, %v5049
    %v5074 = vpack.c.b16 %v5052, %v5051
    %v5075 = vpack.c.b16 %v5054, %v5053
    %v5076 = vpack.c.b16 %v5056, %v5055
    %v5077 = vpack.c.b16 %v5058, %v5057
    %v5078 = vpack.c.b16 %v5060, %v5059
    %v5098 = vsel %vm1273, %v4876, 0
    %v5101 = vsel %vm1273, %v4879, 0
    %v5104 = vsel %vm1273, %v4882, 0
    %v5107 = vsel %vm1273, %v4885, 0
    %v5110 = vsel %vm1273, %v4888, 0
    %v5113 = vsel %vm1273, %v4891, 0
    %v5116 = vsel %vm1273, %v4894, 0
    %v5119 = vsel %vm1273, %v4897, 0
    %v5122 = vsel %vm1273, %v4900, 0
    %v5125 = vsel %vm1273, %v4903, 0
    %v5128 = vsel %vm1273, %v4906, 0
    %v5131 = vsel %vm1273, %v4909, 0
    %v5134 = vsel %vm1273, %v4912, 0
    %v5137 = vsel %vm1273, %v4915, 0
    %v5140 = vsel %vm1273, %v4918, 0
    %v5143 = vsel %vm1273, %v4921, 0
    %v5146 = vsel %vm1273, %v4924, 0
    %v5149 = vsel %vm1273, %v4927, 0
    %v5152 = vsel %vm1273, %v4930, 0
    %v5155 = vsel %vm1273, %v4933, 0
    %v5158 = vsel %vm1273, %v4936, 0
    %v5161 = vsel %vm1273, %v4939, 0
    %v5164 = vsel %vm1273, %v4942, 0
    %5166 = vmatprep.subr.bf16.mxu0 0
    %5167 = vmatpush1.bf16.msra.mxu0 %v5068
    %5168 = vmatprep.subr.bf16.mxu0 0
    %5169 = vmatpush1.bf16.msra.mxu0 %v5067
    %5170 = vmatprep.subr.bf16.mxu0 0
    %5171 = vmatpush1.bf16.msra.mxu0 %v5066
    %5172 = vmatprep.subr.bf16.mxu0 0
    %5173 = vmatpush1.bf16.msra.mxu0 %v5065
    %5174 = vmatprep.subr.bf16.mxu0 0
    %5175 = vmatpush1.bf16.msra.mxu0 %v5064
    %5176 = vmatprep.subr.bf16.mxu0 0
    %5177 = vmatpush1.bf16.msra.mxu0 %v5063
    %5178 = vmatprep.subr.bf16.mxu0 0
    %5179 = vmatpush1.bf16.msra.mxu0 %v5062
    %5180 = vmatprep.subr.bf16.mxu0 0
    %5181 = vmatpush1.bf16.msra.mxu0 %v5061
    %5182 = vmatprep.subr.bf16.mxu0 0
    %5183 = vmatpush2.bf16.msra.mxu0 %v5076
    %5184 = vmatprep.subr.bf16.mxu0 0
    %5185 = vmatpush2.bf16.msra.mxu0 %v5075
    %5186 = vmatprep.subr.bf16.mxu0 0
    %5187 = vmatpush2.bf16.msra.mxu0 %v5074
    %5188 = vmatprep.subr.bf16.mxu0 0
    %5189 = vmatpush2.bf16.msra.mxu0 %v5073
    %5190 = vmatprep.subr.bf16.mxu0 0
    %5191 = vmatpush2.bf16.msra.mxu0 %v5072
    %5192 = vmatprep.subr.bf16.mxu0 0
    %5193 = vmatpush2.bf16.msra.mxu0 %v5071
    %5194 = vmatprep.subr.bf16.mxu0 0
    %5195 = vmatpush2.bf16.msra.mxu0 %v5070
    %5196 = vmatprep.subr.bf16.mxu0 0
    %5197 = vmatpush2.bf16.msra.mxu0 %v5069
    %5198 = vmatprep.mubr.bf16.mxu0 %v4875
    %5199 = vmatmul.mubr.bf16.gmra.mxu0 %v4874
    %v5200 = vpop.f32.mrf.mxu0
    %v5201 = vadd.f32 0.0, %v5200
    %v5202 = vpop.f32.mrf.mxu0
    %v5203 = vpop.f32.mrf.mxu0
    %v5204 = vadd.f32 0.0, %v5203
    %v5205 = vpop.f32.mrf.mxu0
    %5206 = vmatprep.mubr.bf16.mxu0 %v4878
    %5207 = vmatmul.mubr.bf16.gmra.mxu0 %v4877
    %v5208 = vpop.f32.mrf.mxu0
    %v5209 = vadd.f32 0.0, %v5208
    %v5210 = vpop.f32.mrf.mxu0
    %v5211 = vpop.f32.mrf.mxu0
    %v5212 = vadd.f32 0.0, %v5211
    %v5213 = vpop.f32.mrf.mxu0
    %5214 = vmatprep.mubr.bf16.mxu0 %v4881
    %5215 = vmatmul.mubr.bf16.gmra.mxu0 %v4880
    %v5216 = vpop.f32.mrf.mxu0
    %v5217 = vadd.f32 0.0, %v5216
    %v5218 = vpop.f32.mrf.mxu0
    %v5219 = vpop.f32.mrf.mxu0
    %v5220 = vadd.f32 0.0, %v5219
    %v5221 = vpop.f32.mrf.mxu0
    %5222 = vmatprep.mubr.bf16.mxu0 %v4884
    %5223 = vmatmul.mubr.bf16.gmra.mxu0 %v4883
    %v5224 = vpop.f32.mrf.mxu0
    %v5225 = vadd.f32 0.0, %v5224
    %v5226 = vpop.f32.mrf.mxu0
    %v5227 = vpop.f32.mrf.mxu0
    %v5228 = vadd.f32 0.0, %v5227
    %v5229 = vpop.f32.mrf.mxu0
    %5230 = vmatprep.mubr.bf16.mxu0 %v4887
    %5231 = vmatmul.mubr.bf16.gmra.mxu0 %v4886
    %v5232 = vpop.f32.mrf.mxu0
    %v5233 = vadd.f32 0.0, %v5232
    %v5234 = vpop.f32.mrf.mxu0
    %v5235 = vpop.f32.mrf.mxu0
    %v5236 = vadd.f32 0.0, %v5235
    %v5237 = vpop.f32.mrf.mxu0
    %5238 = vmatprep.mubr.bf16.mxu0 %v4890
    %5239 = vmatmul.mubr.bf16.gmra.mxu0 %v4889
    %v5240 = vpop.f32.mrf.mxu0
    %v5241 = vadd.f32 0.0, %v5240
    %v5242 = vpop.f32.mrf.mxu0
    %v5243 = vpop.f32.mrf.mxu0
    %v5244 = vadd.f32 0.0, %v5243
    %v5245 = vpop.f32.mrf.mxu0
    %5246 = vmatprep.mubr.bf16.mxu0 %v4893
    %5247 = vmatmul.mubr.bf16.gmra.mxu0 %v4892
    %v5248 = vpop.f32.mrf.mxu0
    %v5249 = vadd.f32 0.0, %v5248
    %v5250 = vpop.f32.mrf.mxu0
    %v5251 = vpop.f32.mrf.mxu0
    %v5252 = vadd.f32 0.0, %v5251
    %v5253 = vpop.f32.mrf.mxu0
    %5254 = vmatprep.mubr.bf16.mxu0 %v4896
    %5255 = vmatmul.mubr.bf16.gmra.mxu0 %v4895
    %v5256 = vpop.f32.mrf.mxu0
    %v5257 = vadd.f32 0.0, %v5256
    %v5258 = vpop.f32.mrf.mxu0
    %v5259 = vpop.f32.mrf.mxu0
    %v5260 = vadd.f32 0.0, %v5259
    %v5261 = vpop.f32.mrf.mxu0
    %5262 = vmatprep.mubr.bf16.mxu0 %v4899
    %5263 = vmatmul.mubr.bf16.gmra.mxu0 %v4898
    %v5264 = vpop.f32.mrf.mxu0
    %v5265 = vadd.f32 0.0, %v5264
    %v5266 = vpop.f32.mrf.mxu0
    %v5267 = vpop.f32.mrf.mxu0
    %v5268 = vadd.f32 0.0, %v5267
    %v5269 = vpop.f32.mrf.mxu0
    %5270 = vmatprep.mubr.bf16.mxu0 %v4902
    %5271 = vmatmul.mubr.bf16.gmra.mxu0 %v4901
    %v5272 = vpop.f32.mrf.mxu0
    %v5273 = vadd.f32 0.0, %v5272
    %v5274 = vpop.f32.mrf.mxu0
    %v5275 = vpop.f32.mrf.mxu0
    %v5276 = vadd.f32 0.0, %v5275
    %v5277 = vpop.f32.mrf.mxu0
    %5278 = vmatprep.mubr.bf16.mxu0 %v4905
    %5279 = vmatmul.mubr.bf16.gmra.mxu0 %v4904
    %v5280 = vpop.f32.mrf.mxu0
    %v5281 = vadd.f32 0.0, %v5280
    %v5282 = vpop.f32.mrf.mxu0
    %v5283 = vpop.f32.mrf.mxu0
    %v5284 = vadd.f32 0.0, %v5283
    %v5285 = vpop.f32.mrf.mxu0
    %5286 = vmatprep.mubr.bf16.mxu0 %v4908
    %5287 = vmatmul.mubr.bf16.gmra.mxu0 %v4907
    %v5288 = vpop.f32.mrf.mxu0
    %v5289 = vadd.f32 0.0, %v5288
    %v5290 = vpop.f32.mrf.mxu0
    %v5291 = vpop.f32.mrf.mxu0
    %v5292 = vadd.f32 0.0, %v5291
    %v5293 = vpop.f32.mrf.mxu0
    %5294 = vmatprep.mubr.bf16.mxu0 %v4911
    %5295 = vmatmul.mubr.bf16.gmra.mxu0 %v4910
    %v5296 = vpop.f32.mrf.mxu0
    %v5297 = vadd.f32 0.0, %v5296
    %v5298 = vpop.f32.mrf.mxu0
    %v5299 = vpop.f32.mrf.mxu0
    %v5300 = vadd.f32 0.0, %v5299
    %v5301 = vpop.f32.mrf.mxu0
    %5302 = vmatprep.mubr.bf16.mxu0 %v4914
    %5303 = vmatmul.mubr.bf16.gmra.mxu0 %v4913
    %v5304 = vpop.f32.mrf.mxu0
    %v5305 = vadd.f32 0.0, %v5304
    %v5306 = vpop.f32.mrf.mxu0
    %v5307 = vpop.f32.mrf.mxu0
    %v5308 = vadd.f32 0.0, %v5307
    %v5309 = vpop.f32.mrf.mxu0
    %5310 = vmatprep.mubr.bf16.mxu0 %v4917
    %5311 = vmatmul.mubr.bf16.gmra.mxu0 %v4916
    %v5312 = vpop.f32.mrf.mxu0
    %v5313 = vadd.f32 0.0, %v5312
    %v5314 = vpop.f32.mrf.mxu0
    %v5315 = vpop.f32.mrf.mxu0
    %v5316 = vadd.f32 0.0, %v5315
    %v5317 = vpop.f32.mrf.mxu0
    %5318 = vmatprep.mubr.bf16.mxu0 %v4920
    %5319 = vmatmul.mubr.bf16.gmra.mxu0 %v4919
    %v5320 = vpop.f32.mrf.mxu0
    %v5321 = vadd.f32 0.0, %v5320
    %v5322 = vpop.f32.mrf.mxu0
    %v5323 = vpop.f32.mrf.mxu0
    %v5324 = vadd.f32 0.0, %v5323
    %v5325 = vpop.f32.mrf.mxu0
    %5326 = vmatprep.mubr.bf16.mxu0 %v4923
    %5327 = vmatmul.mubr.bf16.gmra.mxu0 %v4922
    %v5328 = vpop.f32.mrf.mxu0
    %v5329 = vadd.f32 0.0, %v5328
    %v5330 = vpop.f32.mrf.mxu0
    %v5331 = vpop.f32.mrf.mxu0
    %v5332 = vadd.f32 0.0, %v5331
    %v5333 = vpop.f32.mrf.mxu0
    %5334 = vmatprep.mubr.bf16.mxu0 %v4926
    %5335 = vmatmul.mubr.bf16.gmra.mxu0 %v4925
    %v5336 = vpop.f32.mrf.mxu0
    %v5337 = vadd.f32 0.0, %v5336
    %v5338 = vpop.f32.mrf.mxu0
    %v5339 = vpop.f32.mrf.mxu0
    %v5340 = vadd.f32 0.0, %v5339
    %v5341 = vpop.f32.mrf.mxu0
    %5342 = vmatprep.mubr.bf16.mxu0 %v4929
    %5343 = vmatmul.mubr.bf16.gmra.mxu0 %v4928
    %v5344 = vpop.f32.mrf.mxu0
    %v5345 = vadd.f32 0.0, %v5344
    %v5346 = vpop.f32.mrf.mxu0
    %v5347 = vpop.f32.mrf.mxu0
    %v5348 = vadd.f32 0.0, %v5347
    %v5349 = vpop.f32.mrf.mxu0
    %5350 = vmatprep.mubr.bf16.mxu0 %v4932
    %5351 = vmatmul.mubr.bf16.gmra.mxu0 %v4931
    %v5352 = vpop.f32.mrf.mxu0
    %v5353 = vadd.f32 0.0, %v5352
    %v5354 = vpop.f32.mrf.mxu0
    %v5355 = vpop.f32.mrf.mxu0
    %v5356 = vadd.f32 0.0, %v5355
    %v5357 = vpop.f32.mrf.mxu0
    %5358 = vmatprep.mubr.bf16.mxu0 %v4935
    %5359 = vmatmul.mubr.bf16.gmra.mxu0 %v4934
    %v5360 = vpop.f32.mrf.mxu0
    %v5361 = vadd.f32 0.0, %v5360
    %v5362 = vpop.f32.mrf.mxu0
    %v5363 = vpop.f32.mrf.mxu0
    %v5364 = vadd.f32 0.0, %v5363
    %v5365 = vpop.f32.mrf.mxu0
    %5366 = vmatprep.mubr.bf16.mxu0 %v4938
    %5367 = vmatmul.mubr.bf16.gmra.mxu0 %v4937
    %v5368 = vpop.f32.mrf.mxu0
    %v5369 = vadd.f32 0.0, %v5368
    %v5370 = vpop.f32.mrf.mxu0
    %v5371 = vpop.f32.mrf.mxu0
    %v5372 = vadd.f32 0.0, %v5371
    %v5373 = vpop.f32.mrf.mxu0
    %5374 = vmatprep.mubr.bf16.mxu0 %v4941
    %5375 = vmatmul.mubr.bf16.gmra.mxu0 %v4940
    %v5376 = vpop.f32.mrf.mxu0
    %v5377 = vadd.f32 0.0, %v5376
    %v5378 = vpop.f32.mrf.mxu0
    %v5379 = vpop.f32.mrf.mxu0
    %v5380 = vadd.f32 0.0, %v5379
    %v5381 = vpop.f32.mrf.mxu0
    %5382 = vdwg.mxu0
    %5383 = vmatprep.subr.bf16.mxu0 0
    %5384 = vmatpush1.bf16.msra.mxu0 0
    %5385 = vmatprep.subr.bf16.mxu0 0
    %5386 = vmatpush1.bf16.msra.mxu0 0
    %5387 = vmatprep.subr.bf16.mxu0 0
    %5388 = vmatpush1.bf16.msra.mxu0 0
    %5389 = vmatprep.subr.bf16.mxu0 0
    %5390 = vmatpush1.bf16.msra.mxu0 0
    %5391 = vmatprep.subr.bf16.mxu0 0
    %5392 = vmatpush1.bf16.msra.mxu0 0
    %5393 = vmatprep.subr.bf16.mxu0 0
    %5394 = vmatpush1.bf16.msra.mxu0 0
    %5395 = vmatprep.subr.bf16.mxu0 0
    %5396 = vmatpush1.bf16.msra.mxu0 %v5078
    %5397 = vmatprep.subr.bf16.mxu0 0
    %5398 = vmatpush1.bf16.msra.mxu0 %v5077
    %5399 = vmatprep.subr.bf16.mxu0 0
    %5400 = vmatpush2.bf16.msra.mxu0 0
    %5401 = vmatprep.subr.bf16.mxu0 0
    %5402 = vmatpush2.bf16.msra.mxu0 0
    %5403 = vmatprep.subr.bf16.mxu0 0
    %5404 = vmatpush2.bf16.msra.mxu0 0
    %5405 = vmatprep.subr.bf16.mxu0 0
    %5406 = vmatpush2.bf16.msra.mxu0 0
    %5407 = vmatprep.subr.bf16.mxu0 0
    %5408 = vmatpush2.bf16.msra.mxu0 0
    %5409 = vmatprep.subr.bf16.mxu0 0
    %5410 = vmatpush2.bf16.msra.mxu0 0
    %5411 = vmatprep.subr.bf16.mxu0 0
    %5412 = vmatpush2.bf16.msra.mxu0 0
    %5413 = vmatprep.subr.bf16.mxu0 0
    %5414 = vmatpush2.bf16.msra.mxu0 0
    %5415 = vmatprep.mubr.bf16.mxu0 0
    %5416 = vmatmul.mubr.bf16.gmra.mxu0 %v5098
    %v5417 = vpop.f32.mrf.mxu0
    %v5418 = vadd.f32 %v5201, %v5417
    %v5419 = vpop.f32.mrf.mxu0
    %v5420 = vpop.f32.mrf.mxu0
    %v5421 = vadd.f32 %v5204, %v5420
    %v5422 = vpop.f32.mrf.mxu0
    %5423 = vmatprep.mubr.bf16.mxu0 0
    %5424 = vmatmul.mubr.bf16.gmra.mxu0 %v5101
    %v5425 = vpop.f32.mrf.mxu0
    %v5426 = vadd.f32 %v5209, %v5425
    %v5427 = vpop.f32.mrf.mxu0
    %v5428 = vpop.f32.mrf.mxu0
    %v5429 = vadd.f32 %v5212, %v5428
    %v5430 = vpop.f32.mrf.mxu0
    %5431 = vmatprep.mubr.bf16.mxu0 0
    %5432 = vmatmul.mubr.bf16.gmra.mxu0 %v5104
    %v5433 = vpop.f32.mrf.mxu0
    %v5434 = vadd.f32 %v5217, %v5433
    %v5435 = vpop.f32.mrf.mxu0
    %v5436 = vpop.f32.mrf.mxu0
    %v5437 = vadd.f32 %v5220, %v5436
    %v5438 = vpop.f32.mrf.mxu0
    %5439 = vmatprep.mubr.bf16.mxu0 0
    %5440 = vmatmul.mubr.bf16.gmra.mxu0 %v5107
    %v5441 = vpop.f32.mrf.mxu0
    %v5442 = vadd.f32 %v5225, %v5441
    %v5443 = vpop.f32.mrf.mxu0
    %v5444 = vpop.f32.mrf.mxu0
    %v5445 = vadd.f32 %v5228, %v5444
    %v5446 = vpop.f32.mrf.mxu0
    %5447 = vmatprep.mubr.bf16.mxu0 0
    %5448 = vmatmul.mubr.bf16.gmra.mxu0 %v5110
    %v5449 = vpop.f32.mrf.mxu0
    %v5450 = vadd.f32 %v5233, %v5449
    %v5451 = vpop.f32.mrf.mxu0
    %v5452 = vpop.f32.mrf.mxu0
    %v5453 = vadd.f32 %v5236, %v5452
    %v5454 = vpop.f32.mrf.mxu0
    %5455 = vmatprep.mubr.bf16.mxu0 0
    %5456 = vmatmul.mubr.bf16.gmra.mxu0 %v5113
    %v5457 = vpop.f32.mrf.mxu0
    %v5458 = vadd.f32 %v5241, %v5457
    %v5459 = vpop.f32.mrf.mxu0
    %v5460 = vpop.f32.mrf.mxu0
    %v5461 = vadd.f32 %v5244, %v5460
    %v5462 = vpop.f32.mrf.mxu0
    %5463 = vmatprep.mubr.bf16.mxu0 0
    %5464 = vmatmul.mubr.bf16.gmra.mxu0 %v5116
    %v5465 = vpop.f32.mrf.mxu0
    %v5466 = vadd.f32 %v5249, %v5465
    %v5467 = vpop.f32.mrf.mxu0
    %v5468 = vpop.f32.mrf.mxu0
    %v5469 = vadd.f32 %v5252, %v5468
    %v5470 = vpop.f32.mrf.mxu0
    %5471 = vmatprep.mubr.bf16.mxu0 0
    %5472 = vmatmul.mubr.bf16.gmra.mxu0 %v5119
    %v5473 = vpop.f32.mrf.mxu0
    %v5474 = vadd.f32 %v5257, %v5473
    %v5475 = vpop.f32.mrf.mxu0
    %v5476 = vpop.f32.mrf.mxu0
    %v5477 = vadd.f32 %v5260, %v5476
    %v5478 = vpop.f32.mrf.mxu0
    %5479 = vmatprep.mubr.bf16.mxu0 0
    %5480 = vmatmul.mubr.bf16.gmra.mxu0 %v5122
    %v5481 = vpop.f32.mrf.mxu0
    %v5482 = vadd.f32 %v5265, %v5481
    %v5483 = vpop.f32.mrf.mxu0
    %v5484 = vpop.f32.mrf.mxu0
    %v5485 = vadd.f32 %v5268, %v5484
    %v5486 = vpop.f32.mrf.mxu0
    %5487 = vmatprep.mubr.bf16.mxu0 0
    %5488 = vmatmul.mubr.bf16.gmra.mxu0 %v5125
    %v5489 = vpop.f32.mrf.mxu0
    %v5490 = vadd.f32 %v5273, %v5489
    %v5491 = vpop.f32.mrf.mxu0
    %v5492 = vpop.f32.mrf.mxu0
    %v5493 = vadd.f32 %v5276, %v5492
    %v5494 = vpop.f32.mrf.mxu0
    %5495 = vmatprep.mubr.bf16.mxu0 0
    %5496 = vmatmul.mubr.bf16.gmra.mxu0 %v5128
    %v5497 = vpop.f32.mrf.mxu0
    %v5498 = vadd.f32 %v5281, %v5497
    %v5499 = vpop.f32.mrf.mxu0
    %v5500 = vpop.f32.mrf.mxu0
    %v5501 = vadd.f32 %v5284, %v5500
    %v5502 = vpop.f32.mrf.mxu0
    %5503 = vmatprep.mubr.bf16.mxu0 0
    %5504 = vmatmul.mubr.bf16.gmra.mxu0 %v5131
    %v5505 = vpop.f32.mrf.mxu0
    %v5506 = vadd.f32 %v5289, %v5505
    %v5507 = vpop.f32.mrf.mxu0
    %v5508 = vpop.f32.mrf.mxu0
    %v5509 = vadd.f32 %v5292, %v5508
    %v5510 = vpop.f32.mrf.mxu0
    %5511 = vmatprep.mubr.bf16.mxu0 0
    %5512 = vmatmul.mubr.bf16.gmra.mxu0 %v5134
    %v5513 = vpop.f32.mrf.mxu0
    %v5514 = vadd.f32 %v5297, %v5513
    %v5515 = vpop.f32.mrf.mxu0
    %v5516 = vpop.f32.mrf.mxu0
    %v5517 = vadd.f32 %v5300, %v5516
    %v5518 = vpop.f32.mrf.mxu0
    %5519 = vmatprep.mubr.bf16.mxu0 0
    %5520 = vmatmul.mubr.bf16.gmra.mxu0 %v5137
    %v5521 = vpop.f32.mrf.mxu0
    %v5522 = vadd.f32 %v5305, %v5521
    %v5523 = vpop.f32.mrf.mxu0
    %v5524 = vpop.f32.mrf.mxu0
    %v5525 = vadd.f32 %v5308, %v5524
    %v5526 = vpop.f32.mrf.mxu0
    %5527 = vmatprep.mubr.bf16.mxu0 0
    %5528 = vmatmul.mubr.bf16.gmra.mxu0 %v5140
    %v5529 = vpop.f32.mrf.mxu0
    %v5530 = vadd.f32 %v5313, %v5529
    %v5531 = vpop.f32.mrf.mxu0
    %v5532 = vpop.f32.mrf.mxu0
    %v5533 = vadd.f32 %v5316, %v5532
    %v5534 = vpop.f32.mrf.mxu0
    %5535 = vmatprep.mubr.bf16.mxu0 0
    %5536 = vmatmul.mubr.bf16.gmra.mxu0 %v5143
    %v5537 = vpop.f32.mrf.mxu0
    %v5538 = vadd.f32 %v5321, %v5537
    %v5539 = vpop.f32.mrf.mxu0
    %v5540 = vpop.f32.mrf.mxu0
    %v5541 = vadd.f32 %v5324, %v5540
    %v5542 = vpop.f32.mrf.mxu0
    %5543 = vmatprep.mubr.bf16.mxu0 0
    %5544 = vmatmul.mubr.bf16.gmra.mxu0 %v5146
    %v5545 = vpop.f32.mrf.mxu0
    %v5546 = vadd.f32 %v5329, %v5545
    %v5547 = vpop.f32.mrf.mxu0
    %v5548 = vpop.f32.mrf.mxu0
    %v5549 = vadd.f32 %v5332, %v5548
    %v5550 = vpop.f32.mrf.mxu0
    %5551 = vmatprep.mubr.bf16.mxu0 0
    %5552 = vmatmul.mubr.bf16.gmra.mxu0 %v5149
    %v5553 = vpop.f32.mrf.mxu0
    %v5554 = vadd.f32 %v5337, %v5553
    %v5555 = vpop.f32.mrf.mxu0
    %v5556 = vpop.f32.mrf.mxu0
    %v5557 = vadd.f32 %v5340, %v5556
    %v5558 = vpop.f32.mrf.mxu0
    %5559 = vmatprep.mubr.bf16.mxu0 0
    %5560 = vmatmul.mubr.bf16.gmra.mxu0 %v5152
    %v5561 = vpop.f32.mrf.mxu0
    %v5562 = vadd.f32 %v5345, %v5561
    %v5563 = vpop.f32.mrf.mxu0
    %v5564 = vpop.f32.mrf.mxu0
    %v5565 = vadd.f32 %v5348, %v5564
    %v5566 = vpop.f32.mrf.mxu0
    %5567 = vmatprep.mubr.bf16.mxu0 0
    %5568 = vmatmul.mubr.bf16.gmra.mxu0 %v5155
    %v5569 = vpop.f32.mrf.mxu0
    %v5570 = vadd.f32 %v5353, %v5569
    %v5571 = vpop.f32.mrf.mxu0
    %v5572 = vpop.f32.mrf.mxu0
    %v5573 = vadd.f32 %v5356, %v5572
    %v5574 = vpop.f32.mrf.mxu0
    %5575 = vmatprep.mubr.bf16.mxu0 0
    %5576 = vmatmul.mubr.bf16.gmra.mxu0 %v5158
    %v5577 = vpop.f32.mrf.mxu0
    %v5578 = vadd.f32 %v5361, %v5577
    %v5579 = vpop.f32.mrf.mxu0
    %v5580 = vpop.f32.mrf.mxu0
    %v5581 = vadd.f32 %v5364, %v5580
    %v5582 = vpop.f32.mrf.mxu0
    %5583 = vmatprep.mubr.bf16.mxu0 0
    %5584 = vmatmul.mubr.bf16.gmra.mxu0 %v5161
    %v5585 = vpop.f32.mrf.mxu0
    %v5586 = vadd.f32 %v5369, %v5585
    %v5587 = vpop.f32.mrf.mxu0
    %v5588 = vpop.f32.mrf.mxu0
    %v5589 = vadd.f32 %v5372, %v5588
    %v5590 = vpop.f32.mrf.mxu0
    %5591 = vmatprep.mubr.bf16.mxu0 0
    %5592 = vmatmul.mubr.bf16.gmra.mxu0 %v5164
    %v5593 = vpop.f32.mrf.mxu0
    %v5594 = vadd.f32 %v5377, %v5593
    %v5595 = vpop.f32.mrf.mxu0
    %v5596 = vpop.f32.mrf.mxu0
    %v5597 = vadd.f32 %v5380, %v5596
    %v5598 = vpop.f32.mrf.mxu0
    %5599 = vdwg.mxu0
    %vm5634 = vcmask 1045504
    %v5635 = vrot.slane %v5418, 2
    %v5636 = vrot.slane %v5421, 2
    %v5637 = vsel %vm5634, %v5635, %v5636
    %v5638 = vrot.slane %v5426, 2
    %v5639 = vsel %vm5634, %v5636, %v5638
    %v5640 = vrot.slane %v5429, 2
    %v5641 = vsel %vm5634, %v5638, %v5640
    %v5642 = vrot.slane %v5434, 2
    %v5643 = vsel %vm5634, %v5640, %v5642
    %v5644 = vrot.slane %v5442, 2
    %v5645 = vrot.slane %v5445, 2
    %v5646 = vsel %vm5634, %v5644, %v5645
    %v5647 = vrot.slane %v5450, 2
    %v5648 = vsel %vm5634, %v5645, %v5647
    %v5649 = vrot.slane %v5453, 2
    %v5650 = vsel %vm5634, %v5647, %v5649
    %v5651 = vrot.slane %v5458, 2
    %v5652 = vsel %vm5634, %v5649, %v5651
    %v5653 = vrot.slane %v5461, 2
    %v5654 = vsel %vm5634, %v5651, %v5653
    %v5655 = vrot.slane %v5466, 2
    %v5656 = vsel %vm5634, %v5653, %v5655
    %v5657 = vrot.slane %v5474, 2
    %v5658 = vrot.slane %v5477, 2
    %v5659 = vsel %vm5634, %v5657, %v5658
    %v5660 = vrot.slane %v5482, 2
    %v5661 = vsel %vm5634, %v5658, %v5660
    %v5662 = vrot.slane %v5485, 2
    %v5663 = vsel %vm5634, %v5660, %v5662
    %v5664 = vrot.slane %v5490, 2
    %v5665 = vsel %vm5634, %v5662, %v5664
    %v5666 = vrot.slane %v5506, 2
    %v5667 = vrot.slane %v5509, 2
    %v5668 = vsel %vm5634, %v5666, %v5667
    %v5669 = vrot.slane %v5514, 2
    %v5670 = vsel %vm5634, %v5667, %v5669
    %v5671 = vrot.slane %v5517, 2
    %v5672 = vsel %vm5634, %v5669, %v5671
    %v5673 = vrot.slane %v5522, 2
    %v5674 = vsel %vm5634, %v5671, %v5673
    %v5675 = vrot.slane %v5538, 2
    %v5676 = vrot.slane %v5541, 2
    %v5677 = vsel %vm5634, %v5675, %v5676
    %v5678 = vrot.slane %v5546, 2
    %v5679 = vsel %vm5634, %v5676, %v5678
    %v5680 = vrot.slane %v5549, 2
    %v5681 = vsel %vm5634, %v5678, %v5680
    %v5682 = vrot.slane %v5554, 2
    %v5683 = vsel %vm5634, %v5680, %v5682
    %v5684 = vrot.slane %v5562, 2
    %v5685 = vrot.slane %v5565, 2
    %v5686 = vsel %vm5634, %v5684, %v5685
    %v5687 = vrot.slane %v5570, 2
    %v5688 = vsel %vm5634, %v5685, %v5687
    %v5689 = vrot.slane %v5573, 2
    %v5690 = vsel %vm5634, %v5687, %v5689
    %v5691 = vrot.slane %v5578, 2
    %v5692 = vsel %vm5634, %v5689, %v5691
    %v5693 = vrot.slane %v5581, 2
    %v5694 = vsel %vm5634, %v5691, %v5693
    %v5695 = vrot.slane %v5586, 2
    %v5696 = vsel %vm5634, %v5693, %v5695
    %v5725 = vmax.f32 %v5418, %v5637
    %v5726 = vmax.f32 %v5421, %v5639
    %v5727 = vmax.f32 %v5426, %v5641
    %v5728 = vmax.f32 %v5429, %v5643
    %v5729 = vmax.f32 %v5442, %v5646
    %v5730 = vmax.f32 %v5445, %v5648
    %v5731 = vmax.f32 %v5450, %v5650
    %v5732 = vmax.f32 %v5453, %v5652
    %v5733 = vmax.f32 %v5458, %v5654
    %v5734 = vmax.f32 %v5461, %v5656
    %v5735 = vmax.f32 %v5474, %v5659
    %v5736 = vmax.f32 %v5477, %v5661
    %v5737 = vmax.f32 %v5482, %v5663
    %v5738 = vmax.f32 %v5485, %v5665
    %v5739 = vmax.f32 %v5506, %v5668
    %v5740 = vmax.f32 %v5509, %v5670
    %v5741 = vmax.f32 %v5514, %v5672
    %v5742 = vmax.f32 %v5517, %v5674
    %v5743 = vmax.f32 %v5538, %v5677
    %v5744 = vmax.f32 %v5541, %v5679
    %v5745 = vmax.f32 %v5546, %v5681
    %v5746 = vmax.f32 %v5549, %v5683
    %v5747 = vmax.f32 %v5562, %v5686
    %v5748 = vmax.f32 %v5565, %v5688
    %v5749 = vmax.f32 %v5570, %v5690
    %v5750 = vmax.f32 %v5573, %v5692
    %v5751 = vmax.f32 %v5578, %v5694
    %v5752 = vmax.f32 %v5581, %v5696
    %v5765 = vrot.slane %v5437, 2
    %v5766 = vsel %vm5634, %v5642, %v5765
    %v5767 = vsel %vm5634, %v5765, %v5644
    %v5768 = vrot.slane %v5469, 2
    %v5769 = vsel %vm5634, %v5655, %v5768
    %v5770 = vsel %vm5634, %v5768, %v5657
    %v5771 = vrot.slane %v5493, 2
    %v5772 = vsel %vm5634, %v5664, %v5771
    %v5773 = vrot.slane %v5498, 2
    %v5774 = vsel %vm5634, %v5771, %v5773
    %v5775 = vrot.slane %v5501, 2
    %v5776 = vsel %vm5634, %v5773, %v5775
    %v5777 = vsel %vm5634, %v5775, %v5666
    %v5778 = vrot.slane %v5525, 2
    %v5779 = vsel %vm5634, %v5673, %v5778
    %v5780 = vrot.slane %v5530, 2
    %v5781 = vsel %vm5634, %v5778, %v5780
    %v5782 = vrot.slane %v5533, 2
    %v5783 = vsel %vm5634, %v5780, %v5782
    %v5784 = vsel %vm5634, %v5782, %v5675
    %v5785 = vrot.slane %v5557, 2
    %v5786 = vsel %vm5634, %v5682, %v5785
    %v5787 = vsel %vm5634, %v5785, %v5684
    %v5788 = vrot.slane %v5589, 2
    %v5789 = vsel %vm5634, %v5695, %v5788
    %v5790 = vrot.slane %v5594, 2
    %v5791 = vsel %vm5634, %v5788, %v5790
    %v5792 = vrot.slane %v5597, 2
    %v5793 = vsel %vm5634, %v5790, %v5792
    %v5813 = vmax.f32 %v5429, %v5642
    %v5814 = vmax.f32 %v5434, %v5766
    %v5815 = vmax.f32 %v5437, %v5767
    %v5816 = vmax.f32 %v5466, %v5769
    %v5817 = vmax.f32 %v5469, %v5770
    %v5818 = vmax.f32 %v5490, %v5772
    %v5819 = vmax.f32 %v5493, %v5774
    %v5820 = vmax.f32 %v5498, %v5776
    %v5821 = vmax.f32 %v5501, %v5777
    %v5822 = vmax.f32 %v5522, %v5779
    %v5823 = vmax.f32 %v5525, %v5781
    %v5824 = vmax.f32 %v5530, %v5783
    %v5825 = vmax.f32 %v5533, %v5784
    %v5826 = vmax.f32 %v5554, %v5786
    %v5827 = vmax.f32 %v5557, %v5787
    %v5828 = vmax.f32 %v5586, %v5789
    %v5829 = vmax.f32 %v5589, %v5791
    %v5830 = vmax.f32 %v5594, %v5793
    %v5831 = vmax.f32 %v5597, %v5792
    %vm5866 = vcmask 1041408
    %v5867 = vrot.slane %v5813, 6
    %v5868 = vrot.slane %v5814, 6
    %v5869 = vsel %vm5866, %v5867, %v5868
    %v5870 = vrot.slane %v5815, 6
    %v5871 = vsel %vm5866, %v5868, %v5870
    %v5872 = vrot.slane %v5729, 6
    %v5873 = vsel %vm5866, %v5870, %v5872
    %v5874 = vrot.slane %v5730, 6
    %v5875 = vsel %vm5866, %v5872, %v5874
    %v5876 = vrot.slane %v5732, 6
    %v5877 = vrot.slane %v5733, 6
    %v5878 = vsel %vm5866, %v5876, %v5877
    %v5879 = vrot.slane %v5734, 6
    %v5880 = vsel %vm5866, %v5877, %v5879
    %v5881 = vrot.slane %v5816, 6
    %v5882 = vsel %vm5866, %v5879, %v5881
    %v5883 = vrot.slane %v5817, 6
    %v5884 = vsel %vm5866, %v5881, %v5883
    %v5885 = vrot.slane %v5735, 6
    %v5886 = vsel %vm5866, %v5883, %v5885
    %v5887 = vrot.slane %v5736, 6
    %v5888 = vsel %vm5866, %v5885, %v5887
    %v5889 = vrot.slane %v5738, 6
    %v5890 = vrot.slane %v5818, 6
    %v5891 = vsel %vm5866, %v5889, %v5890
    %v5892 = vrot.slane %v5819, 6
    %v5893 = vsel %vm5866, %v5890, %v5892
    %v5894 = vrot.slane %v5820, 6
    %v5895 = vsel %vm5866, %v5892, %v5894
    %v5896 = vrot.slane %v5821, 6
    %v5897 = vsel %vm5866, %v5894, %v5896
    %v5898 = vrot.slane %v5742, 6
    %v5899 = vrot.slane %v5822, 6
    %v5900 = vsel %vm5866, %v5898, %v5899
    %v5901 = vrot.slane %v5823, 6
    %v5902 = vsel %vm5866, %v5899, %v5901
    %v5903 = vrot.slane %v5824, 6
    %v5904 = vsel %vm5866, %v5901, %v5903
    %v5905 = vrot.slane %v5825, 6
    %v5906 = vsel %vm5866, %v5903, %v5905
    %v5907 = vrot.slane %v5746, 6
    %v5908 = vrot.slane %v5826, 6
    %v5909 = vsel %vm5866, %v5907, %v5908
    %v5910 = vrot.slane %v5827, 6
    %v5911 = vsel %vm5866, %v5908, %v5910
    %v5912 = vrot.slane %v5747, 6
    %v5913 = vsel %vm5866, %v5910, %v5912
    %v5914 = vrot.slane %v5748, 6
    %v5915 = vsel %vm5866, %v5912, %v5914
    %v5916 = vrot.slane %v5750, 6
    %v5917 = vrot.slane %v5751, 6
    %v5918 = vsel %vm5866, %v5916, %v5917
    %v5919 = vrot.slane %v5752, 6
    %v5920 = vsel %vm5866, %v5917, %v5919
    %v5921 = vrot.slane %v5828, 6
    %v5922 = vsel %vm5866, %v5919, %v5921
    %v5923 = vrot.slane %v5829, 6
    %v5924 = vsel %vm5866, %v5921, %v5923
    %v5925 = vrot.slane %v5830, 6
    %v5926 = vsel %vm5866, %v5923, %v5925
    %v5927 = vrot.slane %v5831, 6
    %v5928 = vsel %vm5866, %v5925, %v5927
    %v5957 = vmax.f32 %v5725, %v5869
    %v5958 = vmax.f32 %v5726, %v5871
    %v5959 = vmax.f32 %v5727, %v5873
    %v5960 = vmax.f32 %v5728, %v5875
    %v5961 = vmax.f32 %v5729, %v5878
    %v5962 = vmax.f32 %v5730, %v5880
    %v5963 = vmax.f32 %v5731, %v5882
    %v5964 = vmax.f32 %v5732, %v5884
    %v5965 = vmax.f32 %v5733, %v5886
    %v5966 = vmax.f32 %v5734, %v5888
    %v5967 = vmax.f32 %v5735, %v5891
    %v5968 = vmax.f32 %v5736, %v5893
    %v5969 = vmax.f32 %v5737, %v5895
    %v5970 = vmax.f32 %v5738, %v5897
    %v5971 = vmax.f32 %v5739, %v5900
    %v5972 = vmax.f32 %v5740, %v5902
    %v5973 = vmax.f32 %v5741, %v5904
    %v5974 = vmax.f32 %v5742, %v5906
    %v5975 = vmax.f32 %v5743, %v5909
    %v5976 = vmax.f32 %v5744, %v5911
    %v5977 = vmax.f32 %v5745, %v5913
    %v5978 = vmax.f32 %v5746, %v5915
    %v5979 = vmax.f32 %v5747, %v5918
    %v5980 = vmax.f32 %v5748, %v5920
    %v5981 = vmax.f32 %v5749, %v5922
    %v5982 = vmax.f32 %v5750, %v5924
    %v5983 = vmax.f32 %v5751, %v5926
    %v5984 = vmax.f32 %v5752, %v5928
    %v5985 = vld [vmem:[%s4] sm:$0x1]
    %v5987 = vlaneseq
    %v5988 = vshrl.u32 %v5987, 7
    %v5989 = vsub.s32 0, %v5988
    %v5990 = vrot.slane %v5985, %v5989
    %v5992 = vadd.f32 %v5957, %v5990
    %v5993 = vadd.f32 %v5958, %v5990
    %v5994 = vadd.f32 %v5959, %v5990
    %v5995 = vadd.f32 %v5960, %v5990
    %v5996 = vadd.f32 %v5961, %v5990
    %v5997 = vadd.f32 %v5962, %v5990
    %v5998 = vadd.f32 %v5963, %v5990
    %v5999 = vadd.f32 %v5964, %v5990
    %v6000 = vadd.f32 %v5965, %v5990
    %v6001 = vadd.f32 %v5966, %v5990
    %v6002 = vadd.f32 %v5967, %v5990
    %v6003 = vadd.f32 %v5968, %v5990
    %v6004 = vadd.f32 %v5969, %v5990
    %v6005 = vadd.f32 %v5970, %v5990
    %v6006 = vadd.f32 %v5971, %v5990
    %v6007 = vadd.f32 %v5972, %v5990
    %v6008 = vadd.f32 %v5973, %v5990
    %v6009 = vadd.f32 %v5974, %v5990
    %v6010 = vadd.f32 %v5975, %v5990
    %v6011 = vadd.f32 %v5976, %v5990
    %v6012 = vadd.f32 %v5977, %v5990
    %v6013 = vadd.f32 %v5978, %v5990
    %v6014 = vadd.f32 %v5979, %v5990
    %v6015 = vadd.f32 %v5980, %v5990
    %v6016 = vadd.f32 %v5981, %v5990
    %v6017 = vadd.f32 %v5982, %v5990
    %v6018 = vadd.f32 %v5983, %v5990
    %v6019 = vadd.f32 %v5984, %v5990
    %v6020 = vmax.f32 %v5992, 0.0
    %v6021 = vmax.f32 %v5993, 0.0
    %v6022 = vmax.f32 %v5994, 0.0
    %v6023 = vmax.f32 %v5995, 0.0
    %v6024 = vmax.f32 %v5996, 0.0
    %v6025 = vmax.f32 %v5997, 0.0
    %v6026 = vmax.f32 %v5998, 0.0
    %v6027 = vmax.f32 %v5999, 0.0
    %v6028 = vmax.f32 %v6000, 0.0
    %v6029 = vmax.f32 %v6001, 0.0
    %v6030 = vmax.f32 %v6002, 0.0
    %v6031 = vmax.f32 %v6003, 0.0
    %v6032 = vmax.f32 %v6004, 0.0
    %v6033 = vmax.f32 %v6005, 0.0
    %v6034 = vmax.f32 %v6006, 0.0
    %v6035 = vmax.f32 %v6007, 0.0
    %v6036 = vmax.f32 %v6008, 0.0
    %v6037 = vmax.f32 %v6009, 0.0
    %v6038 = vmax.f32 %v6010, 0.0
    %v6039 = vmax.f32 %v6011, 0.0
    %v6040 = vmax.f32 %v6012, 0.0
    %v6041 = vmax.f32 %v6013, 0.0
    %v6042 = vmax.f32 %v6014, 0.0
    %v6043 = vmax.f32 %v6015, 0.0
    %v6044 = vmax.f32 %v6016, 0.0
    %v6045 = vmax.f32 %v6017, 0.0
    %v6046 = vmax.f32 %v6018, 0.0
    %v6047 = vmax.f32 %v6019, 0.0
    %v6048 = vpack.c.bf16 %v6021, %v6020
    %v6049 = vpack.c.bf16 %v6023, %v6022
    %v6050 = vpack.c.bf16 %v6025, %v6024
    %v6051 = vpack.c.bf16 %v6027, %v6026
    %v6052 = vpack.c.bf16 %v6029, %v6028
    %v6053 = vpack.c.bf16 %v6031, %v6030
    %v6054 = vpack.c.bf16 %v6033, %v6032
    %v6055 = vpack.c.bf16 %v6035, %v6034
    %v6056 = vpack.c.bf16 %v6037, %v6036
    %v6057 = vpack.c.bf16 %v6039, %v6038
    %v6058 = vpack.c.bf16 %v6041, %v6040
    %v6059 = vpack.c.bf16 %v6043, %v6042
    %v6060 = vpack.c.bf16 %v6045, %v6044
    %v6061 = vpack.c.bf16 %v6047, %v6046
    %vm6062 = vcmask 516096
    %6063 = vst.msk [vmem:[#allocation3] sm:$0x1] %vm6062, %v6048
    %v6066 = vunpack.c.l.s4 1966171168
    %v6067 = vunpack.c.0.s8 %v6066
    %v6068 = vlaneseq
    %v6069 = vshrl.u32 %v6068, 7
    %v6070 = vsub.s32 %v6067, %v6069
    %v6071 = vrot.slane %v6048, %v6070
    %v6073 = vunpack.c.l.s4 1966171168
    %v6074 = vunpack.c.0.s8 %v6073
    %v6075 = vlaneseq
    %v6076 = vshrl.u32 %v6075, 7
    %v6077 = vsub.s32 %v6074, %v6076
    %v6078 = vrot.slane %v6071, %v6077
    %v6079 = vcombine.high %v6078, %v6078
    %6080 = vrot.lane.b32.xlu0 %v6079, 64
    %v6081 = vpop.permute.xlu0 %6080
    %vm6083 = vcmask 1040896
    %6084 = vst.msk [vmem:[#allocation3] sm:$0x1] %vm6083, %v6081
    %v6085 = vcombine.high %v6048, %v6048
    %v6087 = vunpack.c.l.s4 1966171168
    %v6088 = vunpack.c.0.s8 %v6087
    %v6089 = vlaneseq
    %v6090 = vshrl.u32 %v6089, 7
    %v6091 = vsub.s32 %v6088, %v6090
    %v6092 = vrot.slane %v6085, %v6091
    %v6094 = vunpack.c.l.s4 1966171168
    %v6095 = vunpack.c.0.s8 %v6094
    %v6096 = vlaneseq
    %v6097 = vshrl.u32 %v6096, 7
    %v6098 = vsub.s32 %v6095, %v6097
    %v6099 = vrot.slane %v6092, %v6098
    %6101 = vst.msk [vmem:[#allocation3 + $0x1] sm:$0x1] %vm6062, %v6099
    %v6102 = vcombine.high %v6099, %v6099
    %6103 = vrot.lane.b32.xlu0 %v6102, 64
    %v6104 = vpop.permute.xlu0 %6103
    %6106 = vst.msk [vmem:[#allocation3 + $0x1] sm:$0x1] %vm6083, %v6104
    %6107 = vst.msk [vmem:[#allocation3 + $0x2] sm:$0x1] %vm6062, %v6049
    %v6110 = vunpack.c.l.s4 1966171168
    %v6111 = vunpack.c.0.s8 %v6110
    %v6112 = vlaneseq
    %v6113 = vshrl.u32 %v6112, 7
    %v6114 = vsub.s32 %v6111, %v6113
    %v6115 = vrot.slane %v6049, %v6114
    %v6117 = vunpack.c.l.s4 1966171168
    %v6118 = vunpack.c.0.s8 %v6117
    %v6119 = vlaneseq
    %v6120 = vshrl.u32 %v6119, 7
    %v6121 = vsub.s32 %v6118, %v6120
    %v6122 = vrot.slane %v6115, %v6121
    %v6123 = vcombine.high %v6122, %v6122
    %6124 = vrot.lane.b32.xlu0 %v6123, 64
    %v6125 = vpop.permute.xlu0 %6124
    %6127 = vst.msk [vmem:[#allocation3 + $0x2] sm:$0x1] %vm6083, %v6125
    %v6129 = vcombine.high %v6050, %v6050
    %v6131 = vunpack.c.l.s4 1966171168
    %v6132 = vunpack.c.0.s8 %v6131
    %v6133 = vlaneseq
    %v6134 = vshrl.u32 %v6133, 7
    %v6135 = vsub.s32 %v6132, %v6134
    %v6136 = vrot.slane %v6129, %v6135
    %v6138 = vunpack.c.l.s4 1966171168
    %v6139 = vunpack.c.0.s8 %v6138
    %v6140 = vlaneseq
    %v6141 = vshrl.u32 %v6140, 7
    %v6142 = vsub.s32 %v6139, %v6141
    %v6143 = vrot.slane %v6136, %v6142
    %v6144 = vcombine.high %v6143, %v6143
    %6146 = vst.msk [vmem:[#allocation3 + $0x3] sm:$0x1] %vm6062, %v6144
    %v6149 = vunpack.c.l.s4 1966171168
    %v6150 = vunpack.c.0.s8 %v6149
    %v6151 = vlaneseq
    %v6152 = vshrl.u32 %v6151, 7
    %v6153 = vsub.s32 %v6150, %v6152
    %v6154 = vrot.slane %v6051, %v6153
    %v6156 = vunpack.c.l.s4 1966171168
    %v6157 = vunpack.c.0.s8 %v6156
    %v6158 = vlaneseq
    %v6159 = vshrl.u32 %v6158, 7
    %v6160 = vsub.s32 %v6157, %v6159
    %v6161 = vrot.slane %v6154, %v6160
    %6162 = vrot.lane.b32.xlu0 %v6161, 64
    %v6163 = vpop.permute.xlu0 %6162
    %6165 = vst.msk [vmem:[#allocation3 + $0x3] sm:$0x1] %vm6083, %v6163
    %v6166 = vcombine.high %v6161, %v6161
    %6168 = vst.msk [vmem:[#allocation3 + $0x4] sm:$0x1] %vm6062, %v6166
    %v6169 = vcombine.high %v6051, %v6051
    %v6171 = vunpack.c.l.s4 1966171168
    %v6172 = vunpack.c.0.s8 %v6171
    %v6173 = vlaneseq
    %v6174 = vshrl.u32 %v6173, 7
    %v6175 = vsub.s32 %v6172, %v6174
    %v6176 = vrot.slane %v6169, %v6175
    %v6178 = vunpack.c.l.s4 1966171168
    %v6179 = vunpack.c.0.s8 %v6178
    %v6180 = vlaneseq
    %v6181 = vshrl.u32 %v6180, 7
    %v6182 = vsub.s32 %v6179, %v6181
    %v6183 = vrot.slane %v6176, %v6182
    %6184 = vrot.lane.b32.xlu0 %v6183, 64
    %v6185 = vpop.permute.xlu0 %6184
    %6187 = vst.msk [vmem:[#allocation3 + $0x4] sm:$0x1] %vm6083, %v6185
    %v6188 = vcombine.high %v6183, %v6183
    %6190 = vst.msk [vmem:[#allocation3 + $0x5] sm:$0x1] %vm6062, %v6188
    %v6193 = vunpack.c.l.s4 1966171168
    %v6194 = vunpack.c.0.s8 %v6193
    %v6195 = vlaneseq
    %v6196 = vshrl.u32 %v6195, 7
    %v6197 = vsub.s32 %v6194, %v6196
    %v6198 = vrot.slane %v6052, %v6197
    %v6200 = vunpack.c.l.s4 1966171168
    %v6201 = vunpack.c.0.s8 %v6200
    %v6202 = vlaneseq
    %v6203 = vshrl.u32 %v6202, 7
    %v6204 = vsub.s32 %v6201, %v6203
    %v6205 = vrot.slane %v6198, %v6204
    %6206 = vrot.lane.b32.xlu0 %v6205, 64
    %v6207 = vpop.permute.xlu0 %6206
    %6209 = vst.msk [vmem:[#allocation3 + $0x5] sm:$0x1] %vm6083, %v6207
    %v6211 = vcombine.high %v6053, %v6053
    %v6213 = vunpack.c.l.s4 1966171168
    %v6214 = vunpack.c.0.s8 %v6213
    %v6215 = vlaneseq
    %v6216 = vshrl.u32 %v6215, 7
    %v6217 = vsub.s32 %v6214, %v6216
    %v6218 = vrot.slane %v6211, %v6217
    %v6220 = vunpack.c.l.s4 1966171168
    %v6221 = vunpack.c.0.s8 %v6220
    %v6222 = vlaneseq
    %v6223 = vshrl.u32 %v6222, 7
    %v6224 = vsub.s32 %v6221, %v6223
    %v6225 = vrot.slane %v6218, %v6224
    %6227 = vst.msk [vmem:[#allocation3 + $0x6] sm:$0x1] %vm6062, %v6225
    %v6228 = vcombine.high %v6225, %v6225
    %6229 = vrot.lane.b32.xlu0 %v6228, 64
    %v6230 = vpop.permute.xlu0 %6229
    %6232 = vst.msk [vmem:[#allocation3 + $0x6] sm:$0x1] %vm6083, %v6230
    %6233 = vst.msk [vmem:[#allocation3 + $0x7] sm:$0x1] %vm6062, %v6054
    %v6236 = vunpack.c.l.s4 1966171168
    %v6237 = vunpack.c.0.s8 %v6236
    %v6238 = vlaneseq
    %v6239 = vshrl.u32 %v6238, 7
    %v6240 = vsub.s32 %v6237, %v6239
    %v6241 = vrot.slane %v6054, %v6240
    %v6243 = vunpack.c.l.s4 1966171168
    %v6244 = vunpack.c.0.s8 %v6243
    %v6245 = vlaneseq
    %v6246 = vshrl.u32 %v6245, 7
    %v6247 = vsub.s32 %v6244, %v6246
    %v6248 = vrot.slane %v6241, %v6247
    %v6249 = vcombine.high %v6248, %v6248
    %6250 = vrot.lane.b32.xlu0 %v6249, 64
    %v6251 = vpop.permute.xlu0 %6250
    %6253 = vst.msk [vmem:[#allocation3 + $0x7] sm:$0x1] %vm6083, %v6251
    %v6254 = vcombine.high %v6054, %v6054
    %v6256 = vunpack.c.l.s4 1966171168
    %v6257 = vunpack.c.0.s8 %v6256
    %v6258 = vlaneseq
    %v6259 = vshrl.u32 %v6258, 7
    %v6260 = vsub.s32 %v6257, %v6259
    %v6261 = vrot.slane %v6254, %v6260
    %v6263 = vunpack.c.l.s4 1966171168
    %v6264 = vunpack.c.0.s8 %v6263
    %v6265 = vlaneseq
    %v6266 = vshrl.u32 %v6265, 7
    %v6267 = vsub.s32 %v6264, %v6266
    %v6268 = vrot.slane %v6261, %v6267
    %6270 = vst.msk [vmem:[#allocation3 + $0x8] sm:$0x1] %vm6062, %v6268
    %v6271 = vcombine.high %v6268, %v6268
    %6272 = vrot.lane.b32.xlu0 %v6271, 64
    %v6273 = vpop.permute.xlu0 %6272
    %6275 = vst.msk [vmem:[#allocation3 + $0x8] sm:$0x1] %vm6083, %v6273
    %v6278 = vunpack.c.l.s4 1966171168
    %v6279 = vunpack.c.0.s8 %v6278
    %v6280 = vlaneseq
    %v6281 = vshrl.u32 %v6280, 7
    %v6282 = vsub.s32 %v6279, %v6281
    %v6283 = vrot.slane %v6055, %v6282
    %v6285 = vunpack.c.l.s4 1966171168
    %v6286 = vunpack.c.0.s8 %v6285
    %v6287 = vlaneseq
    %v6288 = vshrl.u32 %v6287, 7
    %v6289 = vsub.s32 %v6286, %v6288
    %v6290 = vrot.slane %v6283, %v6289
    %v6291 = vcombine.high %v6290, %v6290
    %6293 = vst.msk [vmem:[#allocation3 + $0x9] sm:$0x1] %vm6062, %v6291
    %v6294 = vcombine.high %v6055, %v6055
    %v6296 = vunpack.c.l.s4 1966171168
    %v6297 = vunpack.c.0.s8 %v6296
    %v6298 = vlaneseq
    %v6299 = vshrl.u32 %v6298, 7
    %v6300 = vsub.s32 %v6297, %v6299
    %v6301 = vrot.slane %v6294, %v6300
    %v6303 = vunpack.c.l.s4 1966171168
    %v6304 = vunpack.c.0.s8 %v6303
    %v6305 = vlaneseq
    %v6306 = vshrl.u32 %v6305, 7
    %v6307 = vsub.s32 %v6304, %v6306
    %v6308 = vrot.slane %v6301, %v6307
    %6309 = vrot.lane.b32.xlu0 %v6308, 64
    %v6310 = vpop.permute.xlu0 %6309
    %6312 = vst.msk [vmem:[#allocation3 + $0x9] sm:$0x1] %vm6083, %v6310
    %v6313 = vcombine.high %v6308, %v6308
    %6315 = vst.msk [vmem:[#allocation3 + $0xa] sm:$0x1] %vm6062, %v6313
    %v6318 = vunpack.c.l.s4 1966171168
    %v6319 = vunpack.c.0.s8 %v6318
    %v6320 = vlaneseq
    %v6321 = vshrl.u32 %v6320, 7
    %v6322 = vsub.s32 %v6319, %v6321
    %v6323 = vrot.slane %v6056, %v6322
    %v6325 = vunpack.c.l.s4 1966171168
    %v6326 = vunpack.c.0.s8 %v6325
    %v6327 = vlaneseq
    %v6328 = vshrl.u32 %v6327, 7
    %v6329 = vsub.s32 %v6326, %v6328
    %v6330 = vrot.slane %v6323, %v6329
    %6331 = vrot.lane.b32.xlu0 %v6330, 64
    %v6332 = vpop.permute.xlu0 %6331
    %6334 = vst.msk [vmem:[#allocation3 + $0xa] sm:$0x1] %vm6083, %v6332
    %v6335 = vcombine.high %v6330, %v6330
    %6337 = vst.msk [vmem:[#allocation3 + $0xb] sm:$0x1] %vm6062, %v6335
    %v6338 = vcombine.high %v6056, %v6056
    %v6340 = vunpack.c.l.s4 1966171168
    %v6341 = vunpack.c.0.s8 %v6340
    %v6342 = vlaneseq
    %v6343 = vshrl.u32 %v6342, 7
    %v6344 = vsub.s32 %v6341, %v6343
    %v6345 = vrot.slane %v6338, %v6344
    %v6347 = vunpack.c.l.s4 1966171168
    %v6348 = vunpack.c.0.s8 %v6347
    %v6349 = vlaneseq
    %v6350 = vshrl.u32 %v6349, 7
    %v6351 = vsub.s32 %v6348, %v6350
    %v6352 = vrot.slane %v6345, %v6351
    %6353 = vrot.lane.b32.xlu0 %v6352, 64
    %v6354 = vpop.permute.xlu0 %6353
    %6356 = vst.msk [vmem:[#allocation3 + $0xb] sm:$0x1] %vm6083, %v6354
    %6357 = vst.msk [vmem:[#allocation3 + $0xc] sm:$0x1] %vm6062, %v6057
    %v6360 = vunpack.c.l.s4 1966171168
    %v6361 = vunpack.c.0.s8 %v6360
    %v6362 = vlaneseq
    %v6363 = vshrl.u32 %v6362, 7
    %v6364 = vsub.s32 %v6361, %v6363
    %v6365 = vrot.slane %v6057, %v6364
    %v6367 = vunpack.c.l.s4 1966171168
    %v6368 = vunpack.c.0.s8 %v6367
    %v6369 = vlaneseq
    %v6370 = vshrl.u32 %v6369, 7
    %v6371 = vsub.s32 %v6368, %v6370
    %v6372 = vrot.slane %v6365, %v6371
    %v6373 = vcombine.high %v6372, %v6372
    %6374 = vrot.lane.b32.xlu0 %v6373, 64
    %v6375 = vpop.permute.xlu0 %6374
    %6377 = vst.msk [vmem:[#allocation3 + $0xc] sm:$0x1] %vm6083, %v6375
    %v6378 = vcombine.high %v6057, %v6057
    %v6380 = vunpack.c.l.s4 1966171168
    %v6381 = vunpack.c.0.s8 %v6380
    %v6382 = vlaneseq
    %v6383 = vshrl.u32 %v6382, 7
    %v6384 = vsub.s32 %v6381, %v6383
    %v6385 = vrot.slane %v6378, %v6384
    %v6387 = vunpack.c.l.s4 1966171168
    %v6388 = vunpack.c.0.s8 %v6387
    %v6389 = vlaneseq
    %v6390 = vshrl.u32 %v6389, 7
    %v6391 = vsub.s32 %v6388, %v6390
    %v6392 = vrot.slane %v6385, %v6391
    %6394 = vst.msk [vmem:[#allocation3 + $0xd] sm:$0x1] %vm6062, %v6392
    %v6395 = vcombine.high %v6392, %v6392
    %6396 = vrot.lane.b32.xlu0 %v6395, 64
    %v6397 = vpop.permute.xlu0 %6396
    %6399 = vst.msk [vmem:[#allocation3 + $0xd] sm:$0x1] %vm6083, %v6397
    %6400 = vst.msk [vmem:[#allocation3 + $0xe] sm:$0x1] %vm6062, %v6058
    %v6403 = vunpack.c.l.s4 1966171168
    %v6404 = vunpack.c.0.s8 %v6403
    %v6405 = vlaneseq
    %v6406 = vshrl.u32 %v6405, 7
    %v6407 = vsub.s32 %v6404, %v6406
    %v6408 = vrot.slane %v6058, %v6407
    %v6410 = vunpack.c.l.s4 1966171168
    %v6411 = vunpack.c.0.s8 %v6410
    %v6412 = vlaneseq
    %v6413 = vshrl.u32 %v6412, 7
    %v6414 = vsub.s32 %v6411, %v6413
    %v6415 = vrot.slane %v6408, %v6414
    %v6416 = vcombine.high %v6415, %v6415
    %6417 = vrot.lane.b32.xlu0 %v6416, 64
    %v6418 = vpop.permute.xlu0 %6417
    %6420 = vst.msk [vmem:[#allocation3 + $0xe] sm:$0x1] %vm6083, %v6418
    %v6422 = vcombine.high %v6059, %v6059
    %v6424 = vunpack.c.l.s4 1966171168
    %v6425 = vunpack.c.0.s8 %v6424
    %v6426 = vlaneseq
    %v6427 = vshrl.u32 %v6426, 7
    %v6428 = vsub.s32 %v6425, %v6427
    %v6429 = vrot.slane %v6422, %v6428
    %v6431 = vunpack.c.l.s4 1966171168
    %v6432 = vunpack.c.0.s8 %v6431
    %v6433 = vlaneseq
    %v6434 = vshrl.u32 %v6433, 7
    %v6435 = vsub.s32 %v6432, %v6434
    %v6436 = vrot.slane %v6429, %v6435
    %v6437 = vcombine.high %v6436, %v6436
    %6439 = vst.msk [vmem:[#allocation3 + $0xf] sm:$0x1] %vm6062, %v6437
    %v6442 = vunpack.c.l.s4 1966171168
    %v6443 = vunpack.c.0.s8 %v6442
    %v6444 = vlaneseq
    %v6445 = vshrl.u32 %v6444, 7
    %v6446 = vsub.s32 %v6443, %v6445
    %v6447 = vrot.slane %v6060, %v6446
    %v6449 = vunpack.c.l.s4 1966171168
    %v6450 = vunpack.c.0.s8 %v6449
    %v6451 = vlaneseq
    %v6452 = vshrl.u32 %v6451, 7
    %v6453 = vsub.s32 %v6450, %v6452
    %v6454 = vrot.slane %v6447, %v6453
    %6455 = vrot.lane.b32.xlu0 %v6454, 64
    %v6456 = vpop.permute.xlu0 %6455
    %6458 = vst.msk [vmem:[#allocation3 + $0xf] sm:$0x1] %vm6083, %v6456
    %v6459 = vcombine.high %v6454, %v6454
    %6461 = vst.msk [vmem:[#allocation3 + $0x10] sm:$0x1] %vm6062, %v6459
    %v6462 = vcombine.high %v6060, %v6060
    %v6464 = vunpack.c.l.s4 1966171168
    %v6465 = vunpack.c.0.s8 %v6464
    %v6466 = vlaneseq
    %v6467 = vshrl.u32 %v6466, 7
    %v6468 = vsub.s32 %v6465, %v6467
    %v6469 = vrot.slane %v6462, %v6468
    %v6471 = vunpack.c.l.s4 1966171168
    %v6472 = vunpack.c.0.s8 %v6471
    %v6473 = vlaneseq
    %v6474 = vshrl.u32 %v6473, 7
    %v6475 = vsub.s32 %v6472, %v6474
    %v6476 = vrot.slane %v6469, %v6475
    %6477 = vrot.lane.b32.xlu0 %v6476, 64
    %v6478 = vpop.permute.xlu0 %6477
    %6480 = vst.msk [vmem:[#allocation3 + $0x10] sm:$0x1] %vm6083, %v6478
    %v6481 = vcombine.high %v6476, %v6476
    %6483 = vst.msk [vmem:[#allocation3 + $0x11] sm:$0x1] %vm6062, %v6481
    %v6486 = vunpack.c.l.s4 1966171168
    %v6487 = vunpack.c.0.s8 %v6486
    %v6488 = vlaneseq
    %v6489 = vshrl.u32 %v6488, 7
    %v6490 = vsub.s32 %v6487, %v6489
    %v6491 = vrot.slane %v6061, %v6490
    %v6493 = vunpack.c.l.s4 1966171168
    %v6494 = vunpack.c.0.s8 %v6493
    %v6495 = vlaneseq
    %v6496 = vshrl.u32 %v6495, 7
    %v6497 = vsub.s32 %v6494, %v6496
    %v6498 = vrot.slane %v6491, %v6497
    %6499 = vrot.lane.b32.xlu0 %v6498, 64
    %v6500 = vpop.permute.xlu0 %6499
    %6502 = vst.msk [vmem:[#allocation3 + $0x11] sm:$0x1] %vm6083, %v6500
    %s6503 = smul.u32 4, 288
    %s6504 = smul.u32 %s6503, 1
    %s6505 = sshll.u32 %s6504, 4
    %6506 = dma.done [#allocation5], %s6505
    %v6507 = vld [vmem:[#allocation3] sm:$0xff]
    %v6508 = vld [vmem:[#allocation3 + $0x8] sm:$0xff]
    %v6509 = vld [vmem:[#allocation3 + $0x10] sm:$0x3]
    %v6510 = vld [vmem:[#allocation4] sm:$0xf]
    %v6511 = vld [vmem:[#allocation4 + $0x4] sm:$0xf]
    %v6512 = vld [vmem:[#allocation4 + $0x8] sm:$0xf]
    %v6513 = vld [vmem:[#allocation4 + $0xc] sm:$0xf]
    %v6514 = vld [vmem:[#allocation4 + $0x10] sm:$0xf]
    %v6515 = vld [vmem:[#allocation4 + $0x14] sm:$0xf]
    %v6516 = vld [vmem:[#allocation4 + $0x18] sm:$0xf]
    %v6517 = vld [vmem:[#allocation4 + $0x1c] sm:$0xf]
    %v6518 = vld [vmem:[#allocation4 + $0x20] sm:$0xf]
    %v6519 = vld [vmem:[#allocation4 + $0x24] sm:$0xf]
    %v6520 = vld [vmem:[#allocation4 + $0x28] sm:$0xf]
    %v6521 = vld [vmem:[#allocation4 + $0x2c] sm:$0xf]
    %v6522 = vld [vmem:[#allocation4 + $0x30] sm:$0xf]
    %v6523 = vld [vmem:[#allocation4 + $0x34] sm:$0xf]
    %v6524 = vld [vmem:[#allocation4 + $0x38] sm:$0xf]
    %v6525 = vld [vmem:[#allocation4 + $0x3c] sm:$0xf]
    %v6526 = vld [vmem:[#allocation4 + $0x40] sm:$0xf]
    %v6527 = vld [vmem:[#allocation4 + $0x44] sm:$0xf]
    %v6528 = vld [vmem:[#allocation4 + $0x48] sm:$0xf]
    %v6529 = vld [vmem:[#allocation4 + $0x4c] sm:$0xf]
    %v6530 = vld [vmem:[#allocation4 + $0x50] sm:$0xf]
    %v6531 = vld [vmem:[#allocation4 + $0x54] sm:$0xf]
    %v6532 = vld [vmem:[#allocation4 + $0x58] sm:$0xf]
    %v6533 = vld [vmem:[#allocation4 + $0x5c] sm:$0xf]
    %v6534 = vld [vmem:[#allocation4 + $0x60] sm:$0xf]
    %v6535 = vld [vmem:[#allocation4 + $0x64] sm:$0xf]
    %v6536 = vld [vmem:[#allocation4 + $0x68] sm:$0xf]
    %v6537 = vld [vmem:[#allocation4 + $0x6c] sm:$0xf]
    %v6538 = vld [vmem:[#allocation4 + $0x70] sm:$0xf]
    %v6539 = vld [vmem:[#allocation4 + $0x74] sm:$0xf]
    %v6540 = vld [vmem:[#allocation4 + $0x78] sm:$0xf]
    %v6541 = vld [vmem:[#allocation4 + $0x7c] sm:$0xf]
    %v6542 = vld [vmem:[#allocation4 + $0x80] sm:$0xf]
    %v6543 = vld [vmem:[#allocation4 + $0x84] sm:$0xf]
    %v6544 = vld [vmem:[#allocation4 + $0x88] sm:$0xf]
    %v6545 = vld [vmem:[#allocation4 + $0x8c] sm:$0xf]
    %v6546 = vld [vmem:[#allocation4 + $0x90] sm:$0xf]
    %v6547 = vld [vmem:[#allocation4 + $0x94] sm:$0xf]
    %v6548 = vld [vmem:[#allocation4 + $0x98] sm:$0xf]
    %v6549 = vld [vmem:[#allocation4 + $0x9c] sm:$0xf]
    %v6550 = vld [vmem:[#allocation4 + $0xa0] sm:$0xf]
    %v6551 = vld [vmem:[#allocation4 + $0xa4] sm:$0xf]
    %v6552 = vld [vmem:[#allocation4 + $0xa8] sm:$0xf]
    %v6553 = vld [vmem:[#allocation4 + $0xac] sm:$0xf]
    %v6554 = vld [vmem:[#allocation4 + $0xb0] sm:$0xf]
    %v6555 = vld [vmem:[#allocation4 + $0xb4] sm:$0xf]
    %v6556 = vld [vmem:[#allocation4 + $0xb8] sm:$0xf]
    %v6557 = vld [vmem:[#allocation4 + $0xbc] sm:$0xf]
    %v6558 = vld [vmem:[#allocation4 + $0xc0] sm:$0xf]
    %v6559 = vld [vmem:[#allocation4 + $0xc4] sm:$0xf]
    %v6560 = vld [vmem:[#allocation4 + $0xc8] sm:$0xf]
    %v6561 = vld [vmem:[#allocation4 + $0xcc] sm:$0xf]
    %v6562 = vld [vmem:[#allocation4 + $0xd0] sm:$0xf]
    %v6563 = vld [vmem:[#allocation4 + $0xd4] sm:$0xf]
    %v6564 = vld [vmem:[#allocation4 + $0xd8] sm:$0xf]
    %v6565 = vld [vmem:[#allocation4 + $0xdc] sm:$0xf]
    %v6566 = vld [vmem:[#allocation4 + $0xe0] sm:$0xf]
    %v6567 = vld [vmem:[#allocation4 + $0xe4] sm:$0xf]
    %v6568 = vld [vmem:[#allocation4 + $0xe8] sm:$0xf]
    %v6569 = vld [vmem:[#allocation4 + $0xec] sm:$0xf]
    %v6570 = vld [vmem:[#allocation4 + $0xf0] sm:$0xf]
    %v6571 = vld [vmem:[#allocation4 + $0xf4] sm:$0xf]
    %v6572 = vld [vmem:[#allocation4 + $0xf8] sm:$0xf]
    %v6573 = vld [vmem:[#allocation4 + $0xfc] sm:$0xf]
    %v6574 = vld [vmem:[#allocation4 + $0x100] sm:$0xf]
    %v6575 = vld [vmem:[#allocation4 + $0x104] sm:$0xf]
    %v6576 = vld [vmem:[#allocation4 + $0x108] sm:$0xf]
    %v6577 = vld [vmem:[#allocation4 + $0x10c] sm:$0xf]
    %v6578 = vld [vmem:[#allocation4 + $0x110] sm:$0xf]
    %v6579 = vld [vmem:[#allocation4 + $0x114] sm:$0xf]
    %v6580 = vld [vmem:[#allocation4 + $0x118] sm:$0xf]
    %v6581 = vld [vmem:[#allocation4 + $0x11c] sm:$0xf]
    %v6582 = vld [vmem:[#allocation4 + $0x120] sm:$0xf]
    %v6583 = vld [vmem:[#allocation4 + $0x124] sm:$0xf]
    %v6584 = vld [vmem:[#allocation4 + $0x128] sm:$0xf]
    %v6585 = vld [vmem:[#allocation4 + $0x12c] sm:$0xf]
    %v6586 = vld [vmem:[#allocation4 + $0x130] sm:$0xf]
    %v6587 = vld [vmem:[#allocation4 + $0x134] sm:$0xf]
    %v6588 = vld [vmem:[#allocation4 + $0x138] sm:$0xf]
    %v6589 = vld [vmem:[#allocation4 + $0x13c] sm:$0xf]
    %v6590 = vld [vmem:[#allocation4 + $0x140] sm:$0xf]
    %v6591 = vld [vmem:[#allocation4 + $0x144] sm:$0xf]
    %v6592 = vld [vmem:[#allocation4 + $0x148] sm:$0xf]
    %v6593 = vld [vmem:[#allocation4 + $0x14c] sm:$0xf]
    %v6594 = vld [vmem:[#allocation4 + $0x150] sm:$0xf]
    %v6595 = vld [vmem:[#allocation4 + $0x154] sm:$0xf]
    %v6596 = vld [vmem:[#allocation4 + $0x158] sm:$0xf]
    %v6597 = vld [vmem:[#allocation4 + $0x15c] sm:$0xf]
    %v6598 = vld [vmem:[#allocation4 + $0x160] sm:$0xf]
    %v6599 = vld [vmem:[#allocation4 + $0x164] sm:$0xf]
    %v6600 = vld [vmem:[#allocation4 + $0x168] sm:$0xf]
    %v6601 = vld [vmem:[#allocation4 + $0x16c] sm:$0xf]
    %v6602 = vld [vmem:[#allocation4 + $0x170] sm:$0xf]
    %v6603 = vld [vmem:[#allocation4 + $0x174] sm:$0xf]
    %v6604 = vld [vmem:[#allocation4 + $0x178] sm:$0xf]
    %v6605 = vld [vmem:[#allocation4 + $0x17c] sm:$0xf]
    %v6606 = vld [vmem:[#allocation4 + $0x180] sm:$0xf]
    %v6607 = vld [vmem:[#allocation4 + $0x184] sm:$0xf]
    %v6608 = vld [vmem:[#allocation4 + $0x188] sm:$0xf]
    %v6609 = vld [vmem:[#allocation4 + $0x18c] sm:$0xf]
    %v6610 = vld [vmem:[#allocation4 + $0x190] sm:$0xf]
    %v6611 = vld [vmem:[#allocation4 + $0x194] sm:$0xf]
    %v6612 = vld [vmem:[#allocation4 + $0x198] sm:$0xf]
    %v6613 = vld [vmem:[#allocation4 + $0x19c] sm:$0xf]
    %v6614 = vld [vmem:[#allocation4 + $0x1a0] sm:$0xf]
    %v6615 = vld [vmem:[#allocation4 + $0x1a4] sm:$0xf]
    %v6616 = vld [vmem:[#allocation4 + $0x1a8] sm:$0xf]
    %v6617 = vld [vmem:[#allocation4 + $0x1ac] sm:$0xf]
    %v6618 = vld [vmem:[#allocation4 + $0x1b0] sm:$0xf]
    %v6619 = vld [vmem:[#allocation4 + $0x1b4] sm:$0xf]
    %v6620 = vld [vmem:[#allocation4 + $0x1b8] sm:$0xf]
    %v6621 = vld [vmem:[#allocation4 + $0x1bc] sm:$0xf]
    %v6622 = vld [vmem:[#allocation4 + $0x1c0] sm:$0xf]
    %v6623 = vld [vmem:[#allocation4 + $0x1c4] sm:$0xf]
    %v6624 = vld [vmem:[#allocation4 + $0x1c8] sm:$0xf]
    %v6625 = vld [vmem:[#allocation4 + $0x1cc] sm:$0xf]
    %v6626 = vld [vmem:[#allocation4 + $0x1d0] sm:$0xf]
    %v6627 = vld [vmem:[#allocation4 + $0x1d4] sm:$0xf]
    %v6628 = vld [vmem:[#allocation4 + $0x1d8] sm:$0xf]
    %v6629 = vld [vmem:[#allocation4 + $0x1dc] sm:$0xf]
    %v6630 = vld [vmem:[#allocation4 + $0x1e0] sm:$0xf]
    %v6631 = vld [vmem:[#allocation4 + $0x1e4] sm:$0xf]
    %v6632 = vld [vmem:[#allocation4 + $0x1e8] sm:$0xf]
    %v6633 = vld [vmem:[#allocation4 + $0x1ec] sm:$0xf]
    %v6634 = vld [vmem:[#allocation4 + $0x1f0] sm:$0xf]
    %v6635 = vld [vmem:[#allocation4 + $0x1f4] sm:$0xf]
    %v6636 = vld [vmem:[#allocation4 + $0x1f8] sm:$0xf]
    %v6637 = vld [vmem:[#allocation4 + $0x1fc] sm:$0xf]
    %v6638 = vld [vmem:[#allocation4 + $0x200] sm:$0xf]
    %v6639 = vld [vmem:[#allocation4 + $0x204] sm:$0xf]
    %v6640 = vld [vmem:[#allocation4 + $0x208] sm:$0xf]
    %v6641 = vld [vmem:[#allocation4 + $0x20c] sm:$0xf]
    %v6642 = vld [vmem:[#allocation4 + $0x210] sm:$0xf]
    %v6643 = vld [vmem:[#allocation4 + $0x214] sm:$0xf]
    %v6644 = vld [vmem:[#allocation4 + $0x218] sm:$0xf]
    %v6645 = vld [vmem:[#allocation4 + $0x21c] sm:$0xf]
    %v6646 = vld [vmem:[#allocation4 + $0x220] sm:$0xf]
    %v6647 = vld [vmem:[#allocation4 + $0x224] sm:$0xf]
    %v6648 = vld [vmem:[#allocation4 + $0x228] sm:$0xf]
    %v6649 = vld [vmem:[#allocation4 + $0x22c] sm:$0xf]
    %v6650 = vld [vmem:[#allocation4 + $0x230] sm:$0xf]
    %v6651 = vld [vmem:[#allocation4 + $0x234] sm:$0xf]
    %v6652 = vld [vmem:[#allocation4 + $0x238] sm:$0xf]
    %v6653 = vld [vmem:[#allocation4 + $0x23c] sm:$0xf]
    %v6654 = vld [vmem:[#allocation4 + $0x240] sm:$0xf]
    %v6655 = vld [vmem:[#allocation4 + $0x244] sm:$0xf]
    %v6656 = vld [vmem:[#allocation4 + $0x248] sm:$0xf]
    %v6657 = vld [vmem:[#allocation4 + $0x24c] sm:$0xf]
    %v6658 = vld [vmem:[#allocation4 + $0x250] sm:$0xf]
    %v6659 = vld [vmem:[#allocation4 + $0x254] sm:$0xf]
    %v6660 = vld [vmem:[#allocation4 + $0x258] sm:$0xf]
    %v6661 = vld [vmem:[#allocation4 + $0x25c] sm:$0xf]
    %v6662 = vld [vmem:[#allocation4 + $0x260] sm:$0xf]
    %v6663 = vld [vmem:[#allocation4 + $0x264] sm:$0xf]
    %v6664 = vld [vmem:[#allocation4 + $0x268] sm:$0xf]
    %v6665 = vld [vmem:[#allocation4 + $0x26c] sm:$0xf]
    %v6666 = vld [vmem:[#allocation4 + $0x270] sm:$0xf]
    %v6667 = vld [vmem:[#allocation4 + $0x274] sm:$0xf]
    %v6668 = vld [vmem:[#allocation4 + $0x278] sm:$0xf]
    %v6669 = vld [vmem:[#allocation4 + $0x27c] sm:$0xf]
    %v6670 = vld [vmem:[#allocation4 + $0x280] sm:$0xf]
    %v6671 = vld [vmem:[#allocation4 + $0x284] sm:$0xf]
    %v6672 = vld [vmem:[#allocation4 + $0x288] sm:$0xf]
    %v6673 = vld [vmem:[#allocation4 + $0x28c] sm:$0xf]
    %v6674 = vld [vmem:[#allocation4 + $0x290] sm:$0xf]
    %v6675 = vld [vmem:[#allocation4 + $0x294] sm:$0xf]
    %v6676 = vld [vmem:[#allocation4 + $0x298] sm:$0xf]
    %v6677 = vld [vmem:[#allocation4 + $0x29c] sm:$0xf]
    %v6678 = vld [vmem:[#allocation4 + $0x2a0] sm:$0xf]
    %v6679 = vld [vmem:[#allocation4 + $0x2a4] sm:$0xf]
    %v6680 = vld [vmem:[#allocation4 + $0x2a8] sm:$0xf]
    %v6681 = vld [vmem:[#allocation4 + $0x2ac] sm:$0xf]
    %v6682 = vld [vmem:[#allocation4 + $0x2b0] sm:$0xf]
    %v6683 = vld [vmem:[#allocation4 + $0x2b4] sm:$0xf]
    %v6684 = vld [vmem:[#allocation4 + $0x2b8] sm:$0xf]
    %v6685 = vld [vmem:[#allocation4 + $0x2bc] sm:$0xf]
    %v6686 = vld [vmem:[#allocation4 + $0x2c0] sm:$0xf]
    %v6687 = vld [vmem:[#allocation4 + $0x2c4] sm:$0xf]
    %v6688 = vld [vmem:[#allocation4 + $0x2c8] sm:$0xf]
    %v6689 = vld [vmem:[#allocation4 + $0x2cc] sm:$0xf]
    %v6690 = vld [vmem:[#allocation4 + $0x2d0] sm:$0xf]
    %v6691 = vld [vmem:[#allocation4 + $0x2d4] sm:$0xf]
    %v6692 = vld [vmem:[#allocation4 + $0x2d8] sm:$0xf]
    %v6693 = vld [vmem:[#allocation4 + $0x2dc] sm:$0xf]
    %v6694 = vld [vmem:[#allocation4 + $0x2e0] sm:$0xf]
    %v6695 = vld [vmem:[#allocation4 + $0x2e4] sm:$0xf]
    %v6696 = vld [vmem:[#allocation4 + $0x2e8] sm:$0xf]
    %v6697 = vld [vmem:[#allocation4 + $0x2ec] sm:$0xf]
    %v6698 = vld [vmem:[#allocation4 + $0x2f0] sm:$0xf]
    %v6699 = vld [vmem:[#allocation4 + $0x2f4] sm:$0xf]
    %v6700 = vld [vmem:[#allocation4 + $0x2f8] sm:$0xf]
    %v6701 = vld [vmem:[#allocation4 + $0x2fc] sm:$0xf]
    %v6702 = vld [vmem:[#allocation4 + $0x300] sm:$0xf]
    %v6703 = vld [vmem:[#allocation4 + $0x304] sm:$0xf]
    %v6704 = vld [vmem:[#allocation4 + $0x308] sm:$0xf]
    %v6705 = vld [vmem:[#allocation4 + $0x30c] sm:$0xf]
    %v6706 = vld [vmem:[#allocation4 + $0x310] sm:$0xf]
    %v6707 = vld [vmem:[#allocation4 + $0x314] sm:$0xf]
    %v6708 = vld [vmem:[#allocation4 + $0x318] sm:$0xf]
    %v6709 = vld [vmem:[#allocation4 + $0x31c] sm:$0xf]
    %v6710 = vld [vmem:[#allocation4 + $0x320] sm:$0xf]
    %v6711 = vld [vmem:[#allocation4 + $0x324] sm:$0xf]
    %v6712 = vld [vmem:[#allocation4 + $0x328] sm:$0xf]
    %v6713 = vld [vmem:[#allocation4 + $0x32c] sm:$0xf]
    %v6714 = vld [vmem:[#allocation4 + $0x330] sm:$0xf]
    %v6715 = vld [vmem:[#allocation4 + $0x334] sm:$0xf]
    %v6716 = vld [vmem:[#allocation4 + $0x338] sm:$0xf]
    %v6717 = vld [vmem:[#allocation4 + $0x33c] sm:$0xf]
    %v6718 = vld [vmem:[#allocation4 + $0x340] sm:$0xf]
    %v6719 = vld [vmem:[#allocation4 + $0x344] sm:$0xf]
    %v6720 = vld [vmem:[#allocation4 + $0x348] sm:$0xf]
    %v6721 = vld [vmem:[#allocation4 + $0x34c] sm:$0xf]
    %v6722 = vld [vmem:[#allocation4 + $0x350] sm:$0xf]
    %v6723 = vld [vmem:[#allocation4 + $0x354] sm:$0xf]
    %v6724 = vld [vmem:[#allocation4 + $0x358] sm:$0xf]
    %v6725 = vld [vmem:[#allocation4 + $0x35c] sm:$0xf]
    %v6726 = vld [vmem:[#allocation4 + $0x360] sm:$0xf]
    %v6727 = vld [vmem:[#allocation4 + $0x364] sm:$0xf]
    %v6728 = vld [vmem:[#allocation4 + $0x368] sm:$0xf]
    %v6729 = vld [vmem:[#allocation4 + $0x36c] sm:$0xf]
    %v6730 = vld [vmem:[#allocation4 + $0x370] sm:$0xf]
    %v6731 = vld [vmem:[#allocation4 + $0x374] sm:$0xf]
    %v6732 = vld [vmem:[#allocation4 + $0x378] sm:$0xf]
    %v6733 = vld [vmem:[#allocation4 + $0x37c] sm:$0xf]
    %v6734 = vld [vmem:[#allocation4 + $0x380] sm:$0xf]
    %v6735 = vld [vmem:[#allocation4 + $0x384] sm:$0xf]
    %v6736 = vld [vmem:[#allocation4 + $0x388] sm:$0xf]
    %v6737 = vld [vmem:[#allocation4 + $0x38c] sm:$0xf]
    %v6738 = vld [vmem:[#allocation4 + $0x390] sm:$0xf]
    %v6739 = vld [vmem:[#allocation4 + $0x394] sm:$0xf]
    %v6740 = vld [vmem:[#allocation4 + $0x398] sm:$0xf]
    %v6741 = vld [vmem:[#allocation4 + $0x39c] sm:$0xf]
    %v6742 = vld [vmem:[#allocation4 + $0x3a0] sm:$0xf]
    %v6743 = vld [vmem:[#allocation4 + $0x3a4] sm:$0xf]
    %v6744 = vld [vmem:[#allocation4 + $0x3a8] sm:$0xf]
    %v6745 = vld [vmem:[#allocation4 + $0x3ac] sm:$0xf]
    %v6746 = vld [vmem:[#allocation4 + $0x3b0] sm:$0xf]
    %v6747 = vld [vmem:[#allocation4 + $0x3b4] sm:$0xf]
    %v6748 = vld [vmem:[#allocation4 + $0x3b8] sm:$0xf]
    %v6749 = vld [vmem:[#allocation4 + $0x3bc] sm:$0xf]
    %v6750 = vld [vmem:[#allocation4 + $0x3c0] sm:$0xf]
    %v6751 = vld [vmem:[#allocation4 + $0x3c4] sm:$0xf]
    %v6752 = vld [vmem:[#allocation4 + $0x3c8] sm:$0xf]
    %v6753 = vld [vmem:[#allocation4 + $0x3cc] sm:$0xf]
    %v6754 = vld [vmem:[#allocation4 + $0x3d0] sm:$0xf]
    %v6755 = vld [vmem:[#allocation4 + $0x3d4] sm:$0xf]
    %v6756 = vld [vmem:[#allocation4 + $0x3d8] sm:$0xf]
    %v6757 = vld [vmem:[#allocation4 + $0x3dc] sm:$0xf]
    %v6758 = vld [vmem:[#allocation4 + $0x3e0] sm:$0xf]
    %v6759 = vld [vmem:[#allocation4 + $0x3e4] sm:$0xf]
    %v6760 = vld [vmem:[#allocation4 + $0x3e8] sm:$0xf]
    %v6761 = vld [vmem:[#allocation4 + $0x3ec] sm:$0xf]
    %v6762 = vld [vmem:[#allocation4 + $0x3f0] sm:$0xf]
    %v6763 = vld [vmem:[#allocation4 + $0x3f4] sm:$0xf]
    %v6764 = vld [vmem:[#allocation4 + $0x3f8] sm:$0xf]
    %v6765 = vld [vmem:[#allocation4 + $0x3fc] sm:$0xf]
    %v6766 = vld [vmem:[#allocation4 + $0x400] sm:$0xf]
    %v6767 = vld [vmem:[#allocation4 + $0x404] sm:$0xf]
    %v6768 = vld [vmem:[#allocation4 + $0x408] sm:$0xf]
    %v6769 = vld [vmem:[#allocation4 + $0x40c] sm:$0xf]
    %v6770 = vld [vmem:[#allocation4 + $0x410] sm:$0xf]
    %v6771 = vld [vmem:[#allocation4 + $0x414] sm:$0xf]
    %v6772 = vld [vmem:[#allocation4 + $0x418] sm:$0xf]
    %v6773 = vld [vmem:[#allocation4 + $0x41c] sm:$0xf]
    %v6774 = vld [vmem:[#allocation4 + $0x420] sm:$0xf]
    %v6775 = vld [vmem:[#allocation4 + $0x424] sm:$0xf]
    %v6776 = vld [vmem:[#allocation4 + $0x428] sm:$0xf]
    %v6777 = vld [vmem:[#allocation4 + $0x42c] sm:$0xf]
    %v6778 = vld [vmem:[#allocation4 + $0x430] sm:$0xf]
    %v6779 = vld [vmem:[#allocation4 + $0x434] sm:$0xf]
    %v6780 = vld [vmem:[#allocation4 + $0x438] sm:$0xf]
    %v6781 = vld [vmem:[#allocation4 + $0x43c] sm:$0xf]
    %v6782 = vld [vmem:[#allocation4 + $0x440] sm:$0xf]
    %v6783 = vld [vmem:[#allocation4 + $0x444] sm:$0xf]
    %v6784 = vld [vmem:[#allocation4 + $0x448] sm:$0xf]
    %v6785 = vld [vmem:[#allocation4 + $0x44c] sm:$0xf]
    %v6786 = vld [vmem:[#allocation4 + $0x450] sm:$0xf]
    %v6787 = vld [vmem:[#allocation4 + $0x454] sm:$0xf]
    %v6788 = vld [vmem:[#allocation4 + $0x458] sm:$0xf]
    %v6789 = vld [vmem:[#allocation4 + $0x45c] sm:$0xf]
    %v6790 = vld [vmem:[#allocation4 + $0x460] sm:$0xf]
    %v6791 = vld [vmem:[#allocation4 + $0x464] sm:$0xf]
    %v6792 = vld [vmem:[#allocation4 + $0x468] sm:$0xf]
    %v6793 = vld [vmem:[#allocation4 + $0x46c] sm:$0xf]
    %v6794 = vld [vmem:[#allocation4 + $0x470] sm:$0xf]
    %v6795 = vld [vmem:[#allocation4 + $0x474] sm:$0xf]
    %v6796 = vld [vmem:[#allocation4 + $0x478] sm:$0xf]
    %v6797 = vld [vmem:[#allocation4 + $0x47c] sm:$0xf]
    %v6798 = vld [vmem:[%s6] sm:$0x1]
    %v6800 = vlaneseq
    %v6801 = vshrl.u32 %v6800, 7
    %v6802 = vsub.s32 0, %v6801
    %v6803 = vrot.slane %v6798, %v6802
    %v6808 = vcombine.high %v6507, %v6507
    %v6810 = vunpack.c.l.s4 1966171168
    %v6811 = vunpack.c.0.s8 %v6810
    %v6812 = vlaneseq
    %v6813 = vshrl.u32 %v6812, 7
    %v6814 = vsub.s32 %v6811, %v6813
    %v6815 = vrot.slane %v6507, %v6814
    %v6817 = vunpack.c.l.s4 1966171168
    %v6818 = vunpack.c.0.s8 %v6817
    %v6819 = vlaneseq
    %v6820 = vshrl.u32 %v6819, 7
    %v6821 = vsub.s32 %v6818, %v6820
    %v6822 = vrot.slane %v6808, %v6821
    %v6823 = vcombine.high %v6815, %v6815
    %v6824 = vcombine.high %v6822, %v6822
    %v6826 = vunpack.c.l.s4 1966171168
    %v6827 = vunpack.c.0.s8 %v6826
    %v6828 = vlaneseq
    %v6829 = vshrl.u32 %v6828, 7
    %v6830 = vsub.s32 %v6827, %v6829
    %v6831 = vrot.slane %v6815, %v6830
    %v6833 = vunpack.c.l.s4 1966171168
    %v6834 = vunpack.c.0.s8 %v6833
    %v6835 = vlaneseq
    %v6836 = vshrl.u32 %v6835, 7
    %v6837 = vsub.s32 %v6834, %v6836
    %v6838 = vrot.slane %v6822, %v6837
    %v6840 = vunpack.c.l.s4 1966171168
    %v6841 = vunpack.c.0.s8 %v6840
    %v6842 = vlaneseq
    %v6843 = vshrl.u32 %v6842, 7
    %v6844 = vsub.s32 %v6841, %v6843
    %v6845 = vrot.slane %v6823, %v6844
    %v6847 = vunpack.c.l.s4 1966171168
    %v6848 = vunpack.c.0.s8 %v6847
    %v6849 = vlaneseq
    %v6850 = vshrl.u32 %v6849, 7
    %v6851 = vsub.s32 %v6848, %v6850
    %v6852 = vrot.slane %v6824, %v6851
    %v6853 = vcombine.high %v6831, %v6831
    %v6854 = vcombine.high %v6838, %v6838
    %v6855 = vcombine.high %v6845, %v6845
    %v6856 = vcombine.high %v6852, %v6852
    %v6857 = vcombine.high %v6508, %v6508
    %v6859 = vunpack.c.l.s4 1966171168
    %v6860 = vunpack.c.0.s8 %v6859
    %v6861 = vlaneseq
    %v6862 = vshrl.u32 %v6861, 7
    %v6863 = vsub.s32 %v6860, %v6862
    %v6864 = vrot.slane %v6508, %v6863
    %v6866 = vunpack.c.l.s4 1966171168
    %v6867 = vunpack.c.0.s8 %v6866
    %v6868 = vlaneseq
    %v6869 = vshrl.u32 %v6868, 7
    %v6870 = vsub.s32 %v6867, %v6869
    %v6871 = vrot.slane %v6857, %v6870
    %v6872 = vcombine.high %v6864, %v6864
    %v6873 = vcombine.high %v6871, %v6871
    %v6875 = vunpack.c.l.s4 1966171168
    %v6876 = vunpack.c.0.s8 %v6875
    %v6877 = vlaneseq
    %v6878 = vshrl.u32 %v6877, 7
    %v6879 = vsub.s32 %v6876, %v6878
    %v6880 = vrot.slane %v6864, %v6879
    %v6882 = vunpack.c.l.s4 1966171168
    %v6883 = vunpack.c.0.s8 %v6882
    %v6884 = vlaneseq
    %v6885 = vshrl.u32 %v6884, 7
    %v6886 = vsub.s32 %v6883, %v6885
    %v6887 = vrot.slane %v6871, %v6886
    %v6889 = vunpack.c.l.s4 1966171168
    %v6890 = vunpack.c.0.s8 %v6889
    %v6891 = vlaneseq
    %v6892 = vshrl.u32 %v6891, 7
    %v6893 = vsub.s32 %v6890, %v6892
    %v6894 = vrot.slane %v6872, %v6893
    %v6896 = vunpack.c.l.s4 1966171168
    %v6897 = vunpack.c.0.s8 %v6896
    %v6898 = vlaneseq
    %v6899 = vshrl.u32 %v6898, 7
    %v6900 = vsub.s32 %v6897, %v6899
    %v6901 = vrot.slane %v6873, %v6900
    %v6902 = vcombine.high %v6880, %v6880
    %v6903 = vcombine.high %v6887, %v6887
    %v6904 = vcombine.high %v6894, %v6894
    %v6905 = vcombine.high %v6901, %v6901
    %v6907 = vunpack.c.l.s4 1966171168
    %v6908 = vunpack.c.0.s8 %v6907
    %v6909 = vlaneseq
    %v6910 = vshrl.u32 %v6909, 7
    %v6911 = vsub.s32 %v6908, %v6910
    %v6912 = vrot.slane %v6509, %v6911
    %v6913 = vcombine.high %v6912, %v6912
    %v6915 = vunpack.c.l.s4 1966171168
    %v6916 = vunpack.c.0.s8 %v6915
    %v6917 = vlaneseq
    %v6918 = vshrl.u32 %v6917, 7
    %v6919 = vsub.s32 %v6916, %v6918
    %v6920 = vrot.slane %v6912, %v6919
    %v6922 = vunpack.c.l.s4 1966171168
    %v6923 = vunpack.c.0.s8 %v6922
    %v6924 = vlaneseq
    %v6925 = vshrl.u32 %v6924, 7
    %v6926 = vsub.s32 %v6923, %v6925
    %v6927 = vrot.slane %v6913, %v6926
    %v7234 = vunpack.c.l.b16 %v6510
    %v7235 = vunpack.c.l.b16 %v6511
    %v7236 = vunpack.c.l.b16 %v6512
    %v7237 = vunpack.c.l.b16 %v6513
    %v7238 = vunpack.c.l.b16 %v6514
    %v7239 = vunpack.c.l.b16 %v6515
    %v7240 = vunpack.c.l.b16 %v6516
    %v7241 = vunpack.c.l.b16 %v6517
    %v7242 = vunpack.c.l.b16 %v6518
    %v7243 = vunpack.c.l.b16 %v6519
    %v7244 = vunpack.c.l.b16 %v6520
    %v7245 = vunpack.c.l.b16 %v6521
    %v7246 = vunpack.c.l.b16 %v6522
    %v7247 = vunpack.c.l.b16 %v6523
    %v7248 = vunpack.c.l.b16 %v6524
    %v7249 = vunpack.c.l.b16 %v6525
    %v7250 = vunpack.c.l.b16 %v6526
    %v7251 = vunpack.c.l.b16 %v6527
    %v7252 = vunpack.c.l.b16 %v6528
    %v7253 = vunpack.c.l.b16 %v6529
    %v7254 = vunpack.c.l.b16 %v6530
    %v7255 = vunpack.c.l.b16 %v6531
    %v7256 = vunpack.c.l.b16 %v6532
    %v7257 = vunpack.c.l.b16 %v6533
    %v7258 = vunpack.c.l.b16 %v6534
    %v7259 = vunpack.c.l.b16 %v6535
    %v7260 = vunpack.c.l.b16 %v6536
    %v7261 = vunpack.c.l.b16 %v6537
    %v7262 = vunpack.c.l.b16 %v6538
    %v7263 = vunpack.c.l.b16 %v6539
    %v7264 = vunpack.c.l.b16 %v6540
    %v7265 = vunpack.c.l.b16 %v6541
    %v7266 = vunpack.c.l.b16 %v6542
    %v7267 = vunpack.c.l.b16 %v6543
    %v7268 = vunpack.c.l.b16 %v6544
    %v7269 = vunpack.c.l.b16 %v6545
    %v7270 = vunpack.c.l.b16 %v6546
    %v7271 = vunpack.c.l.b16 %v6547
    %v7272 = vunpack.c.l.b16 %v6548
    %v7273 = vunpack.c.l.b16 %v6549
    %v7274 = vunpack.c.l.b16 %v6550
    %v7275 = vunpack.c.l.b16 %v6551
    %v7276 = vunpack.c.l.b16 %v6552
    %v7277 = vunpack.c.l.b16 %v6553
    %v7278 = vunpack.c.l.b16 %v6554
    %v7279 = vunpack.c.l.b16 %v6555
    %v7280 = vunpack.c.l.b16 %v6556
    %v7281 = vunpack.c.l.b16 %v6557
    %v7282 = vunpack.c.l.b16 %v6558
    %v7283 = vunpack.c.l.b16 %v6559
    %v7284 = vunpack.c.l.b16 %v6560
    %v7285 = vunpack.c.l.b16 %v6561
    %v7286 = vunpack.c.l.b16 %v6562
    %v7287 = vunpack.c.l.b16 %v6563
    %v7288 = vunpack.c.l.b16 %v6564
    %v7289 = vunpack.c.l.b16 %v6565
    %v7290 = vunpack.c.l.b16 %v6566
    %v7291 = vunpack.c.l.b16 %v6567
    %v7292 = vunpack.c.l.b16 %v6568
    %v7293 = vunpack.c.l.b16 %v6569
    %v7294 = vunpack.c.l.b16 %v6570
    %v7295 = vunpack.c.l.b16 %v6571
    %v7296 = vunpack.c.l.b16 %v6572
    %v7297 = vunpack.c.l.b16 %v6573
    %v7298 = vunpack.c.l.b16 %v6574
    %v7299 = vunpack.c.l.b16 %v6575
    %v7300 = vunpack.c.l.b16 %v6576
    %v7301 = vunpack.c.l.b16 %v6577
    %v7302 = vunpack.c.l.b16 %v6578
    %v7303 = vunpack.c.l.b16 %v6579
    %v7304 = vunpack.c.l.b16 %v6580
    %v7305 = vunpack.c.l.b16 %v6581
    %v7306 = vunpack.c.l.b16 %v6582
    %v7307 = vunpack.c.l.b16 %v6583
    %v7308 = vunpack.c.l.b16 %v6584
    %v7309 = vunpack.c.l.b16 %v6585
    %v7310 = vunpack.c.l.b16 %v6586
    %v7311 = vunpack.c.l.b16 %v6587
    %v7312 = vunpack.c.l.b16 %v6588
    %v7313 = vunpack.c.l.b16 %v6589
    %v7314 = vunpack.c.l.b16 %v6590
    %v7315 = vunpack.c.l.b16 %v6591
    %v7316 = vunpack.c.l.b16 %v6592
    %v7317 = vunpack.c.l.b16 %v6593
    %v7318 = vunpack.c.l.b16 %v6594
    %v7319 = vunpack.c.l.b16 %v6595
    %v7320 = vunpack.c.l.b16 %v6596
    %v7321 = vunpack.c.l.b16 %v6597
    %v7322 = vunpack.c.l.b16 %v6598
    %v7323 = vunpack.c.l.b16 %v6599
    %v7324 = vunpack.c.l.b16 %v6600
    %v7325 = vunpack.c.l.b16 %v6601
    %v7326 = vunpack.c.l.b16 %v6602
    %v7327 = vunpack.c.l.b16 %v6603
    %v7328 = vunpack.c.l.b16 %v6604
    %v7329 = vunpack.c.l.b16 %v6605
    %v7330 = vunpack.c.l.b16 %v6606
    %v7331 = vunpack.c.l.b16 %v6607
    %v7332 = vunpack.c.l.b16 %v6608
    %v7333 = vunpack.c.l.b16 %v6609
    %v7334 = vunpack.c.l.b16 %v6610
    %v7335 = vunpack.c.l.b16 %v6611
    %v7336 = vunpack.c.l.b16 %v6612
    %v7337 = vunpack.c.l.b16 %v6613
    %v7338 = vunpack.c.l.b16 %v6614
    %v7339 = vunpack.c.l.b16 %v6615
    %v7340 = vunpack.c.l.b16 %v6616
    %v7341 = vunpack.c.l.b16 %v6617
    %v7342 = vunpack.c.l.b16 %v6618
    %v7343 = vunpack.c.l.b16 %v6619
    %v7344 = vunpack.c.l.b16 %v6620
    %v7345 = vunpack.c.l.b16 %v6621
    %v7346 = vunpack.c.l.b16 %v6622
    %v7347 = vunpack.c.l.b16 %v6623
    %v7348 = vunpack.c.l.b16 %v6624
    %v7349 = vunpack.c.l.b16 %v6625
    %v7350 = vunpack.c.l.b16 %v6626
    %v7351 = vunpack.c.l.b16 %v6627
    %v7352 = vunpack.c.l.b16 %v6628
    %v7353 = vunpack.c.l.b16 %v6629
    %v7354 = vunpack.c.l.b16 %v6630
    %v7355 = vunpack.c.l.b16 %v6631
    %v7356 = vunpack.c.l.b16 %v6632
    %v7357 = vunpack.c.l.b16 %v6633
    %v7358 = vunpack.c.l.b16 %v6634
    %v7359 = vunpack.c.l.b16 %v6635
    %v7360 = vunpack.c.l.b16 %v6636
    %v7361 = vunpack.c.l.b16 %v6637
    %v7362 = vunpack.c.l.b16 %v6638
    %v7363 = vunpack.c.l.b16 %v6639
    %v7364 = vunpack.c.l.b16 %v6640
    %v7365 = vunpack.c.l.b16 %v6641
    %v7366 = vunpack.c.l.b16 %v6642
    %v7367 = vunpack.c.l.b16 %v6643
    %v7368 = vunpack.c.l.b16 %v6644
    %v7369 = vunpack.c.l.b16 %v6645
    %v7370 = vunpack.c.l.b16 %v6646
    %v7371 = vunpack.c.l.b16 %v6647
    %v7372 = vunpack.c.l.b16 %v6648
    %v7373 = vunpack.c.l.b16 %v6649
    %v7374 = vunpack.c.l.b16 %v6650
    %v7375 = vunpack.c.l.b16 %v6651
    %v7376 = vunpack.c.l.b16 %v6652
    %v7377 = vunpack.c.l.b16 %v6653
    %v7378 = vunpack.c.l.b16 %v6654
    %v7379 = vunpack.c.l.b16 %v6655
    %v7380 = vunpack.c.l.b16 %v6656
    %v7381 = vunpack.c.l.b16 %v6657
    %v7382 = vunpack.c.l.b16 %v6658
    %v7383 = vunpack.c.l.b16 %v6659
    %v7384 = vunpack.c.l.b16 %v6660
    %v7385 = vunpack.c.l.b16 %v6661
    %v7386 = vunpack.c.l.b16 %v6662
    %v7387 = vunpack.c.l.b16 %v6663
    %v7388 = vunpack.c.l.b16 %v6664
    %v7389 = vunpack.c.l.b16 %v6665
    %v7390 = vunpack.c.l.b16 %v6666
    %v7391 = vunpack.c.l.b16 %v6667
    %v7392 = vunpack.c.l.b16 %v6668
    %v7393 = vunpack.c.l.b16 %v6669
    %v7394 = vunpack.c.l.b16 %v6670
    %v7395 = vunpack.c.l.b16 %v6671
    %v7396 = vunpack.c.l.b16 %v6672
    %v7397 = vunpack.c.l.b16 %v6673
    %v7398 = vunpack.c.l.b16 %v6674
    %v7399 = vunpack.c.l.b16 %v6675
    %v7400 = vunpack.c.l.b16 %v6676
    %v7401 = vunpack.c.l.b16 %v6677
    %v7402 = vunpack.c.l.b16 %v6678
    %v7403 = vunpack.c.l.b16 %v6679
    %v7404 = vunpack.c.l.b16 %v6680
    %v7405 = vunpack.c.l.b16 %v6681
    %v7406 = vunpack.c.l.b16 %v6682
    %v7407 = vunpack.c.l.b16 %v6683
    %v7408 = vunpack.c.l.b16 %v6684
    %v7409 = vunpack.c.l.b16 %v6685
    %v7410 = vunpack.c.l.b16 %v6686
    %v7411 = vunpack.c.l.b16 %v6687
    %v7412 = vunpack.c.l.b16 %v6688
    %v7413 = vunpack.c.l.b16 %v6689
    %v7414 = vunpack.c.l.b16 %v6690
    %v7415 = vunpack.c.l.b16 %v6691
    %v7416 = vunpack.c.l.b16 %v6692
    %v7417 = vunpack.c.l.b16 %v6693
    %v7418 = vunpack.c.l.b16 %v6694
    %v7419 = vunpack.c.l.b16 %v6695
    %v7420 = vunpack.c.l.b16 %v6696
    %v7421 = vunpack.c.l.b16 %v6697
    %v7422 = vunpack.c.l.b16 %v6698
    %v7423 = vunpack.c.l.b16 %v6699
    %v7424 = vunpack.c.l.b16 %v6700
    %v7425 = vunpack.c.l.b16 %v6701
    %v7426 = vunpack.c.l.b16 %v6702
    %v7427 = vunpack.c.l.b16 %v6703
    %v7428 = vunpack.c.l.b16 %v6704
    %v7429 = vunpack.c.l.b16 %v6705
    %v7430 = vunpack.c.l.b16 %v6706
    %v7431 = vunpack.c.l.b16 %v6707
    %v7432 = vunpack.c.l.b16 %v6708
    %v7433 = vunpack.c.l.b16 %v6709
    %v7434 = vunpack.c.l.b16 %v6710
    %v7435 = vunpack.c.l.b16 %v6711
    %v7436 = vunpack.c.l.b16 %v6712
    %v7437 = vunpack.c.l.b16 %v6713
    %v7438 = vunpack.c.l.b16 %v6714
    %v7439 = vunpack.c.l.b16 %v6715
    %v7440 = vunpack.c.l.b16 %v6716
    %v7441 = vunpack.c.l.b16 %v6717
    %v7442 = vunpack.c.l.b16 %v6718
    %v7443 = vunpack.c.l.b16 %v6719
    %v7444 = vunpack.c.l.b16 %v6720
    %v7445 = vunpack.c.l.b16 %v6721
    %v7446 = vunpack.c.l.b16 %v6722
    %v7447 = vunpack.c.l.b16 %v6723
    %v7448 = vunpack.c.l.b16 %v6724
    %v7449 = vunpack.c.l.b16 %v6725
    %v7450 = vunpack.c.l.b16 %v6726
    %v7451 = vunpack.c.l.b16 %v6727
    %v7452 = vunpack.c.l.b16 %v6728
    %v7453 = vunpack.c.l.b16 %v6729
    %v7454 = vunpack.c.l.b16 %v6730
    %v7455 = vunpack.c.l.b16 %v6731
    %v7456 = vunpack.c.l.b16 %v6732
    %v7457 = vunpack.c.l.b16 %v6733
    %v7458 = vunpack.c.l.b16 %v6734
    %v7459 = vunpack.c.l.b16 %v6735
    %v7460 = vunpack.c.l.b16 %v6736
    %v7461 = vunpack.c.l.b16 %v6737
    %v7462 = vunpack.c.l.b16 %v6738
    %v7463 = vunpack.c.l.b16 %v6739
    %v7464 = vunpack.c.l.b16 %v6740
    %v7465 = vunpack.c.l.b16 %v6741
    %v7466 = vunpack.c.l.b16 %v6742
    %v7467 = vunpack.c.l.b16 %v6743
    %v7468 = vunpack.c.l.b16 %v6744
    %v7469 = vunpack.c.l.b16 %v6745
    %v7470 = vunpack.c.l.b16 %v6746
    %v7471 = vunpack.c.l.b16 %v6747
    %v7472 = vunpack.c.l.b16 %v6748
    %v7473 = vunpack.c.l.b16 %v6749
    %v7474 = vunpack.c.l.b16 %v6750
    %v7475 = vunpack.c.l.b16 %v6751
    %v7476 = vunpack.c.l.b16 %v6752
    %v7477 = vunpack.c.l.b16 %v6753
    %v7478 = vunpack.c.l.b16 %v6754
    %v7479 = vunpack.c.l.b16 %v6755
    %v7480 = vunpack.c.l.b16 %v6756
    %v7481 = vunpack.c.l.b16 %v6757
    %v7482 = vunpack.c.l.b16 %v6758
    %v7483 = vunpack.c.l.b16 %v6759
    %v7484 = vunpack.c.l.b16 %v6760
    %v7485 = vunpack.c.l.b16 %v6761
    %v7486 = vunpack.c.l.b16 %v6762
    %v7487 = vunpack.c.l.b16 %v6763
    %v7488 = vunpack.c.l.b16 %v6764
    %v7489 = vunpack.c.l.b16 %v6765
    %v7490 = vunpack.c.l.b16 %v6766
    %v7491 = vunpack.c.l.b16 %v6767
    %v7492 = vunpack.c.l.b16 %v6768
    %v7493 = vunpack.c.l.b16 %v6769
    %v7494 = vunpack.c.l.b16 %v6770
    %v7495 = vunpack.c.l.b16 %v6771
    %v7496 = vunpack.c.l.b16 %v6772
    %v7497 = vunpack.c.l.b16 %v6773
    %v7498 = vunpack.c.l.b16 %v6774
    %v7499 = vunpack.c.l.b16 %v6775
    %v7500 = vunpack.c.l.b16 %v6776
    %v7501 = vunpack.c.l.b16 %v6777
    %v7502 = vunpack.c.l.b16 %v6778
    %v7503 = vunpack.c.l.b16 %v6779
    %v7504 = vunpack.c.l.b16 %v6780
    %v7505 = vunpack.c.l.b16 %v6781
    %v7506 = vunpack.c.l.b16 %v6782
    %v7507 = vunpack.c.l.b16 %v6783
    %v7508 = vunpack.c.l.b16 %v6784
    %v7509 = vunpack.c.l.b16 %v6785
    %v7510 = vunpack.c.l.b16 %v6786
    %v7511 = vunpack.c.l.b16 %v6787
    %v7512 = vunpack.c.l.b16 %v6788
    %v7513 = vunpack.c.l.b16 %v6789
    %v7514 = vunpack.c.l.b16 %v6790
    %v7515 = vunpack.c.l.b16 %v6791
    %v7516 = vunpack.c.l.b16 %v6792
    %v7517 = vunpack.c.l.b16 %v6793
    %v7518 = vunpack.c.l.b16 %v6794
    %v7519 = vunpack.c.l.b16 %v6795
    %v7520 = vunpack.c.l.b16 %v6796
    %v7521 = vunpack.c.l.b16 %v6797
    %v7522 = vpack.c.b16 %v7235, %v7234
    %v7523 = vpack.c.b16 %v7237, %v7236
    %v7524 = vpack.c.b16 %v7239, %v7238
    %v7525 = vpack.c.b16 %v7241, %v7240
    %v7526 = vpack.c.b16 %v7243, %v7242
    %v7527 = vpack.c.b16 %v7245, %v7244
    %v7528 = vpack.c.b16 %v7247, %v7246
    %v7529 = vpack.c.b16 %v7249, %v7248
    %v7530 = vpack.c.b16 %v7251, %v7250
    %v7531 = vpack.c.b16 %v7253, %v7252
    %v7532 = vpack.c.b16 %v7255, %v7254
    %v7533 = vpack.c.b16 %v7257, %v7256
    %v7534 = vpack.c.b16 %v7259, %v7258
    %v7535 = vpack.c.b16 %v7261, %v7260
    %v7536 = vpack.c.b16 %v7263, %v7262
    %v7537 = vpack.c.b16 %v7265, %v7264
    %v7538 = vpack.c.b16 %v7267, %v7266
    %v7539 = vpack.c.b16 %v7269, %v7268
    %v7540 = vpack.c.b16 %v7271, %v7270
    %v7541 = vpack.c.b16 %v7273, %v7272
    %v7542 = vpack.c.b16 %v7275, %v7274
    %v7543 = vpack.c.b16 %v7277, %v7276
    %v7544 = vpack.c.b16 %v7279, %v7278
    %v7545 = vpack.c.b16 %v7281, %v7280
    %v7546 = vpack.c.b16 %v7283, %v7282
    %v7547 = vpack.c.b16 %v7285, %v7284
    %v7548 = vpack.c.b16 %v7287, %v7286
    %v7549 = vpack.c.b16 %v7289, %v7288
    %v7550 = vpack.c.b16 %v7291, %v7290
    %v7551 = vpack.c.b16 %v7293, %v7292
    %v7552 = vpack.c.b16 %v7295, %v7294
    %v7553 = vpack.c.b16 %v7297, %v7296
    %v7554 = vpack.c.b16 %v7299, %v7298
    %v7555 = vpack.c.b16 %v7301, %v7300
    %v7556 = vpack.c.b16 %v7303, %v7302
    %v7557 = vpack.c.b16 %v7305, %v7304
    %v7558 = vpack.c.b16 %v7307, %v7306
    %v7559 = vpack.c.b16 %v7309, %v7308
    %v7560 = vpack.c.b16 %v7311, %v7310
    %v7561 = vpack.c.b16 %v7313, %v7312
    %v7562 = vpack.c.b16 %v7315, %v7314
    %v7563 = vpack.c.b16 %v7317, %v7316
    %v7564 = vpack.c.b16 %v7319, %v7318
    %v7565 = vpack.c.b16 %v7321, %v7320
    %v7566 = vpack.c.b16 %v7323, %v7322
    %v7567 = vpack.c.b16 %v7325, %v7324
    %v7568 = vpack.c.b16 %v7327, %v7326
    %v7569 = vpack.c.b16 %v7329, %v7328
    %v7570 = vpack.c.b16 %v7331, %v7330
    %v7571 = vpack.c.b16 %v7333, %v7332
    %v7572 = vpack.c.b16 %v7335, %v7334
    %v7573 = vpack.c.b16 %v7337, %v7336
    %v7574 = vpack.c.b16 %v7339, %v7338
    %v7575 = vpack.c.b16 %v7341, %v7340
    %v7576 = vpack.c.b16 %v7343, %v7342
    %v7577 = vpack.c.b16 %v7345, %v7344
    %v7578 = vpack.c.b16 %v7347, %v7346
    %v7579 = vpack.c.b16 %v7349, %v7348
    %v7580 = vpack.c.b16 %v7351, %v7350
    %v7581 = vpack.c.b16 %v7353, %v7352
    %v7582 = vpack.c.b16 %v7355, %v7354
    %v7583 = vpack.c.b16 %v7357, %v7356
    %v7584 = vpack.c.b16 %v7359, %v7358
    %v7585 = vpack.c.b16 %v7361, %v7360
    %v7586 = vpack.c.b16 %v7363, %v7362
    %v7587 = vpack.c.b16 %v7365, %v7364
    %v7588 = vpack.c.b16 %v7367, %v7366
    %v7589 = vpack.c.b16 %v7369, %v7368
    %v7590 = vpack.c.b16 %v7371, %v7370
    %v7591 = vpack.c.b16 %v7373, %v7372
    %v7592 = vpack.c.b16 %v7375, %v7374
    %v7593 = vpack.c.b16 %v7377, %v7376
    %v7594 = vpack.c.b16 %v7379, %v7378
    %v7595 = vpack.c.b16 %v7381, %v7380
    %v7596 = vpack.c.b16 %v7383, %v7382
    %v7597 = vpack.c.b16 %v7385, %v7384
    %v7598 = vpack.c.b16 %v7387, %v7386
    %v7599 = vpack.c.b16 %v7389, %v7388
    %v7600 = vpack.c.b16 %v7391, %v7390
    %v7601 = vpack.c.b16 %v7393, %v7392
    %v7602 = vpack.c.b16 %v7395, %v7394
    %v7603 = vpack.c.b16 %v7397, %v7396
    %v7604 = vpack.c.b16 %v7399, %v7398
    %v7605 = vpack.c.b16 %v7401, %v7400
    %v7606 = vpack.c.b16 %v7403, %v7402
    %v7607 = vpack.c.b16 %v7405, %v7404
    %v7608 = vpack.c.b16 %v7407, %v7406
    %v7609 = vpack.c.b16 %v7409, %v7408
    %v7610 = vpack.c.b16 %v7411, %v7410
    %v7611 = vpack.c.b16 %v7413, %v7412
    %v7612 = vpack.c.b16 %v7415, %v7414
    %v7613 = vpack.c.b16 %v7417, %v7416
    %v7614 = vpack.c.b16 %v7419, %v7418
    %v7615 = vpack.c.b16 %v7421, %v7420
    %v7616 = vpack.c.b16 %v7423, %v7422
    %v7617 = vpack.c.b16 %v7425, %v7424
    %v7618 = vpack.c.b16 %v7427, %v7426
    %v7619 = vpack.c.b16 %v7429, %v7428
    %v7620 = vpack.c.b16 %v7431, %v7430
    %v7621 = vpack.c.b16 %v7433, %v7432
    %v7622 = vpack.c.b16 %v7435, %v7434
    %v7623 = vpack.c.b16 %v7437, %v7436
    %v7624 = vpack.c.b16 %v7439, %v7438
    %v7625 = vpack.c.b16 %v7441, %v7440
    %v7626 = vpack.c.b16 %v7443, %v7442
    %v7627 = vpack.c.b16 %v7445, %v7444
    %v7628 = vpack.c.b16 %v7447, %v7446
    %v7629 = vpack.c.b16 %v7449, %v7448
    %v7630 = vpack.c.b16 %v7451, %v7450
    %v7631 = vpack.c.b16 %v7453, %v7452
    %v7632 = vpack.c.b16 %v7455, %v7454
    %v7633 = vpack.c.b16 %v7457, %v7456
    %v7634 = vpack.c.b16 %v7459, %v7458
    %v7635 = vpack.c.b16 %v7461, %v7460
    %v7636 = vpack.c.b16 %v7463, %v7462
    %v7637 = vpack.c.b16 %v7465, %v7464
    %v7638 = vpack.c.b16 %v7467, %v7466
    %v7639 = vpack.c.b16 %v7469, %v7468
    %v7640 = vpack.c.b16 %v7471, %v7470
    %v7641 = vpack.c.b16 %v7473, %v7472
    %v7642 = vpack.c.b16 %v7475, %v7474
    %v7643 = vpack.c.b16 %v7477, %v7476
    %v7644 = vpack.c.b16 %v7479, %v7478
    %v7645 = vpack.c.b16 %v7481, %v7480
    %v7646 = vpack.c.b16 %v7483, %v7482
    %v7647 = vpack.c.b16 %v7485, %v7484
    %v7648 = vpack.c.b16 %v7487, %v7486
    %v7649 = vpack.c.b16 %v7489, %v7488
    %v7650 = vpack.c.b16 %v7491, %v7490
    %v7651 = vpack.c.b16 %v7493, %v7492
    %v7652 = vpack.c.b16 %v7495, %v7494
    %v7653 = vpack.c.b16 %v7497, %v7496
    %v7654 = vpack.c.b16 %v7499, %v7498
    %v7655 = vpack.c.b16 %v7501, %v7500
    %v7656 = vpack.c.b16 %v7503, %v7502
    %v7657 = vpack.c.b16 %v7505, %v7504
    %v7658 = vpack.c.b16 %v7507, %v7506
    %v7659 = vpack.c.b16 %v7509, %v7508
    %v7660 = vpack.c.b16 %v7511, %v7510
    %v7661 = vpack.c.b16 %v7513, %v7512
    %v7662 = vpack.c.b16 %v7515, %v7514
    %v7663 = vpack.c.b16 %v7517, %v7516
    %v7664 = vpack.c.b16 %v7519, %v7518
    %v7665 = vpack.c.b16 %v7521, %v7520
    %7810 = vmatprep.subr.bf16.mxu0 0
    %7811 = vmatpush1.bf16.msra.mxu0 %v7529
    %7812 = vmatprep.subr.bf16.mxu0 0
    %7813 = vmatpush1.bf16.msra.mxu0 %v7528
    %7814 = vmatprep.subr.bf16.mxu0 0
    %7815 = vmatpush1.bf16.msra.mxu0 %v7527
    %7816 = vmatprep.subr.bf16.mxu0 0
    %7817 = vmatpush1.bf16.msra.mxu0 %v7526
    %7818 = vmatprep.subr.bf16.mxu0 0
    %7819 = vmatpush1.bf16.msra.mxu0 %v7525
    %7820 = vmatprep.subr.bf16.mxu0 0
    %7821 = vmatpush1.bf16.msra.mxu0 %v7524
    %7822 = vmatprep.subr.bf16.mxu0 0
    %7823 = vmatpush1.bf16.msra.mxu0 %v7523
    %7824 = vmatprep.subr.bf16.mxu0 0
    %7825 = vmatpush1.bf16.msra.mxu0 %v7522
    %7826 = vmatprep.subr.bf16.mxu0 0
    %7827 = vmatpush2.bf16.msra.mxu0 %v7537
    %7828 = vmatprep.subr.bf16.mxu0 0
    %7829 = vmatpush2.bf16.msra.mxu0 %v7536
    %7830 = vmatprep.subr.bf16.mxu0 0
    %7831 = vmatpush2.bf16.msra.mxu0 %v7535
    %7832 = vmatprep.subr.bf16.mxu0 0
    %7833 = vmatpush2.bf16.msra.mxu0 %v7534
    %7834 = vmatprep.subr.bf16.mxu0 0
    %7835 = vmatpush2.bf16.msra.mxu0 %v7533
    %7836 = vmatprep.subr.bf16.mxu0 0
    %7837 = vmatpush2.bf16.msra.mxu0 %v7532
    %7838 = vmatprep.subr.bf16.mxu0 0
    %7839 = vmatpush2.bf16.msra.mxu0 %v7531
    %7840 = vmatprep.subr.bf16.mxu0 0
    %7841 = vmatpush2.bf16.msra.mxu0 %v7530
    %7842 = vmatprep.mubr.bf16.mxu0 %v6845
    %7843 = vmatmul.mubr.bf16.gmra.mxu0 %v6831
    %v7844 = vpop.f32.mrf.mxu0
    %v7845 = vadd.f32 %v6803, %v7844
    %v7846 = vpop.f32.mrf.mxu0
    %v7847 = vpop.f32.mrf.mxu0
    %v7848 = vpop.f32.mrf.mxu0
    %7849 = vdwg.mxu0
    %7850 = vmatprep.subr.bf16.mxu0 0
    %7851 = vmatpush1.bf16.msra.mxu0 %v7545
    %7852 = vmatprep.subr.bf16.mxu0 0
    %7853 = vmatpush1.bf16.msra.mxu0 %v7544
    %7854 = vmatprep.subr.bf16.mxu0 0
    %7855 = vmatpush1.bf16.msra.mxu0 %v7543
    %7856 = vmatprep.subr.bf16.mxu0 0
    %7857 = vmatpush1.bf16.msra.mxu0 %v7542
    %7858 = vmatprep.subr.bf16.mxu0 0
    %7859 = vmatpush1.bf16.msra.mxu0 %v7541
    %7860 = vmatprep.subr.bf16.mxu0 0
    %7861 = vmatpush1.bf16.msra.mxu0 %v7540
    %7862 = vmatprep.subr.bf16.mxu0 0
    %7863 = vmatpush1.bf16.msra.mxu0 %v7539
    %7864 = vmatprep.subr.bf16.mxu0 0
    %7865 = vmatpush1.bf16.msra.mxu0 %v7538
    %7866 = vmatprep.subr.bf16.mxu0 0
    %7867 = vmatpush2.bf16.msra.mxu0 %v7553
    %7868 = vmatprep.subr.bf16.mxu0 0
    %7869 = vmatpush2.bf16.msra.mxu0 %v7552
    %7870 = vmatprep.subr.bf16.mxu0 0
    %7871 = vmatpush2.bf16.msra.mxu0 %v7551
    %7872 = vmatprep.subr.bf16.mxu0 0
    %7873 = vmatpush2.bf16.msra.mxu0 %v7550
    %7874 = vmatprep.subr.bf16.mxu0 0
    %7875 = vmatpush2.bf16.msra.mxu0 %v7549
    %7876 = vmatprep.subr.bf16.mxu0 0
    %7877 = vmatpush2.bf16.msra.mxu0 %v7548
    %7878 = vmatprep.subr.bf16.mxu0 0
    %7879 = vmatpush2.bf16.msra.mxu0 %v7547
    %7880 = vmatprep.subr.bf16.mxu0 0
    %7881 = vmatpush2.bf16.msra.mxu0 %v7546
    %7882 = vmatprep.mubr.bf16.mxu0 %v6855
    %7883 = vmatmul.mubr.bf16.gmra.mxu0 %v6853
    %v7884 = vpop.f32.mrf.mxu0
    %v7885 = vadd.f32 %v7845, %v7884
    %v7886 = vpop.f32.mrf.mxu0
    %v7887 = vpop.f32.mrf.mxu0
    %v7888 = vpop.f32.mrf.mxu0
    %7889 = vdwg.mxu0
    %7890 = vmatprep.subr.bf16.mxu0 0
    %7891 = vmatpush1.bf16.msra.mxu0 %v7561
    %7892 = vmatprep.subr.bf16.mxu0 0
    %7893 = vmatpush1.bf16.msra.mxu0 %v7560
    %7894 = vmatprep.subr.bf16.mxu0 0
    %7895 = vmatpush1.bf16.msra.mxu0 %v7559
    %7896 = vmatprep.subr.bf16.mxu0 0
    %7897 = vmatpush1.bf16.msra.mxu0 %v7558
    %7898 = vmatprep.subr.bf16.mxu0 0
    %7899 = vmatpush1.bf16.msra.mxu0 %v7557
    %7900 = vmatprep.subr.bf16.mxu0 0
    %7901 = vmatpush1.bf16.msra.mxu0 %v7556
    %7902 = vmatprep.subr.bf16.mxu0 0
    %7903 = vmatpush1.bf16.msra.mxu0 %v7555
    %7904 = vmatprep.subr.bf16.mxu0 0
    %7905 = vmatpush1.bf16.msra.mxu0 %v7554
    %7906 = vmatprep.subr.bf16.mxu0 0
    %7907 = vmatpush2.bf16.msra.mxu0 %v7569
    %7908 = vmatprep.subr.bf16.mxu0 0
    %7909 = vmatpush2.bf16.msra.mxu0 %v7568
    %7910 = vmatprep.subr.bf16.mxu0 0
    %7911 = vmatpush2.bf16.msra.mxu0 %v7567
    %7912 = vmatprep.subr.bf16.mxu0 0
    %7913 = vmatpush2.bf16.msra.mxu0 %v7566
    %7914 = vmatprep.subr.bf16.mxu0 0
    %7915 = vmatpush2.bf16.msra.mxu0 %v7565
    %7916 = vmatprep.subr.bf16.mxu0 0
    %7917 = vmatpush2.bf16.msra.mxu0 %v7564
    %7918 = vmatprep.subr.bf16.mxu0 0
    %7919 = vmatpush2.bf16.msra.mxu0 %v7563
    %7920 = vmatprep.subr.bf16.mxu0 0
    %7921 = vmatpush2.bf16.msra.mxu0 %v7562
    %7922 = vmatprep.mubr.bf16.mxu0 %v6852
    %7923 = vmatmul.mubr.bf16.gmra.mxu0 %v6838
    %v7924 = vpop.f32.mrf.mxu0
    %v7925 = vadd.f32 %v7885, %v7924
    %v7926 = vpop.f32.mrf.mxu0
    %v7927 = vpop.f32.mrf.mxu0
    %v7928 = vpop.f32.mrf.mxu0
    %7929 = vdwg.mxu0
    %7930 = vmatprep.subr.bf16.mxu0 0
    %7931 = vmatpush1.bf16.msra.mxu0 %v7577
    %7932 = vmatprep.subr.bf16.mxu0 0
    %7933 = vmatpush1.bf16.msra.mxu0 %v7576
    %7934 = vmatprep.subr.bf16.mxu0 0
    %7935 = vmatpush1.bf16.msra.mxu0 %v7575
    %7936 = vmatprep.subr.bf16.mxu0 0
    %7937 = vmatpush1.bf16.msra.mxu0 %v7574
    %7938 = vmatprep.subr.bf16.mxu0 0
    %7939 = vmatpush1.bf16.msra.mxu0 %v7573
    %7940 = vmatprep.subr.bf16.mxu0 0
    %7941 = vmatpush1.bf16.msra.mxu0 %v7572
    %7942 = vmatprep.subr.bf16.mxu0 0
    %7943 = vmatpush1.bf16.msra.mxu0 %v7571
    %7944 = vmatprep.subr.bf16.mxu0 0
    %7945 = vmatpush1.bf16.msra.mxu0 %v7570
    %7946 = vmatprep.subr.bf16.mxu0 0
    %7947 = vmatpush2.bf16.msra.mxu0 %v7585
    %7948 = vmatprep.subr.bf16.mxu0 0
    %7949 = vmatpush2.bf16.msra.mxu0 %v7584
    %7950 = vmatprep.subr.bf16.mxu0 0
    %7951 = vmatpush2.bf16.msra.mxu0 %v7583
    %7952 = vmatprep.subr.bf16.mxu0 0
    %7953 = vmatpush2.bf16.msra.mxu0 %v7582
    %7954 = vmatprep.subr.bf16.mxu0 0
    %7955 = vmatpush2.bf16.msra.mxu0 %v7581
    %7956 = vmatprep.subr.bf16.mxu0 0
    %7957 = vmatpush2.bf16.msra.mxu0 %v7580
    %7958 = vmatprep.subr.bf16.mxu0 0
    %7959 = vmatpush2.bf16.msra.mxu0 %v7579
    %7960 = vmatprep.subr.bf16.mxu0 0
    %7961 = vmatpush2.bf16.msra.mxu0 %v7578
    %7962 = vmatprep.mubr.bf16.mxu0 %v6856
    %7963 = vmatmul.mubr.bf16.gmra.mxu0 %v6854
    %v7964 = vpop.f32.mrf.mxu0
    %v7965 = vadd.f32 %v7925, %v7964
    %v7966 = vpop.f32.mrf.mxu0
    %v7967 = vpop.f32.mrf.mxu0
    %v7968 = vpop.f32.mrf.mxu0
    %7969 = vdwg.mxu0
    %7970 = vmatprep.subr.bf16.mxu0 0
    %7971 = vmatpush1.bf16.msra.mxu0 %v7593
    %7972 = vmatprep.subr.bf16.mxu0 0
    %7973 = vmatpush1.bf16.msra.mxu0 %v7592
    %7974 = vmatprep.subr.bf16.mxu0 0
    %7975 = vmatpush1.bf16.msra.mxu0 %v7591
    %7976 = vmatprep.subr.bf16.mxu0 0
    %7977 = vmatpush1.bf16.msra.mxu0 %v7590
    %7978 = vmatprep.subr.bf16.mxu0 0
    %7979 = vmatpush1.bf16.msra.mxu0 %v7589
    %7980 = vmatprep.subr.bf16.mxu0 0
    %7981 = vmatpush1.bf16.msra.mxu0 %v7588
    %7982 = vmatprep.subr.bf16.mxu0 0
    %7983 = vmatpush1.bf16.msra.mxu0 %v7587
    %7984 = vmatprep.subr.bf16.mxu0 0
    %7985 = vmatpush1.bf16.msra.mxu0 %v7586
    %7986 = vmatprep.subr.bf16.mxu0 0
    %7987 = vmatpush2.bf16.msra.mxu0 %v7601
    %7988 = vmatprep.subr.bf16.mxu0 0
    %7989 = vmatpush2.bf16.msra.mxu0 %v7600
    %7990 = vmatprep.subr.bf16.mxu0 0
    %7991 = vmatpush2.bf16.msra.mxu0 %v7599
    %7992 = vmatprep.subr.bf16.mxu0 0
    %7993 = vmatpush2.bf16.msra.mxu0 %v7598
    %7994 = vmatprep.subr.bf16.mxu0 0
    %7995 = vmatpush2.bf16.msra.mxu0 %v7597
    %7996 = vmatprep.subr.bf16.mxu0 0
    %7997 = vmatpush2.bf16.msra.mxu0 %v7596
    %7998 = vmatprep.subr.bf16.mxu0 0
    %7999 = vmatpush2.bf16.msra.mxu0 %v7595
    %8000 = vmatprep.subr.bf16.mxu0 0
    %8001 = vmatpush2.bf16.msra.mxu0 %v7594
    %8002 = vmatprep.mubr.bf16.mxu0 %v6894
    %8003 = vmatmul.mubr.bf16.gmra.mxu0 %v6880
    %v8004 = vpop.f32.mrf.mxu0
    %v8005 = vadd.f32 %v7965, %v8004
    %v8006 = vpop.f32.mrf.mxu0
    %v8007 = vpop.f32.mrf.mxu0
    %v8008 = vpop.f32.mrf.mxu0
    %8009 = vdwg.mxu0
    %8010 = vmatprep.subr.bf16.mxu0 0
    %8011 = vmatpush1.bf16.msra.mxu0 %v7609
    %8012 = vmatprep.subr.bf16.mxu0 0
    %8013 = vmatpush1.bf16.msra.mxu0 %v7608
    %8014 = vmatprep.subr.bf16.mxu0 0
    %8015 = vmatpush1.bf16.msra.mxu0 %v7607
    %8016 = vmatprep.subr.bf16.mxu0 0
    %8017 = vmatpush1.bf16.msra.mxu0 %v7606
    %8018 = vmatprep.subr.bf16.mxu0 0
    %8019 = vmatpush1.bf16.msra.mxu0 %v7605
    %8020 = vmatprep.subr.bf16.mxu0 0
    %8021 = vmatpush1.bf16.msra.mxu0 %v7604
    %8022 = vmatprep.subr.bf16.mxu0 0
    %8023 = vmatpush1.bf16.msra.mxu0 %v7603
    %8024 = vmatprep.subr.bf16.mxu0 0
    %8025 = vmatpush1.bf16.msra.mxu0 %v7602
    %8026 = vmatprep.subr.bf16.mxu0 0
    %8027 = vmatpush2.bf16.msra.mxu0 %v7617
    %8028 = vmatprep.subr.bf16.mxu0 0
    %8029 = vmatpush2.bf16.msra.mxu0 %v7616
    %8030 = vmatprep.subr.bf16.mxu0 0
    %8031 = vmatpush2.bf16.msra.mxu0 %v7615
    %8032 = vmatprep.subr.bf16.mxu0 0
    %8033 = vmatpush2.bf16.msra.mxu0 %v7614
    %8034 = vmatprep.subr.bf16.mxu0 0
    %8035 = vmatpush2.bf16.msra.mxu0 %v7613
    %8036 = vmatprep.subr.bf16.mxu0 0
    %8037 = vmatpush2.bf16.msra.mxu0 %v7612
    %8038 = vmatprep.subr.bf16.mxu0 0
    %8039 = vmatpush2.bf16.msra.mxu0 %v7611
    %8040 = vmatprep.subr.bf16.mxu0 0
    %8041 = vmatpush2.bf16.msra.mxu0 %v7610
    %8042 = vmatprep.mubr.bf16.mxu0 %v6904
    %8043 = vmatmul.mubr.bf16.gmra.mxu0 %v6902
    %v8044 = vpop.f32.mrf.mxu0
    %v8045 = vadd.f32 %v8005, %v8044
    %v8046 = vpop.f32.mrf.mxu0
    %v8047 = vpop.f32.mrf.mxu0
    %v8048 = vpop.f32.mrf.mxu0
    %8049 = vdwg.mxu0
    %8050 = vmatprep.subr.bf16.mxu0 0
    %8051 = vmatpush1.bf16.msra.mxu0 %v7625
    %8052 = vmatprep.subr.bf16.mxu0 0
    %8053 = vmatpush1.bf16.msra.mxu0 %v7624
    %8054 = vmatprep.subr.bf16.mxu0 0
    %8055 = vmatpush1.bf16.msra.mxu0 %v7623
    %8056 = vmatprep.subr.bf16.mxu0 0
    %8057 = vmatpush1.bf16.msra.mxu0 %v7622
    %8058 = vmatprep.subr.bf16.mxu0 0
    %8059 = vmatpush1.bf16.msra.mxu0 %v7621
    %8060 = vmatprep.subr.bf16.mxu0 0
    %8061 = vmatpush1.bf16.msra.mxu0 %v7620
    %8062 = vmatprep.subr.bf16.mxu0 0
    %8063 = vmatpush1.bf16.msra.mxu0 %v7619
    %8064 = vmatprep.subr.bf16.mxu0 0
    %8065 = vmatpush1.bf16.msra.mxu0 %v7618
    %8066 = vmatprep.subr.bf16.mxu0 0
    %8067 = vmatpush2.bf16.msra.mxu0 %v7633
    %8068 = vmatprep.subr.bf16.mxu0 0
    %8069 = vmatpush2.bf16.msra.mxu0 %v7632
    %8070 = vmatprep.subr.bf16.mxu0 0
    %8071 = vmatpush2.bf16.msra.mxu0 %v7631
    %8072 = vmatprep.subr.bf16.mxu0 0
    %8073 = vmatpush2.bf16.msra.mxu0 %v7630
    %8074 = vmatprep.subr.bf16.mxu0 0
    %8075 = vmatpush2.bf16.msra.mxu0 %v7629
    %8076 = vmatprep.subr.bf16.mxu0 0
    %8077 = vmatpush2.bf16.msra.mxu0 %v7628
    %8078 = vmatprep.subr.bf16.mxu0 0
    %8079 = vmatpush2.bf16.msra.mxu0 %v7627
    %8080 = vmatprep.subr.bf16.mxu0 0
    %8081 = vmatpush2.bf16.msra.mxu0 %v7626
    %8082 = vmatprep.mubr.bf16.mxu0 %v6901
    %8083 = vmatmul.mubr.bf16.gmra.mxu0 %v6887
    %v8084 = vpop.f32.mrf.mxu0
    %v8085 = vadd.f32 %v8045, %v8084
    %v8086 = vpop.f32.mrf.mxu0
    %v8087 = vpop.f32.mrf.mxu0
    %v8088 = vpop.f32.mrf.mxu0
    %8089 = vdwg.mxu0
    %8090 = vmatprep.subr.bf16.mxu0 0
    %8091 = vmatpush1.bf16.msra.mxu0 %v7641
    %8092 = vmatprep.subr.bf16.mxu0 0
    %8093 = vmatpush1.bf16.msra.mxu0 %v7640
    %8094 = vmatprep.subr.bf16.mxu0 0
    %8095 = vmatpush1.bf16.msra.mxu0 %v7639
    %8096 = vmatprep.subr.bf16.mxu0 0
    %8097 = vmatpush1.bf16.msra.mxu0 %v7638
    %8098 = vmatprep.subr.bf16.mxu0 0
    %8099 = vmatpush1.bf16.msra.mxu0 %v7637
    %8100 = vmatprep.subr.bf16.mxu0 0
    %8101 = vmatpush1.bf16.msra.mxu0 %v7636
    %8102 = vmatprep.subr.bf16.mxu0 0
    %8103 = vmatpush1.bf16.msra.mxu0 %v7635
    %8104 = vmatprep.subr.bf16.mxu0 0
    %8105 = vmatpush1.bf16.msra.mxu0 %v7634
    %8106 = vmatprep.subr.bf16.mxu0 0
    %8107 = vmatpush2.bf16.msra.mxu0 %v7649
    %8108 = vmatprep.subr.bf16.mxu0 0
    %8109 = vmatpush2.bf16.msra.mxu0 %v7648
    %8110 = vmatprep.subr.bf16.mxu0 0
    %8111 = vmatpush2.bf16.msra.mxu0 %v7647
    %8112 = vmatprep.subr.bf16.mxu0 0
    %8113 = vmatpush2.bf16.msra.mxu0 %v7646
    %8114 = vmatprep.subr.bf16.mxu0 0
    %8115 = vmatpush2.bf16.msra.mxu0 %v7645
    %8116 = vmatprep.subr.bf16.mxu0 0
    %8117 = vmatpush2.bf16.msra.mxu0 %v7644
    %8118 = vmatprep.subr.bf16.mxu0 0
    %8119 = vmatpush2.bf16.msra.mxu0 %v7643
    %8120 = vmatprep.subr.bf16.mxu0 0
    %8121 = vmatpush2.bf16.msra.mxu0 %v7642
    %8122 = vmatprep.mubr.bf16.mxu0 %v6905
    %8123 = vmatmul.mubr.bf16.gmra.mxu0 %v6903
    %v8124 = vpop.f32.mrf.mxu0
    %v8125 = vadd.f32 %v8085, %v8124
    %v8126 = vpop.f32.mrf.mxu0
    %v8127 = vpop.f32.mrf.mxu0
    %v8128 = vpop.f32.mrf.mxu0
    %8129 = vdwg.mxu0
    %8130 = vmatprep.subr.bf16.mxu0 0
    %8131 = vmatpush1.bf16.msra.mxu0 %v7657
    %8132 = vmatprep.subr.bf16.mxu0 0
    %8133 = vmatpush1.bf16.msra.mxu0 %v7656
    %8134 = vmatprep.subr.bf16.mxu0 0
    %8135 = vmatpush1.bf16.msra.mxu0 %v7655
    %8136 = vmatprep.subr.bf16.mxu0 0
    %8137 = vmatpush1.bf16.msra.mxu0 %v7654
    %8138 = vmatprep.subr.bf16.mxu0 0
    %8139 = vmatpush1.bf16.msra.mxu0 %v7653
    %8140 = vmatprep.subr.bf16.mxu0 0
    %8141 = vmatpush1.bf16.msra.mxu0 %v7652
    %8142 = vmatprep.subr.bf16.mxu0 0
    %8143 = vmatpush1.bf16.msra.mxu0 %v7651
    %8144 = vmatprep.subr.bf16.mxu0 0
    %8145 = vmatpush1.bf16.msra.mxu0 %v7650
    %8146 = vmatprep.subr.bf16.mxu0 0
    %8147 = vmatpush2.bf16.msra.mxu0 %v7665
    %8148 = vmatprep.subr.bf16.mxu0 0
    %8149 = vmatpush2.bf16.msra.mxu0 %v7664
    %8150 = vmatprep.subr.bf16.mxu0 0
    %8151 = vmatpush2.bf16.msra.mxu0 %v7663
    %8152 = vmatprep.subr.bf16.mxu0 0
    %8153 = vmatpush2.bf16.msra.mxu0 %v7662
    %8154 = vmatprep.subr.bf16.mxu0 0
    %8155 = vmatpush2.bf16.msra.mxu0 %v7661
    %8156 = vmatprep.subr.bf16.mxu0 0
    %8157 = vmatpush2.bf16.msra.mxu0 %v7660
    %8158 = vmatprep.subr.bf16.mxu0 0
    %8159 = vmatpush2.bf16.msra.mxu0 %v7659
    %8160 = vmatprep.subr.bf16.mxu0 0
    %8161 = vmatpush2.bf16.msra.mxu0 %v7658
    %8162 = vmatprep.mubr.bf16.mxu0 %v6927
    %8163 = vmatmul.mubr.bf16.gmra.mxu0 %v6920
    %v8164 = vpop.f32.mrf.mxu0
    %v8165 = vadd.f32 %v8125, %v8164
    %v8166 = vpop.f32.mrf.mxu0
    %v8167 = vpop.f32.mrf.mxu0
    %v8168 = vpop.f32.mrf.mxu0
    %8169 = vdwg.mxu0
    %v8170 = vmax.f32 %v8165, 0.0
    %v8171 = vpack.c.bf16 %v8170, %v8170
    %v8172 = vld [vmem:[%s7] sm:$0xf]
    %v8173 = vld [vmem:[%s7 + $0x4] sm:$0xf]
    %v8174 = vld [vmem:[%s7 + $0x8] sm:$0xf]
    %v8175 = vld [vmem:[%s7 + $0xc] sm:$0xf]
    %v8176 = vld [vmem:[%s7 + $0x10] sm:$0xf]
    %v8177 = vld [vmem:[%s7 + $0x14] sm:$0xf]
    %v8178 = vld [vmem:[%s7 + $0x18] sm:$0xf]
    %v8179 = vld [vmem:[%s7 + $0x1c] sm:$0xf]
    %v8180 = vld [vmem:[%s7 + $0x20] sm:$0xf]
    %v8181 = vld [vmem:[%s7 + $0x24] sm:$0xf]
    %v8182 = vld [vmem:[%s7 + $0x28] sm:$0xf]
    %v8183 = vld [vmem:[%s7 + $0x2c] sm:$0xf]
    %v8184 = vld [vmem:[%s7 + $0x30] sm:$0xf]
    %v8185 = vld [vmem:[%s7 + $0x34] sm:$0xf]
    %v8186 = vld [vmem:[%s7 + $0x38] sm:$0xf]
    %v8187 = vld [vmem:[%s7 + $0x3c] sm:$0xf]
    %v8188 = vld [vmem:[%s8] sm:$0x1]
    %v8190 = vlaneseq
    %v8191 = vshrl.u32 %v8190, 7
    %v8192 = vsub.s32 0, %v8191
    %v8193 = vrot.slane %v8188, %v8192
    %v8211 = vunpack.c.l.b16 %v8172
    %v8212 = vunpack.c.l.b16 %v8173
    %v8213 = vunpack.c.l.b16 %v8174
    %v8214 = vunpack.c.l.b16 %v8175
    %v8215 = vunpack.c.l.b16 %v8176
    %v8216 = vunpack.c.l.b16 %v8177
    %v8217 = vunpack.c.l.b16 %v8178
    %v8218 = vunpack.c.l.b16 %v8179
    %v8219 = vunpack.c.l.b16 %v8180
    %v8220 = vunpack.c.l.b16 %v8181
    %v8221 = vunpack.c.l.b16 %v8182
    %v8222 = vunpack.c.l.b16 %v8183
    %v8223 = vunpack.c.l.b16 %v8184
    %v8224 = vunpack.c.l.b16 %v8185
    %v8225 = vunpack.c.l.b16 %v8186
    %v8226 = vunpack.c.l.b16 %v8187
    %v8227 = vpack.c.b16 %v8212, %v8211
    %v8228 = vpack.c.b16 %v8214, %v8213
    %v8229 = vpack.c.b16 %v8216, %v8215
    %v8230 = vpack.c.b16 %v8218, %v8217
    %v8231 = vpack.c.b16 %v8220, %v8219
    %v8232 = vpack.c.b16 %v8222, %v8221
    %v8233 = vpack.c.b16 %v8224, %v8223
    %v8234 = vpack.c.b16 %v8226, %v8225
    %8243 = vmatprep.subr.bf16.mxu0 0
    %8244 = vmatpush1.bf16.msra.mxu0 %v8234
    %8245 = vmatprep.subr.bf16.mxu0 0
    %8246 = vmatpush1.bf16.msra.mxu0 %v8233
    %8247 = vmatprep.subr.bf16.mxu0 0
    %8248 = vmatpush1.bf16.msra.mxu0 %v8232
    %8249 = vmatprep.subr.bf16.mxu0 0
    %8250 = vmatpush1.bf16.msra.mxu0 %v8231
    %8251 = vmatprep.subr.bf16.mxu0 0
    %8252 = vmatpush1.bf16.msra.mxu0 %v8230
    %8253 = vmatprep.subr.bf16.mxu0 0
    %8254 = vmatpush1.bf16.msra.mxu0 %v8229
    %8255 = vmatprep.subr.bf16.mxu0 0
    %8256 = vmatpush1.bf16.msra.mxu0 %v8228
    %8257 = vmatprep.subr.bf16.mxu0 0
    %8258 = vmatpush1.bf16.msra.mxu0 %v8227
    %8259 = vmatprep.subr.bf16.mxu0 0
    %8260 = vmatpush2.bf16.msra.mxu0 0
    %8261 = vmatprep.subr.bf16.mxu0 0
    %8262 = vmatpush2.bf16.msra.mxu0 0
    %8263 = vmatprep.subr.bf16.mxu0 0
    %8264 = vmatpush2.bf16.msra.mxu0 0
    %8265 = vmatprep.subr.bf16.mxu0 0
    %8266 = vmatpush2.bf16.msra.mxu0 0
    %8267 = vmatprep.subr.bf16.mxu0 0
    %8268 = vmatpush2.bf16.msra.mxu0 0
    %8269 = vmatprep.subr.bf16.mxu0 0
    %8270 = vmatpush2.bf16.msra.mxu0 0
    %8271 = vmatprep.subr.bf16.mxu0 0
    %8272 = vmatpush2.bf16.msra.mxu0 0
    %8273 = vmatprep.subr.bf16.mxu0 0
    %8274 = vmatpush2.bf16.msra.mxu0 0
    %8275 = vmatprep.mubr.bf16.mxu0 0
    %8276 = vmatmul.mubr.bf16.gmra.mxu0 %v8171
    %v8277 = vpop.f32.mrf.mxu0
    %v8278 = vadd.f32 %v8193, %v8277
    %v8279 = vpop.f32.mrf.mxu0
    %v8280 = vpop.f32.mrf.mxu0
    %v8281 = vpop.f32.mrf.mxu0
    %8282 = vdwg.mxu0
    %vm8283 = vcmask 74752
    %8284 = vst.msk [vmem:[#allocation6] sm:$0x3] %vm8283, %v8278
    // Predicated region
    $region68: #{simple_cnn_forward.1} parent=1 // pred_check
      _
    $region69: #{simple_cnn_forward.1} parent=1 // pred_check_branch
      %8286 = sbr.rel (0) target = $region71
    $region70: #{simple_cnn_forward.1} parent=1 // pred_region
      %s8288 = ssub.s32 32, 32
      %8289 = vsyncadd [#allocation7], %s8288
      %s8291 = sshll.u32 [#allocation6], 4
      %s8292 = int_to_ptr.vmem [resolvable:$true] %s8291
      %8294 = dma.vmem_to_hbm [thread:$0]  %s8292, 32, %s9, [#allocation7]
    $region71: #{simple_cnn_forward.1} parent=1 // pred_fallthru
      _
    // Predicated region
    $region72: #{simple_cnn_forward.1} parent=1 // pred_check
      _
    $region73: #{simple_cnn_forward.1} parent=1 // pred_check_branch
      %8296 = sbr.rel (0) target = $region75
    $region74: #{simple_cnn_forward.1} parent=1 // pred_region
      %8297 = dma.done [#allocation7], 32
    $region75: #{simple_cnn_forward.1} parent=1 // pred_fallthru
      _
    %8298 = vsyncpa [#allocation7], 1
  %8299 = vsyncmov [#allocation5]
  %s8300 = vpop.sfrf %8299
  %p8301 = scmp.eq.s32.totalorder %s8300, 0
  %p8302 = pneg %p8301
  %8304 = shalt.err (%p8302)

</llo_original>
